<compile_context>
chip_gen: v7x
topology: tpu7x:2x2x1
jax: 0.10.0
libtpu: 0.0.40
codegen_flags: <defaults>
</compile_context>

<pallas_src>
import math

import jax
import jax.numpy as jnp
from jax.experimental import pallas as pl
from jax.experimental.pallas import tpu as pltpu

COMPUTE_DTYPE = jnp.float32   # set to jnp.bfloat16 on v6e/v7x for ~2x MXU throughput
NB = 8                        # batch tile per grid step (multiple of 8 keeps every
                              # in-kernel staging store sublane-aligned)

# architecture constants of the PyTorch QNet
C1, K1H, K1W, S1 = 32, 8, 8, 4          # Conv2d(in, 32, 8, stride=4)
C2, K2H, K2W, S2 = 64, 4, 4, 2          # Conv2d(32, 64, 4, stride=2)
C3, K3H, K3W, S3 = 64, 3, 3, 1          # Conv2d(64, 64, 3, stride=1)
HID = 512                               # hidden width of each dueling branch
BLK = 128                               # lane-aligned slot width for conv2 staging


# ----------------------------- fused Pallas kernel -----------------------------

def _make_kernel(oh1, ow1, oh2, ow2):
    """Builds the fused forward kernel for a fixed spatial geometry."""

    def kernel(p1_ref, w1_ref, b1_ref, w2_ref, b2_ref, w3_ref, b3_ref,
               wh1_ref, bh1_ref, wv2_ref, bv2_ref, wa2_ref, ba2_ref,
               q_ref, h1_ref, p2_ref):
        f32 = jnp.float32

        # Zero the conv2 staging scratch once (first grid step only).  The pad
        # lanes are multiplied by zero weight rows, but stale VMEM could hold
        # NaNs and 0 * NaN = NaN, so they must be cleared before first use.
        @pl.when(pl.program_id(0) == 0)
        def _():
            p2_ref[...] = jnp.zeros_like(p2_ref)

        # ---- conv1: one matmul over im2col'd input patches (rows = (oh1, ow1, n))
        h1 = jnp.dot(p1_ref[0], w1_ref[...], preferred_element_type=f32) + b1_ref[...]
        h1_ref[...] = jnp.maximum(h1, 0.0).astype(h1_ref.dtype)

        # ---- conv2 im2col, staged entirely in VMEM (no HBM round trip) ----------
        # Each (ki, kj) channel block gets its own 128-lane-aligned slot; the
        # matching weight rows were zero-padded at init, so the padded lanes
        # (zeroed above) contribute nothing.
        for oh in range(oh2):
            for ow in range(ow2):
                p = oh * ow2 + ow
                for ki in range(K2H):
                    for kj in range(K2W):
                        src = (S2 * oh + ki) * ow1 + (S2 * ow + kj)
                        dst = (ki * K2W + kj) * BLK
                        p2_ref[p * NB:(p + 1) * NB, dst:dst + C1] = \
                            h1_ref[src * NB:(src + 1) * NB, :]

        # ---- conv2: a single matmul for all output positions --------------------
        h2 = jnp.dot(p2_ref[...], w2_ref[...], preferred_element_type=f32) + b2_ref[...]
        h2 = jnp.maximum(h2, 0.0)                         # (oh2*ow2*NB, C2)

        # ---- conv3: the 3x3 kernel covers the whole 3x3 map -> 9 small dots -----
        acc = jnp.zeros((NB, C3), f32)
        for p in range(oh2 * ow2):
            acc = acc + jnp.dot(h2[p * NB:(p + 1) * NB, :],
                                w3_ref[p * C2:(p + 1) * C2, :],
                                preferred_element_type=f32)
        feat = jnp.maximum(acc + b3_ref[...], 0.0)        # (NB, C3) == flattened feats

        # ---- dueling head: value|advantage first layers merged into one matmul --
        hid = jnp.dot(feat, wh1_ref[...], preferred_element_type=f32) + bh1_ref[...]
        hid = jnp.maximum(hid, 0.0)                       # (NB, 2*HID)
        value = jnp.dot(hid[:, :HID], wv2_ref[...],
                        preferred_element_type=f32) + bv2_ref[...]   # (NB, 1)
        adv = jnp.dot(hid[:, HID:], wa2_ref[...],
                      preferred_element_type=f32) + ba2_ref[...]     # (NB, A)
        q = value + (adv - jnp.mean(adv, axis=1, keepdims=True))
        q_ref[0] = q.astype(q_ref.dtype)

    return kernel


# ------------------------------------ glue -------------------------------------

def _feature_dims(input_shape):
    _, h, w = input_shape
    oh1, ow1 = (h - K1H) // S1 + 1, (w - K1W) // S1 + 1
    oh2, ow2 = (oh1 - K2H) // S2 + 1, (ow1 - K2W) // S2 + 1
    oh3, ow3 = (oh2 - K3H) // S3 + 1, (ow2 - K3W) // S3 + 1
    return oh1, ow1, oh2, ow2, oh3, ow3


def feature_size_for(input_shape):
    *_, oh3, ow3 = _feature_dims(input_shape)
    return C3 * oh3 * ow3


def _conv1_patches(x_nhwc, oh1, ow1):
    """im2col for conv1 on the raw input, channels-last patch order (kh, kw, c)."""
    n, _, _, c = x_nhwc.shape
    cols = []
    for ki in range(K1H):
        for kj in range(K1W):
            cols.append(jax.lax.slice(
                x_nhwc, (0, ki, kj, 0),
                (n, ki + S1 * (oh1 - 1) + 1, kj + S1 * (ow1 - 1) + 1, c),
                (1, S1, S1, 1)))                          # (n, oh1, ow1, c)
    p = jnp.stack(cols, axis=3)                           # (n, oh1, ow1, kh*kw, c)
    return p.reshape(n, oh1, ow1, K1H * K1W * c)


@jax.jit
def qnet_forward(x, params):
    """x: (N, C, H, W) float32 -> q values (N, n_actions)."""
    n, c, h, w = x.shape
    oh1, ow1, oh2, ow2, oh3, ow3 = _feature_dims((c, h, w))
    assert oh3 == 1 and ow3 == 1, (
        "fused kernel is specialised to inputs whose conv3 output is 1x1 (e.g. 36x36)")
    # TODO(synk): generalise the conv3/flatten staging (like conv2's) for larger
    # frames (e.g. 84x84 Atari inputs, conv3 output 7x7).

    n_actions = params["ba2"].shape[1]
    n_pad = -(-n // NB) * NB
    n_chunks = n_pad // NB

    x = jnp.transpose(x, (0, 2, 3, 1)).astype(COMPUTE_DTYPE)    # NCHW -> NHWC (only transpose)
    if n_pad != n:
        x = jnp.pad(x, ((0, n_pad - n), (0, 0), (0, 0), (0, 0)))

    patches = _conv1_patches(x, oh1, ow1)                       # (n_pad, oh1, ow1, K1)
    k1 = patches.shape[-1]
    patches = patches.reshape(n_chunks, NB, oh1, ow1, k1)
    patches = patches.transpose(0, 2, 3, 1, 4).reshape(n_chunks, oh1 * ow1 * NB, k1)

    weight_names = ["w1", "b1", "w2", "b2", "w3", "b3",
                    "wh1", "bh1", "wv2", "bv2", "wa2", "ba2"]
    weights = [params[k] for k in weight_names]

    def full_spec(arr):
        nd = arr.ndim
        return pl.BlockSpec(arr.shape, lambda i, _nd=nd: (0,) * _nd)

    k2p = K2H * K2W * BLK
    q = pl.pallas_call(
        _make_kernel(oh1, ow1, oh2, ow2),
        out_shape=jax.ShapeDtypeStruct((n_chunks, NB, n_actions), jnp.float32),
        grid=(n_chunks,),
        in_specs=[pl.BlockSpec((1, oh1 * ow1 * NB, k1), lambda i: (i, 0, 0))]
                 + [full_spec(wt) for wt in weights],
        out_specs=pl.BlockSpec((1, NB, n_actions), lambda i: (i, 0, 0)),
        scratch_shapes=[
            pltpu.VMEM((oh1 * ow1 * NB, C1), COMPUTE_DTYPE),    # conv1 activations
            pltpu.VMEM((oh2 * ow2 * NB, k2p), COMPUTE_DTYPE),   # conv2 im2col staging
        ],
        compiler_params=pltpu.CompilerParams(
            dimension_semantics=("parallel",),                  # multi-TC chips split batch
            vmem_limit_bytes=32 * 1024 * 1024),
    )(patches, *weights)

    return q.reshape(n_pad, n_actions)[:n]


# --------------------------------- parameters ----------------------------------

def _uniform(key, shape, fan_in):
    bound = 1.0 / math.sqrt(fan_in)
    return jax.random.uniform(key, shape, jnp.float32, -bound, bound)


def init_params(key, input_shape, n_actions):
    """PyTorch-layout parameters (Conv2d OIHW, Linear (out, in))."""
    c_in = input_shape[0]
    fsize = feature_size_for(input_shape)
    ks = jax.random.split(key, 14)
    return {
        "conv1_w": _uniform(ks[0], (C1, c_in, K1H, K1W), c_in * K1H * K1W),
        "conv1_b": _uniform(ks[1], (C1,), c_in * K1H * K1W),
        "conv2_w": _uniform(ks[2], (C2, C1, K2H, K2W), C1 * K2H * K2W),
        "conv2_b": _uniform(ks[3], (C2,), C1 * K2H * K2W),
        "conv3_w": _uniform(ks[4], (C3, C2, K3H, K3W), C2 * K3H * K3W),
        "conv3_b": _uniform(ks[5], (C3,), C2 * K3H * K3W),
        "v1_w": _uniform(ks[6], (HID, fsize), fsize),
        "v1_b": _uniform(ks[7], (HID,), fsize),
        "v2_w": _uniform(ks[8], (1, HID), HID),
        "v2_b": _uniform(ks[9], (1,), HID),
        "a1_w": _uniform(ks[10], (HID, fsize), fsize),
        "a1_b": _uniform(ks[11], (HID,), fsize),
        "a2_w": _uniform(ks[12], (n_actions, HID), HID),
        "a2_b": _uniform(ks[13], (n_actions,), HID),
    }


def prepare_params(p):
    """One-time conversion to kernel-ready layouts (done at init, not per step):
    conv weights as (K, OC) matmul operands (conv2's K zero-padded to 128-lane
    aligned blocks), biases as (1, OC), and the two dueling-head first-layer
    Linears merged into a single (F, 2*HID) matmul."""
    dt = COMPUTE_DTYPE
    w2 = jnp.transpose(p["conv2_w"], (2, 3, 1, 0)).reshape(K2H * K2W, C1, C2)
    w2 = jnp.pad(w2, ((0, 0), (0, BLK - C1), (0, 0))).reshape(K2H * K2W * BLK, C2)
    return {
        "w1": jnp.transpose(p["conv1_w"], (2, 3, 1, 0)).reshape(-1, C1).astype(dt),
        "b1": p["conv1_b"].reshape(1, -1).astype(dt),
        "w2": w2.astype(dt),
        "b2": p["conv2_b"].reshape(1, -1).astype(dt),
        "w3": jnp.transpose(p["conv3_w"], (2, 3, 1, 0)).reshape(-1, C3).astype(dt),
        "b3": p["conv3_b"].reshape(1, -1).astype(dt),
        "wh1": jnp.concatenate([p["v1_w"].T, p["a1_w"].T], axis=1).astype(dt),
        "bh1": jnp.concatenate([p["v1_b"], p["a1_b"]]).reshape(1, -1).astype(dt),
        "wv2": p["v2_w"].T.astype(dt),
        "bv2": p["v2_b"].reshape(1, 1).astype(dt),
        "wa2": p["a2_w"].T.astype(dt),
        "ba2": p["a2_b"].reshape(1, -1).astype(dt),
    }


# ------------------------------- pure-JAX reference ------------------------------

def qnet_reference(x, raw):
    """Straightforward NCHW implementation of the PyTorch module (f32, highest prec)."""
    prec = jax.lax.Precision.HIGHEST
    dn = ("NCHW", "OIHW", "NCHW")
    h = jax.lax.conv_general_dilated(x, raw["conv1_w"], (S1, S1), "VALID",
                                     dimension_numbers=dn, precision=prec)
    h = jax.nn.relu(h + raw["conv1_b"][None, :, None, None])
    h = jax.lax.conv_general_dilated(h, raw["conv2_w"], (S2, S2), "VALID",
                                     dimension_numbers=dn, precision=prec)
    h = jax.nn.relu(h + raw["conv2_b"][None, :, None, None])
    h = jax.lax.conv_general_dilated(h, raw["conv3_w"], (S3, S3), "VALID",
                                     dimension_numbers=dn, precision=prec)
    h = jax.nn.relu(h + raw["conv3_b"][None, :, None, None])
    f = h.reshape(h.shape[0], -1)
    v = jax.nn.relu(jnp.dot(f, raw["v1_w"].T, precision=prec) + raw["v1_b"])
    v = jnp.dot(v, raw["v2_w"].T, precision=prec) + raw["v2_b"]
    a = jax.nn.relu(jnp.dot(f, raw["a1_w"].T, precision=prec) + raw["a1_b"])
    a = jnp.dot(a, raw["a2_w"].T, precision=prec) + raw["a2_b"]
    return v + (a - a.mean(axis=1, keepdims=True))


# ------------------------------------- main -------------------------------------

if __name__ == "__main__":
    input_shape = (4, 36, 36)   # smallest (C,H,W) the conv stack accepts (conv3 -> 1x1)
    n_actions = 6
    batch = 2

    key = jax.random.PRNGKey(0)
    k_params, k_x = jax.random.split(key)
    raw_params = init_params(k_params, input_shape, n_actions)
    params = prepare_params(raw_params)
    x = jax.random.normal(k_x, (batch,) + input_shape, jnp.float32)

    q = qnet_forward(x, params)
    q = jax.block_until_ready(q)
    assert q.shape == (batch, n_actions)

    q_ref = jax.block_until_ready(qnet_reference(x, raw_params))
    err = float(jnp.max(jnp.abs(q - q_ref)))
    assert err < 3e-2, f"max abs error vs reference: {err}"

    print("KERNEL_OK")
</pallas_src>

<mosaic_0001>
module attributes {stable_mosaic.version = 11 : i64} {
  func.func @kernel(%arg0: i32, %arg1: memref<1x512x256xf32, #tpu.memory_space<vmem>>, %arg2: memref<256x32xf32, #tpu.memory_space<vmem>>, %arg3: memref<1x32xf32, #tpu.memory_space<vmem>>, %arg4: memref<2048x64xf32, #tpu.memory_space<vmem>>, %arg5: memref<1x64xf32, #tpu.memory_space<vmem>>, %arg6: memref<576x64xf32, #tpu.memory_space<vmem>>, %arg7: memref<1x64xf32, #tpu.memory_space<vmem>>, %arg8: memref<64x1024xf32, #tpu.memory_space<vmem>>, %arg9: memref<1x1024xf32, #tpu.memory_space<vmem>>, %arg10: memref<512x1xf32, #tpu.memory_space<vmem>>, %arg11: memref<1x1xf32, #tpu.memory_space<vmem>>, %arg12: memref<512x6xf32, #tpu.memory_space<vmem>>, %arg13: memref<1x6xf32, #tpu.memory_space<vmem>>, %arg14: memref<1x8x6xf32, #tpu.memory_space<vmem>>, %arg15: memref<512x32xf32, #tpu.memory_space<vmem>>, %arg16: memref<72x2048xf32, #tpu.memory_space<vmem>>) attributes {dimension_semantics = [#tpu.dimension_semantics<parallel>], iteration_bounds = array<i64: 1>, scalar_prefetch = 0 : i64, scratch_operands = 2 : i64, tpu.core_type = #tpu.core_type<tc>, window_params = [{transform_indices = @transform_0, window_bounds = array<i64: 1, 512, 256>}, {pipeline_mode = #tpu.pipeline_mode<synchronous>, transform_indices = @transform_1, window_bounds = array<i64: 256, 32>}, {pipeline_mode = #tpu.pipeline_mode<synchronous>, transform_indices = @transform_2, window_bounds = array<i64: 1, 32>}, {pipeline_mode = #tpu.pipeline_mode<synchronous>, transform_indices = @transform_3, window_bounds = array<i64: 2048, 64>}, {pipeline_mode = #tpu.pipeline_mode<synchronous>, transform_indices = @transform_4, window_bounds = array<i64: 1, 64>}, {pipeline_mode = #tpu.pipeline_mode<synchronous>, transform_indices = @transform_5, window_bounds = array<i64: 576, 64>}, {pipeline_mode = #tpu.pipeline_mode<synchronous>, transform_indices = @transform_6, window_bounds = array<i64: 1, 64>}, {pipeline_mode = #tpu.pipeline_mode<synchronous>, transform_indices = @transform_7, window_bounds = array<i64: 64, 1024>}, {pipeline_mode = #tpu.pipeline_mode<synchronous>, transform_indices = @transform_8, window_bounds = array<i64: 1, 1024>}, {pipeline_mode = #tpu.pipeline_mode<synchronous>, transform_indices = @transform_9, window_bounds = array<i64: 512, 1>}, {pipeline_mode = #tpu.pipeline_mode<synchronous>, transform_indices = @transform_10, window_bounds = array<i64: 1, 1>}, {pipeline_mode = #tpu.pipeline_mode<synchronous>, transform_indices = @transform_11, window_bounds = array<i64: 512, 6>}, {pipeline_mode = #tpu.pipeline_mode<synchronous>, transform_indices = @transform_12, window_bounds = array<i64: 1, 6>}, {transform_indices = @transform_13, window_bounds = array<i64: 1, 8, 6>}]} {
    %c0_i32 = arith.constant 0 : i32
    %0 = arith.cmpi eq, %arg0, %c0_i32 : i32
    %1 = arith.extui %0 : i1 to i32
    %c0_i32_0 = arith.constant 0 : i32
    %2 = arith.cmpi ne, %1, %c0_i32_0 : i32
    scf.if %2 {
      %cst_571 = arith.constant 0.000000e+00 : f32
      %381 = vector.broadcast %cst_571 : f32 to vector<72x2048xf32>
      %c0_572 = arith.constant 0 : index
      %c0_573 = arith.constant 0 : index
      %382 = vector.load %arg16[%c0_572, %c0_573] : memref<72x2048xf32, #tpu.memory_space<vmem>>, vector<72x2048xf32>
      tpu.vector_store %arg16[%c0_572, %c0_573], %381 {strides = array<i32>} : memref<72x2048xf32, #tpu.memory_space<vmem>>, vector<72x2048xf32>,
    } else {
    }
    %c0 = arith.constant 0 : index
    %c0_1 = arith.constant 0 : index
    %c0_2 = arith.constant 0 : index
    %3 = vector.load %arg1[%c0, %c0_1, %c0_2] : memref<1x512x256xf32, #tpu.memory_space<vmem>>, vector<1x512x256xf32>
    %4 = vector.shape_cast %3 : vector<1x512x256xf32> to vector<512x256xf32>
    %c0_3 = arith.constant 0 : index
    %c0_4 = arith.constant 0 : index
    %5 = vector.load %arg2[%c0_3, %c0_4] : memref<256x32xf32, #tpu.memory_space<vmem>>, vector<256x32xf32>
    %cst = arith.constant dense<0.000000e+00> : vector<512x32xf32>
    %6 = tpu.matmul %4, %5, %cst {dimension_numbers = #tpu.dot_dimension_numbers<[1], [0], [0], [1], [0, 0, 1, 1], [], []>} : vector<512x256xf32>, vector<256x32xf32>, vector<512x32xf32> -> vector<512x32xf32>
    %c0_5 = arith.constant 0 : index
    %c0_6 = arith.constant 0 : index
    %7 = vector.load %arg3[%c0_5, %c0_6] : memref<1x32xf32, #tpu.memory_space<vmem>>, vector<1x32xf32>
    %8 = vector.broadcast %7 : vector<1x32xf32> to vector<512x32xf32>
    %9 = arith.addf %6, %8 : vector<512x32xf32>
    %cst_7 = arith.constant 0.000000e+00 : f32
    %10 = vector.broadcast %cst_7 : f32 to vector<512x32xf32>
    %11 = arith.maximumf %9, %10 : vector<512x32xf32>
    %c0_8 = arith.constant 0 : index
    %c0_9 = arith.constant 0 : index
    %12 = vector.load %arg15[%c0_8, %c0_9] : memref<512x32xf32, #tpu.memory_space<vmem>>, vector<512x32xf32>
    tpu.vector_store %arg15[%c0_8, %c0_9], %11 {strides = array<i32>} : memref<512x32xf32, #tpu.memory_space<vmem>>, vector<512x32xf32>,
    %c0_10 = arith.constant 0 : index
    %c0_11 = arith.constant 0 : index
    %13 = vector.load %arg15[%c0_10, %c0_11] : memref<512x32xf32, #tpu.memory_space<vmem>>, vector<8x32xf32>
    %c0_12 = arith.constant 0 : index
    %c0_13 = arith.constant 0 : index
    %14 = vector.load %arg16[%c0_12, %c0_13] : memref<72x2048xf32, #tpu.memory_space<vmem>>, vector<8x32xf32>
    tpu.vector_store %arg16[%c0_12, %c0_13], %13 {strides = array<i32>} : memref<72x2048xf32, #tpu.memory_space<vmem>>, vector<8x32xf32>,
    %c8 = arith.constant 8 : index
    %c0_14 = arith.constant 0 : index
    %15 = vector.load %arg15[%c8, %c0_14] : memref<512x32xf32, #tpu.memory_space<vmem>>, vector<8x32xf32>
    %c0_15 = arith.constant 0 : index
    %c128 = arith.constant 128 : index
    %16 = vector.load %arg16[%c0_15, %c128] : memref<72x2048xf32, #tpu.memory_space<vmem>>, vector<8x32xf32>
    tpu.vector_store %arg16[%c0_15, %c128], %15 {strides = array<i32>} : memref<72x2048xf32, #tpu.memory_space<vmem>>, vector<8x32xf32>,
    %c16 = arith.constant 16 : index
    %c0_16 = arith.constant 0 : index
    %17 = vector.load %arg15[%c16, %c0_16] : memref<512x32xf32, #tpu.memory_space<vmem>>, vector<8x32xf32>
    %c0_17 = arith.constant 0 : index
    %c256 = arith.constant 256 : index
    %18 = vector.load %arg16[%c0_17, %c256] : memref<72x2048xf32, #tpu.memory_space<vmem>>, vector<8x32xf32>
    tpu.vector_store %arg16[%c0_17, %c256], %17 {strides = array<i32>} : memref<72x2048xf32, #tpu.memory_space<vmem>>, vector<8x32xf32>,
    %c24 = arith.constant 24 : index
    %c0_18 = arith.constant 0 : index
    %19 = vector.load %arg15[%c24, %c0_18] : memref<512x32xf32, #tpu.memory_space<vmem>>, vector<8x32xf32>
    %c0_19 = arith.constant 0 : index
    %c384 = arith.constant 384 : index
    %20 = vector.load %arg16[%c0_19, %c384] : memref<72x2048xf32, #tpu.memory_space<vmem>>, vector<8x32xf32>
    tpu.vector_store %arg16[%c0_19, %c384], %19 {strides = array<i32>} : memref<72x2048xf32, #tpu.memory_space<vmem>>, vector<8x32xf32>,
    %c64 = arith.constant 64 : index
    %c0_20 = arith.constant 0 : index
    %21 = vector.load %arg15[%c64, %c0_20] : memref<512x32xf32, #tpu.memory_space<vmem>>, vector<8x32xf32>
    %c0_21 = arith.constant 0 : index
    %c512 = arith.constant 512 : index
    %22 = vector.load %arg16[%c0_21, %c512] : memref<72x2048xf32, #tpu.memory_space<vmem>>, vector<8x32xf32>
    tpu.vector_store %arg16[%c0_21, %c512], %21 {strides = array<i32>} : memref<72x2048xf32, #tpu.memory_space<vmem>>, vector<8x32xf32>,
    %c72 = arith.constant 72 : index
    %c0_22 = arith.constant 0 : index
    %23 = vector.load %arg15[%c72, %c0_22] : memref<512x32xf32, #tpu.memory_space<vmem>>, vector<8x32xf32>
    %c0_23 = arith.constant 0 : index
    %c640 = arith.constant 640 : index
    %24 = vector.load %arg16[%c0_23, %c640] : memref<72x2048xf32, #tpu.memory_space<vmem>>, vector<8x32xf32>
    tpu.vector_store %arg16[%c0_23, %c640], %23 {strides = array<i32>} : memref<72x2048xf32, #tpu.memory_space<vmem>>, vector<8x32xf32>,
    %c80 = arith.constant 80 : index
    %c0_24 = arith.constant 0 : index
    %25 = vector.load %arg15[%c80, %c0_24] : memref<512x32xf32, #tpu.memory_space<vmem>>, vector<8x32xf32>
    %c0_25 = arith.constant 0 : index
    %c768 = arith.constant 768 : index
    %26 = vector.load %arg16[%c0_25, %c768] : memref<72x2048xf32, #tpu.memory_space<vmem>>, vector<8x32xf32>
    tpu.vector_store %arg16[%c0_25, %c768], %25 {strides = array<i32>} : memref<72x2048xf32, #tpu.memory_space<vmem>>, vector<8x32xf32>,
    %c88 = arith.constant 88 : index
    %c0_26 = arith.constant 0 : index
    %27 = vector.load %arg15[%c88, %c0_26] : memref<512x32xf32, #tpu.memory_space<vmem>>, vector<8x32xf32>
    %c0_27 = arith.constant 0 : index
    %c896 = arith.constant 896 : index
    %28 = vector.load %arg16[%c0_27, %c896] : memref<72x2048xf32, #tpu.memory_space<vmem>>, vector<8x32xf32>
    tpu.vector_store %arg16[%c0_27, %c896], %27 {strides = array<i32>} : memref<72x2048xf32, #tpu.memory_space<vmem>>, vector<8x32xf32>,
    %c128_28 = arith.constant 128 : index
    %c0_29 = arith.constant 0 : index
    %29 = vector.load %arg15[%c128_28, %c0_29] : memref<512x32xf32, #tpu.memory_space<vmem>>, vector<8x32xf32>
    %c0_30 = arith.constant 0 : index
    %c1024 = arith.constant 1024 : index
    %30 = vector.load %arg16[%c0_30, %c1024] : memref<72x2048xf32, #tpu.memory_space<vmem>>, vector<8x32xf32>
    tpu.vector_store %arg16[%c0_30, %c1024], %29 {strides = array<i32>} : memref<72x2048xf32, #tpu.memory_space<vmem>>, vector<8x32xf32>,
    %c136 = arith.constant 136 : index
    %c0_31 = arith.constant 0 : index
    %31 = vector.load %arg15[%c136, %c0_31] : memref<512x32xf32, #tpu.memory_space<vmem>>, vector<8x32xf32>
    %c0_32 = arith.constant 0 : index
    %c1152 = arith.constant 1152 : index
    %32 = vector.load %arg16[%c0_32, %c1152] : memref<72x2048xf32, #tpu.memory_space<vmem>>, vector<8x32xf32>
    tpu.vector_store %arg16[%c0_32, %c1152], %31 {strides = array<i32>} : memref<72x2048xf32, #tpu.memory_space<vmem>>, vector<8x32xf32>,
    %c144 = arith.constant 144 : index
    %c0_33 = arith.constant 0 : index
    %33 = vector.load %arg15[%c144, %c0_33] : memref<512x32xf32, #tpu.memory_space<vmem>>, vector<8x32xf32>
    %c0_34 = arith.constant 0 : index
    %c1280 = arith.constant 1280 : index
    %34 = vector.load %arg16[%c0_34, %c1280] : memref<72x2048xf32, #tpu.memory_space<vmem>>, vector<8x32xf32>
    tpu.vector_store %arg16[%c0_34, %c1280], %33 {strides = array<i32>} : memref<72x2048xf32, #tpu.memory_space<vmem>>, vector<8x32xf32>,
    %c152 = arith.constant 152 : index
    %c0_35 = arith.constant 0 : index
    %35 = vector.load %arg15[%c152, %c0_35] : memref<512x32xf32, #tpu.memory_space<vmem>>, vector<8x32xf32>
    %c0_36 = arith.constant 0 : index
    %c1408 = arith.constant 1408 : index
    %36 = vector.load %arg16[%c0_36, %c1408] : memref<72x2048xf32, #tpu.memory_space<vmem>>, vector<8x32xf32>
    tpu.vector_store %arg16[%c0_36, %c1408], %35 {strides = array<i32>} : memref<72x2048xf32, #tpu.memory_space<vmem>>, vector<8x32xf32>,
    %c192 = arith.constant 192 : index
    %c0_37 = arith.constant 0 : index
    %37 = vector.load %arg15[%c192, %c0_37] : memref<512x32xf32, #tpu.memory_space<vmem>>, vector<8x32xf32>
    %c0_38 = arith.constant 0 : index
    %c1536 = arith.constant 1536 : index
    %38 = vector.load %arg16[%c0_38, %c1536] : memref<72x2048xf32, #tpu.memory_space<vmem>>, vector<8x32xf32>
    tpu.vector_store %arg16[%c0_38, %c1536], %37 {strides = array<i32>} : memref<72x2048xf32, #tpu.memory_space<vmem>>, vector<8x32xf32>,
    %c200 = arith.constant 200 : index
    %c0_39 = arith.constant 0 : index
    %39 = vector.load %arg15[%c200, %c0_39] : memref<512x32xf32, #tpu.memory_space<vmem>>, vector<8x32xf32>
    %c0_40 = arith.constant 0 : index
    %c1664 = arith.constant 1664 : index
    %40 = vector.load %arg16[%c0_40, %c1664] : memref<72x2048xf32, #tpu.memory_space<vmem>>, vector<8x32xf32>
    tpu.vector_store %arg16[%c0_40, %c1664], %39 {strides = array<i32>} : memref<72x2048xf32, #tpu.memory_space<vmem>>, vector<8x32xf32>,
    %c208 = arith.constant 208 : index
    %c0_41 = arith.constant 0 : index
    %41 = vector.load %arg15[%c208, %c0_41] : memref<512x32xf32, #tpu.memory_space<vmem>>, vector<8x32xf32>
    %c0_42 = arith.constant 0 : index
    %c1792 = arith.constant 1792 : index
    %42 = vector.load %arg16[%c0_42, %c1792] : memref<72x2048xf32, #tpu.memory_space<vmem>>, vector<8x32xf32>
    tpu.vector_store %arg16[%c0_42, %c1792], %41 {strides = array<i32>} : memref<72x2048xf32, #tpu.memory_space<vmem>>, vector<8x32xf32>,
    %c216 = arith.constant 216 : index
    %c0_43 = arith.constant 0 : index
    %43 = vector.load %arg15[%c216, %c0_43] : memref<512x32xf32, #tpu.memory_space<vmem>>, vector<8x32xf32>
    %c0_44 = arith.constant 0 : index
    %c1920 = arith.constant 1920 : index
    %44 = vector.load %arg16[%c0_44, %c1920] : memref<72x2048xf32, #tpu.memory_space<vmem>>, vector<8x32xf32>
    tpu.vector_store %arg16[%c0_44, %c1920], %43 {strides = array<i32>} : memref<72x2048xf32, #tpu.memory_space<vmem>>, vector<8x32xf32>,
    %c16_45 = arith.constant 16 : index
    %c0_46 = arith.constant 0 : index
    %45 = vector.load %arg15[%c16_45, %c0_46] : memref<512x32xf32, #tpu.memory_space<vmem>>, vector<8x32xf32>
    %c8_47 = arith.constant 8 : index
    %c0_48 = arith.constant 0 : index
    %46 = vector.load %arg16[%c8_47, %c0_48] : memref<72x2048xf32, #tpu.memory_space<vmem>>, vector<8x32xf32>
    tpu.vector_store %arg16[%c8_47, %c0_48], %45 {strides = array<i32>} : memref<72x2048xf32, #tpu.memory_space<vmem>>, vector<8x32xf32>,
    %c24_49 = arith.constant 24 : index
    %c0_50 = arith.constant 0 : index
    %47 = vector.load %arg15[%c24_49, %c0_50] : memref<512x32xf32, #tpu.memory_space<vmem>>, vector<8x32xf32>
    %c8_51 = arith.constant 8 : index
    %c128_52 = arith.constant 128 : index
    %48 = vector.load %arg16[%c8_51, %c128_52] : memref<72x2048xf32, #tpu.memory_space<vmem>>, vector<8x32xf32>
    tpu.vector_store %arg16[%c8_51, %c128_52], %47 {strides = array<i32>} : memref<72x2048xf32, #tpu.memory_space<vmem>>, vector<8x32xf32>,
    %c32 = arith.constant 32 : index
    %c0_53 = arith.constant 0 : index
    %49 = vector.load %arg15[%c32, %c0_53] : memref<512x32xf32, #tpu.memory_space<vmem>>, vector<8x32xf32>
    %c8_54 = arith.constant 8 : index
    %c256_55 = arith.constant 256 : index
    %50 = vector.load %arg16[%c8_54, %c256_55] : memref<72x2048xf32, #tpu.memory_space<vmem>>, vector<8x32xf32>
    tpu.vector_store %arg16[%c8_54, %c256_55], %49 {strides = array<i32>} : memref<72x2048xf32, #tpu.memory_space<vmem>>, vector<8x32xf32>,
    %c40 = arith.constant 40 : index
    %c0_56 = arith.constant 0 : index
    %51 = vector.load %arg15[%c40, %c0_56] : memref<512x32xf32, #tpu.memory_space<vmem>>, vector<8x32xf32>
    %c8_57 = arith.constant 8 : index
    %c384_58 = arith.constant 384 : index
    %52 = vector.load %arg16[%c8_57, %c384_58] : memref<72x2048xf32, #tpu.memory_space<vmem>>, vector<8x32xf32>
    tpu.vector_store %arg16[%c8_57, %c384_58], %51 {strides = array<i32>} : memref<72x2048xf32, #tpu.memory_space<vmem>>, vector<8x32xf32>,
    %c80_59 = arith.constant 80 : index
    %c0_60 = arith.constant 0 : index
    %53 = vector.load %arg15[%c80_59, %c0_60] : memref<512x32xf32, #tpu.memory_space<vmem>>, vector<8x32xf32>
    %c8_61 = arith.constant 8 : index
    %c512_62 = arith.constant 512 : index
    %54 = vector.load %arg16[%c8_61, %c512_62] : memref<72x2048xf32, #tpu.memory_space<vmem>>, vector<8x32xf32>
    tpu.vector_store %arg16[%c8_61, %c512_62], %53 {strides = array<i32>} : memref<72x2048xf32, #tpu.memory_space<vmem>>, vector<8x32xf32>,
    %c88_63 = arith.constant 88 : index
    %c0_64 = arith.constant 0 : index
    %55 = vector.load %arg15[%c88_63, %c0_64] : memref<512x32xf32, #tpu.memory_space<vmem>>, vector<8x32xf32>
    %c8_65 = arith.constant 8 : index
    %c640_66 = arith.constant 640 : index
    %56 = vector.load %arg16[%c8_65, %c640_66] : memref<72x2048xf32, #tpu.memory_space<vmem>>, vector<8x32xf32>
    tpu.vector_store %arg16[%c8_65, %c640_66], %55 {strides = array<i32>} : memref<72x2048xf32, #tpu.memory_space<vmem>>, vector<8x32xf32>,
    %c96 = arith.constant 96 : index
    %c0_67 = arith.constant 0 : index
    %57 = vector.load %arg15[%c96, %c0_67] : memref<512x32xf32, #tpu.memory_space<vmem>>, vector<8x32xf32>
    %c8_68 = arith.constant 8 : index
    %c768_69 = arith.constant 768 : index
    %58 = vector.load %arg16[%c8_68, %c768_69] : memref<72x2048xf32, #tpu.memory_space<vmem>>, vector<8x32xf32>
    tpu.vector_store %arg16[%c8_68, %c768_69], %57 {strides = array<i32>} : memref<72x2048xf32, #tpu.memory_space<vmem>>, vector<8x32xf32>,
    %c104 = arith.constant 104 : index
    %c0_70 = arith.constant 0 : index
    %59 = vector.load %arg15[%c104, %c0_70] : memref<512x32xf32, #tpu.memory_space<vmem>>, vector<8x32xf32>
    %c8_71 = arith.constant 8 : index
    %c896_72 = arith.constant 896 : index
    %60 = vector.load %arg16[%c8_71, %c896_72] : memref<72x2048xf32, #tpu.memory_space<vmem>>, vector<8x32xf32>
    tpu.vector_store %arg16[%c8_71, %c896_72], %59 {strides = array<i32>} : memref<72x2048xf32, #tpu.memory_space<vmem>>, vector<8x32xf32>,
    %c144_73 = arith.constant 144 : index
    %c0_74 = arith.constant 0 : index
    %61 = vector.load %arg15[%c144_73, %c0_74] : memref<512x32xf32, #tpu.memory_space<vmem>>, vector<8x32xf32>
    %c8_75 = arith.constant 8 : index
    %c1024_76 = arith.constant 1024 : index
    %62 = vector.load %arg16[%c8_75, %c1024_76] : memref<72x2048xf32, #tpu.memory_space<vmem>>, vector<8x32xf32>
    tpu.vector_store %arg16[%c8_75, %c1024_76], %61 {strides = array<i32>} : memref<72x2048xf32, #tpu.memory_space<vmem>>, vector<8x32xf32>,
    %c152_77 = arith.constant 152 : index
    %c0_78 = arith.constant 0 : index
    %63 = vector.load %arg15[%c152_77, %c0_78] : memref<512x32xf32, #tpu.memory_space<vmem>>, vector<8x32xf32>
    %c8_79 = arith.constant 8 : index
    %c1152_80 = arith.constant 1152 : index
    %64 = vector.load %arg16[%c8_79, %c1152_80] : memref<72x2048xf32, #tpu.memory_space<vmem>>, vector<8x32xf32>
    tpu.vector_store %arg16[%c8_79, %c1152_80], %63 {strides = array<i32>} : memref<72x2048xf32, #tpu.memory_space<vmem>>, vector<8x32xf32>,
    %c160 = arith.constant 160 : index
    %c0_81 = arith.constant 0 : index
    %65 = vector.load %arg15[%c160, %c0_81] : memref<512x32xf32, #tpu.memory_space<vmem>>, vector<8x32xf32>
    %c8_82 = arith.constant 8 : index
    %c1280_83 = arith.constant 1280 : index
    %66 = vector.load %arg16[%c8_82, %c1280_83] : memref<72x2048xf32, #tpu.memory_space<vmem>>, vector<8x32xf32>
    tpu.vector_store %arg16[%c8_82, %c1280_83], %65 {strides = array<i32>} : memref<72x2048xf32, #tpu.memory_space<vmem>>, vector<8x32xf32>,
    %c168 = arith.constant 168 : index
    %c0_84 = arith.constant 0 : index
    %67 = vector.load %arg15[%c168, %c0_84] : memref<512x32xf32, #tpu.memory_space<vmem>>, vector<8x32xf32>
    %c8_85 = arith.constant 8 : index
    %c1408_86 = arith.constant 1408 : index
    %68 = vector.load %arg16[%c8_85, %c1408_86] : memref<72x2048xf32, #tpu.memory_space<vmem>>, vector<8x32xf32>
    tpu.vector_store %arg16[%c8_85, %c1408_86], %67 {strides = array<i32>} : memref<72x2048xf32, #tpu.memory_space<vmem>>, vector<8x32xf32>,
    %c208_87 = arith.constant 208 : index
    %c0_88 = arith.constant 0 : index
    %69 = vector.load %arg15[%c208_87, %c0_88] : memref<512x32xf32, #tpu.memory_space<vmem>>, vector<8x32xf32>
    %c8_89 = arith.constant 8 : index
    %c1536_90 = arith.constant 1536 : index
    %70 = vector.load %arg16[%c8_89, %c1536_90] : memref<72x2048xf32, #tpu.memory_space<vmem>>, vector<8x32xf32>
    tpu.vector_store %arg16[%c8_89, %c1536_90], %69 {strides = array<i32>} : memref<72x2048xf32, #tpu.memory_space<vmem>>, vector<8x32xf32>,
    %c216_91 = arith.constant 216 : index
    %c0_92 = arith.constant 0 : index
    %71 = vector.load %arg15[%c216_91, %c0_92] : memref<512x32xf32, #tpu.memory_space<vmem>>, vector<8x32xf32>
    %c8_93 = arith.constant 8 : index
    %c1664_94 = arith.constant 1664 : index
    %72 = vector.load %arg16[%c8_93, %c1664_94] : memref<72x2048xf32, #tpu.memory_space<vmem>>, vector<8x32xf32>
    tpu.vector_store %arg16[%c8_93, %c1664_94], %71 {strides = array<i32>} : memref<72x2048xf32, #tpu.memory_space<vmem>>, vector<8x32xf32>,
    %c224 = arith.constant 224 : index
    %c0_95 = arith.constant 0 : index
    %73 = vector.load %arg15[%c224, %c0_95] : memref<512x32xf32, #tpu.memory_space<vmem>>, vector<8x32xf32>
    %c8_96 = arith.constant 8 : index
    %c1792_97 = arith.constant 1792 : index
    %74 = vector.load %arg16[%c8_96, %c1792_97] : memref<72x2048xf32, #tpu.memory_space<vmem>>, vector<8x32xf32>
    tpu.vector_store %arg16[%c8_96, %c1792_97], %73 {strides = array<i32>} : memref<72x2048xf32, #tpu.memory_space<vmem>>, vector<8x32xf32>,
    %c232 = arith.constant 232 : index
    %c0_98 = arith.constant 0 : index
    %75 = vector.load %arg15[%c232, %c0_98] : memref<512x32xf32, #tpu.memory_space<vmem>>, vector<8x32xf32>
    %c8_99 = arith.constant 8 : index
    %c1920_100 = arith.constant 1920 : index
    %76 = vector.load %arg16[%c8_99, %c1920_100] : memref<72x2048xf32, #tpu.memory_space<vmem>>, vector<8x32xf32>
    tpu.vector_store %arg16[%c8_99, %c1920_100], %75 {strides = array<i32>} : memref<72x2048xf32, #tpu.memory_space<vmem>>, vector<8x32xf32>,
    %c32_101 = arith.constant 32 : index
    %c0_102 = arith.constant 0 : index
    %77 = vector.load %arg15[%c32_101, %c0_102] : memref<512x32xf32, #tpu.memory_space<vmem>>, vector<8x32xf32>
    %c16_103 = arith.constant 16 : index
    %c0_104 = arith.constant 0 : index
    %78 = vector.load %arg16[%c16_103, %c0_104] : memref<72x2048xf32, #tpu.memory_space<vmem>>, vector<8x32xf32>
    tpu.vector_store %arg16[%c16_103, %c0_104], %77 {strides = array<i32>} : memref<72x2048xf32, #tpu.memory_space<vmem>>, vector<8x32xf32>,
    %c40_105 = arith.constant 40 : index
    %c0_106 = arith.constant 0 : index
    %79 = vector.load %arg15[%c40_105, %c0_106] : memref<512x32xf32, #tpu.memory_space<vmem>>, vector<8x32xf32>
    %c16_107 = arith.constant 16 : index
    %c128_108 = arith.constant 128 : index
    %80 = vector.load %arg16[%c16_107, %c128_108] : memref<72x2048xf32, #tpu.memory_space<vmem>>, vector<8x32xf32>
    tpu.vector_store %arg16[%c16_107, %c128_108], %79 {strides = array<i32>} : memref<72x2048xf32, #tpu.memory_space<vmem>>, vector<8x32xf32>,
    %c48 = arith.constant 48 : index
    %c0_109 = arith.constant 0 : index
    %81 = vector.load %arg15[%c48, %c0_109] : memref<512x32xf32, #tpu.memory_space<vmem>>, vector<8x32xf32>
    %c16_110 = arith.constant 16 : index
    %c256_111 = arith.constant 256 : index
    %82 = vector.load %arg16[%c16_110, %c256_111] : memref<72x2048xf32, #tpu.memory_space<vmem>>, vector<8x32xf32>
    tpu.vector_store %arg16[%c16_110, %c256_111], %81 {strides = array<i32>} : memref<72x2048xf32, #tpu.memory_space<vmem>>, vector<8x32xf32>,
    %c56 = arith.constant 56 : index
    %c0_112 = arith.constant 0 : index
    %83 = vector.load %arg15[%c56, %c0_112] : memref<512x32xf32, #tpu.memory_space<vmem>>, vector<8x32xf32>
    %c16_113 = arith.constant 16 : index
    %c384_114 = arith.constant 384 : index
    %84 = vector.load %arg16[%c16_113, %c384_114] : memref<72x2048xf32, #tpu.memory_space<vmem>>, vector<8x32xf32>
    tpu.vector_store %arg16[%c16_113, %c384_114], %83 {strides = array<i32>} : memref<72x2048xf32, #tpu.memory_space<vmem>>, vector<8x32xf32>,
    %c96_115 = arith.constant 96 : index
    %c0_116 = arith.constant 0 : index
    %85 = vector.load %arg15[%c96_115, %c0_116] : memref<512x32xf32, #tpu.memory_space<vmem>>, vector<8x32xf32>
    %c16_117 = arith.constant 16 : index
    %c512_118 = arith.constant 512 : index
    %86 = vector.load %arg16[%c16_117, %c512_118] : memref<72x2048xf32, #tpu.memory_space<vmem>>, vector<8x32xf32>
    tpu.vector_store %arg16[%c16_117, %c512_118], %85 {strides = array<i32>} : memref<72x2048xf32, #tpu.memory_space<vmem>>, vector<8x32xf32>,
    %c104_119 = arith.constant 104 : index
    %c0_120 = arith.constant 0 : index
    %87 = vector.load %arg15[%c104_119, %c0_120] : memref<512x32xf32, #tpu.memory_space<vmem>>, vector<8x32xf32>
    %c16_121 = arith.constant 16 : index
    %c640_122 = arith.constant 640 : index
    %88 = vector.load %arg16[%c16_121, %c640_122] : memref<72x2048xf32, #tpu.memory_space<vmem>>, vector<8x32xf32>
    tpu.vector_store %arg16[%c16_121, %c640_122], %87 {strides = array<i32>} : memref<72x2048xf32, #tpu.memory_space<vmem>>, vector<8x32xf32>,
    %c112 = arith.constant 112 : index
    %c0_123 = arith.constant 0 : index
    %89 = vector.load %arg15[%c112, %c0_123] : memref<512x32xf32, #tpu.memory_space<vmem>>, vector<8x32xf32>
    %c16_124 = arith.constant 16 : index
    %c768_125 = arith.constant 768 : index
    %90 = vector.load %arg16[%c16_124, %c768_125] : memref<72x2048xf32, #tpu.memory_space<vmem>>, vector<8x32xf32>
    tpu.vector_store %arg16[%c16_124, %c768_125], %89 {strides = array<i32>} : memref<72x2048xf32, #tpu.memory_space<vmem>>, vector<8x32xf32>,
    %c120 = arith.constant 120 : index
    %c0_126 = arith.constant 0 : index
    %91 = vector.load %arg15[%c120, %c0_126] : memref<512x32xf32, #tpu.memory_space<vmem>>, vector<8x32xf32>
    %c16_127 = arith.constant 16 : index
    %c896_128 = arith.constant 896 : index
    %92 = vector.load %arg16[%c16_127, %c896_128] : memref<72x2048xf32, #tpu.memory_space<vmem>>, vector<8x32xf32>
    tpu.vector_store %arg16[%c16_127, %c896_128], %91 {strides = array<i32>} : memref<72x2048xf32, #tpu.memory_space<vmem>>, vector<8x32xf32>,
    %c160_129 = arith.constant 160 : index
    %c0_130 = arith.constant 0 : index
    %93 = vector.load %arg15[%c160_129, %c0_130] : memref<512x32xf32, #tpu.memory_space<vmem>>, vector<8x32xf32>
    %c16_131 = arith.constant 16 : index
    %c1024_132 = arith.constant 1024 : index
    %94 = vector.load %arg16[%c16_131, %c1024_132] : memref<72x2048xf32, #tpu.memory_space<vmem>>, vector<8x32xf32>
    tpu.vector_store %arg16[%c16_131, %c1024_132], %93 {strides = array<i32>} : memref<72x2048xf32, #tpu.memory_space<vmem>>, vector<8x32xf32>,
    %c168_133 = arith.constant 168 : index
    %c0_134 = arith.constant 0 : index
    %95 = vector.load %arg15[%c168_133, %c0_134] : memref<512x32xf32, #tpu.memory_space<vmem>>, vector<8x32xf32>
    %c16_135 = arith.constant 16 : index
    %c1152_136 = arith.constant 1152 : index
    %96 = vector.load %arg16[%c16_135, %c1152_136] : memref<72x2048xf32, #tpu.memory_space<vmem>>, vector<8x32xf32>
    tpu.vector_store %arg16[%c16_135, %c1152_136], %95 {strides = array<i32>} : memref<72x2048xf32, #tpu.memory_space<vmem>>, vector<8x32xf32>,
    %c176 = arith.constant 176 : index
    %c0_137 = arith.constant 0 : index
    %97 = vector.load %arg15[%c176, %c0_137] : memref<512x32xf32, #tpu.memory_space<vmem>>, vector<8x32xf32>
    %c16_138 = arith.constant 16 : index
    %c1280_139 = arith.constant 1280 : index
    %98 = vector.load %arg16[%c16_138, %c1280_139] : memref<72x2048xf32, #tpu.memory_space<vmem>>, vector<8x32xf32>
    tpu.vector_store %arg16[%c16_138, %c1280_139], %97 {strides = array<i32>} : memref<72x2048xf32, #tpu.memory_space<vmem>>, vector<8x32xf32>,
    %c184 = arith.constant 184 : index
    %c0_140 = arith.constant 0 : index
    %99 = vector.load %arg15[%c184, %c0_140] : memref<512x32xf32, #tpu.memory_space<vmem>>, vector<8x32xf32>
    %c16_141 = arith.constant 16 : index
    %c1408_142 = arith.constant 1408 : index
    %100 = vector.load %arg16[%c16_141, %c1408_142] : memref<72x2048xf32, #tpu.memory_space<vmem>>, vector<8x32xf32>
    tpu.vector_store %arg16[%c16_141, %c1408_142], %99 {strides = array<i32>} : memref<72x2048xf32, #tpu.memory_space<vmem>>, vector<8x32xf32>,
    %c224_143 = arith.constant 224 : index
    %c0_144 = arith.constant 0 : index
    %101 = vector.load %arg15[%c224_143, %c0_144] : memref<512x32xf32, #tpu.memory_space<vmem>>, vector<8x32xf32>
    %c16_145 = arith.constant 16 : index
    %c1536_146 = arith.constant 1536 : index
    %102 = vector.load %arg16[%c16_145, %c1536_146] : memref<72x2048xf32, #tpu.memory_space<vmem>>, vector<8x32xf32>
    tpu.vector_store %arg16[%c16_145, %c1536_146], %101 {strides = array<i32>} : memref<72x2048xf32, #tpu.memory_space<vmem>>, vector<8x32xf32>,
    %c232_147 = arith.constant 232 : index
    %c0_148 = arith.constant 0 : index
    %103 = vector.load %arg15[%c232_147, %c0_148] : memref<512x32xf32, #tpu.memory_space<vmem>>, vector<8x32xf32>
    %c16_149 = arith.constant 16 : index
    %c1664_150 = arith.constant 1664 : index
    %104 = vector.load %arg16[%c16_149, %c1664_150] : memref<72x2048xf32, #tpu.memory_space<vmem>>, vector<8x32xf32>
    tpu.vector_store %arg16[%c16_149, %c1664_150], %103 {strides = array<i32>} : memref<72x2048xf32, #tpu.memory_space<vmem>>, vector<8x32xf32>,
    %c240 = arith.constant 240 : index
    %c0_151 = arith.constant 0 : index
    %105 = vector.load %arg15[%c240, %c0_151] : memref<512x32xf32, #tpu.memory_space<vmem>>, vector<8x32xf32>
    %c16_152 = arith.constant 16 : index
    %c1792_153 = arith.constant 1792 : index
    %106 = vector.load %arg16[%c16_152, %c1792_153] : memref<72x2048xf32, #tpu.memory_space<vmem>>, vector<8x32xf32>
    tpu.vector_store %arg16[%c16_152, %c1792_153], %105 {strides = array<i32>} : memref<72x2048xf32, #tpu.memory_space<vmem>>, vector<8x32xf32>,
    %c248 = arith.constant 248 : index
    %c0_154 = arith.constant 0 : index
    %107 = vector.load %arg15[%c248, %c0_154] : memref<512x32xf32, #tpu.memory_space<vmem>>, vector<8x32xf32>
    %c16_155 = arith.constant 16 : index
    %c1920_156 = arith.constant 1920 : index
    %108 = vector.load %arg16[%c16_155, %c1920_156] : memref<72x2048xf32, #tpu.memory_space<vmem>>, vector<8x32xf32>
    tpu.vector_store %arg16[%c16_155, %c1920_156], %107 {strides = array<i32>} : memref<72x2048xf32, #tpu.memory_space<vmem>>, vector<8x32xf32>,
    %c128_157 = arith.constant 128 : index
    %c0_158 = arith.constant 0 : index
    %109 = vector.load %arg15[%c128_157, %c0_158] : memref<512x32xf32, #tpu.memory_space<vmem>>, vector<8x32xf32>
    %c24_159 = arith.constant 24 : index
    %c0_160 = arith.constant 0 : index
    %110 = vector.load %arg16[%c24_159, %c0_160] : memref<72x2048xf32, #tpu.memory_space<vmem>>, vector<8x32xf32>
    tpu.vector_store %arg16[%c24_159, %c0_160], %109 {strides = array<i32>} : memref<72x2048xf32, #tpu.memory_space<vmem>>, vector<8x32xf32>,
    %c136_161 = arith.constant 136 : index
    %c0_162 = arith.constant 0 : index
    %111 = vector.load %arg15[%c136_161, %c0_162] : memref<512x32xf32, #tpu.memory_space<vmem>>, vector<8x32xf32>
    %c24_163 = arith.constant 24 : index
    %c128_164 = arith.constant 128 : index
    %112 = vector.load %arg16[%c24_163, %c128_164] : memref<72x2048xf32, #tpu.memory_space<vmem>>, vector<8x32xf32>
    tpu.vector_store %arg16[%c24_163, %c128_164], %111 {strides = array<i32>} : memref<72x2048xf32, #tpu.memory_space<vmem>>, vector<8x32xf32>,
    %c144_165 = arith.constant 144 : index
    %c0_166 = arith.constant 0 : index
    %113 = vector.load %arg15[%c144_165, %c0_166] : memref<512x32xf32, #tpu.memory_space<vmem>>, vector<8x32xf32>
    %c24_167 = arith.constant 24 : index
    %c256_168 = arith.constant 256 : index
    %114 = vector.load %arg16[%c24_167, %c256_168] : memref<72x2048xf32, #tpu.memory_space<vmem>>, vector<8x32xf32>
    tpu.vector_store %arg16[%c24_167, %c256_168], %113 {strides = array<i32>} : memref<72x2048xf32, #tpu.memory_space<vmem>>, vector<8x32xf32>,
    %c152_169 = arith.constant 152 : index
    %c0_170 = arith.constant 0 : index
    %115 = vector.load %arg15[%c152_169, %c0_170] : memref<512x32xf32, #tpu.memory_space<vmem>>, vector<8x32xf32>
    %c24_171 = arith.constant 24 : index
    %c384_172 = arith.constant 384 : index
    %116 = vector.load %arg16[%c24_171, %c384_172] : memref<72x2048xf32, #tpu.memory_space<vmem>>, vector<8x32xf32>
    tpu.vector_store %arg16[%c24_171, %c384_172], %115 {strides = array<i32>} : memref<72x2048xf32, #tpu.memory_space<vmem>>, vector<8x32xf32>,
    %c192_173 = arith.constant 192 : index
    %c0_174 = arith.constant 0 : index
    %117 = vector.load %arg15[%c192_173, %c0_174] : memref<512x32xf32, #tpu.memory_space<vmem>>, vector<8x32xf32>
    %c24_175 = arith.constant 24 : index
    %c512_176 = arith.constant 512 : index
    %118 = vector.load %arg16[%c24_175, %c512_176] : memref<72x2048xf32, #tpu.memory_space<vmem>>, vector<8x32xf32>
    tpu.vector_store %arg16[%c24_175, %c512_176], %117 {strides = array<i32>} : memref<72x2048xf32, #tpu.memory_space<vmem>>, vector<8x32xf32>,
    %c200_177 = arith.constant 200 : index
    %c0_178 = arith.constant 0 : index
    %119 = vector.load %arg15[%c200_177, %c0_178] : memref<512x32xf32, #tpu.memory_space<vmem>>, vector<8x32xf32>
    %c24_179 = arith.constant 24 : index
    %c640_180 = arith.constant 640 : index
    %120 = vector.load %arg16[%c24_179, %c640_180] : memref<72x2048xf32, #tpu.memory_space<vmem>>, vector<8x32xf32>
    tpu.vector_store %arg16[%c24_179, %c640_180], %119 {strides = array<i32>} : memref<72x2048xf32, #tpu.memory_space<vmem>>, vector<8x32xf32>,
    %c208_181 = arith.constant 208 : index
    %c0_182 = arith.constant 0 : index
    %121 = vector.load %arg15[%c208_181, %c0_182] : memref<512x32xf32, #tpu.memory_space<vmem>>, vector<8x32xf32>
    %c24_183 = arith.constant 24 : index
    %c768_184 = arith.constant 768 : index
    %122 = vector.load %arg16[%c24_183, %c768_184] : memref<72x2048xf32, #tpu.memory_space<vmem>>, vector<8x32xf32>
    tpu.vector_store %arg16[%c24_183, %c768_184], %121 {strides = array<i32>} : memref<72x2048xf32, #tpu.memory_space<vmem>>, vector<8x32xf32>,
    %c216_185 = arith.constant 216 : index
    %c0_186 = arith.constant 0 : index
    %123 = vector.load %arg15[%c216_185, %c0_186] : memref<512x32xf32, #tpu.memory_space<vmem>>, vector<8x32xf32>
    %c24_187 = arith.constant 24 : index
    %c896_188 = arith.constant 896 : index
    %124 = vector.load %arg16[%c24_187, %c896_188] : memref<72x2048xf32, #tpu.memory_space<vmem>>, vector<8x32xf32>
    tpu.vector_store %arg16[%c24_187, %c896_188], %123 {strides = array<i32>} : memref<72x2048xf32, #tpu.memory_space<vmem>>, vector<8x32xf32>,
    %c256_189 = arith.constant 256 : index
    %c0_190 = arith.constant 0 : index
    %125 = vector.load %arg15[%c256_189, %c0_190] : memref<512x32xf32, #tpu.memory_space<vmem>>, vector<8x32xf32>
    %c24_191 = arith.constant 24 : index
    %c1024_192 = arith.constant 1024 : index
    %126 = vector.load %arg16[%c24_191, %c1024_192] : memref<72x2048xf32, #tpu.memory_space<vmem>>, vector<8x32xf32>
    tpu.vector_store %arg16[%c24_191, %c1024_192], %125 {strides = array<i32>} : memref<72x2048xf32, #tpu.memory_space<vmem>>, vector<8x32xf32>,
    %c264 = arith.constant 264 : index
    %c0_193 = arith.constant 0 : index
    %127 = vector.load %arg15[%c264, %c0_193] : memref<512x32xf32, #tpu.memory_space<vmem>>, vector<8x32xf32>
    %c24_194 = arith.constant 24 : index
    %c1152_195 = arith.constant 1152 : index
    %128 = vector.load %arg16[%c24_194, %c1152_195] : memref<72x2048xf32, #tpu.memory_space<vmem>>, vector<8x32xf32>
    tpu.vector_store %arg16[%c24_194, %c1152_195], %127 {strides = array<i32>} : memref<72x2048xf32, #tpu.memory_space<vmem>>, vector<8x32xf32>,
    %c272 = arith.constant 272 : index
    %c0_196 = arith.constant 0 : index
    %129 = vector.load %arg15[%c272, %c0_196] : memref<512x32xf32, #tpu.memory_space<vmem>>, vector<8x32xf32>
    %c24_197 = arith.constant 24 : index
    %c1280_198 = arith.constant 1280 : index
    %130 = vector.load %arg16[%c24_197, %c1280_198] : memref<72x2048xf32, #tpu.memory_space<vmem>>, vector<8x32xf32>
    tpu.vector_store %arg16[%c24_197, %c1280_198], %129 {strides = array<i32>} : memref<72x2048xf32, #tpu.memory_space<vmem>>, vector<8x32xf32>,
    %c280 = arith.constant 280 : index
    %c0_199 = arith.constant 0 : index
    %131 = vector.load %arg15[%c280, %c0_199] : memref<512x32xf32, #tpu.memory_space<vmem>>, vector<8x32xf32>
    %c24_200 = arith.constant 24 : index
    %c1408_201 = arith.constant 1408 : index
    %132 = vector.load %arg16[%c24_200, %c1408_201] : memref<72x2048xf32, #tpu.memory_space<vmem>>, vector<8x32xf32>
    tpu.vector_store %arg16[%c24_200, %c1408_201], %131 {strides = array<i32>} : memref<72x2048xf32, #tpu.memory_space<vmem>>, vector<8x32xf32>,
    %c320 = arith.constant 320 : index
    %c0_202 = arith.constant 0 : index
    %133 = vector.load %arg15[%c320, %c0_202] : memref<512x32xf32, #tpu.memory_space<vmem>>, vector<8x32xf32>
    %c24_203 = arith.constant 24 : index
    %c1536_204 = arith.constant 1536 : index
    %134 = vector.load %arg16[%c24_203, %c1536_204] : memref<72x2048xf32, #tpu.memory_space<vmem>>, vector<8x32xf32>
    tpu.vector_store %arg16[%c24_203, %c1536_204], %133 {strides = array<i32>} : memref<72x2048xf32, #tpu.memory_space<vmem>>, vector<8x32xf32>,
    %c328 = arith.constant 328 : index
    %c0_205 = arith.constant 0 : index
    %135 = vector.load %arg15[%c328, %c0_205] : memref<512x32xf32, #tpu.memory_space<vmem>>, vector<8x32xf32>
    %c24_206 = arith.constant 24 : index
    %c1664_207 = arith.constant 1664 : index
    %136 = vector.load %arg16[%c24_206, %c1664_207] : memref<72x2048xf32, #tpu.memory_space<vmem>>, vector<8x32xf32>
    tpu.vector_store %arg16[%c24_206, %c1664_207], %135 {strides = array<i32>} : memref<72x2048xf32, #tpu.memory_space<vmem>>, vector<8x32xf32>,
    %c336 = arith.constant 336 : index
    %c0_208 = arith.constant 0 : index
    %137 = vector.load %arg15[%c336, %c0_208] : memref<512x32xf32, #tpu.memory_space<vmem>>, vector<8x32xf32>
    %c24_209 = arith.constant 24 : index
    %c1792_210 = arith.constant 1792 : index
    %138 = vector.load %arg16[%c24_209, %c1792_210] : memref<72x2048xf32, #tpu.memory_space<vmem>>, vector<8x32xf32>
    tpu.vector_store %arg16[%c24_209, %c1792_210], %137 {strides = array<i32>} : memref<72x2048xf32, #tpu.memory_space<vmem>>, vector<8x32xf32>,
    %c344 = arith.constant 344 : index
    %c0_211 = arith.constant 0 : index
    %139 = vector.load %arg15[%c344, %c0_211] : memref<512x32xf32, #tpu.memory_space<vmem>>, vector<8x32xf32>
    %c24_212 = arith.constant 24 : index
    %c1920_213 = arith.constant 1920 : index
    %140 = vector.load %arg16[%c24_212, %c1920_213] : memref<72x2048xf32, #tpu.memory_space<vmem>>, vector<8x32xf32>
    tpu.vector_store %arg16[%c24_212, %c1920_213], %139 {strides = array<i32>} : memref<72x2048xf32, #tpu.memory_space<vmem>>, vector<8x32xf32>,
    %c144_214 = arith.constant 144 : index
    %c0_215 = arith.constant 0 : index
    %141 = vector.load %arg15[%c144_214, %c0_215] : memref<512x32xf32, #tpu.memory_space<vmem>>, vector<8x32xf32>
    %c32_216 = arith.constant 32 : index
    %c0_217 = arith.constant 0 : index
    %142 = vector.load %arg16[%c32_216, %c0_217] : memref<72x2048xf32, #tpu.memory_space<vmem>>, vector<8x32xf32>
    tpu.vector_store %arg16[%c32_216, %c0_217], %141 {strides = array<i32>} : memref<72x2048xf32, #tpu.memory_space<vmem>>, vector<8x32xf32>,
    %c152_218 = arith.constant 152 : index
    %c0_219 = arith.constant 0 : index
    %143 = vector.load %arg15[%c152_218, %c0_219] : memref<512x32xf32, #tpu.memory_space<vmem>>, vector<8x32xf32>
    %c32_220 = arith.constant 32 : index
    %c128_221 = arith.constant 128 : index
    %144 = vector.load %arg16[%c32_220, %c128_221] : memref<72x2048xf32, #tpu.memory_space<vmem>>, vector<8x32xf32>
    tpu.vector_store %arg16[%c32_220, %c128_221], %143 {strides = array<i32>} : memref<72x2048xf32, #tpu.memory_space<vmem>>, vector<8x32xf32>,
    %c160_222 = arith.constant 160 : index
    %c0_223 = arith.constant 0 : index
    %145 = vector.load %arg15[%c160_222, %c0_223] : memref<512x32xf32, #tpu.memory_space<vmem>>, vector<8x32xf32>
    %c32_224 = arith.constant 32 : index
    %c256_225 = arith.constant 256 : index
    %146 = vector.load %arg16[%c32_224, %c256_225] : memref<72x2048xf32, #tpu.memory_space<vmem>>, vector<8x32xf32>
    tpu.vector_store %arg16[%c32_224, %c256_225], %145 {strides = array<i32>} : memref<72x2048xf32, #tpu.memory_space<vmem>>, vector<8x32xf32>,
    %c168_226 = arith.constant 168 : index
    %c0_227 = arith.constant 0 : index
    %147 = vector.load %arg15[%c168_226, %c0_227] : memref<512x32xf32, #tpu.memory_space<vmem>>, vector<8x32xf32>
    %c32_228 = arith.constant 32 : index
    %c384_229 = arith.constant 384 : index
    %148 = vector.load %arg16[%c32_228, %c384_229] : memref<72x2048xf32, #tpu.memory_space<vmem>>, vector<8x32xf32>
    tpu.vector_store %arg16[%c32_228, %c384_229], %147 {strides = array<i32>} : memref<72x2048xf32, #tpu.memory_space<vmem>>, vector<8x32xf32>,
    %c208_230 = arith.constant 208 : index
    %c0_231 = arith.constant 0 : index
    %149 = vector.load %arg15[%c208_230, %c0_231] : memref<512x32xf32, #tpu.memory_space<vmem>>, vector<8x32xf32>
    %c32_232 = arith.constant 32 : index
    %c512_233 = arith.constant 512 : index
    %150 = vector.load %arg16[%c32_232, %c512_233] : memref<72x2048xf32, #tpu.memory_space<vmem>>, vector<8x32xf32>
    tpu.vector_store %arg16[%c32_232, %c512_233], %149 {strides = array<i32>} : memref<72x2048xf32, #tpu.memory_space<vmem>>, vector<8x32xf32>,
    %c216_234 = arith.constant 216 : index
    %c0_235 = arith.constant 0 : index
    %151 = vector.load %arg15[%c216_234, %c0_235] : memref<512x32xf32, #tpu.memory_space<vmem>>, vector<8x32xf32>
    %c32_236 = arith.constant 32 : index
    %c640_237 = arith.constant 640 : index
    %152 = vector.load %arg16[%c32_236, %c640_237] : memref<72x2048xf32, #tpu.memory_space<vmem>>, vector<8x32xf32>
    tpu.vector_store %arg16[%c32_236, %c640_237], %151 {strides = array<i32>} : memref<72x2048xf32, #tpu.memory_space<vmem>>, vector<8x32xf32>,
    %c224_238 = arith.constant 224 : index
    %c0_239 = arith.constant 0 : index
    %153 = vector.load %arg15[%c224_238, %c0_239] : memref<512x32xf32, #tpu.memory_space<vmem>>, vector<8x32xf32>
    %c32_240 = arith.constant 32 : index
    %c768_241 = arith.constant 768 : index
    %154 = vector.load %arg16[%c32_240, %c768_241] : memref<72x2048xf32, #tpu.memory_space<vmem>>, vector<8x32xf32>
    tpu.vector_store %arg16[%c32_240, %c768_241], %153 {strides = array<i32>} : memref<72x2048xf32, #tpu.memory_space<vmem>>, vector<8x32xf32>,
    %c232_242 = arith.constant 232 : index
    %c0_243 = arith.constant 0 : index
    %155 = vector.load %arg15[%c232_242, %c0_243] : memref<512x32xf32, #tpu.memory_space<vmem>>, vector<8x32xf32>
    %c32_244 = arith.constant 32 : index
    %c896_245 = arith.constant 896 : index
    %156 = vector.load %arg16[%c32_244, %c896_245] : memref<72x2048xf32, #tpu.memory_space<vmem>>, vector<8x32xf32>
    tpu.vector_store %arg16[%c32_244, %c896_245], %155 {strides = array<i32>} : memref<72x2048xf32, #tpu.memory_space<vmem>>, vector<8x32xf32>,
    %c272_246 = arith.constant 272 : index
    %c0_247 = arith.constant 0 : index
    %157 = vector.load %arg15[%c272_246, %c0_247] : memref<512x32xf32, #tpu.memory_space<vmem>>, vector<8x32xf32>
    %c32_248 = arith.constant 32 : index
    %c1024_249 = arith.constant 1024 : index
    %158 = vector.load %arg16[%c32_248, %c1024_249] : memref<72x2048xf32, #tpu.memory_space<vmem>>, vector<8x32xf32>
    tpu.vector_store %arg16[%c32_248, %c1024_249], %157 {strides = array<i32>} : memref<72x2048xf32, #tpu.memory_space<vmem>>, vector<8x32xf32>,
    %c280_250 = arith.constant 280 : index
    %c0_251 = arith.constant 0 : index
    %159 = vector.load %arg15[%c280_250, %c0_251] : memref<512x32xf32, #tpu.memory_space<vmem>>, vector<8x32xf32>
    %c32_252 = arith.constant 32 : index
    %c1152_253 = arith.constant 1152 : index
    %160 = vector.load %arg16[%c32_252, %c1152_253] : memref<72x2048xf32, #tpu.memory_space<vmem>>, vector<8x32xf32>
    tpu.vector_store %arg16[%c32_252, %c1152_253], %159 {strides = array<i32>} : memref<72x2048xf32, #tpu.memory_space<vmem>>, vector<8x32xf32>,
    %c288 = arith.constant 288 : index
    %c0_254 = arith.constant 0 : index
    %161 = vector.load %arg15[%c288, %c0_254] : memref<512x32xf32, #tpu.memory_space<vmem>>, vector<8x32xf32>
    %c32_255 = arith.constant 32 : index
    %c1280_256 = arith.constant 1280 : index
    %162 = vector.load %arg16[%c32_255, %c1280_256] : memref<72x2048xf32, #tpu.memory_space<vmem>>, vector<8x32xf32>
    tpu.vector_store %arg16[%c32_255, %c1280_256], %161 {strides = array<i32>} : memref<72x2048xf32, #tpu.memory_space<vmem>>, vector<8x32xf32>,
    %c296 = arith.constant 296 : index
    %c0_257 = arith.constant 0 : index
    %163 = vector.load %arg15[%c296, %c0_257] : memref<512x32xf32, #tpu.memory_space<vmem>>, vector<8x32xf32>
    %c32_258 = arith.constant 32 : index
    %c1408_259 = arith.constant 1408 : index
    %164 = vector.load %arg16[%c32_258, %c1408_259] : memref<72x2048xf32, #tpu.memory_space<vmem>>, vector<8x32xf32>
    tpu.vector_store %arg16[%c32_258, %c1408_259], %163 {strides = array<i32>} : memref<72x2048xf32, #tpu.memory_space<vmem>>, vector<8x32xf32>,
    %c336_260 = arith.constant 336 : index
    %c0_261 = arith.constant 0 : index
    %165 = vector.load %arg15[%c336_260, %c0_261] : memref<512x32xf32, #tpu.memory_space<vmem>>, vector<8x32xf32>
    %c32_262 = arith.constant 32 : index
    %c1536_263 = arith.constant 1536 : index
    %166 = vector.load %arg16[%c32_262, %c1536_263] : memref<72x2048xf32, #tpu.memory_space<vmem>>, vector<8x32xf32>
    tpu.vector_store %arg16[%c32_262, %c1536_263], %165 {strides = array<i32>} : memref<72x2048xf32, #tpu.memory_space<vmem>>, vector<8x32xf32>,
    %c344_264 = arith.constant 344 : index
    %c0_265 = arith.constant 0 : index
    %167 = vector.load %arg15[%c344_264, %c0_265] : memref<512x32xf32, #tpu.memory_space<vmem>>, vector<8x32xf32>
    %c32_266 = arith.constant 32 : index
    %c1664_267 = arith.constant 1664 : index
    %168 = vector.load %arg16[%c32_266, %c1664_267] : memref<72x2048xf32, #tpu.memory_space<vmem>>, vector<8x32xf32>
    tpu.vector_store %arg16[%c32_266, %c1664_267], %167 {strides = array<i32>} : memref<72x2048xf32, #tpu.memory_space<vmem>>, vector<8x32xf32>,
    %c352 = arith.constant 352 : index
    %c0_268 = arith.constant 0 : index
    %169 = vector.load %arg15[%c352, %c0_268] : memref<512x32xf32, #tpu.memory_space<vmem>>, vector<8x32xf32>
    %c32_269 = arith.constant 32 : index
    %c1792_270 = arith.constant 1792 : index
    %170 = vector.load %arg16[%c32_269, %c1792_270] : memref<72x2048xf32, #tpu.memory_space<vmem>>, vector<8x32xf32>
    tpu.vector_store %arg16[%c32_269, %c1792_270], %169 {strides = array<i32>} : memref<72x2048xf32, #tpu.memory_space<vmem>>, vector<8x32xf32>,
    %c360 = arith.constant 360 : index
    %c0_271 = arith.constant 0 : index
    %171 = vector.load %arg15[%c360, %c0_271] : memref<512x32xf32, #tpu.memory_space<vmem>>, vector<8x32xf32>
    %c32_272 = arith.constant 32 : index
    %c1920_273 = arith.constant 1920 : index
    %172 = vector.load %arg16[%c32_272, %c1920_273] : memref<72x2048xf32, #tpu.memory_space<vmem>>, vector<8x32xf32>
    tpu.vector_store %arg16[%c32_272, %c1920_273], %171 {strides = array<i32>} : memref<72x2048xf32, #tpu.memory_space<vmem>>, vector<8x32xf32>,
    %c160_274 = arith.constant 160 : index
    %c0_275 = arith.constant 0 : index
    %173 = vector.load %arg15[%c160_274, %c0_275] : memref<512x32xf32, #tpu.memory_space<vmem>>, vector<8x32xf32>
    %c40_276 = arith.constant 40 : index
    %c0_277 = arith.constant 0 : index
    %174 = vector.load %arg16[%c40_276, %c0_277] : memref<72x2048xf32, #tpu.memory_space<vmem>>, vector<8x32xf32>
    tpu.vector_store %arg16[%c40_276, %c0_277], %173 {strides = array<i32>} : memref<72x2048xf32, #tpu.memory_space<vmem>>, vector<8x32xf32>,
    %c168_278 = arith.constant 168 : index
    %c0_279 = arith.constant 0 : index
    %175 = vector.load %arg15[%c168_278, %c0_279] : memref<512x32xf32, #tpu.memory_space<vmem>>, vector<8x32xf32>
    %c40_280 = arith.constant 40 : index
    %c128_281 = arith.constant 128 : index
    %176 = vector.load %arg16[%c40_280, %c128_281] : memref<72x2048xf32, #tpu.memory_space<vmem>>, vector<8x32xf32>
    tpu.vector_store %arg16[%c40_280, %c128_281], %175 {strides = array<i32>} : memref<72x2048xf32, #tpu.memory_space<vmem>>, vector<8x32xf32>,
    %c176_282 = arith.constant 176 : index
    %c0_283 = arith.constant 0 : index
    %177 = vector.load %arg15[%c176_282, %c0_283] : memref<512x32xf32, #tpu.memory_space<vmem>>, vector<8x32xf32>
    %c40_284 = arith.constant 40 : index
    %c256_285 = arith.constant 256 : index
    %178 = vector.load %arg16[%c40_284, %c256_285] : memref<72x2048xf32, #tpu.memory_space<vmem>>, vector<8x32xf32>
    tpu.vector_store %arg16[%c40_284, %c256_285], %177 {strides = array<i32>} : memref<72x2048xf32, #tpu.memory_space<vmem>>, vector<8x32xf32>,
    %c184_286 = arith.constant 184 : index
    %c0_287 = arith.constant 0 : index
    %179 = vector.load %arg15[%c184_286, %c0_287] : memref<512x32xf32, #tpu.memory_space<vmem>>, vector<8x32xf32>
    %c40_288 = arith.constant 40 : index
    %c384_289 = arith.constant 384 : index
    %180 = vector.load %arg16[%c40_288, %c384_289] : memref<72x2048xf32, #tpu.memory_space<vmem>>, vector<8x32xf32>
    tpu.vector_store %arg16[%c40_288, %c384_289], %179 {strides = array<i32>} : memref<72x2048xf32, #tpu.memory_space<vmem>>, vector<8x32xf32>,
    %c224_290 = arith.constant 224 : index
    %c0_291 = arith.constant 0 : index
    %181 = vector.load %arg15[%c224_290, %c0_291] : memref<512x32xf32, #tpu.memory_space<vmem>>, vector<8x32xf32>
    %c40_292 = arith.constant 40 : index
    %c512_293 = arith.constant 512 : index
    %182 = vector.load %arg16[%c40_292, %c512_293] : memref<72x2048xf32, #tpu.memory_space<vmem>>, vector<8x32xf32>
    tpu.vector_store %arg16[%c40_292, %c512_293], %181 {strides = array<i32>} : memref<72x2048xf32, #tpu.memory_space<vmem>>, vector<8x32xf32>,
    %c232_294 = arith.constant 232 : index
    %c0_295 = arith.constant 0 : index
    %183 = vector.load %arg15[%c232_294, %c0_295] : memref<512x32xf32, #tpu.memory_space<vmem>>, vector<8x32xf32>
    %c40_296 = arith.constant 40 : index
    %c640_297 = arith.constant 640 : index
    %184 = vector.load %arg16[%c40_296, %c640_297] : memref<72x2048xf32, #tpu.memory_space<vmem>>, vector<8x32xf32>
    tpu.vector_store %arg16[%c40_296, %c640_297], %183 {strides = array<i32>} : memref<72x2048xf32, #tpu.memory_space<vmem>>, vector<8x32xf32>,
    %c240_298 = arith.constant 240 : index
    %c0_299 = arith.constant 0 : index
    %185 = vector.load %arg15[%c240_298, %c0_299] : memref<512x32xf32, #tpu.memory_space<vmem>>, vector<8x32xf32>
    %c40_300 = arith.constant 40 : index
    %c768_301 = arith.constant 768 : index
    %186 = vector.load %arg16[%c40_300, %c768_301] : memref<72x2048xf32, #tpu.memory_space<vmem>>, vector<8x32xf32>
    tpu.vector_store %arg16[%c40_300, %c768_301], %185 {strides = array<i32>} : memref<72x2048xf32, #tpu.memory_space<vmem>>, vector<8x32xf32>,
    %c248_302 = arith.constant 248 : index
    %c0_303 = arith.constant 0 : index
    %187 = vector.load %arg15[%c248_302, %c0_303] : memref<512x32xf32, #tpu.memory_space<vmem>>, vector<8x32xf32>
    %c40_304 = arith.constant 40 : index
    %c896_305 = arith.constant 896 : index
    %188 = vector.load %arg16[%c40_304, %c896_305] : memref<72x2048xf32, #tpu.memory_space<vmem>>, vector<8x32xf32>
    tpu.vector_store %arg16[%c40_304, %c896_305], %187 {strides = array<i32>} : memref<72x2048xf32, #tpu.memory_space<vmem>>, vector<8x32xf32>,
    %c288_306 = arith.constant 288 : index
    %c0_307 = arith.constant 0 : index
    %189 = vector.load %arg15[%c288_306, %c0_307] : memref<512x32xf32, #tpu.memory_space<vmem>>, vector<8x32xf32>
    %c40_308 = arith.constant 40 : index
    %c1024_309 = arith.constant 1024 : index
    %190 = vector.load %arg16[%c40_308, %c1024_309] : memref<72x2048xf32, #tpu.memory_space<vmem>>, vector<8x32xf32>
    tpu.vector_store %arg16[%c40_308, %c1024_309], %189 {strides = array<i32>} : memref<72x2048xf32, #tpu.memory_space<vmem>>, vector<8x32xf32>,
    %c296_310 = arith.constant 296 : index
    %c0_311 = arith.constant 0 : index
    %191 = vector.load %arg15[%c296_310, %c0_311] : memref<512x32xf32, #tpu.memory_space<vmem>>, vector<8x32xf32>
    %c40_312 = arith.constant 40 : index
    %c1152_313 = arith.constant 1152 : index
    %192 = vector.load %arg16[%c40_312, %c1152_313] : memref<72x2048xf32, #tpu.memory_space<vmem>>, vector<8x32xf32>
    tpu.vector_store %arg16[%c40_312, %c1152_313], %191 {strides = array<i32>} : memref<72x2048xf32, #tpu.memory_space<vmem>>, vector<8x32xf32>,
    %c304 = arith.constant 304 : index
    %c0_314 = arith.constant 0 : index
    %193 = vector.load %arg15[%c304, %c0_314] : memref<512x32xf32, #tpu.memory_space<vmem>>, vector<8x32xf32>
    %c40_315 = arith.constant 40 : index
    %c1280_316 = arith.constant 1280 : index
    %194 = vector.load %arg16[%c40_315, %c1280_316] : memref<72x2048xf32, #tpu.memory_space<vmem>>, vector<8x32xf32>
    tpu.vector_store %arg16[%c40_315, %c1280_316], %193 {strides = array<i32>} : memref<72x2048xf32, #tpu.memory_space<vmem>>, vector<8x32xf32>,
    %c312 = arith.constant 312 : index
    %c0_317 = arith.constant 0 : index
    %195 = vector.load %arg15[%c312, %c0_317] : memref<512x32xf32, #tpu.memory_space<vmem>>, vector<8x32xf32>
    %c40_318 = arith.constant 40 : index
    %c1408_319 = arith.constant 1408 : index
    %196 = vector.load %arg16[%c40_318, %c1408_319] : memref<72x2048xf32, #tpu.memory_space<vmem>>, vector<8x32xf32>
    tpu.vector_store %arg16[%c40_318, %c1408_319], %195 {strides = array<i32>} : memref<72x2048xf32, #tpu.memory_space<vmem>>, vector<8x32xf32>,
    %c352_320 = arith.constant 352 : index
    %c0_321 = arith.constant 0 : index
    %197 = vector.load %arg15[%c352_320, %c0_321] : memref<512x32xf32, #tpu.memory_space<vmem>>, vector<8x32xf32>
    %c40_322 = arith.constant 40 : index
    %c1536_323 = arith.constant 1536 : index
    %198 = vector.load %arg16[%c40_322, %c1536_323] : memref<72x2048xf32, #tpu.memory_space<vmem>>, vector<8x32xf32>
    tpu.vector_store %arg16[%c40_322, %c1536_323], %197 {strides = array<i32>} : memref<72x2048xf32, #tpu.memory_space<vmem>>, vector<8x32xf32>,
    %c360_324 = arith.constant 360 : index
    %c0_325 = arith.constant 0 : index
    %199 = vector.load %arg15[%c360_324, %c0_325] : memref<512x32xf32, #tpu.memory_space<vmem>>, vector<8x32xf32>
    %c40_326 = arith.constant 40 : index
    %c1664_327 = arith.constant 1664 : index
    %200 = vector.load %arg16[%c40_326, %c1664_327] : memref<72x2048xf32, #tpu.memory_space<vmem>>, vector<8x32xf32>
    tpu.vector_store %arg16[%c40_326, %c1664_327], %199 {strides = array<i32>} : memref<72x2048xf32, #tpu.memory_space<vmem>>, vector<8x32xf32>,
    %c368 = arith.constant 368 : index
    %c0_328 = arith.constant 0 : index
    %201 = vector.load %arg15[%c368, %c0_328] : memref<512x32xf32, #tpu.memory_space<vmem>>, vector<8x32xf32>
    %c40_329 = arith.constant 40 : index
    %c1792_330 = arith.constant 1792 : index
    %202 = vector.load %arg16[%c40_329, %c1792_330] : memref<72x2048xf32, #tpu.memory_space<vmem>>, vector<8x32xf32>
    tpu.vector_store %arg16[%c40_329, %c1792_330], %201 {strides = array<i32>} : memref<72x2048xf32, #tpu.memory_space<vmem>>, vector<8x32xf32>,
    %c376 = arith.constant 376 : index
    %c0_331 = arith.constant 0 : index
    %203 = vector.load %arg15[%c376, %c0_331] : memref<512x32xf32, #tpu.memory_space<vmem>>, vector<8x32xf32>
    %c40_332 = arith.constant 40 : index
    %c1920_333 = arith.constant 1920 : index
    %204 = vector.load %arg16[%c40_332, %c1920_333] : memref<72x2048xf32, #tpu.memory_space<vmem>>, vector<8x32xf32>
    tpu.vector_store %arg16[%c40_332, %c1920_333], %203 {strides = array<i32>} : memref<72x2048xf32, #tpu.memory_space<vmem>>, vector<8x32xf32>,
    %c256_334 = arith.constant 256 : index
    %c0_335 = arith.constant 0 : index
    %205 = vector.load %arg15[%c256_334, %c0_335] : memref<512x32xf32, #tpu.memory_space<vmem>>, vector<8x32xf32>
    %c48_336 = arith.constant 48 : index
    %c0_337 = arith.constant 0 : index
    %206 = vector.load %arg16[%c48_336, %c0_337] : memref<72x2048xf32, #tpu.memory_space<vmem>>, vector<8x32xf32>
    tpu.vector_store %arg16[%c48_336, %c0_337], %205 {strides = array<i32>} : memref<72x2048xf32, #tpu.memory_space<vmem>>, vector<8x32xf32>,
    %c264_338 = arith.constant 264 : index
    %c0_339 = arith.constant 0 : index
    %207 = vector.load %arg15[%c264_338, %c0_339] : memref<512x32xf32, #tpu.memory_space<vmem>>, vector<8x32xf32>
    %c48_340 = arith.constant 48 : index
    %c128_341 = arith.constant 128 : index
    %208 = vector.load %arg16[%c48_340, %c128_341] : memref<72x2048xf32, #tpu.memory_space<vmem>>, vector<8x32xf32>
    tpu.vector_store %arg16[%c48_340, %c128_341], %207 {strides = array<i32>} : memref<72x2048xf32, #tpu.memory_space<vmem>>, vector<8x32xf32>,
    %c272_342 = arith.constant 272 : index
    %c0_343 = arith.constant 0 : index
    %209 = vector.load %arg15[%c272_342, %c0_343] : memref<512x32xf32, #tpu.memory_space<vmem>>, vector<8x32xf32>
    %c48_344 = arith.constant 48 : index
    %c256_345 = arith.constant 256 : index
    %210 = vector.load %arg16[%c48_344, %c256_345] : memref<72x2048xf32, #tpu.memory_space<vmem>>, vector<8x32xf32>
    tpu.vector_store %arg16[%c48_344, %c256_345], %209 {strides = array<i32>} : memref<72x2048xf32, #tpu.memory_space<vmem>>, vector<8x32xf32>,
    %c280_346 = arith.constant 280 : index
    %c0_347 = arith.constant 0 : index
    %211 = vector.load %arg15[%c280_346, %c0_347] : memref<512x32xf32, #tpu.memory_space<vmem>>, vector<8x32xf32>
    %c48_348 = arith.constant 48 : index
    %c384_349 = arith.constant 384 : index
    %212 = vector.load %arg16[%c48_348, %c384_349] : memref<72x2048xf32, #tpu.memory_space<vmem>>, vector<8x32xf32>
    tpu.vector_store %arg16[%c48_348, %c384_349], %211 {strides = array<i32>} : memref<72x2048xf32, #tpu.memory_space<vmem>>, vector<8x32xf32>,
    %c320_350 = arith.constant 320 : index
    %c0_351 = arith.constant 0 : index
    %213 = vector.load %arg15[%c320_350, %c0_351] : memref<512x32xf32, #tpu.memory_space<vmem>>, vector<8x32xf32>
    %c48_352 = arith.constant 48 : index
    %c512_353 = arith.constant 512 : index
    %214 = vector.load %arg16[%c48_352, %c512_353] : memref<72x2048xf32, #tpu.memory_space<vmem>>, vector<8x32xf32>
    tpu.vector_store %arg16[%c48_352, %c512_353], %213 {strides = array<i32>} : memref<72x2048xf32, #tpu.memory_space<vmem>>, vector<8x32xf32>,
    %c328_354 = arith.constant 328 : index
    %c0_355 = arith.constant 0 : index
    %215 = vector.load %arg15[%c328_354, %c0_355] : memref<512x32xf32, #tpu.memory_space<vmem>>, vector<8x32xf32>
    %c48_356 = arith.constant 48 : index
    %c640_357 = arith.constant 640 : index
    %216 = vector.load %arg16[%c48_356, %c640_357] : memref<72x2048xf32, #tpu.memory_space<vmem>>, vector<8x32xf32>
    tpu.vector_store %arg16[%c48_356, %c640_357], %215 {strides = array<i32>} : memref<72x2048xf32, #tpu.memory_space<vmem>>, vector<8x32xf32>,
    %c336_358 = arith.constant 336 : index
    %c0_359 = arith.constant 0 : index
    %217 = vector.load %arg15[%c336_358, %c0_359] : memref<512x32xf32, #tpu.memory_space<vmem>>, vector<8x32xf32>
    %c48_360 = arith.constant 48 : index
    %c768_361 = arith.constant 768 : index
    %218 = vector.load %arg16[%c48_360, %c768_361] : memref<72x2048xf32, #tpu.memory_space<vmem>>, vector<8x32xf32>
    tpu.vector_store %arg16[%c48_360, %c768_361], %217 {strides = array<i32>} : memref<72x2048xf32, #tpu.memory_space<vmem>>, vector<8x32xf32>,
    %c344_362 = arith.constant 344 : index
    %c0_363 = arith.constant 0 : index
    %219 = vector.load %arg15[%c344_362, %c0_363] : memref<512x32xf32, #tpu.memory_space<vmem>>, vector<8x32xf32>
    %c48_364 = arith.constant 48 : index
    %c896_365 = arith.constant 896 : index
    %220 = vector.load %arg16[%c48_364, %c896_365] : memref<72x2048xf32, #tpu.memory_space<vmem>>, vector<8x32xf32>
    tpu.vector_store %arg16[%c48_364, %c896_365], %219 {strides = array<i32>} : memref<72x2048xf32, #tpu.memory_space<vmem>>, vector<8x32xf32>,
    %c384_366 = arith.constant 384 : index
    %c0_367 = arith.constant 0 : index
    %221 = vector.load %arg15[%c384_366, %c0_367] : memref<512x32xf32, #tpu.memory_space<vmem>>, vector<8x32xf32>
    %c48_368 = arith.constant 48 : index
    %c1024_369 = arith.constant 1024 : index
    %222 = vector.load %arg16[%c48_368, %c1024_369] : memref<72x2048xf32, #tpu.memory_space<vmem>>, vector<8x32xf32>
    tpu.vector_store %arg16[%c48_368, %c1024_369], %221 {strides = array<i32>} : memref<72x2048xf32, #tpu.memory_space<vmem>>, vector<8x32xf32>,
    %c392 = arith.constant 392 : index
    %c0_370 = arith.constant 0 : index
    %223 = vector.load %arg15[%c392, %c0_370] : memref<512x32xf32, #tpu.memory_space<vmem>>, vector<8x32xf32>
    %c48_371 = arith.constant 48 : index
    %c1152_372 = arith.constant 1152 : index
    %224 = vector.load %arg16[%c48_371, %c1152_372] : memref<72x2048xf32, #tpu.memory_space<vmem>>, vector<8x32xf32>
    tpu.vector_store %arg16[%c48_371, %c1152_372], %223 {strides = array<i32>} : memref<72x2048xf32, #tpu.memory_space<vmem>>, vector<8x32xf32>,
    %c400 = arith.constant 400 : index
    %c0_373 = arith.constant 0 : index
    %225 = vector.load %arg15[%c400, %c0_373] : memref<512x32xf32, #tpu.memory_space<vmem>>, vector<8x32xf32>
    %c48_374 = arith.constant 48 : index
    %c1280_375 = arith.constant 1280 : index
    %226 = vector.load %arg16[%c48_374, %c1280_375] : memref<72x2048xf32, #tpu.memory_space<vmem>>, vector<8x32xf32>
    tpu.vector_store %arg16[%c48_374, %c1280_375], %225 {strides = array<i32>} : memref<72x2048xf32, #tpu.memory_space<vmem>>, vector<8x32xf32>,
    %c408 = arith.constant 408 : index
    %c0_376 = arith.constant 0 : index
    %227 = vector.load %arg15[%c408, %c0_376] : memref<512x32xf32, #tpu.memory_space<vmem>>, vector<8x32xf32>
    %c48_377 = arith.constant 48 : index
    %c1408_378 = arith.constant 1408 : index
    %228 = vector.load %arg16[%c48_377, %c1408_378] : memref<72x2048xf32, #tpu.memory_space<vmem>>, vector<8x32xf32>
    tpu.vector_store %arg16[%c48_377, %c1408_378], %227 {strides = array<i32>} : memref<72x2048xf32, #tpu.memory_space<vmem>>, vector<8x32xf32>,
    %c448 = arith.constant 448 : index
    %c0_379 = arith.constant 0 : index
    %229 = vector.load %arg15[%c448, %c0_379] : memref<512x32xf32, #tpu.memory_space<vmem>>, vector<8x32xf32>
    %c48_380 = arith.constant 48 : index
    %c1536_381 = arith.constant 1536 : index
    %230 = vector.load %arg16[%c48_380, %c1536_381] : memref<72x2048xf32, #tpu.memory_space<vmem>>, vector<8x32xf32>
    tpu.vector_store %arg16[%c48_380, %c1536_381], %229 {strides = array<i32>} : memref<72x2048xf32, #tpu.memory_space<vmem>>, vector<8x32xf32>,
    %c456 = arith.constant 456 : index
    %c0_382 = arith.constant 0 : index
    %231 = vector.load %arg15[%c456, %c0_382] : memref<512x32xf32, #tpu.memory_space<vmem>>, vector<8x32xf32>
    %c48_383 = arith.constant 48 : index
    %c1664_384 = arith.constant 1664 : index
    %232 = vector.load %arg16[%c48_383, %c1664_384] : memref<72x2048xf32, #tpu.memory_space<vmem>>, vector<8x32xf32>
    tpu.vector_store %arg16[%c48_383, %c1664_384], %231 {strides = array<i32>} : memref<72x2048xf32, #tpu.memory_space<vmem>>, vector<8x32xf32>,
    %c464 = arith.constant 464 : index
    %c0_385 = arith.constant 0 : index
    %233 = vector.load %arg15[%c464, %c0_385] : memref<512x32xf32, #tpu.memory_space<vmem>>, vector<8x32xf32>
    %c48_386 = arith.constant 48 : index
    %c1792_387 = arith.constant 1792 : index
    %234 = vector.load %arg16[%c48_386, %c1792_387] : memref<72x2048xf32, #tpu.memory_space<vmem>>, vector<8x32xf32>
    tpu.vector_store %arg16[%c48_386, %c1792_387], %233 {strides = array<i32>} : memref<72x2048xf32, #tpu.memory_space<vmem>>, vector<8x32xf32>,
    %c472 = arith.constant 472 : index
    %c0_388 = arith.constant 0 : index
    %235 = vector.load %arg15[%c472, %c0_388] : memref<512x32xf32, #tpu.memory_space<vmem>>, vector<8x32xf32>
    %c48_389 = arith.constant 48 : index
    %c1920_390 = arith.constant 1920 : index
    %236 = vector.load %arg16[%c48_389, %c1920_390] : memref<72x2048xf32, #tpu.memory_space<vmem>>, vector<8x32xf32>
    tpu.vector_store %arg16[%c48_389, %c1920_390], %235 {strides = array<i32>} : memref<72x2048xf32, #tpu.memory_space<vmem>>, vector<8x32xf32>,
    %c272_391 = arith.constant 272 : index
    %c0_392 = arith.constant 0 : index
    %237 = vector.load %arg15[%c272_391, %c0_392] : memref<512x32xf32, #tpu.memory_space<vmem>>, vector<8x32xf32>
    %c56_393 = arith.constant 56 : index
    %c0_394 = arith.constant 0 : index
    %238 = vector.load %arg16[%c56_393, %c0_394] : memref<72x2048xf32, #tpu.memory_space<vmem>>, vector<8x32xf32>
    tpu.vector_store %arg16[%c56_393, %c0_394], %237 {strides = array<i32>} : memref<72x2048xf32, #tpu.memory_space<vmem>>, vector<8x32xf32>,
    %c280_395 = arith.constant 280 : index
    %c0_396 = arith.constant 0 : index
    %239 = vector.load %arg15[%c280_395, %c0_396] : memref<512x32xf32, #tpu.memory_space<vmem>>, vector<8x32xf32>
    %c56_397 = arith.constant 56 : index
    %c128_398 = arith.constant 128 : index
    %240 = vector.load %arg16[%c56_397, %c128_398] : memref<72x2048xf32, #tpu.memory_space<vmem>>, vector<8x32xf32>
    tpu.vector_store %arg16[%c56_397, %c128_398], %239 {strides = array<i32>} : memref<72x2048xf32, #tpu.memory_space<vmem>>, vector<8x32xf32>,
    %c288_399 = arith.constant 288 : index
    %c0_400 = arith.constant 0 : index
    %241 = vector.load %arg15[%c288_399, %c0_400] : memref<512x32xf32, #tpu.memory_space<vmem>>, vector<8x32xf32>
    %c56_401 = arith.constant 56 : index
    %c256_402 = arith.constant 256 : index
    %242 = vector.load %arg16[%c56_401, %c256_402] : memref<72x2048xf32, #tpu.memory_space<vmem>>, vector<8x32xf32>
    tpu.vector_store %arg16[%c56_401, %c256_402], %241 {strides = array<i32>} : memref<72x2048xf32, #tpu.memory_space<vmem>>, vector<8x32xf32>,
    %c296_403 = arith.constant 296 : index
    %c0_404 = arith.constant 0 : index
    %243 = vector.load %arg15[%c296_403, %c0_404] : memref<512x32xf32, #tpu.memory_space<vmem>>, vector<8x32xf32>
    %c56_405 = arith.constant 56 : index
    %c384_406 = arith.constant 384 : index
    %244 = vector.load %arg16[%c56_405, %c384_406] : memref<72x2048xf32, #tpu.memory_space<vmem>>, vector<8x32xf32>
    tpu.vector_store %arg16[%c56_405, %c384_406], %243 {strides = array<i32>} : memref<72x2048xf32, #tpu.memory_space<vmem>>, vector<8x32xf32>,
    %c336_407 = arith.constant 336 : index
    %c0_408 = arith.constant 0 : index
    %245 = vector.load %arg15[%c336_407, %c0_408] : memref<512x32xf32, #tpu.memory_space<vmem>>, vector<8x32xf32>
    %c56_409 = arith.constant 56 : index
    %c512_410 = arith.constant 512 : index
    %246 = vector.load %arg16[%c56_409, %c512_410] : memref<72x2048xf32, #tpu.memory_space<vmem>>, vector<8x32xf32>
    tpu.vector_store %arg16[%c56_409, %c512_410], %245 {strides = array<i32>} : memref<72x2048xf32, #tpu.memory_space<vmem>>, vector<8x32xf32>,
    %c344_411 = arith.constant 344 : index
    %c0_412 = arith.constant 0 : index
    %247 = vector.load %arg15[%c344_411, %c0_412] : memref<512x32xf32, #tpu.memory_space<vmem>>, vector<8x32xf32>
    %c56_413 = arith.constant 56 : index
    %c640_414 = arith.constant 640 : index
    %248 = vector.load %arg16[%c56_413, %c640_414] : memref<72x2048xf32, #tpu.memory_space<vmem>>, vector<8x32xf32>
    tpu.vector_store %arg16[%c56_413, %c640_414], %247 {strides = array<i32>} : memref<72x2048xf32, #tpu.memory_space<vmem>>, vector<8x32xf32>,
    %c352_415 = arith.constant 352 : index
    %c0_416 = arith.constant 0 : index
    %249 = vector.load %arg15[%c352_415, %c0_416] : memref<512x32xf32, #tpu.memory_space<vmem>>, vector<8x32xf32>
    %c56_417 = arith.constant 56 : index
    %c768_418 = arith.constant 768 : index
    %250 = vector.load %arg16[%c56_417, %c768_418] : memref<72x2048xf32, #tpu.memory_space<vmem>>, vector<8x32xf32>
    tpu.vector_store %arg16[%c56_417, %c768_418], %249 {strides = array<i32>} : memref<72x2048xf32, #tpu.memory_space<vmem>>, vector<8x32xf32>,
    %c360_419 = arith.constant 360 : index
    %c0_420 = arith.constant 0 : index
    %251 = vector.load %arg15[%c360_419, %c0_420] : memref<512x32xf32, #tpu.memory_space<vmem>>, vector<8x32xf32>
    %c56_421 = arith.constant 56 : index
    %c896_422 = arith.constant 896 : index
    %252 = vector.load %arg16[%c56_421, %c896_422] : memref<72x2048xf32, #tpu.memory_space<vmem>>, vector<8x32xf32>
    tpu.vector_store %arg16[%c56_421, %c896_422], %251 {strides = array<i32>} : memref<72x2048xf32, #tpu.memory_space<vmem>>, vector<8x32xf32>,
    %c400_423 = arith.constant 400 : index
    %c0_424 = arith.constant 0 : index
    %253 = vector.load %arg15[%c400_423, %c0_424] : memref<512x32xf32, #tpu.memory_space<vmem>>, vector<8x32xf32>
    %c56_425 = arith.constant 56 : index
    %c1024_426 = arith.constant 1024 : index
    %254 = vector.load %arg16[%c56_425, %c1024_426] : memref<72x2048xf32, #tpu.memory_space<vmem>>, vector<8x32xf32>
    tpu.vector_store %arg16[%c56_425, %c1024_426], %253 {strides = array<i32>} : memref<72x2048xf32, #tpu.memory_space<vmem>>, vector<8x32xf32>,
    %c408_427 = arith.constant 408 : index
    %c0_428 = arith.constant 0 : index
    %255 = vector.load %arg15[%c408_427, %c0_428] : memref<512x32xf32, #tpu.memory_space<vmem>>, vector<8x32xf32>
    %c56_429 = arith.constant 56 : index
    %c1152_430 = arith.constant 1152 : index
    %256 = vector.load %arg16[%c56_429, %c1152_430] : memref<72x2048xf32, #tpu.memory_space<vmem>>, vector<8x32xf32>
    tpu.vector_store %arg16[%c56_429, %c1152_430], %255 {strides = array<i32>} : memref<72x2048xf32, #tpu.memory_space<vmem>>, vector<8x32xf32>,
    %c416 = arith.constant 416 : index
    %c0_431 = arith.constant 0 : index
    %257 = vector.load %arg15[%c416, %c0_431] : memref<512x32xf32, #tpu.memory_space<vmem>>, vector<8x32xf32>
    %c56_432 = arith.constant 56 : index
    %c1280_433 = arith.constant 1280 : index
    %258 = vector.load %arg16[%c56_432, %c1280_433] : memref<72x2048xf32, #tpu.memory_space<vmem>>, vector<8x32xf32>
    tpu.vector_store %arg16[%c56_432, %c1280_433], %257 {strides = array<i32>} : memref<72x2048xf32, #tpu.memory_space<vmem>>, vector<8x32xf32>,
    %c424 = arith.constant 424 : index
    %c0_434 = arith.constant 0 : index
    %259 = vector.load %arg15[%c424, %c0_434] : memref<512x32xf32, #tpu.memory_space<vmem>>, vector<8x32xf32>
    %c56_435 = arith.constant 56 : index
    %c1408_436 = arith.constant 1408 : index
    %260 = vector.load %arg16[%c56_435, %c1408_436] : memref<72x2048xf32, #tpu.memory_space<vmem>>, vector<8x32xf32>
    tpu.vector_store %arg16[%c56_435, %c1408_436], %259 {strides = array<i32>} : memref<72x2048xf32, #tpu.memory_space<vmem>>, vector<8x32xf32>,
    %c464_437 = arith.constant 464 : index
    %c0_438 = arith.constant 0 : index
    %261 = vector.load %arg15[%c464_437, %c0_438] : memref<512x32xf32, #tpu.memory_space<vmem>>, vector<8x32xf32>
    %c56_439 = arith.constant 56 : index
    %c1536_440 = arith.constant 1536 : index
    %262 = vector.load %arg16[%c56_439, %c1536_440] : memref<72x2048xf32, #tpu.memory_space<vmem>>, vector<8x32xf32>
    tpu.vector_store %arg16[%c56_439, %c1536_440], %261 {strides = array<i32>} : memref<72x2048xf32, #tpu.memory_space<vmem>>, vector<8x32xf32>,
    %c472_441 = arith.constant 472 : index
    %c0_442 = arith.constant 0 : index
    %263 = vector.load %arg15[%c472_441, %c0_442] : memref<512x32xf32, #tpu.memory_space<vmem>>, vector<8x32xf32>
    %c56_443 = arith.constant 56 : index
    %c1664_444 = arith.constant 1664 : index
    %264 = vector.load %arg16[%c56_443, %c1664_444] : memref<72x2048xf32, #tpu.memory_space<vmem>>, vector<8x32xf32>
    tpu.vector_store %arg16[%c56_443, %c1664_444], %263 {strides = array<i32>} : memref<72x2048xf32, #tpu.memory_space<vmem>>, vector<8x32xf32>,
    %c480 = arith.constant 480 : index
    %c0_445 = arith.constant 0 : index
    %265 = vector.load %arg15[%c480, %c0_445] : memref<512x32xf32, #tpu.memory_space<vmem>>, vector<8x32xf32>
    %c56_446 = arith.constant 56 : index
    %c1792_447 = arith.constant 1792 : index
    %266 = vector.load %arg16[%c56_446, %c1792_447] : memref<72x2048xf32, #tpu.memory_space<vmem>>, vector<8x32xf32>
    tpu.vector_store %arg16[%c56_446, %c1792_447], %265 {strides = array<i32>} : memref<72x2048xf32, #tpu.memory_space<vmem>>, vector<8x32xf32>,
    %c488 = arith.constant 488 : index
    %c0_448 = arith.constant 0 : index
    %267 = vector.load %arg15[%c488, %c0_448] : memref<512x32xf32, #tpu.memory_space<vmem>>, vector<8x32xf32>
    %c56_449 = arith.constant 56 : index
    %c1920_450 = arith.constant 1920 : index
    %268 = vector.load %arg16[%c56_449, %c1920_450] : memref<72x2048xf32, #tpu.memory_space<vmem>>, vector<8x32xf32>
    tpu.vector_store %arg16[%c56_449, %c1920_450], %267 {strides = array<i32>} : memref<72x2048xf32, #tpu.memory_space<vmem>>, vector<8x32xf32>,
    %c288_451 = arith.constant 288 : index
    %c0_452 = arith.constant 0 : index
    %269 = vector.load %arg15[%c288_451, %c0_452] : memref<512x32xf32, #tpu.memory_space<vmem>>, vector<8x32xf32>
    %c64_453 = arith.constant 64 : index
    %c0_454 = arith.constant 0 : index
    %270 = vector.load %arg16[%c64_453, %c0_454] : memref<72x2048xf32, #tpu.memory_space<vmem>>, vector<8x32xf32>
    tpu.vector_store %arg16[%c64_453, %c0_454], %269 {strides = array<i32>} : memref<72x2048xf32, #tpu.memory_space<vmem>>, vector<8x32xf32>,
    %c296_455 = arith.constant 296 : index
    %c0_456 = arith.constant 0 : index
    %271 = vector.load %arg15[%c296_455, %c0_456] : memref<512x32xf32, #tpu.memory_space<vmem>>, vector<8x32xf32>
    %c64_457 = arith.constant 64 : index
    %c128_458 = arith.constant 128 : index
    %272 = vector.load %arg16[%c64_457, %c128_458] : memref<72x2048xf32, #tpu.memory_space<vmem>>, vector<8x32xf32>
    tpu.vector_store %arg16[%c64_457, %c128_458], %271 {strides = array<i32>} : memref<72x2048xf32, #tpu.memory_space<vmem>>, vector<8x32xf32>,
    %c304_459 = arith.constant 304 : index
    %c0_460 = arith.constant 0 : index
    %273 = vector.load %arg15[%c304_459, %c0_460] : memref<512x32xf32, #tpu.memory_space<vmem>>, vector<8x32xf32>
    %c64_461 = arith.constant 64 : index
    %c256_462 = arith.constant 256 : index
    %274 = vector.load %arg16[%c64_461, %c256_462] : memref<72x2048xf32, #tpu.memory_space<vmem>>, vector<8x32xf32>
    tpu.vector_store %arg16[%c64_461, %c256_462], %273 {strides = array<i32>} : memref<72x2048xf32, #tpu.memory_space<vmem>>, vector<8x32xf32>,
    %c312_463 = arith.constant 312 : index
    %c0_464 = arith.constant 0 : index
    %275 = vector.load %arg15[%c312_463, %c0_464] : memref<512x32xf32, #tpu.memory_space<vmem>>, vector<8x32xf32>
    %c64_465 = arith.constant 64 : index
    %c384_466 = arith.constant 384 : index
    %276 = vector.load %arg16[%c64_465, %c384_466] : memref<72x2048xf32, #tpu.memory_space<vmem>>, vector<8x32xf32>
    tpu.vector_store %arg16[%c64_465, %c384_466], %275 {strides = array<i32>} : memref<72x2048xf32, #tpu.memory_space<vmem>>, vector<8x32xf32>,
    %c352_467 = arith.constant 352 : index
    %c0_468 = arith.constant 0 : index
    %277 = vector.load %arg15[%c352_467, %c0_468] : memref<512x32xf32, #tpu.memory_space<vmem>>, vector<8x32xf32>
    %c64_469 = arith.constant 64 : index
    %c512_470 = arith.constant 512 : index
    %278 = vector.load %arg16[%c64_469, %c512_470] : memref<72x2048xf32, #tpu.memory_space<vmem>>, vector<8x32xf32>
    tpu.vector_store %arg16[%c64_469, %c512_470], %277 {strides = array<i32>} : memref<72x2048xf32, #tpu.memory_space<vmem>>, vector<8x32xf32>,
    %c360_471 = arith.constant 360 : index
    %c0_472 = arith.constant 0 : index
    %279 = vector.load %arg15[%c360_471, %c0_472] : memref<512x32xf32, #tpu.memory_space<vmem>>, vector<8x32xf32>
    %c64_473 = arith.constant 64 : index
    %c640_474 = arith.constant 640 : index
    %280 = vector.load %arg16[%c64_473, %c640_474] : memref<72x2048xf32, #tpu.memory_space<vmem>>, vector<8x32xf32>
    tpu.vector_store %arg16[%c64_473, %c640_474], %279 {strides = array<i32>} : memref<72x2048xf32, #tpu.memory_space<vmem>>, vector<8x32xf32>,
    %c368_475 = arith.constant 368 : index
    %c0_476 = arith.constant 0 : index
    %281 = vector.load %arg15[%c368_475, %c0_476] : memref<512x32xf32, #tpu.memory_space<vmem>>, vector<8x32xf32>
    %c64_477 = arith.constant 64 : index
    %c768_478 = arith.constant 768 : index
    %282 = vector.load %arg16[%c64_477, %c768_478] : memref<72x2048xf32, #tpu.memory_space<vmem>>, vector<8x32xf32>
    tpu.vector_store %arg16[%c64_477, %c768_478], %281 {strides = array<i32>} : memref<72x2048xf32, #tpu.memory_space<vmem>>, vector<8x32xf32>,
    %c376_479 = arith.constant 376 : index
    %c0_480 = arith.constant 0 : index
    %283 = vector.load %arg15[%c376_479, %c0_480] : memref<512x32xf32, #tpu.memory_space<vmem>>, vector<8x32xf32>
    %c64_481 = arith.constant 64 : index
    %c896_482 = arith.constant 896 : index
    %284 = vector.load %arg16[%c64_481, %c896_482] : memref<72x2048xf32, #tpu.memory_space<vmem>>, vector<8x32xf32>
    tpu.vector_store %arg16[%c64_481, %c896_482], %283 {strides = array<i32>} : memref<72x2048xf32, #tpu.memory_space<vmem>>, vector<8x32xf32>,
    %c416_483 = arith.constant 416 : index
    %c0_484 = arith.constant 0 : index
    %285 = vector.load %arg15[%c416_483, %c0_484] : memref<512x32xf32, #tpu.memory_space<vmem>>, vector<8x32xf32>
    %c64_485 = arith.constant 64 : index
    %c1024_486 = arith.constant 1024 : index
    %286 = vector.load %arg16[%c64_485, %c1024_486] : memref<72x2048xf32, #tpu.memory_space<vmem>>, vector<8x32xf32>
    tpu.vector_store %arg16[%c64_485, %c1024_486], %285 {strides = array<i32>} : memref<72x2048xf32, #tpu.memory_space<vmem>>, vector<8x32xf32>,
    %c424_487 = arith.constant 424 : index
    %c0_488 = arith.constant 0 : index
    %287 = vector.load %arg15[%c424_487, %c0_488] : memref<512x32xf32, #tpu.memory_space<vmem>>, vector<8x32xf32>
    %c64_489 = arith.constant 64 : index
    %c1152_490 = arith.constant 1152 : index
    %288 = vector.load %arg16[%c64_489, %c1152_490] : memref<72x2048xf32, #tpu.memory_space<vmem>>, vector<8x32xf32>
    tpu.vector_store %arg16[%c64_489, %c1152_490], %287 {strides = array<i32>} : memref<72x2048xf32, #tpu.memory_space<vmem>>, vector<8x32xf32>,
    %c432 = arith.constant 432 : index
    %c0_491 = arith.constant 0 : index
    %289 = vector.load %arg15[%c432, %c0_491] : memref<512x32xf32, #tpu.memory_space<vmem>>, vector<8x32xf32>
    %c64_492 = arith.constant 64 : index
    %c1280_493 = arith.constant 1280 : index
    %290 = vector.load %arg16[%c64_492, %c1280_493] : memref<72x2048xf32, #tpu.memory_space<vmem>>, vector<8x32xf32>
    tpu.vector_store %arg16[%c64_492, %c1280_493], %289 {strides = array<i32>} : memref<72x2048xf32, #tpu.memory_space<vmem>>, vector<8x32xf32>,
    %c440 = arith.constant 440 : index
    %c0_494 = arith.constant 0 : index
    %291 = vector.load %arg15[%c440, %c0_494] : memref<512x32xf32, #tpu.memory_space<vmem>>, vector<8x32xf32>
    %c64_495 = arith.constant 64 : index
    %c1408_496 = arith.constant 1408 : index
    %292 = vector.load %arg16[%c64_495, %c1408_496] : memref<72x2048xf32, #tpu.memory_space<vmem>>, vector<8x32xf32>
    tpu.vector_store %arg16[%c64_495, %c1408_496], %291 {strides = array<i32>} : memref<72x2048xf32, #tpu.memory_space<vmem>>, vector<8x32xf32>,
    %c480_497 = arith.constant 480 : index
    %c0_498 = arith.constant 0 : index
    %293 = vector.load %arg15[%c480_497, %c0_498] : memref<512x32xf32, #tpu.memory_space<vmem>>, vector<8x32xf32>
    %c64_499 = arith.constant 64 : index
    %c1536_500 = arith.constant 1536 : index
    %294 = vector.load %arg16[%c64_499, %c1536_500] : memref<72x2048xf32, #tpu.memory_space<vmem>>, vector<8x32xf32>
    tpu.vector_store %arg16[%c64_499, %c1536_500], %293 {strides = array<i32>} : memref<72x2048xf32, #tpu.memory_space<vmem>>, vector<8x32xf32>,
    %c488_501 = arith.constant 488 : index
    %c0_502 = arith.constant 0 : index
    %295 = vector.load %arg15[%c488_501, %c0_502] : memref<512x32xf32, #tpu.memory_space<vmem>>, vector<8x32xf32>
    %c64_503 = arith.constant 64 : index
    %c1664_504 = arith.constant 1664 : index
    %296 = vector.load %arg16[%c64_503, %c1664_504] : memref<72x2048xf32, #tpu.memory_space<vmem>>, vector<8x32xf32>
    tpu.vector_store %arg16[%c64_503, %c1664_504], %295 {strides = array<i32>} : memref<72x2048xf32, #tpu.memory_space<vmem>>, vector<8x32xf32>,
    %c496 = arith.constant 496 : index
    %c0_505 = arith.constant 0 : index
    %297 = vector.load %arg15[%c496, %c0_505] : memref<512x32xf32, #tpu.memory_space<vmem>>, vector<8x32xf32>
    %c64_506 = arith.constant 64 : index
    %c1792_507 = arith.constant 1792 : index
    %298 = vector.load %arg16[%c64_506, %c1792_507] : memref<72x2048xf32, #tpu.memory_space<vmem>>, vector<8x32xf32>
    tpu.vector_store %arg16[%c64_506, %c1792_507], %297 {strides = array<i32>} : memref<72x2048xf32, #tpu.memory_space<vmem>>, vector<8x32xf32>,
    %c504 = arith.constant 504 : index
    %c0_508 = arith.constant 0 : index
    %299 = vector.load %arg15[%c504, %c0_508] : memref<512x32xf32, #tpu.memory_space<vmem>>, vector<8x32xf32>
    %c64_509 = arith.constant 64 : index
    %c1920_510 = arith.constant 1920 : index
    %300 = vector.load %arg16[%c64_509, %c1920_510] : memref<72x2048xf32, #tpu.memory_space<vmem>>, vector<8x32xf32>
    tpu.vector_store %arg16[%c64_509, %c1920_510], %299 {strides = array<i32>} : memref<72x2048xf32, #tpu.memory_space<vmem>>, vector<8x32xf32>,
    %c0_511 = arith.constant 0 : index
    %c0_512 = arith.constant 0 : index
    %301 = vector.load %arg16[%c0_511, %c0_512] : memref<72x2048xf32, #tpu.memory_space<vmem>>, vector<72x2048xf32>
    %c0_513 = arith.constant 0 : index
    %c0_514 = arith.constant 0 : index
    %302 = vector.load %arg4[%c0_513, %c0_514] : memref<2048x64xf32, #tpu.memory_space<vmem>>, vector<2048x64xf32>
    %cst_515 = arith.constant dense<0.000000e+00> : vector<72x64xf32>
    %303 = tpu.matmul %301, %302, %cst_515 {dimension_numbers = #tpu.dot_dimension_numbers<[1], [0], [0], [1], [0, 0, 1, 1], [], []>} : vector<72x2048xf32>, vector<2048x64xf32>, vector<72x64xf32> -> vector<72x64xf32>
    %c0_516 = arith.constant 0 : index
    %c0_517 = arith.constant 0 : index
    %304 = vector.load %arg5[%c0_516, %c0_517] : memref<1x64xf32, #tpu.memory_space<vmem>>, vector<1x64xf32>
    %305 = vector.broadcast %304 : vector<1x64xf32> to vector<72x64xf32>
    %306 = arith.addf %303, %305 : vector<72x64xf32>
    %cst_518 = arith.constant 0.000000e+00 : f32
    %307 = vector.broadcast %cst_518 : f32 to vector<72x64xf32>
    %308 = arith.maximumf %306, %307 : vector<72x64xf32>
    %cst_519 = arith.constant 0.000000e+00 : f32
    %309 = vector.broadcast %cst_519 : f32 to vector<8x64xf32>
    %310 = vector.extract_strided_slice %308 {offsets = [0, 0], sizes = [8, 64], strides = [1, 1]} : vector<72x64xf32> to vector<8x64xf32>
    %c0_520 = arith.constant 0 : index
    %c0_521 = arith.constant 0 : index
    %311 = vector.load %arg6[%c0_520, %c0_521] : memref<576x64xf32, #tpu.memory_space<vmem>>, vector<64x64xf32>
    %cst_522 = arith.constant dense<0.000000e+00> : vector<8x64xf32>
    %312 = tpu.matmul %310, %311, %cst_522 {dimension_numbers = #tpu.dot_dimension_numbers<[1], [0], [0], [1], [0, 0, 1, 1], [], []>} : vector<8x64xf32>, vector<64x64xf32>, vector<8x64xf32> -> vector<8x64xf32>
    %313 = arith.addf %309, %312 : vector<8x64xf32>
    %314 = vector.extract_strided_slice %308 {offsets = [8, 0], sizes = [8, 64], strides = [1, 1]} : vector<72x64xf32> to vector<8x64xf32>
    %c64_523 = arith.constant 64 : index
    %c0_524 = arith.constant 0 : index
    %315 = vector.load %arg6[%c64_523, %c0_524] : memref<576x64xf32, #tpu.memory_space<vmem>>, vector<64x64xf32>
    %cst_525 = arith.constant dense<0.000000e+00> : vector<8x64xf32>
    %316 = tpu.matmul %314, %315, %cst_525 {dimension_numbers = #tpu.dot_dimension_numbers<[1], [0], [0], [1], [0, 0, 1, 1], [], []>} : vector<8x64xf32>, vector<64x64xf32>, vector<8x64xf32> -> vector<8x64xf32>
    %317 = arith.addf %313, %316 : vector<8x64xf32>
    %318 = vector.extract_strided_slice %308 {offsets = [16, 0], sizes = [8, 64], strides = [1, 1]} : vector<72x64xf32> to vector<8x64xf32>
    %c128_526 = arith.constant 128 : index
    %c0_527 = arith.constant 0 : index
    %319 = vector.load %arg6[%c128_526, %c0_527] : memref<576x64xf32, #tpu.memory_space<vmem>>, vector<64x64xf32>
    %cst_528 = arith.constant dense<0.000000e+00> : vector<8x64xf32>
    %320 = tpu.matmul %318, %319, %cst_528 {dimension_numbers = #tpu.dot_dimension_numbers<[1], [0], [0], [1], [0, 0, 1, 1], [], []>} : vector<8x64xf32>, vector<64x64xf32>, vector<8x64xf32> -> vector<8x64xf32>
    %321 = arith.addf %317, %320 : vector<8x64xf32>
    %322 = vector.extract_strided_slice %308 {offsets = [24, 0], sizes = [8, 64], strides = [1, 1]} : vector<72x64xf32> to vector<8x64xf32>
    %c192_529 = arith.constant 192 : index
    %c0_530 = arith.constant 0 : index
    %323 = vector.load %arg6[%c192_529, %c0_530] : memref<576x64xf32, #tpu.memory_space<vmem>>, vector<64x64xf32>
    %cst_531 = arith.constant dense<0.000000e+00> : vector<8x64xf32>
    %324 = tpu.matmul %322, %323, %cst_531 {dimension_numbers = #tpu.dot_dimension_numbers<[1], [0], [0], [1], [0, 0, 1, 1], [], []>} : vector<8x64xf32>, vector<64x64xf32>, vector<8x64xf32> -> vector<8x64xf32>
    %325 = arith.addf %321, %324 : vector<8x64xf32>
    %326 = vector.extract_strided_slice %308 {offsets = [32, 0], sizes = [8, 64], strides = [1, 1]} : vector<72x64xf32> to vector<8x64xf32>
    %c256_532 = arith.constant 256 : index
    %c0_533 = arith.constant 0 : index
    %327 = vector.load %arg6[%c256_532, %c0_533] : memref<576x64xf32, #tpu.memory_space<vmem>>, vector<64x64xf32>
    %cst_534 = arith.constant dense<0.000000e+00> : vector<8x64xf32>
    %328 = tpu.matmul %326, %327, %cst_534 {dimension_numbers = #tpu.dot_dimension_numbers<[1], [0], [0], [1], [0, 0, 1, 1], [], []>} : vector<8x64xf32>, vector<64x64xf32>, vector<8x64xf32> -> vector<8x64xf32>
    %329 = arith.addf %325, %328 : vector<8x64xf32>
    %330 = vector.extract_strided_slice %308 {offsets = [40, 0], sizes = [8, 64], strides = [1, 1]} : vector<72x64xf32> to vector<8x64xf32>
    %c320_535 = arith.constant 320 : index
    %c0_536 = arith.constant 0 : index
    %331 = vector.load %arg6[%c320_535, %c0_536] : memref<576x64xf32, #tpu.memory_space<vmem>>, vector<64x64xf32>
    %cst_537 = arith.constant dense<0.000000e+00> : vector<8x64xf32>
    %332 = tpu.matmul %330, %331, %cst_537 {dimension_numbers = #tpu.dot_dimension_numbers<[1], [0], [0], [1], [0, 0, 1, 1], [], []>} : vector<8x64xf32>, vector<64x64xf32>, vector<8x64xf32> -> vector<8x64xf32>
    %333 = arith.addf %329, %332 : vector<8x64xf32>
    %334 = vector.extract_strided_slice %308 {offsets = [48, 0], sizes = [8, 64], strides = [1, 1]} : vector<72x64xf32> to vector<8x64xf32>
    %c384_538 = arith.constant 384 : index
    %c0_539 = arith.constant 0 : index
    %335 = vector.load %arg6[%c384_538, %c0_539] : memref<576x64xf32, #tpu.memory_space<vmem>>, vector<64x64xf32>
    %cst_540 = arith.constant dense<0.000000e+00> : vector<8x64xf32>
    %336 = tpu.matmul %334, %335, %cst_540 {dimension_numbers = #tpu.dot_dimension_numbers<[1], [0], [0], [1], [0, 0, 1, 1], [], []>} : vector<8x64xf32>, vector<64x64xf32>, vector<8x64xf32> -> vector<8x64xf32>
    %337 = arith.addf %333, %336 : vector<8x64xf32>
    %338 = vector.extract_strided_slice %308 {offsets = [56, 0], sizes = [8, 64], strides = [1, 1]} : vector<72x64xf32> to vector<8x64xf32>
    %c448_541 = arith.constant 448 : index
    %c0_542 = arith.constant 0 : index
    %339 = vector.load %arg6[%c448_541, %c0_542] : memref<576x64xf32, #tpu.memory_space<vmem>>, vector<64x64xf32>
    %cst_543 = arith.constant dense<0.000000e+00> : vector<8x64xf32>
    %340 = tpu.matmul %338, %339, %cst_543 {dimension_numbers = #tpu.dot_dimension_numbers<[1], [0], [0], [1], [0, 0, 1, 1], [], []>} : vector<8x64xf32>, vector<64x64xf32>, vector<8x64xf32> -> vector<8x64xf32>
    %341 = arith.addf %337, %340 : vector<8x64xf32>
    %342 = vector.extract_strided_slice %308 {offsets = [64, 0], sizes = [8, 64], strides = [1, 1]} : vector<72x64xf32> to vector<8x64xf32>
    %c512_544 = arith.constant 512 : index
    %c0_545 = arith.constant 0 : index
    %343 = vector.load %arg6[%c512_544, %c0_545] : memref<576x64xf32, #tpu.memory_space<vmem>>, vector<64x64xf32>
    %cst_546 = arith.constant dense<0.000000e+00> : vector<8x64xf32>
    %344 = tpu.matmul %342, %343, %cst_546 {dimension_numbers = #tpu.dot_dimension_numbers<[1], [0], [0], [1], [0, 0, 1, 1], [], []>} : vector<8x64xf32>, vector<64x64xf32>, vector<8x64xf32> -> vector<8x64xf32>
    %345 = arith.addf %341, %344 : vector<8x64xf32>
    %c0_547 = arith.constant 0 : index
    %c0_548 = arith.constant 0 : index
    %346 = vector.load %arg7[%c0_547, %c0_548] : memref<1x64xf32, #tpu.memory_space<vmem>>, vector<1x64xf32>
    %347 = vector.broadcast %346 : vector<1x64xf32> to vector<8x64xf32>
    %348 = arith.addf %345, %347 : vector<8x64xf32>
    %cst_549 = arith.constant 0.000000e+00 : f32
    %349 = vector.broadcast %cst_549 : f32 to vector<8x64xf32>
    %350 = arith.maximumf %348, %349 : vector<8x64xf32>
    %c0_550 = arith.constant 0 : index
    %c0_551 = arith.constant 0 : index
    %351 = vector.load %arg8[%c0_550, %c0_551] : memref<64x1024xf32, #tpu.memory_space<vmem>>, vector<64x1024xf32>
    %cst_552 = arith.constant dense<0.000000e+00> : vector<8x1024xf32>
    %352 = tpu.matmul %350, %351, %cst_552 {dimension_numbers = #tpu.dot_dimension_numbers<[1], [0], [0], [1], [0, 0, 1, 1], [], []>} : vector<8x64xf32>, vector<64x1024xf32>, vector<8x1024xf32> -> vector<8x1024xf32>
    %c0_553 = arith.constant 0 : index
    %c0_554 = arith.constant 0 : index
    %353 = vector.load %arg9[%c0_553, %c0_554] : memref<1x1024xf32, #tpu.memory_space<vmem>>, vector<1x1024xf32>
    %354 = vector.broadcast %353 : vector<1x1024xf32> to vector<8x1024xf32>
    %355 = arith.addf %352, %354 : vector<8x1024xf32>
    %cst_555 = arith.constant 0.000000e+00 : f32
    %356 = vector.broadcast %cst_555 : f32 to vector<8x1024xf32>
    %357 = arith.maximumf %355, %356 : vector<8x1024xf32>
    %358 = vector.extract_strided_slice %357 {offsets = [0, 0], sizes = [8, 512], strides = [1, 1]} : vector<8x1024xf32> to vector<8x512xf32>
    %c0_556 = arith.constant 0 : index
    %c0_557 = arith.constant 0 : index
    %359 = vector.load %arg10[%c0_556, %c0_557] : memref<512x1xf32, #tpu.memory_space<vmem>>, vector<512x1xf32>
    %cst_558 = arith.constant dense<0.000000e+00> : vector<8x1xf32>
    %360 = tpu.matmul %358, %359, %cst_558 {dimension_numbers = #tpu.dot_dimension_numbers<[1], [0], [0], [1], [0, 0, 1, 1], [], []>} : vector<8x512xf32>, vector<512x1xf32>, vector<8x1xf32> -> vector<8x1xf32>
    %c0_559 = arith.constant 0 : index
    %c0_560 = arith.constant 0 : index
    %361 = vector.load %arg11[%c0_559, %c0_560] : memref<1x1xf32, #tpu.memory_space<vmem>>, vector<1x1xf32>
    %362 = vector.broadcast %361 : vector<1x1xf32> to vector<8x1xf32>
    %363 = arith.addf %360, %362 : vector<8x1xf32>
    %364 = vector.extract_strided_slice %357 {offsets = [0, 512], sizes = [8, 512], strides = [1, 1]} : vector<8x1024xf32> to vector<8x512xf32>
    %c0_561 = arith.constant 0 : index
    %c0_562 = arith.constant 0 : index
    %365 = vector.load %arg12[%c0_561, %c0_562] : memref<512x6xf32, #tpu.memory_space<vmem>>, vector<512x6xf32>
    %cst_563 = arith.constant dense<0.000000e+00> : vector<8x6xf32>
    %366 = tpu.matmul %364, %365, %cst_563 {dimension_numbers = #tpu.dot_dimension_numbers<[1], [0], [0], [1], [0, 0, 1, 1], [], []>} : vector<8x512xf32>, vector<512x6xf32>, vector<8x6xf32> -> vector<8x6xf32>
    %c0_564 = arith.constant 0 : index
    %c0_565 = arith.constant 0 : index
    %367 = vector.load %arg13[%c0_564, %c0_565] : memref<1x6xf32, #tpu.memory_space<vmem>>, vector<1x6xf32>
    %368 = vector.broadcast %367 : vector<1x6xf32> to vector<8x6xf32>
    %369 = arith.addf %366, %368 : vector<8x6xf32>
    %cst_566 = arith.constant dense<0.000000e+00> : vector<8xf32>
    %370 = vector.multi_reduction <add>, %369, %cst_566 [1] : vector<8x6xf32> to vector<8xf32>
    %371 = vector.shape_cast %370 : vector<8xf32> to vector<8x1xf32>
    %cst_567 = arith.constant 6.000000e+00 : f32
    %372 = vector.broadcast %cst_567 : f32 to vector<8x1xf32>
    %373 = arith.divf %371, %372 : vector<8x1xf32>
    %374 = vector.broadcast %373 : vector<8x1xf32> to vector<8x6xf32>
    %375 = arith.subf %369, %374 : vector<8x6xf32>
    %376 = vector.broadcast %363 : vector<8x1xf32> to vector<8x6xf32>
    %377 = arith.addf %376, %375 : vector<8x6xf32>
    %c0_568 = arith.constant 0 : index
    %c0_569 = arith.constant 0 : index
    %c0_570 = arith.constant 0 : index
    %378 = vector.load %arg14[%c0_568, %c0_569, %c0_570] : memref<1x8x6xf32, #tpu.memory_space<vmem>>, vector<1x8x6xf32>
    %379 = vector.shape_cast %378 : vector<1x8x6xf32> to vector<8x6xf32>
    %380 = vector.shape_cast %377 : vector<8x6xf32> to vector<1x8x6xf32>
    tpu.vector_store %arg14[%c0_568, %c0_569, %c0_570], %380 {strides = array<i32>} : memref<1x8x6xf32, #tpu.memory_space<vmem>>, vector<1x8x6xf32>,
    return
  }
  func.func @transform_0(%arg0: i32) -> (i32, i32, i32) {
    %c0_i32 = arith.constant 0 : i32
    %c0_i32_0 = arith.constant 0 : i32
    %c0_i32_1 = arith.constant 0 : i32
    return %arg0, %c0_i32, %c0_i32_0 : i32, i32, i32
  }
  func.func @transform_1(%arg0: i32) -> (i32, i32) {
    %c0_i32 = arith.constant 0 : i32
    %c0_i32_0 = arith.constant 0 : i32
    %c0_i32_1 = arith.constant 0 : i32
    return %c0_i32, %c0_i32_0 : i32, i32
  }
  func.func @transform_2(%arg0: i32) -> (i32, i32) {
    %c0_i32 = arith.constant 0 : i32
    %c0_i32_0 = arith.constant 0 : i32
    %c0_i32_1 = arith.constant 0 : i32
    return %c0_i32, %c0_i32_0 : i32, i32
  }
  func.func @transform_3(%arg0: i32) -> (i32, i32) {
    %c0_i32 = arith.constant 0 : i32
    %c0_i32_0 = arith.constant 0 : i32
    %c0_i32_1 = arith.constant 0 : i32
    return %c0_i32, %c0_i32_0 : i32, i32
  }
  func.func @transform_4(%arg0: i32) -> (i32, i32) {
    %c0_i32 = arith.constant 0 : i32
    %c0_i32_0 = arith.constant 0 : i32
    %c0_i32_1 = arith.constant 0 : i32
    return %c0_i32, %c0_i32_0 : i32, i32
  }
  func.func @transform_5(%arg0: i32) -> (i32, i32) {
    %c0_i32 = arith.constant 0 : i32
    %c0_i32_0 = arith.constant 0 : i32
    %c0_i32_1 = arith.constant 0 : i32
    return %c0_i32, %c0_i32_0 : i32, i32
  }
  func.func @transform_6(%arg0: i32) -> (i32, i32) {
    %c0_i32 = arith.constant 0 : i32
    %c0_i32_0 = arith.constant 0 : i32
    %c0_i32_1 = arith.constant 0 : i32
    return %c0_i32, %c0_i32_0 : i32, i32
  }
  func.func @transform_7(%arg0: i32) -> (i32, i32) {
    %c0_i32 = arith.constant 0 : i32
    %c0_i32_0 = arith.constant 0 : i32
    %c0_i32_1 = arith.constant 0 : i32
    return %c0_i32, %c0_i32_0 : i32, i32
  }
  func.func @transform_8(%arg0: i32) -> (i32, i32) {
    %c0_i32 = arith.constant 0 : i32
    %c0_i32_0 = arith.constant 0 : i32
    %c0_i32_1 = arith.constant 0 : i32
    return %c0_i32, %c0_i32_0 : i32, i32
  }
  func.func @transform_9(%arg0: i32) -> (i32, i32) {
    %c0_i32 = arith.constant 0 : i32
    %c0_i32_0 = arith.constant 0 : i32
    %c0_i32_1 = arith.constant 0 : i32
    return %c0_i32, %c0_i32_0 : i32, i32
  }
  func.func @transform_10(%arg0: i32) -> (i32, i32) {
    %c0_i32 = arith.constant 0 : i32
    %c0_i32_0 = arith.constant 0 : i32
    %c0_i32_1 = arith.constant 0 : i32
    return %c0_i32, %c0_i32_0 : i32, i32
  }
  func.func @transform_11(%arg0: i32) -> (i32, i32) {
    %c0_i32 = arith.constant 0 : i32
    %c0_i32_0 = arith.constant 0 : i32
    %c0_i32_1 = arith.constant 0 : i32
    return %c0_i32, %c0_i32_0 : i32, i32
  }
  func.func @transform_12(%arg0: i32) -> (i32, i32) {
    %c0_i32 = arith.constant 0 : i32
    %c0_i32_0 = arith.constant 0 : i32
    %c0_i32_1 = arith.constant 0 : i32
    return %c0_i32, %c0_i32_0 : i32, i32
  }
  func.func @transform_13(%arg0: i32) -> (i32, i32, i32) {
    %c0_i32 = arith.constant 0 : i32
    %c0_i32_0 = arith.constant 0 : i32
    %c0_i32_1 = arith.constant 0 : i32
    return %arg0, %c0_i32, %c0_i32_0 : i32, i32, i32
  }
}

</mosaic_0001>

<llo_original>
// kernel: qnet_forward.1
$region0: #{qnet_forward.1}
  #allocation0 [shape = 'u32[]', space=smem, size = 0x4, offset = 0x4, fixed_abs, tag = 'smem constant byte address 0x4 - core index']
  #allocation1 [shape = 'u32[144,128]{1,0:T(1,128)}', space=vmem, size = 0x12000, scoped, tag = 'internal scratch']
  #allocation2 [shape = 'f32[512,32]{1,0:T(8,128)}', space=vmem, size = 0x40000, scoped, tag = 'scratch operand']
  #allocation3 [shape = 'f32[72,2048]{1,0:T(8,128)}', space=vmem, size = 0x90000, scoped, tag = 'scratch operand']
  #allocation4 [shape = 'f32[1,1]{1,0:T(1,128)S(1)}', space=vmem, size = 0x200, scoped, tag = 'scoped memory for qnet_forward.1']
  %s0 = inlined_call_operand.vmem [shape: f32[1,512,256], index: 0, kind: input, shape index: {}]
  %s1 = inlined_call_operand.vmem [shape: f32[256,32], index: 1, kind: input, shape index: {}]
  %s2 = inlined_call_operand.vmem [shape: f32[1,32], index: 2, kind: input, shape index: {}]
  %s3 = inlined_call_operand.vmem [shape: f32[2048,64], index: 3, kind: input, shape index: {}]
  %s4 = inlined_call_operand.vmem [shape: f32[1,64], index: 4, kind: input, shape index: {}]
  %s5 = inlined_call_operand.vmem [shape: f32[576,64], index: 5, kind: input, shape index: {}]
  %s6 = inlined_call_operand.vmem [shape: f32[1,64], index: 6, kind: input, shape index: {}]
  %s7 = inlined_call_operand.vmem [shape: f32[64,1024], index: 7, kind: input, shape index: {}]
  %s8 = inlined_call_operand.vmem [shape: f32[1,1024], index: 8, kind: input, shape index: {}]
  %s9 = inlined_call_operand.vmem [shape: f32[512,1], index: 9, kind: input, shape index: {}]
  %s10 = inlined_call_operand.<no memory space> [shape: f32[1,1], index: 10, kind: input, shape index: {}]
  %s11 = inlined_call_operand.vmem [shape: f32[512,6], index: 11, kind: input, shape index: {}]
  %s12 = inlined_call_operand.vmem [shape: f32[1,6], index: 12, kind: input, shape index: {}]
  %s13 = inlined_call_operand.vmem [shape: f32[1,8,6], index: 13, kind: output, shape index: {}]
  %s14 = sld [smem:[#allocation0]]
  $region66: #{qnet_forward.1} parent=0
    _
  %s16 = ssub.s32 1, %s14
  %s17 = scalar_select 0, %s16, %s14
  %v18 = vstv %s10
  %19 = vst [vmem:[#allocation4] sm:$0x1] %v18
  // Predicated region
  $region2: #{qnet_forward.1} parent=0 // pred_check
    _
  $region3: #{qnet_forward.1} parent=0 // pred_check_branch
    %21 = sbr.rel (0) target = $region5
  $region4: #{qnet_forward.1} parent=0 // pred_region
    _
  $region5: #{qnet_forward.1} parent=0 // pred_fallthru
    _
  // Predicated region
  $region6: #{qnet_forward.1} parent=0 // pred_check
    _
  $region7: #{qnet_forward.1} parent=0 // pred_check_branch
    %23 = sbr.rel (0) target = $region9
  $region8: #{qnet_forward.1} parent=0 // pred_region
    _
  $region9: #{qnet_forward.1} parent=0 // pred_fallthru
    _
  // Predicated region
  $region10: #{qnet_forward.1} parent=0 // pred_check
    _
  $region11: #{qnet_forward.1} parent=0 // pred_check_branch
    %25 = sbr.rel (0) target = $region13
  $region12: #{qnet_forward.1} parent=0 // pred_region
    _
  $region13: #{qnet_forward.1} parent=0 // pred_fallthru
    _
  // Predicated region
  $region14: #{qnet_forward.1} parent=0 // pred_check
    _
  $region15: #{qnet_forward.1} parent=0 // pred_check_branch
    %27 = sbr.rel (0) target = $region17
  $region16: #{qnet_forward.1} parent=0 // pred_region
    _
  $region17: #{qnet_forward.1} parent=0 // pred_fallthru
    _
  // Predicated region
  $region18: #{qnet_forward.1} parent=0 // pred_check
    _
  $region19: #{qnet_forward.1} parent=0 // pred_check_branch
    %29 = sbr.rel (0) target = $region21
  $region20: #{qnet_forward.1} parent=0 // pred_region
    _
  $region21: #{qnet_forward.1} parent=0 // pred_fallthru
    _
  // Predicated region
  $region22: #{qnet_forward.1} parent=0 // pred_check
    _
  $region23: #{qnet_forward.1} parent=0 // pred_check_branch
    %31 = sbr.rel (0) target = $region25
  $region24: #{qnet_forward.1} parent=0 // pred_region
    _
  $region25: #{qnet_forward.1} parent=0 // pred_fallthru
    _
  // Predicated region
  $region26: #{qnet_forward.1} parent=0 // pred_check
    _
  $region27: #{qnet_forward.1} parent=0 // pred_check_branch
    %33 = sbr.rel (0) target = $region29
  $region28: #{qnet_forward.1} parent=0 // pred_region
    _
  $region29: #{qnet_forward.1} parent=0 // pred_fallthru
    _
  // Predicated region
  $region30: #{qnet_forward.1} parent=0 // pred_check
    _
  $region31: #{qnet_forward.1} parent=0 // pred_check_branch
    %35 = sbr.rel (0) target = $region33
  $region32: #{qnet_forward.1} parent=0 // pred_region
    _
  $region33: #{qnet_forward.1} parent=0 // pred_fallthru
    _
  // Predicated region
  $region34: #{qnet_forward.1} parent=0 // pred_check
    _
  $region35: #{qnet_forward.1} parent=0 // pred_check_branch
    %37 = sbr.rel (0) target = $region37
  $region36: #{qnet_forward.1} parent=0 // pred_region
    _
  $region37: #{qnet_forward.1} parent=0 // pred_fallthru
    _
  // Predicated region
  $region38: #{qnet_forward.1} parent=0 // pred_check
    _
  $region39: #{qnet_forward.1} parent=0 // pred_check_branch
    %39 = sbr.rel (0) target = $region41
  $region40: #{qnet_forward.1} parent=0 // pred_region
    _
  $region41: #{qnet_forward.1} parent=0 // pred_fallthru
    _
  // Predicated region
  $region42: #{qnet_forward.1} parent=0 // pred_check
    _
  $region43: #{qnet_forward.1} parent=0 // pred_check_branch
    %41 = sbr.rel (0) target = $region45
  $region44: #{qnet_forward.1} parent=0 // pred_region
    _
  $region45: #{qnet_forward.1} parent=0 // pred_fallthru
    _
  // Predicated region
  $region46: #{qnet_forward.1} parent=0 // pred_check
    _
  $region47: #{qnet_forward.1} parent=0 // pred_check_branch
    %43 = sbr.rel (0) target = $region49
  $region48: #{qnet_forward.1} parent=0 // pred_region
    _
  $region49: #{qnet_forward.1} parent=0 // pred_fallthru
    _
  // Predicated region
  $region50: #{qnet_forward.1} parent=0 // pred_check
    _
  $region51: #{qnet_forward.1} parent=0 // pred_check_branch
    %45 = sbr.rel (0) target = $region53
  $region52: #{qnet_forward.1} parent=0 // pred_region
    _
  $region53: #{qnet_forward.1} parent=0 // pred_fallthru
    _
  %p46 = scmp.eq.s32.totalorder 0, 0
  // Predicated region
  $region54: #{qnet_forward.1} parent=0 // pred_check
    %p47 = pneg %p46
  $region55: #{qnet_forward.1} parent=0 // pred_check_branch
    %49 = sbr.rel (%p47) target = $region57
  $region56: #{qnet_forward.1} parent=0 // pred_region
    %50 = vst [vmem:[#allocation3] sm:$0xff] 0.0
    %51 = vst [vmem:[#allocation3 + $0x8] sm:$0xff] 0.0
    %52 = vst [vmem:[#allocation3 + $0x10] sm:$0xff] 0.0
    %53 = vst [vmem:[#allocation3 + $0x18] sm:$0xff] 0.0
    %54 = vst [vmem:[#allocation3 + $0x20] sm:$0xff] 0.0
    %55 = vst [vmem:[#allocation3 + $0x28] sm:$0xff] 0.0
    %56 = vst [vmem:[#allocation3 + $0x30] sm:$0xff] 0.0
    %57 = vst [vmem:[#allocation3 + $0x38] sm:$0xff] 0.0
    %58 = vst [vmem:[#allocation3 + $0x40] sm:$0xff] 0.0
    %59 = vst [vmem:[#allocation3 + $0x48] sm:$0xff] 0.0
    %60 = vst [vmem:[#allocation3 + $0x50] sm:$0xff] 0.0
    %61 = vst [vmem:[#allocation3 + $0x58] sm:$0xff] 0.0
    %62 = vst [vmem:[#allocation3 + $0x60] sm:$0xff] 0.0
    %63 = vst [vmem:[#allocation3 + $0x68] sm:$0xff] 0.0
    %64 = vst [vmem:[#allocation3 + $0x70] sm:$0xff] 0.0
    %65 = vst [vmem:[#allocation3 + $0x78] sm:$0xff] 0.0
    %66 = vst [vmem:[#allocation3 + $0x80] sm:$0xff] 0.0
    %67 = vst [vmem:[#allocation3 + $0x88] sm:$0xff] 0.0
    %68 = vst [vmem:[#allocation3 + $0x90] sm:$0xff] 0.0
    %69 = vst [vmem:[#allocation3 + $0x98] sm:$0xff] 0.0
    %70 = vst [vmem:[#allocation3 + $0xa0] sm:$0xff] 0.0
    %71 = vst [vmem:[#allocation3 + $0xa8] sm:$0xff] 0.0
    %72 = vst [vmem:[#allocation3 + $0xb0] sm:$0xff] 0.0
    %73 = vst [vmem:[#allocation3 + $0xb8] sm:$0xff] 0.0
    %74 = vst [vmem:[#allocation3 + $0xc0] sm:$0xff] 0.0
    %75 = vst [vmem:[#allocation3 + $0xc8] sm:$0xff] 0.0
    %76 = vst [vmem:[#allocation3 + $0xd0] sm:$0xff] 0.0
    %77 = vst [vmem:[#allocation3 + $0xd8] sm:$0xff] 0.0
    %78 = vst [vmem:[#allocation3 + $0xe0] sm:$0xff] 0.0
    %79 = vst [vmem:[#allocation3 + $0xe8] sm:$0xff] 0.0
    %80 = vst [vmem:[#allocation3 + $0xf0] sm:$0xff] 0.0
    %81 = vst [vmem:[#allocation3 + $0xf8] sm:$0xff] 0.0
    %82 = vst [vmem:[#allocation3 + $0x100] sm:$0xff] 0.0
    %83 = vst [vmem:[#allocation3 + $0x108] sm:$0xff] 0.0
    %84 = vst [vmem:[#allocation3 + $0x110] sm:$0xff] 0.0
    %85 = vst [vmem:[#allocation3 + $0x118] sm:$0xff] 0.0
    %86 = vst [vmem:[#allocation3 + $0x120] sm:$0xff] 0.0
    %87 = vst [vmem:[#allocation3 + $0x128] sm:$0xff] 0.0
    %88 = vst [vmem:[#allocation3 + $0x130] sm:$0xff] 0.0
    %89 = vst [vmem:[#allocation3 + $0x138] sm:$0xff] 0.0
    %90 = vst [vmem:[#allocation3 + $0x140] sm:$0xff] 0.0
    %91 = vst [vmem:[#allocation3 + $0x148] sm:$0xff] 0.0
    %92 = vst [vmem:[#allocation3 + $0x150] sm:$0xff] 0.0
    %93 = vst [vmem:[#allocation3 + $0x158] sm:$0xff] 0.0
    %94 = vst [vmem:[#allocation3 + $0x160] sm:$0xff] 0.0
    %95 = vst [vmem:[#allocation3 + $0x168] sm:$0xff] 0.0
    %96 = vst [vmem:[#allocation3 + $0x170] sm:$0xff] 0.0
    %97 = vst [vmem:[#allocation3 + $0x178] sm:$0xff] 0.0
    %98 = vst [vmem:[#allocation3 + $0x180] sm:$0xff] 0.0
    %99 = vst [vmem:[#allocation3 + $0x188] sm:$0xff] 0.0
    %100 = vst [vmem:[#allocation3 + $0x190] sm:$0xff] 0.0
    %101 = vst [vmem:[#allocation3 + $0x198] sm:$0xff] 0.0
    %102 = vst [vmem:[#allocation3 + $0x1a0] sm:$0xff] 0.0
    %103 = vst [vmem:[#allocation3 + $0x1a8] sm:$0xff] 0.0
    %104 = vst [vmem:[#allocation3 + $0x1b0] sm:$0xff] 0.0
    %105 = vst [vmem:[#allocation3 + $0x1b8] sm:$0xff] 0.0
    %106 = vst [vmem:[#allocation3 + $0x1c0] sm:$0xff] 0.0
    %107 = vst [vmem:[#allocation3 + $0x1c8] sm:$0xff] 0.0
    %108 = vst [vmem:[#allocation3 + $0x1d0] sm:$0xff] 0.0
    %109 = vst [vmem:[#allocation3 + $0x1d8] sm:$0xff] 0.0
    %110 = vst [vmem:[#allocation3 + $0x1e0] sm:$0xff] 0.0
    %111 = vst [vmem:[#allocation3 + $0x1e8] sm:$0xff] 0.0
    %112 = vst [vmem:[#allocation3 + $0x1f0] sm:$0xff] 0.0
    %113 = vst [vmem:[#allocation3 + $0x1f8] sm:$0xff] 0.0
    %114 = vst [vmem:[#allocation3 + $0x200] sm:$0xff] 0.0
    %115 = vst [vmem:[#allocation3 + $0x208] sm:$0xff] 0.0
    %116 = vst [vmem:[#allocation3 + $0x210] sm:$0xff] 0.0
    %117 = vst [vmem:[#allocation3 + $0x218] sm:$0xff] 0.0
    %118 = vst [vmem:[#allocation3 + $0x220] sm:$0xff] 0.0
    %119 = vst [vmem:[#allocation3 + $0x228] sm:$0xff] 0.0
    %120 = vst [vmem:[#allocation3 + $0x230] sm:$0xff] 0.0
    %121 = vst [vmem:[#allocation3 + $0x238] sm:$0xff] 0.0
    %122 = vst [vmem:[#allocation3 + $0x240] sm:$0xff] 0.0
    %123 = vst [vmem:[#allocation3 + $0x248] sm:$0xff] 0.0
    %124 = vst [vmem:[#allocation3 + $0x250] sm:$0xff] 0.0
    %125 = vst [vmem:[#allocation3 + $0x258] sm:$0xff] 0.0
    %126 = vst [vmem:[#allocation3 + $0x260] sm:$0xff] 0.0
    %127 = vst [vmem:[#allocation3 + $0x268] sm:$0xff] 0.0
    %128 = vst [vmem:[#allocation3 + $0x270] sm:$0xff] 0.0
    %129 = vst [vmem:[#allocation3 + $0x278] sm:$0xff] 0.0
    %130 = vst [vmem:[#allocation3 + $0x280] sm:$0xff] 0.0
    %131 = vst [vmem:[#allocation3 + $0x288] sm:$0xff] 0.0
    %132 = vst [vmem:[#allocation3 + $0x290] sm:$0xff] 0.0
    %133 = vst [vmem:[#allocation3 + $0x298] sm:$0xff] 0.0
    %134 = vst [vmem:[#allocation3 + $0x2a0] sm:$0xff] 0.0
    %135 = vst [vmem:[#allocation3 + $0x2a8] sm:$0xff] 0.0
    %136 = vst [vmem:[#allocation3 + $0x2b0] sm:$0xff] 0.0
    %137 = vst [vmem:[#allocation3 + $0x2b8] sm:$0xff] 0.0
    %138 = vst [vmem:[#allocation3 + $0x2c0] sm:$0xff] 0.0
    %139 = vst [vmem:[#allocation3 + $0x2c8] sm:$0xff] 0.0
    %140 = vst [vmem:[#allocation3 + $0x2d0] sm:$0xff] 0.0
    %141 = vst [vmem:[#allocation3 + $0x2d8] sm:$0xff] 0.0
    %142 = vst [vmem:[#allocation3 + $0x2e0] sm:$0xff] 0.0
    %143 = vst [vmem:[#allocation3 + $0x2e8] sm:$0xff] 0.0
    %144 = vst [vmem:[#allocation3 + $0x2f0] sm:$0xff] 0.0
    %145 = vst [vmem:[#allocation3 + $0x2f8] sm:$0xff] 0.0
    %146 = vst [vmem:[#allocation3 + $0x300] sm:$0xff] 0.0
    %147 = vst [vmem:[#allocation3 + $0x308] sm:$0xff] 0.0
    %148 = vst [vmem:[#allocation3 + $0x310] sm:$0xff] 0.0
    %149 = vst [vmem:[#allocation3 + $0x318] sm:$0xff] 0.0
    %150 = vst [vmem:[#allocation3 + $0x320] sm:$0xff] 0.0
    %151 = vst [vmem:[#allocation3 + $0x328] sm:$0xff] 0.0
    %152 = vst [vmem:[#allocation3 + $0x330] sm:$0xff] 0.0
    %153 = vst [vmem:[#allocation3 + $0x338] sm:$0xff] 0.0
    %154 = vst [vmem:[#allocation3 + $0x340] sm:$0xff] 0.0
    %155 = vst [vmem:[#allocation3 + $0x348] sm:$0xff] 0.0
    %156 = vst [vmem:[#allocation3 + $0x350] sm:$0xff] 0.0
    %157 = vst [vmem:[#allocation3 + $0x358] sm:$0xff] 0.0
    %158 = vst [vmem:[#allocation3 + $0x360] sm:$0xff] 0.0
    %159 = vst [vmem:[#allocation3 + $0x368] sm:$0xff] 0.0
    %160 = vst [vmem:[#allocation3 + $0x370] sm:$0xff] 0.0
    %161 = vst [vmem:[#allocation3 + $0x378] sm:$0xff] 0.0
    %162 = vst [vmem:[#allocation3 + $0x380] sm:$0xff] 0.0
    %163 = vst [vmem:[#allocation3 + $0x388] sm:$0xff] 0.0
    %164 = vst [vmem:[#allocation3 + $0x390] sm:$0xff] 0.0
    %165 = vst [vmem:[#allocation3 + $0x398] sm:$0xff] 0.0
    %166 = vst [vmem:[#allocation3 + $0x3a0] sm:$0xff] 0.0
    %167 = vst [vmem:[#allocation3 + $0x3a8] sm:$0xff] 0.0
    %168 = vst [vmem:[#allocation3 + $0x3b0] sm:$0xff] 0.0
    %169 = vst [vmem:[#allocation3 + $0x3b8] sm:$0xff] 0.0
    %170 = vst [vmem:[#allocation3 + $0x3c0] sm:$0xff] 0.0
    %171 = vst [vmem:[#allocation3 + $0x3c8] sm:$0xff] 0.0
    %172 = vst [vmem:[#allocation3 + $0x3d0] sm:$0xff] 0.0
    %173 = vst [vmem:[#allocation3 + $0x3d8] sm:$0xff] 0.0
    %174 = vst [vmem:[#allocation3 + $0x3e0] sm:$0xff] 0.0
    %175 = vst [vmem:[#allocation3 + $0x3e8] sm:$0xff] 0.0
    %176 = vst [vmem:[#allocation3 + $0x3f0] sm:$0xff] 0.0
    %177 = vst [vmem:[#allocation3 + $0x3f8] sm:$0xff] 0.0
    %178 = vst [vmem:[#allocation3 + $0x400] sm:$0xff] 0.0
    %179 = vst [vmem:[#allocation3 + $0x408] sm:$0xff] 0.0
    %180 = vst [vmem:[#allocation3 + $0x410] sm:$0xff] 0.0
    %181 = vst [vmem:[#allocation3 + $0x418] sm:$0xff] 0.0
    %182 = vst [vmem:[#allocation3 + $0x420] sm:$0xff] 0.0
    %183 = vst [vmem:[#allocation3 + $0x428] sm:$0xff] 0.0
    %184 = vst [vmem:[#allocation3 + $0x430] sm:$0xff] 0.0
    %185 = vst [vmem:[#allocation3 + $0x438] sm:$0xff] 0.0
    %186 = vst [vmem:[#allocation3 + $0x440] sm:$0xff] 0.0
    %187 = vst [vmem:[#allocation3 + $0x448] sm:$0xff] 0.0
    %188 = vst [vmem:[#allocation3 + $0x450] sm:$0xff] 0.0
    %189 = vst [vmem:[#allocation3 + $0x458] sm:$0xff] 0.0
    %190 = vst [vmem:[#allocation3 + $0x460] sm:$0xff] 0.0
    %191 = vst [vmem:[#allocation3 + $0x468] sm:$0xff] 0.0
    %192 = vst [vmem:[#allocation3 + $0x470] sm:$0xff] 0.0
    %193 = vst [vmem:[#allocation3 + $0x478] sm:$0xff] 0.0
  $region57: #{qnet_forward.1} parent=0 // pred_fallthru
    _
  %v194 = vld [vmem:[%s0] sm:$0xff]
  %v195 = vld [vmem:[%s0 + $0x8] sm:$0xff]
  %v196 = vld [vmem:[%s0 + $0x10] sm:$0xff]
  %v197 = vld [vmem:[%s0 + $0x18] sm:$0xff]
  %v198 = vld [vmem:[%s0 + $0x20] sm:$0xff]
  %v199 = vld [vmem:[%s0 + $0x28] sm:$0xff]
  %v200 = vld [vmem:[%s0 + $0x30] sm:$0xff]
  %v201 = vld [vmem:[%s0 + $0x38] sm:$0xff]
  %v202 = vld [vmem:[%s0 + $0x40] sm:$0xff]
  %v203 = vld [vmem:[%s0 + $0x48] sm:$0xff]
  %v204 = vld [vmem:[%s0 + $0x50] sm:$0xff]
  %v205 = vld [vmem:[%s0 + $0x58] sm:$0xff]
  %v206 = vld [vmem:[%s0 + $0x60] sm:$0xff]
  %v207 = vld [vmem:[%s0 + $0x68] sm:$0xff]
  %v208 = vld [vmem:[%s0 + $0x70] sm:$0xff]
  %v209 = vld [vmem:[%s0 + $0x78] sm:$0xff]
  %v210 = vld [vmem:[%s0 + $0x80] sm:$0xff]
  %v211 = vld [vmem:[%s0 + $0x88] sm:$0xff]
  %v212 = vld [vmem:[%s0 + $0x90] sm:$0xff]
  %v213 = vld [vmem:[%s0 + $0x98] sm:$0xff]
  %v214 = vld [vmem:[%s0 + $0xa0] sm:$0xff]
  %v215 = vld [vmem:[%s0 + $0xa8] sm:$0xff]
  %v216 = vld [vmem:[%s0 + $0xb0] sm:$0xff]
  %v217 = vld [vmem:[%s0 + $0xb8] sm:$0xff]
  %v218 = vld [vmem:[%s0 + $0xc0] sm:$0xff]
  %v219 = vld [vmem:[%s0 + $0xc8] sm:$0xff]
  %v220 = vld [vmem:[%s0 + $0xd0] sm:$0xff]
  %v221 = vld [vmem:[%s0 + $0xd8] sm:$0xff]
  %v222 = vld [vmem:[%s0 + $0xe0] sm:$0xff]
  %v223 = vld [vmem:[%s0 + $0xe8] sm:$0xff]
  %v224 = vld [vmem:[%s0 + $0xf0] sm:$0xff]
  %v225 = vld [vmem:[%s0 + $0xf8] sm:$0xff]
  %v226 = vld [vmem:[%s0 + $0x100] sm:$0xff]
  %v227 = vld [vmem:[%s0 + $0x108] sm:$0xff]
  %v228 = vld [vmem:[%s0 + $0x110] sm:$0xff]
  %v229 = vld [vmem:[%s0 + $0x118] sm:$0xff]
  %v230 = vld [vmem:[%s0 + $0x120] sm:$0xff]
  %v231 = vld [vmem:[%s0 + $0x128] sm:$0xff]
  %v232 = vld [vmem:[%s0 + $0x130] sm:$0xff]
  %v233 = vld [vmem:[%s0 + $0x138] sm:$0xff]
  %v234 = vld [vmem:[%s0 + $0x140] sm:$0xff]
  %v235 = vld [vmem:[%s0 + $0x148] sm:$0xff]
  %v236 = vld [vmem:[%s0 + $0x150] sm:$0xff]
  %v237 = vld [vmem:[%s0 + $0x158] sm:$0xff]
  %v238 = vld [vmem:[%s0 + $0x160] sm:$0xff]
  %v239 = vld [vmem:[%s0 + $0x168] sm:$0xff]
  %v240 = vld [vmem:[%s0 + $0x170] sm:$0xff]
  %v241 = vld [vmem:[%s0 + $0x178] sm:$0xff]
  %v242 = vld [vmem:[%s0 + $0x180] sm:$0xff]
  %v243 = vld [vmem:[%s0 + $0x188] sm:$0xff]
  %v244 = vld [vmem:[%s0 + $0x190] sm:$0xff]
  %v245 = vld [vmem:[%s0 + $0x198] sm:$0xff]
  %v246 = vld [vmem:[%s0 + $0x1a0] sm:$0xff]
  %v247 = vld [vmem:[%s0 + $0x1a8] sm:$0xff]
  %v248 = vld [vmem:[%s0 + $0x1b0] sm:$0xff]
  %v249 = vld [vmem:[%s0 + $0x1b8] sm:$0xff]
  %v250 = vld [vmem:[%s0 + $0x1c0] sm:$0xff]
  %v251 = vld [vmem:[%s0 + $0x1c8] sm:$0xff]
  %v252 = vld [vmem:[%s0 + $0x1d0] sm:$0xff]
  %v253 = vld [vmem:[%s0 + $0x1d8] sm:$0xff]
  %v254 = vld [vmem:[%s0 + $0x1e0] sm:$0xff]
  %v255 = vld [vmem:[%s0 + $0x1e8] sm:$0xff]
  %v256 = vld [vmem:[%s0 + $0x1f0] sm:$0xff]
  %v257 = vld [vmem:[%s0 + $0x1f8] sm:$0xff]
  %v258 = vld [vmem:[%s0 + $0x200] sm:$0xff]
  %v259 = vld [vmem:[%s0 + $0x208] sm:$0xff]
  %v260 = vld [vmem:[%s0 + $0x210] sm:$0xff]
  %v261 = vld [vmem:[%s0 + $0x218] sm:$0xff]
  %v262 = vld [vmem:[%s0 + $0x220] sm:$0xff]
  %v263 = vld [vmem:[%s0 + $0x228] sm:$0xff]
  %v264 = vld [vmem:[%s0 + $0x230] sm:$0xff]
  %v265 = vld [vmem:[%s0 + $0x238] sm:$0xff]
  %v266 = vld [vmem:[%s0 + $0x240] sm:$0xff]
  %v267 = vld [vmem:[%s0 + $0x248] sm:$0xff]
  %v268 = vld [vmem:[%s0 + $0x250] sm:$0xff]
  %v269 = vld [vmem:[%s0 + $0x258] sm:$0xff]
  %v270 = vld [vmem:[%s0 + $0x260] sm:$0xff]
  %v271 = vld [vmem:[%s0 + $0x268] sm:$0xff]
  %v272 = vld [vmem:[%s0 + $0x270] sm:$0xff]
  %v273 = vld [vmem:[%s0 + $0x278] sm:$0xff]
  %v274 = vld [vmem:[%s0 + $0x280] sm:$0xff]
  %v275 = vld [vmem:[%s0 + $0x288] sm:$0xff]
  %v276 = vld [vmem:[%s0 + $0x290] sm:$0xff]
  %v277 = vld [vmem:[%s0 + $0x298] sm:$0xff]
  %v278 = vld [vmem:[%s0 + $0x2a0] sm:$0xff]
  %v279 = vld [vmem:[%s0 + $0x2a8] sm:$0xff]
  %v280 = vld [vmem:[%s0 + $0x2b0] sm:$0xff]
  %v281 = vld [vmem:[%s0 + $0x2b8] sm:$0xff]
  %v282 = vld [vmem:[%s0 + $0x2c0] sm:$0xff]
  %v283 = vld [vmem:[%s0 + $0x2c8] sm:$0xff]
  %v284 = vld [vmem:[%s0 + $0x2d0] sm:$0xff]
  %v285 = vld [vmem:[%s0 + $0x2d8] sm:$0xff]
  %v286 = vld [vmem:[%s0 + $0x2e0] sm:$0xff]
  %v287 = vld [vmem:[%s0 + $0x2e8] sm:$0xff]
  %v288 = vld [vmem:[%s0 + $0x2f0] sm:$0xff]
  %v289 = vld [vmem:[%s0 + $0x2f8] sm:$0xff]
  %v290 = vld [vmem:[%s0 + $0x300] sm:$0xff]
  %v291 = vld [vmem:[%s0 + $0x308] sm:$0xff]
  %v292 = vld [vmem:[%s0 + $0x310] sm:$0xff]
  %v293 = vld [vmem:[%s0 + $0x318] sm:$0xff]
  %v294 = vld [vmem:[%s0 + $0x320] sm:$0xff]
  %v295 = vld [vmem:[%s0 + $0x328] sm:$0xff]
  %v296 = vld [vmem:[%s0 + $0x330] sm:$0xff]
  %v297 = vld [vmem:[%s0 + $0x338] sm:$0xff]
  %v298 = vld [vmem:[%s0 + $0x340] sm:$0xff]
  %v299 = vld [vmem:[%s0 + $0x348] sm:$0xff]
  %v300 = vld [vmem:[%s0 + $0x350] sm:$0xff]
  %v301 = vld [vmem:[%s0 + $0x358] sm:$0xff]
  %v302 = vld [vmem:[%s0 + $0x360] sm:$0xff]
  %v303 = vld [vmem:[%s0 + $0x368] sm:$0xff]
  %v304 = vld [vmem:[%s0 + $0x370] sm:$0xff]
  %v305 = vld [vmem:[%s0 + $0x378] sm:$0xff]
  %v306 = vld [vmem:[%s0 + $0x380] sm:$0xff]
  %v307 = vld [vmem:[%s0 + $0x388] sm:$0xff]
  %v308 = vld [vmem:[%s0 + $0x390] sm:$0xff]
  %v309 = vld [vmem:[%s0 + $0x398] sm:$0xff]
  %v310 = vld [vmem:[%s0 + $0x3a0] sm:$0xff]
  %v311 = vld [vmem:[%s0 + $0x3a8] sm:$0xff]
  %v312 = vld [vmem:[%s0 + $0x3b0] sm:$0xff]
  %v313 = vld [vmem:[%s0 + $0x3b8] sm:$0xff]
  %v314 = vld [vmem:[%s0 + $0x3c0] sm:$0xff]
  %v315 = vld [vmem:[%s0 + $0x3c8] sm:$0xff]
  %v316 = vld [vmem:[%s0 + $0x3d0] sm:$0xff]
  %v317 = vld [vmem:[%s0 + $0x3d8] sm:$0xff]
  %v318 = vld [vmem:[%s0 + $0x3e0] sm:$0xff]
  %v319 = vld [vmem:[%s0 + $0x3e8] sm:$0xff]
  %v320 = vld [vmem:[%s0 + $0x3f0] sm:$0xff]
  %v321 = vld [vmem:[%s0 + $0x3f8] sm:$0xff]
  %v322 = vld [vmem:[%s1] sm:$0xff]
  %v323 = vld [vmem:[%s1 + $0x8] sm:$0xff]
  %v324 = vld [vmem:[%s1 + $0x10] sm:$0xff]
  %v325 = vld [vmem:[%s1 + $0x18] sm:$0xff]
  %v326 = vld [vmem:[%s1 + $0x20] sm:$0xff]
  %v327 = vld [vmem:[%s1 + $0x28] sm:$0xff]
  %v328 = vld [vmem:[%s1 + $0x30] sm:$0xff]
  %v329 = vld [vmem:[%s1 + $0x38] sm:$0xff]
  %v330 = vld [vmem:[%s1 + $0x40] sm:$0xff]
  %v331 = vld [vmem:[%s1 + $0x48] sm:$0xff]
  %v332 = vld [vmem:[%s1 + $0x50] sm:$0xff]
  %v333 = vld [vmem:[%s1 + $0x58] sm:$0xff]
  %v334 = vld [vmem:[%s1 + $0x60] sm:$0xff]
  %v335 = vld [vmem:[%s1 + $0x68] sm:$0xff]
  %v336 = vld [vmem:[%s1 + $0x70] sm:$0xff]
  %v337 = vld [vmem:[%s1 + $0x78] sm:$0xff]
  %v338 = vld [vmem:[%s1 + $0x80] sm:$0xff]
  %v339 = vld [vmem:[%s1 + $0x88] sm:$0xff]
  %v340 = vld [vmem:[%s1 + $0x90] sm:$0xff]
  %v341 = vld [vmem:[%s1 + $0x98] sm:$0xff]
  %v342 = vld [vmem:[%s1 + $0xa0] sm:$0xff]
  %v343 = vld [vmem:[%s1 + $0xa8] sm:$0xff]
  %v344 = vld [vmem:[%s1 + $0xb0] sm:$0xff]
  %v345 = vld [vmem:[%s1 + $0xb8] sm:$0xff]
  %v346 = vld [vmem:[%s1 + $0xc0] sm:$0xff]
  %v347 = vld [vmem:[%s1 + $0xc8] sm:$0xff]
  %v348 = vld [vmem:[%s1 + $0xd0] sm:$0xff]
  %v349 = vld [vmem:[%s1 + $0xd8] sm:$0xff]
  %v350 = vld [vmem:[%s1 + $0xe0] sm:$0xff]
  %v351 = vld [vmem:[%s1 + $0xe8] sm:$0xff]
  %v352 = vld [vmem:[%s1 + $0xf0] sm:$0xff]
  %v353 = vld [vmem:[%s1 + $0xf8] sm:$0xff]
  %v354 = vld [vmem:[%s2] sm:$0x1]
  %v356 = vlaneseq
  %v357 = vshrl.u32 %v356, 7
  %v358 = vsub.s32 0, %v357
  %v359 = vrot.slane %v354, %v358
  %361 = vmatprep.subr.mxu0 0.0
  %362 = vmatpush1.msra.mxu0 %v322
  %363 = vmatprep.subr.mxu0 0.0
  %364 = vmatpush1.msra.mxu0 %v323
  %365 = vmatprep.subr.mxu0 0.0
  %366 = vmatpush1.msra.mxu0 %v324
  %367 = vmatprep.subr.mxu0 0.0
  %368 = vmatpush1.msra.mxu0 %v325
  %369 = vmatprep.subr.mxu0 0.0
  %370 = vmatpush1.msra.mxu0 %v326
  %371 = vmatprep.subr.mxu0 0.0
  %372 = vmatpush1.msra.mxu0 %v327
  %373 = vmatprep.subr.mxu0 0.0
  %374 = vmatpush1.msra.mxu0 %v328
  %375 = vmatprep.subr.mxu0 0.0
  %376 = vmatpush1.msra.mxu0 %v329
  %377 = vmatprep.subr.mxu0 0.0
  %378 = vmatpush1.msra.mxu0 %v330
  %379 = vmatprep.subr.mxu0 0.0
  %380 = vmatpush1.msra.mxu0 %v331
  %381 = vmatprep.subr.mxu0 0.0
  %382 = vmatpush1.msra.mxu0 %v332
  %383 = vmatprep.subr.mxu0 0.0
  %384 = vmatpush1.msra.mxu0 %v333
  %385 = vmatprep.subr.mxu0 0.0
  %386 = vmatpush1.msra.mxu0 %v334
  %387 = vmatprep.subr.mxu0 0.0
  %388 = vmatpush1.msra.mxu0 %v335
  %389 = vmatprep.subr.mxu0 0.0
  %390 = vmatpush1.msra.mxu0 %v336
  %391 = vmatprep.subr.mxu0 0.0
  %392 = vmatpush1.msra.mxu0 %v337
  %393 = vmatprep.subr.mxu0 0.0
  %394 = vmatpush1.msra.mxu0 %v338
  %395 = vmatprep.subr.mxu0 0.0
  %396 = vmatpush1.msra.mxu0 %v339
  %397 = vmatprep.subr.mxu0 0.0
  %398 = vmatpush1.msra.mxu0 %v340
  %399 = vmatprep.subr.mxu0 0.0
  %400 = vmatpush1.msra.mxu0 %v341
  %401 = vmatprep.subr.mxu0 0.0
  %402 = vmatpush1.msra.mxu0 %v342
  %403 = vmatprep.subr.mxu0 0.0
  %404 = vmatpush1.msra.mxu0 %v343
  %405 = vmatprep.subr.mxu0 0.0
  %406 = vmatpush1.msra.mxu0 %v344
  %407 = vmatprep.subr.mxu0 0.0
  %408 = vmatpush1.msra.mxu0 %v345
  %409 = vmatprep.subr.mxu0 0.0
  %410 = vmatpush1.msra.mxu0 %v346
  %411 = vmatprep.subr.mxu0 0.0
  %412 = vmatpush1.msra.mxu0 %v347
  %413 = vmatprep.subr.mxu0 0.0
  %414 = vmatpush1.msra.mxu0 %v348
  %415 = vmatprep.subr.mxu0 0.0
  %416 = vmatpush1.msra.mxu0 %v349
  %417 = vmatprep.subr.mxu0 0.0
  %418 = vmatpush1.msra.mxu0 %v350
  %419 = vmatprep.subr.mxu0 0.0
  %420 = vmatpush1.msra.mxu0 %v351
  %421 = vmatprep.subr.mxu0 0.0
  %422 = vmatpush1.msra.mxu0 %v352
  %423 = vmatprep.subr.mxu0 0.0
  %424 = vmatpush1.msra.mxu0 %v353
  %425 = vmatprep.mubr.f32.mxu0 %v195
  %426 = vmatmul.mubr.f32.gmra.mrb[0].mxu0 %v194
  %v427 = vpop.f32.mrb[0].mxu0
  %v428 = vadd.f32 %v359, %v427
  %v429 = vpop.f32.mrb[0].mxu0
  %430 = vmatprep.mubr.f32.mxu0 %v197
  %431 = vmatmul.mubr.f32.gmra.mrb[0].mxu0 %v196
  %v432 = vpop.f32.mrb[0].mxu0
  %v433 = vadd.f32 %v359, %v432
  %v434 = vpop.f32.mrb[0].mxu0
  %435 = vmatprep.mubr.f32.mxu0 %v199
  %436 = vmatmul.mubr.f32.gmra.mrb[0].mxu0 %v198
  %v437 = vpop.f32.mrb[0].mxu0
  %v438 = vadd.f32 %v359, %v437
  %v439 = vpop.f32.mrb[0].mxu0
  %440 = vmatprep.mubr.f32.mxu0 %v201
  %441 = vmatmul.mubr.f32.gmra.mrb[0].mxu0 %v200
  %v442 = vpop.f32.mrb[0].mxu0
  %v443 = vadd.f32 %v359, %v442
  %v444 = vpop.f32.mrb[0].mxu0
  %445 = vmatprep.mubr.f32.mxu0 %v203
  %446 = vmatmul.mubr.f32.gmra.mrb[0].mxu0 %v202
  %v447 = vpop.f32.mrb[0].mxu0
  %v448 = vadd.f32 %v359, %v447
  %v449 = vpop.f32.mrb[0].mxu0
  %450 = vmatprep.mubr.f32.mxu0 %v205
  %451 = vmatmul.mubr.f32.gmra.mrb[0].mxu0 %v204
  %v452 = vpop.f32.mrb[0].mxu0
  %v453 = vadd.f32 %v359, %v452
  %v454 = vpop.f32.mrb[0].mxu0
  %455 = vmatprep.mubr.f32.mxu0 %v207
  %456 = vmatmul.mubr.f32.gmra.mrb[0].mxu0 %v206
  %v457 = vpop.f32.mrb[0].mxu0
  %v458 = vadd.f32 %v359, %v457
  %v459 = vpop.f32.mrb[0].mxu0
  %460 = vmatprep.mubr.f32.mxu0 %v209
  %461 = vmatmul.mubr.f32.gmra.mrb[0].mxu0 %v208
  %v462 = vpop.f32.mrb[0].mxu0
  %v463 = vadd.f32 %v359, %v462
  %v464 = vpop.f32.mrb[0].mxu0
  %465 = vmatprep.mubr.f32.mxu0 %v211
  %466 = vmatmul.mubr.f32.gmra.mrb[0].mxu0 %v210
  %v467 = vpop.f32.mrb[0].mxu0
  %v468 = vadd.f32 %v359, %v467
  %v469 = vpop.f32.mrb[0].mxu0
  %470 = vmatprep.mubr.f32.mxu0 %v213
  %471 = vmatmul.mubr.f32.gmra.mrb[0].mxu0 %v212
  %v472 = vpop.f32.mrb[0].mxu0
  %v473 = vadd.f32 %v359, %v472
  %v474 = vpop.f32.mrb[0].mxu0
  %475 = vmatprep.mubr.f32.mxu0 %v215
  %476 = vmatmul.mubr.f32.gmra.mrb[0].mxu0 %v214
  %v477 = vpop.f32.mrb[0].mxu0
  %v478 = vadd.f32 %v359, %v477
  %v479 = vpop.f32.mrb[0].mxu0
  %480 = vmatprep.mubr.f32.mxu0 %v217
  %481 = vmatmul.mubr.f32.gmra.mrb[0].mxu0 %v216
  %v482 = vpop.f32.mrb[0].mxu0
  %v483 = vadd.f32 %v359, %v482
  %v484 = vpop.f32.mrb[0].mxu0
  %485 = vmatprep.mubr.f32.mxu0 %v219
  %486 = vmatmul.mubr.f32.gmra.mrb[0].mxu0 %v218
  %v487 = vpop.f32.mrb[0].mxu0
  %v488 = vadd.f32 %v359, %v487
  %v489 = vpop.f32.mrb[0].mxu0
  %490 = vmatprep.mubr.f32.mxu0 %v221
  %491 = vmatmul.mubr.f32.gmra.mrb[0].mxu0 %v220
  %v492 = vpop.f32.mrb[0].mxu0
  %v493 = vadd.f32 %v359, %v492
  %v494 = vpop.f32.mrb[0].mxu0
  %495 = vmatprep.mubr.f32.mxu0 %v223
  %496 = vmatmul.mubr.f32.gmra.mrb[0].mxu0 %v222
  %v497 = vpop.f32.mrb[0].mxu0
  %v498 = vadd.f32 %v359, %v497
  %v499 = vpop.f32.mrb[0].mxu0
  %500 = vmatprep.mubr.f32.mxu0 %v225
  %501 = vmatmul.mubr.f32.gmra.mrb[0].mxu0 %v224
  %v502 = vpop.f32.mrb[0].mxu0
  %v503 = vadd.f32 %v359, %v502
  %v504 = vpop.f32.mrb[0].mxu0
  %505 = vmatprep.mubr.f32.mxu0 %v227
  %506 = vmatmul.mubr.f32.gmra.mrb[0].mxu0 %v226
  %v507 = vpop.f32.mrb[0].mxu0
  %v508 = vadd.f32 %v359, %v507
  %v509 = vpop.f32.mrb[0].mxu0
  %510 = vmatprep.mubr.f32.mxu0 %v229
  %511 = vmatmul.mubr.f32.gmra.mrb[0].mxu0 %v228
  %v512 = vpop.f32.mrb[0].mxu0
  %v513 = vadd.f32 %v359, %v512
  %v514 = vpop.f32.mrb[0].mxu0
  %515 = vmatprep.mubr.f32.mxu0 %v231
  %516 = vmatmul.mubr.f32.gmra.mrb[0].mxu0 %v230
  %v517 = vpop.f32.mrb[0].mxu0
  %v518 = vadd.f32 %v359, %v517
  %v519 = vpop.f32.mrb[0].mxu0
  %520 = vmatprep.mubr.f32.mxu0 %v233
  %521 = vmatmul.mubr.f32.gmra.mrb[0].mxu0 %v232
  %v522 = vpop.f32.mrb[0].mxu0
  %v523 = vadd.f32 %v359, %v522
  %v524 = vpop.f32.mrb[0].mxu0
  %525 = vmatprep.mubr.f32.mxu0 %v235
  %526 = vmatmul.mubr.f32.gmra.mrb[0].mxu0 %v234
  %v527 = vpop.f32.mrb[0].mxu0
  %v528 = vadd.f32 %v359, %v527
  %v529 = vpop.f32.mrb[0].mxu0
  %530 = vmatprep.mubr.f32.mxu0 %v237
  %531 = vmatmul.mubr.f32.gmra.mrb[0].mxu0 %v236
  %v532 = vpop.f32.mrb[0].mxu0
  %v533 = vadd.f32 %v359, %v532
  %v534 = vpop.f32.mrb[0].mxu0
  %535 = vmatprep.mubr.f32.mxu0 %v239
  %536 = vmatmul.mubr.f32.gmra.mrb[0].mxu0 %v238
  %v537 = vpop.f32.mrb[0].mxu0
  %v538 = vadd.f32 %v359, %v537
  %v539 = vpop.f32.mrb[0].mxu0
  %540 = vmatprep.mubr.f32.mxu0 %v241
  %541 = vmatmul.mubr.f32.gmra.mrb[0].mxu0 %v240
  %v542 = vpop.f32.mrb[0].mxu0
  %v543 = vadd.f32 %v359, %v542
  %v544 = vpop.f32.mrb[0].mxu0
  %545 = vmatprep.mubr.f32.mxu0 %v243
  %546 = vmatmul.mubr.f32.gmra.mrb[0].mxu0 %v242
  %v547 = vpop.f32.mrb[0].mxu0
  %v548 = vadd.f32 %v359, %v547
  %v549 = vpop.f32.mrb[0].mxu0
  %550 = vmatprep.mubr.f32.mxu0 %v245
  %551 = vmatmul.mubr.f32.gmra.mrb[0].mxu0 %v244
  %v552 = vpop.f32.mrb[0].mxu0
  %v553 = vadd.f32 %v359, %v552
  %v554 = vpop.f32.mrb[0].mxu0
  %555 = vmatprep.mubr.f32.mxu0 %v247
  %556 = vmatmul.mubr.f32.gmra.mrb[0].mxu0 %v246
  %v557 = vpop.f32.mrb[0].mxu0
  %v558 = vadd.f32 %v359, %v557
  %v559 = vpop.f32.mrb[0].mxu0
  %560 = vmatprep.mubr.f32.mxu0 %v249
  %561 = vmatmul.mubr.f32.gmra.mrb[0].mxu0 %v248
  %v562 = vpop.f32.mrb[0].mxu0
  %v563 = vadd.f32 %v359, %v562
  %v564 = vpop.f32.mrb[0].mxu0
  %565 = vmatprep.mubr.f32.mxu0 %v251
  %566 = vmatmul.mubr.f32.gmra.mrb[0].mxu0 %v250
  %v567 = vpop.f32.mrb[0].mxu0
  %v568 = vadd.f32 %v359, %v567
  %v569 = vpop.f32.mrb[0].mxu0
  %570 = vmatprep.mubr.f32.mxu0 %v253
  %571 = vmatmul.mubr.f32.gmra.mrb[0].mxu0 %v252
  %v572 = vpop.f32.mrb[0].mxu0
  %v573 = vadd.f32 %v359, %v572
  %v574 = vpop.f32.mrb[0].mxu0
  %575 = vmatprep.mubr.f32.mxu0 %v255
  %576 = vmatmul.mubr.f32.gmra.mrb[0].mxu0 %v254
  %v577 = vpop.f32.mrb[0].mxu0
  %v578 = vadd.f32 %v359, %v577
  %v579 = vpop.f32.mrb[0].mxu0
  %580 = vmatprep.mubr.f32.mxu0 %v257
  %581 = vmatmul.mubr.f32.gmra.mrb[0].mxu0 %v256
  %v582 = vpop.f32.mrb[0].mxu0
  %v583 = vadd.f32 %v359, %v582
  %v584 = vpop.f32.mrb[0].mxu0
  %585 = vmatprep.mubr.f32.mxu0 %v259
  %586 = vmatmul.mubr.f32.gmra.mrb[0].mxu0 %v258
  %v587 = vpop.f32.mrb[0].mxu0
  %v588 = vadd.f32 %v359, %v587
  %v589 = vpop.f32.mrb[0].mxu0
  %590 = vmatprep.mubr.f32.mxu0 %v261
  %591 = vmatmul.mubr.f32.gmra.mrb[0].mxu0 %v260
  %v592 = vpop.f32.mrb[0].mxu0
  %v593 = vadd.f32 %v359, %v592
  %v594 = vpop.f32.mrb[0].mxu0
  %595 = vmatprep.mubr.f32.mxu0 %v263
  %596 = vmatmul.mubr.f32.gmra.mrb[0].mxu0 %v262
  %v597 = vpop.f32.mrb[0].mxu0
  %v598 = vadd.f32 %v359, %v597
  %v599 = vpop.f32.mrb[0].mxu0
  %600 = vmatprep.mubr.f32.mxu0 %v265
  %601 = vmatmul.mubr.f32.gmra.mrb[0].mxu0 %v264
  %v602 = vpop.f32.mrb[0].mxu0
  %v603 = vadd.f32 %v359, %v602
  %v604 = vpop.f32.mrb[0].mxu0
  %605 = vmatprep.mubr.f32.mxu0 %v267
  %606 = vmatmul.mubr.f32.gmra.mrb[0].mxu0 %v266
  %v607 = vpop.f32.mrb[0].mxu0
  %v608 = vadd.f32 %v359, %v607
  %v609 = vpop.f32.mrb[0].mxu0
  %610 = vmatprep.mubr.f32.mxu0 %v269
  %611 = vmatmul.mubr.f32.gmra.mrb[0].mxu0 %v268
  %v612 = vpop.f32.mrb[0].mxu0
  %v613 = vadd.f32 %v359, %v612
  %v614 = vpop.f32.mrb[0].mxu0
  %615 = vmatprep.mubr.f32.mxu0 %v271
  %616 = vmatmul.mubr.f32.gmra.mrb[0].mxu0 %v270
  %v617 = vpop.f32.mrb[0].mxu0
  %v618 = vadd.f32 %v359, %v617
  %v619 = vpop.f32.mrb[0].mxu0
  %620 = vmatprep.mubr.f32.mxu0 %v273
  %621 = vmatmul.mubr.f32.gmra.mrb[0].mxu0 %v272
  %v622 = vpop.f32.mrb[0].mxu0
  %v623 = vadd.f32 %v359, %v622
  %v624 = vpop.f32.mrb[0].mxu0
  %625 = vmatprep.mubr.f32.mxu0 %v275
  %626 = vmatmul.mubr.f32.gmra.mrb[0].mxu0 %v274
  %v627 = vpop.f32.mrb[0].mxu0
  %v628 = vadd.f32 %v359, %v627
  %v629 = vpop.f32.mrb[0].mxu0
  %630 = vmatprep.mubr.f32.mxu0 %v277
  %631 = vmatmul.mubr.f32.gmra.mrb[0].mxu0 %v276
  %v632 = vpop.f32.mrb[0].mxu0
  %v633 = vadd.f32 %v359, %v632
  %v634 = vpop.f32.mrb[0].mxu0
  %635 = vmatprep.mubr.f32.mxu0 %v279
  %636 = vmatmul.mubr.f32.gmra.mrb[0].mxu0 %v278
  %v637 = vpop.f32.mrb[0].mxu0
  %v638 = vadd.f32 %v359, %v637
  %v639 = vpop.f32.mrb[0].mxu0
  %640 = vmatprep.mubr.f32.mxu0 %v281
  %641 = vmatmul.mubr.f32.gmra.mrb[0].mxu0 %v280
  %v642 = vpop.f32.mrb[0].mxu0
  %v643 = vadd.f32 %v359, %v642
  %v644 = vpop.f32.mrb[0].mxu0
  %645 = vmatprep.mubr.f32.mxu0 %v283
  %646 = vmatmul.mubr.f32.gmra.mrb[0].mxu0 %v282
  %v647 = vpop.f32.mrb[0].mxu0
  %v648 = vadd.f32 %v359, %v647
  %v649 = vpop.f32.mrb[0].mxu0
  %650 = vmatprep.mubr.f32.mxu0 %v285
  %651 = vmatmul.mubr.f32.gmra.mrb[0].mxu0 %v284
  %v652 = vpop.f32.mrb[0].mxu0
  %v653 = vadd.f32 %v359, %v652
  %v654 = vpop.f32.mrb[0].mxu0
  %655 = vmatprep.mubr.f32.mxu0 %v287
  %656 = vmatmul.mubr.f32.gmra.mrb[0].mxu0 %v286
  %v657 = vpop.f32.mrb[0].mxu0
  %v658 = vadd.f32 %v359, %v657
  %v659 = vpop.f32.mrb[0].mxu0
  %660 = vmatprep.mubr.f32.mxu0 %v289
  %661 = vmatmul.mubr.f32.gmra.mrb[0].mxu0 %v288
  %v662 = vpop.f32.mrb[0].mxu0
  %v663 = vadd.f32 %v359, %v662
  %v664 = vpop.f32.mrb[0].mxu0
  %665 = vmatprep.mubr.f32.mxu0 %v291
  %666 = vmatmul.mubr.f32.gmra.mrb[0].mxu0 %v290
  %v667 = vpop.f32.mrb[0].mxu0
  %v668 = vadd.f32 %v359, %v667
  %v669 = vpop.f32.mrb[0].mxu0
  %670 = vmatprep.mubr.f32.mxu0 %v293
  %671 = vmatmul.mubr.f32.gmra.mrb[0].mxu0 %v292
  %v672 = vpop.f32.mrb[0].mxu0
  %v673 = vadd.f32 %v359, %v672
  %v674 = vpop.f32.mrb[0].mxu0
  %675 = vmatprep.mubr.f32.mxu0 %v295
  %676 = vmatmul.mubr.f32.gmra.mrb[0].mxu0 %v294
  %v677 = vpop.f32.mrb[0].mxu0
  %v678 = vadd.f32 %v359, %v677
  %v679 = vpop.f32.mrb[0].mxu0
  %680 = vmatprep.mubr.f32.mxu0 %v297
  %681 = vmatmul.mubr.f32.gmra.mrb[0].mxu0 %v296
  %v682 = vpop.f32.mrb[0].mxu0
  %v683 = vadd.f32 %v359, %v682
  %v684 = vpop.f32.mrb[0].mxu0
  %685 = vmatprep.mubr.f32.mxu0 %v299
  %686 = vmatmul.mubr.f32.gmra.mrb[0].mxu0 %v298
  %v687 = vpop.f32.mrb[0].mxu0
  %v688 = vadd.f32 %v359, %v687
  %v689 = vpop.f32.mrb[0].mxu0
  %690 = vmatprep.mubr.f32.mxu0 %v301
  %691 = vmatmul.mubr.f32.gmra.mrb[0].mxu0 %v300
  %v692 = vpop.f32.mrb[0].mxu0
  %v693 = vadd.f32 %v359, %v692
  %v694 = vpop.f32.mrb[0].mxu0
  %695 = vmatprep.mubr.f32.mxu0 %v303
  %696 = vmatmul.mubr.f32.gmra.mrb[0].mxu0 %v302
  %v697 = vpop.f32.mrb[0].mxu0
  %v698 = vadd.f32 %v359, %v697
  %v699 = vpop.f32.mrb[0].mxu0
  %700 = vmatprep.mubr.f32.mxu0 %v305
  %701 = vmatmul.mubr.f32.gmra.mrb[0].mxu0 %v304
  %v702 = vpop.f32.mrb[0].mxu0
  %v703 = vadd.f32 %v359, %v702
  %v704 = vpop.f32.mrb[0].mxu0
  %705 = vmatprep.mubr.f32.mxu0 %v307
  %706 = vmatmul.mubr.f32.gmra.mrb[0].mxu0 %v306
  %v707 = vpop.f32.mrb[0].mxu0
  %v708 = vadd.f32 %v359, %v707
  %v709 = vpop.f32.mrb[0].mxu0
  %710 = vmatprep.mubr.f32.mxu0 %v309
  %711 = vmatmul.mubr.f32.gmra.mrb[0].mxu0 %v308
  %v712 = vpop.f32.mrb[0].mxu0
  %v713 = vadd.f32 %v359, %v712
  %v714 = vpop.f32.mrb[0].mxu0
  %715 = vmatprep.mubr.f32.mxu0 %v311
  %716 = vmatmul.mubr.f32.gmra.mrb[0].mxu0 %v310
  %v717 = vpop.f32.mrb[0].mxu0
  %v718 = vadd.f32 %v359, %v717
  %v719 = vpop.f32.mrb[0].mxu0
  %720 = vmatprep.mubr.f32.mxu0 %v313
  %721 = vmatmul.mubr.f32.gmra.mrb[0].mxu0 %v312
  %v722 = vpop.f32.mrb[0].mxu0
  %v723 = vadd.f32 %v359, %v722
  %v724 = vpop.f32.mrb[0].mxu0
  %725 = vmatprep.mubr.f32.mxu0 %v315
  %726 = vmatmul.mubr.f32.gmra.mrb[0].mxu0 %v314
  %v727 = vpop.f32.mrb[0].mxu0
  %v728 = vadd.f32 %v359, %v727
  %v729 = vpop.f32.mrb[0].mxu0
  %730 = vmatprep.mubr.f32.mxu0 %v317
  %731 = vmatmul.mubr.f32.gmra.mrb[0].mxu0 %v316
  %v732 = vpop.f32.mrb[0].mxu0
  %v733 = vadd.f32 %v359, %v732
  %v734 = vpop.f32.mrb[0].mxu0
  %735 = vmatprep.mubr.f32.mxu0 %v319
  %736 = vmatmul.mubr.f32.gmra.mrb[0].mxu0 %v318
  %v737 = vpop.f32.mrb[0].mxu0
  %v738 = vadd.f32 %v359, %v737
  %v739 = vpop.f32.mrb[0].mxu0
  %740 = vmatprep.mubr.f32.mxu0 %v321
  %741 = vmatmul.mubr.f32.gmra.mrb[0].mxu0 %v320
  %v742 = vpop.f32.mrb[0].mxu0
  %v743 = vadd.f32 %v359, %v742
  %v744 = vpop.f32.mrb[0].mxu0
  %745 = vdwg.mxu0
  %v746 = vmax.f32 %v428, 0.0
  %v747 = vmax.f32 %v433, 0.0
  %v748 = vmax.f32 %v438, 0.0
  %v749 = vmax.f32 %v443, 0.0
  %v750 = vmax.f32 %v448, 0.0
  %v751 = vmax.f32 %v453, 0.0
  %v752 = vmax.f32 %v458, 0.0
  %v753 = vmax.f32 %v463, 0.0
  %v754 = vmax.f32 %v468, 0.0
  %v755 = vmax.f32 %v473, 0.0
  %v756 = vmax.f32 %v478, 0.0
  %v757 = vmax.f32 %v483, 0.0
  %v758 = vmax.f32 %v488, 0.0
  %v759 = vmax.f32 %v493, 0.0
  %v760 = vmax.f32 %v498, 0.0
  %v761 = vmax.f32 %v503, 0.0
  %v762 = vmax.f32 %v508, 0.0
  %v763 = vmax.f32 %v513, 0.0
  %v764 = vmax.f32 %v518, 0.0
  %v765 = vmax.f32 %v523, 0.0
  %v766 = vmax.f32 %v528, 0.0
  %v767 = vmax.f32 %v533, 0.0
  %v768 = vmax.f32 %v538, 0.0
  %v769 = vmax.f32 %v543, 0.0
  %v770 = vmax.f32 %v548, 0.0
  %v771 = vmax.f32 %v553, 0.0
  %v772 = vmax.f32 %v558, 0.0
  %v773 = vmax.f32 %v563, 0.0
  %v774 = vmax.f32 %v568, 0.0
  %v775 = vmax.f32 %v573, 0.0
  %v776 = vmax.f32 %v578, 0.0
  %v777 = vmax.f32 %v583, 0.0
  %v778 = vmax.f32 %v588, 0.0
  %v779 = vmax.f32 %v593, 0.0
  %v780 = vmax.f32 %v598, 0.0
  %v781 = vmax.f32 %v603, 0.0
  %v782 = vmax.f32 %v608, 0.0
  %v783 = vmax.f32 %v613, 0.0
  %v784 = vmax.f32 %v618, 0.0
  %v785 = vmax.f32 %v623, 0.0
  %v786 = vmax.f32 %v628, 0.0
  %v787 = vmax.f32 %v633, 0.0
  %v788 = vmax.f32 %v638, 0.0
  %v789 = vmax.f32 %v643, 0.0
  %v790 = vmax.f32 %v648, 0.0
  %v791 = vmax.f32 %v653, 0.0
  %v792 = vmax.f32 %v658, 0.0
  %v793 = vmax.f32 %v663, 0.0
  %v794 = vmax.f32 %v668, 0.0
  %v795 = vmax.f32 %v673, 0.0
  %v796 = vmax.f32 %v678, 0.0
  %v797 = vmax.f32 %v683, 0.0
  %v798 = vmax.f32 %v688, 0.0
  %v799 = vmax.f32 %v693, 0.0
  %v800 = vmax.f32 %v698, 0.0
  %v801 = vmax.f32 %v703, 0.0
  %v802 = vmax.f32 %v708, 0.0
  %v803 = vmax.f32 %v713, 0.0
  %v804 = vmax.f32 %v718, 0.0
  %v805 = vmax.f32 %v723, 0.0
  %v806 = vmax.f32 %v728, 0.0
  %v807 = vmax.f32 %v733, 0.0
  %v808 = vmax.f32 %v738, 0.0
  %v809 = vmax.f32 %v743, 0.0
  %vm810 = vcmask 261120
  %811 = vst.msk [vmem:[#allocation2] sm:$0xff] %vm810, %v746
  %812 = vst.msk [vmem:[#allocation2 + $0x8] sm:$0xff] %vm810, %v747
  %813 = vst.msk [vmem:[#allocation2 + $0x10] sm:$0xff] %vm810, %v748
  %814 = vst.msk [vmem:[#allocation2 + $0x18] sm:$0xff] %vm810, %v749
  %815 = vst.msk [vmem:[#allocation2 + $0x20] sm:$0xff] %vm810, %v750
  %816 = vst.msk [vmem:[#allocation2 + $0x28] sm:$0xff] %vm810, %v751
  %817 = vst.msk [vmem:[#allocation2 + $0x30] sm:$0xff] %vm810, %v752
  %818 = vst.msk [vmem:[#allocation2 + $0x38] sm:$0xff] %vm810, %v753
  %819 = vst.msk [vmem:[#allocation2 + $0x40] sm:$0xff] %vm810, %v754
  %820 = vst.msk [vmem:[#allocation2 + $0x48] sm:$0xff] %vm810, %v755
  %821 = vst.msk [vmem:[#allocation2 + $0x50] sm:$0xff] %vm810, %v756
  %822 = vst.msk [vmem:[#allocation2 + $0x58] sm:$0xff] %vm810, %v757
  %823 = vst.msk [vmem:[#allocation2 + $0x60] sm:$0xff] %vm810, %v758
  %824 = vst.msk [vmem:[#allocation2 + $0x68] sm:$0xff] %vm810, %v759
  %825 = vst.msk [vmem:[#allocation2 + $0x70] sm:$0xff] %vm810, %v760
  %826 = vst.msk [vmem:[#allocation2 + $0x78] sm:$0xff] %vm810, %v761
  %827 = vst.msk [vmem:[#allocation2 + $0x80] sm:$0xff] %vm810, %v762
  %828 = vst.msk [vmem:[#allocation2 + $0x88] sm:$0xff] %vm810, %v763
  %829 = vst.msk [vmem:[#allocation2 + $0x90] sm:$0xff] %vm810, %v764
  %830 = vst.msk [vmem:[#allocation2 + $0x98] sm:$0xff] %vm810, %v765
  %831 = vst.msk [vmem:[#allocation2 + $0xa0] sm:$0xff] %vm810, %v766
  %832 = vst.msk [vmem:[#allocation2 + $0xa8] sm:$0xff] %vm810, %v767
  %833 = vst.msk [vmem:[#allocation2 + $0xb0] sm:$0xff] %vm810, %v768
  %834 = vst.msk [vmem:[#allocation2 + $0xb8] sm:$0xff] %vm810, %v769
  %835 = vst.msk [vmem:[#allocation2 + $0xc0] sm:$0xff] %vm810, %v770
  %836 = vst.msk [vmem:[#allocation2 + $0xc8] sm:$0xff] %vm810, %v771
  %837 = vst.msk [vmem:[#allocation2 + $0xd0] sm:$0xff] %vm810, %v772
  %838 = vst.msk [vmem:[#allocation2 + $0xd8] sm:$0xff] %vm810, %v773
  %839 = vst.msk [vmem:[#allocation2 + $0xe0] sm:$0xff] %vm810, %v774
  %840 = vst.msk [vmem:[#allocation2 + $0xe8] sm:$0xff] %vm810, %v775
  %841 = vst.msk [vmem:[#allocation2 + $0xf0] sm:$0xff] %vm810, %v776
  %842 = vst.msk [vmem:[#allocation2 + $0xf8] sm:$0xff] %vm810, %v777
  %843 = vst.msk [vmem:[#allocation2 + $0x100] sm:$0xff] %vm810, %v778
  %844 = vst.msk [vmem:[#allocation2 + $0x108] sm:$0xff] %vm810, %v779
  %845 = vst.msk [vmem:[#allocation2 + $0x110] sm:$0xff] %vm810, %v780
  %846 = vst.msk [vmem:[#allocation2 + $0x118] sm:$0xff] %vm810, %v781
  %847 = vst.msk [vmem:[#allocation2 + $0x120] sm:$0xff] %vm810, %v782
  %848 = vst.msk [vmem:[#allocation2 + $0x128] sm:$0xff] %vm810, %v783
  %849 = vst.msk [vmem:[#allocation2 + $0x130] sm:$0xff] %vm810, %v784
  %850 = vst.msk [vmem:[#allocation2 + $0x138] sm:$0xff] %vm810, %v785
  %851 = vst.msk [vmem:[#allocation2 + $0x140] sm:$0xff] %vm810, %v786
  %852 = vst.msk [vmem:[#allocation2 + $0x148] sm:$0xff] %vm810, %v787
  %853 = vst.msk [vmem:[#allocation2 + $0x150] sm:$0xff] %vm810, %v788
  %854 = vst.msk [vmem:[#allocation2 + $0x158] sm:$0xff] %vm810, %v789
  %855 = vst.msk [vmem:[#allocation2 + $0x160] sm:$0xff] %vm810, %v790
  %856 = vst.msk [vmem:[#allocation2 + $0x168] sm:$0xff] %vm810, %v791
  %857 = vst.msk [vmem:[#allocation2 + $0x170] sm:$0xff] %vm810, %v792
  %858 = vst.msk [vmem:[#allocation2 + $0x178] sm:$0xff] %vm810, %v793
  %859 = vst.msk [vmem:[#allocation2 + $0x180] sm:$0xff] %vm810, %v794
  %860 = vst.msk [vmem:[#allocation2 + $0x188] sm:$0xff] %vm810, %v795
  %861 = vst.msk [vmem:[#allocation2 + $0x190] sm:$0xff] %vm810, %v796
  %862 = vst.msk [vmem:[#allocation2 + $0x198] sm:$0xff] %vm810, %v797
  %863 = vst.msk [vmem:[#allocation2 + $0x1a0] sm:$0xff] %vm810, %v798
  %864 = vst.msk [vmem:[#allocation2 + $0x1a8] sm:$0xff] %vm810, %v799
  %865 = vst.msk [vmem:[#allocation2 + $0x1b0] sm:$0xff] %vm810, %v800
  %866 = vst.msk [vmem:[#allocation2 + $0x1b8] sm:$0xff] %vm810, %v801
  %867 = vst.msk [vmem:[#allocation2 + $0x1c0] sm:$0xff] %vm810, %v802
  %868 = vst.msk [vmem:[#allocation2 + $0x1c8] sm:$0xff] %vm810, %v803
  %869 = vst.msk [vmem:[#allocation2 + $0x1d0] sm:$0xff] %vm810, %v804
  %870 = vst.msk [vmem:[#allocation2 + $0x1d8] sm:$0xff] %vm810, %v805
  %871 = vst.msk [vmem:[#allocation2 + $0x1e0] sm:$0xff] %vm810, %v806
  %872 = vst.msk [vmem:[#allocation2 + $0x1e8] sm:$0xff] %vm810, %v807
  %873 = vst.msk [vmem:[#allocation2 + $0x1f0] sm:$0xff] %vm810, %v808
  %874 = vst.msk [vmem:[#allocation2 + $0x1f8] sm:$0xff] %vm810, %v809
  %v875 = vld [vmem:[#allocation2] sm:$0xff]
  %876 = vst.msk [vmem:[#allocation3] sm:$0xff] %vm810, %v875
  %v877 = vld [vmem:[#allocation2 + $0x8] sm:$0xff]
  %878 = vst.msk [vmem:[#allocation3 + $0x8] sm:$0xff] %vm810, %v877
  %v879 = vld [vmem:[#allocation2 + $0x10] sm:$0xff]
  %880 = vst.msk [vmem:[#allocation3 + $0x10] sm:$0xff] %vm810, %v879
  %v881 = vld [vmem:[#allocation2 + $0x18] sm:$0xff]
  %882 = vst.msk [vmem:[#allocation3 + $0x18] sm:$0xff] %vm810, %v881
  %v883 = vld [vmem:[#allocation2 + $0x40] sm:$0xff]
  %884 = vst.msk [vmem:[#allocation3 + $0x20] sm:$0xff] %vm810, %v883
  %v885 = vld [vmem:[#allocation2 + $0x48] sm:$0xff]
  %886 = vst.msk [vmem:[#allocation3 + $0x28] sm:$0xff] %vm810, %v885
  %v887 = vld [vmem:[#allocation2 + $0x50] sm:$0xff]
  %888 = vst.msk [vmem:[#allocation3 + $0x30] sm:$0xff] %vm810, %v887
  %v889 = vld [vmem:[#allocation2 + $0x58] sm:$0xff]
  %890 = vst.msk [vmem:[#allocation3 + $0x38] sm:$0xff] %vm810, %v889
  %v891 = vld [vmem:[#allocation2 + $0x80] sm:$0xff]
  %892 = vst.msk [vmem:[#allocation3 + $0x40] sm:$0xff] %vm810, %v891
  %v893 = vld [vmem:[#allocation2 + $0x88] sm:$0xff]
  %894 = vst.msk [vmem:[#allocation3 + $0x48] sm:$0xff] %vm810, %v893
  %v895 = vld [vmem:[#allocation2 + $0x90] sm:$0xff]
  %896 = vst.msk [vmem:[#allocation3 + $0x50] sm:$0xff] %vm810, %v895
  %v897 = vld [vmem:[#allocation2 + $0x98] sm:$0xff]
  %898 = vst.msk [vmem:[#allocation3 + $0x58] sm:$0xff] %vm810, %v897
  %v899 = vld [vmem:[#allocation2 + $0xc0] sm:$0xff]
  %900 = vst.msk [vmem:[#allocation3 + $0x60] sm:$0xff] %vm810, %v899
  %v901 = vld [vmem:[#allocation2 + $0xc8] sm:$0xff]
  %902 = vst.msk [vmem:[#allocation3 + $0x68] sm:$0xff] %vm810, %v901
  %v903 = vld [vmem:[#allocation2 + $0xd0] sm:$0xff]
  %904 = vst.msk [vmem:[#allocation3 + $0x70] sm:$0xff] %vm810, %v903
  %v905 = vld [vmem:[#allocation2 + $0xd8] sm:$0xff]
  %906 = vst.msk [vmem:[#allocation3 + $0x78] sm:$0xff] %vm810, %v905
  %v907 = vld [vmem:[#allocation2 + $0x10] sm:$0xff]
  %908 = vst.msk [vmem:[#allocation3 + $0x80] sm:$0xff] %vm810, %v907
  %v909 = vld [vmem:[#allocation2 + $0x18] sm:$0xff]
  %910 = vst.msk [vmem:[#allocation3 + $0x88] sm:$0xff] %vm810, %v909
  %v911 = vld [vmem:[#allocation2 + $0x20] sm:$0xff]
  %912 = vst.msk [vmem:[#allocation3 + $0x90] sm:$0xff] %vm810, %v911
  %v913 = vld [vmem:[#allocation2 + $0x28] sm:$0xff]
  %914 = vst.msk [vmem:[#allocation3 + $0x98] sm:$0xff] %vm810, %v913
  %v915 = vld [vmem:[#allocation2 + $0x50] sm:$0xff]
  %916 = vst.msk [vmem:[#allocation3 + $0xa0] sm:$0xff] %vm810, %v915
  %v917 = vld [vmem:[#allocation2 + $0x58] sm:$0xff]
  %918 = vst.msk [vmem:[#allocation3 + $0xa8] sm:$0xff] %vm810, %v917
  %v919 = vld [vmem:[#allocation2 + $0x60] sm:$0xff]
  %920 = vst.msk [vmem:[#allocation3 + $0xb0] sm:$0xff] %vm810, %v919
  %v921 = vld [vmem:[#allocation2 + $0x68] sm:$0xff]
  %922 = vst.msk [vmem:[#allocation3 + $0xb8] sm:$0xff] %vm810, %v921
  %v923 = vld [vmem:[#allocation2 + $0x90] sm:$0xff]
  %924 = vst.msk [vmem:[#allocation3 + $0xc0] sm:$0xff] %vm810, %v923
  %v925 = vld [vmem:[#allocation2 + $0x98] sm:$0xff]
  %926 = vst.msk [vmem:[#allocation3 + $0xc8] sm:$0xff] %vm810, %v925
  %v927 = vld [vmem:[#allocation2 + $0xa0] sm:$0xff]
  %928 = vst.msk [vmem:[#allocation3 + $0xd0] sm:$0xff] %vm810, %v927
  %v929 = vld [vmem:[#allocation2 + $0xa8] sm:$0xff]
  %930 = vst.msk [vmem:[#allocation3 + $0xd8] sm:$0xff] %vm810, %v929
  %v931 = vld [vmem:[#allocation2 + $0xd0] sm:$0xff]
  %932 = vst.msk [vmem:[#allocation3 + $0xe0] sm:$0xff] %vm810, %v931
  %v933 = vld [vmem:[#allocation2 + $0xd8] sm:$0xff]
  %934 = vst.msk [vmem:[#allocation3 + $0xe8] sm:$0xff] %vm810, %v933
  %v935 = vld [vmem:[#allocation2 + $0xe0] sm:$0xff]
  %936 = vst.msk [vmem:[#allocation3 + $0xf0] sm:$0xff] %vm810, %v935
  %v937 = vld [vmem:[#allocation2 + $0xe8] sm:$0xff]
  %938 = vst.msk [vmem:[#allocation3 + $0xf8] sm:$0xff] %vm810, %v937
  %v939 = vld [vmem:[#allocation2 + $0x20] sm:$0xff]
  %940 = vst.msk [vmem:[#allocation3 + $0x100] sm:$0xff] %vm810, %v939
  %v941 = vld [vmem:[#allocation2 + $0x28] sm:$0xff]
  %942 = vst.msk [vmem:[#allocation3 + $0x108] sm:$0xff] %vm810, %v941
  %v943 = vld [vmem:[#allocation2 + $0x30] sm:$0xff]
  %944 = vst.msk [vmem:[#allocation3 + $0x110] sm:$0xff] %vm810, %v943
  %v945 = vld [vmem:[#allocation2 + $0x38] sm:$0xff]
  %946 = vst.msk [vmem:[#allocation3 + $0x118] sm:$0xff] %vm810, %v945
  %v947 = vld [vmem:[#allocation2 + $0x60] sm:$0xff]
  %948 = vst.msk [vmem:[#allocation3 + $0x120] sm:$0xff] %vm810, %v947
  %v949 = vld [vmem:[#allocation2 + $0x68] sm:$0xff]
  %950 = vst.msk [vmem:[#allocation3 + $0x128] sm:$0xff] %vm810, %v949
  %v951 = vld [vmem:[#allocation2 + $0x70] sm:$0xff]
  %952 = vst.msk [vmem:[#allocation3 + $0x130] sm:$0xff] %vm810, %v951
  %v953 = vld [vmem:[#allocation2 + $0x78] sm:$0xff]
  %954 = vst.msk [vmem:[#allocation3 + $0x138] sm:$0xff] %vm810, %v953
  %v955 = vld [vmem:[#allocation2 + $0xa0] sm:$0xff]
  %956 = vst.msk [vmem:[#allocation3 + $0x140] sm:$0xff] %vm810, %v955
  %v957 = vld [vmem:[#allocation2 + $0xa8] sm:$0xff]
  %958 = vst.msk [vmem:[#allocation3 + $0x148] sm:$0xff] %vm810, %v957
  %v959 = vld [vmem:[#allocation2 + $0xb0] sm:$0xff]
  %960 = vst.msk [vmem:[#allocation3 + $0x150] sm:$0xff] %vm810, %v959
  %v961 = vld [vmem:[#allocation2 + $0xb8] sm:$0xff]
  %962 = vst.msk [vmem:[#allocation3 + $0x158] sm:$0xff] %vm810, %v961
  %v963 = vld [vmem:[#allocation2 + $0xe0] sm:$0xff]
  %964 = vst.msk [vmem:[#allocation3 + $0x160] sm:$0xff] %vm810, %v963
  %v965 = vld [vmem:[#allocation2 + $0xe8] sm:$0xff]
  %966 = vst.msk [vmem:[#allocation3 + $0x168] sm:$0xff] %vm810, %v965
  %v967 = vld [vmem:[#allocation2 + $0xf0] sm:$0xff]
  %968 = vst.msk [vmem:[#allocation3 + $0x170] sm:$0xff] %vm810, %v967
  %v969 = vld [vmem:[#allocation2 + $0xf8] sm:$0xff]
  %970 = vst.msk [vmem:[#allocation3 + $0x178] sm:$0xff] %vm810, %v969
  %v971 = vld [vmem:[#allocation2 + $0x80] sm:$0xff]
  %972 = vst.msk [vmem:[#allocation3 + $0x180] sm:$0xff] %vm810, %v971
  %v973 = vld [vmem:[#allocation2 + $0x88] sm:$0xff]
  %974 = vst.msk [vmem:[#allocation3 + $0x188] sm:$0xff] %vm810, %v973
  %v975 = vld [vmem:[#allocation2 + $0x90] sm:$0xff]
  %976 = vst.msk [vmem:[#allocation3 + $0x190] sm:$0xff] %vm810, %v975
  %v977 = vld [vmem:[#allocation2 + $0x98] sm:$0xff]
  %978 = vst.msk [vmem:[#allocation3 + $0x198] sm:$0xff] %vm810, %v977
  %v979 = vld [vmem:[#allocation2 + $0xc0] sm:$0xff]
  %980 = vst.msk [vmem:[#allocation3 + $0x1a0] sm:$0xff] %vm810, %v979
  %v981 = vld [vmem:[#allocation2 + $0xc8] sm:$0xff]
  %982 = vst.msk [vmem:[#allocation3 + $0x1a8] sm:$0xff] %vm810, %v981
  %v983 = vld [vmem:[#allocation2 + $0xd0] sm:$0xff]
  %984 = vst.msk [vmem:[#allocation3 + $0x1b0] sm:$0xff] %vm810, %v983
  %v985 = vld [vmem:[#allocation2 + $0xd8] sm:$0xff]
  %986 = vst.msk [vmem:[#allocation3 + $0x1b8] sm:$0xff] %vm810, %v985
  %v987 = vld [vmem:[#allocation2 + $0x100] sm:$0xff]
  %988 = vst.msk [vmem:[#allocation3 + $0x1c0] sm:$0xff] %vm810, %v987
  %v989 = vld [vmem:[#allocation2 + $0x108] sm:$0xff]
  %990 = vst.msk [vmem:[#allocation3 + $0x1c8] sm:$0xff] %vm810, %v989
  %v991 = vld [vmem:[#allocation2 + $0x110] sm:$0xff]
  %992 = vst.msk [vmem:[#allocation3 + $0x1d0] sm:$0xff] %vm810, %v991
  %v993 = vld [vmem:[#allocation2 + $0x118] sm:$0xff]
  %994 = vst.msk [vmem:[#allocation3 + $0x1d8] sm:$0xff] %vm810, %v993
  %v995 = vld [vmem:[#allocation2 + $0x140] sm:$0xff]
  %996 = vst.msk [vmem:[#allocation3 + $0x1e0] sm:$0xff] %vm810, %v995
  %v997 = vld [vmem:[#allocation2 + $0x148] sm:$0xff]
  %998 = vst.msk [vmem:[#allocation3 + $0x1e8] sm:$0xff] %vm810, %v997
  %v999 = vld [vmem:[#allocation2 + $0x150] sm:$0xff]
  %1000 = vst.msk [vmem:[#allocation3 + $0x1f0] sm:$0xff] %vm810, %v999
  %v1001 = vld [vmem:[#allocation2 + $0x158] sm:$0xff]
  %1002 = vst.msk [vmem:[#allocation3 + $0x1f8] sm:$0xff] %vm810, %v1001
  %v1003 = vld [vmem:[#allocation2 + $0x90] sm:$0xff]
  %1004 = vst.msk [vmem:[#allocation3 + $0x200] sm:$0xff] %vm810, %v1003
  %v1005 = vld [vmem:[#allocation2 + $0x98] sm:$0xff]
  %1006 = vst.msk [vmem:[#allocation3 + $0x208] sm:$0xff] %vm810, %v1005
  %v1007 = vld [vmem:[#allocation2 + $0xa0] sm:$0xff]
  %1008 = vst.msk [vmem:[#allocation3 + $0x210] sm:$0xff] %vm810, %v1007
  %v1009 = vld [vmem:[#allocation2 + $0xa8] sm:$0xff]
  %1010 = vst.msk [vmem:[#allocation3 + $0x218] sm:$0xff] %vm810, %v1009
  %v1011 = vld [vmem:[#allocation2 + $0xd0] sm:$0xff]
  %1012 = vst.msk [vmem:[#allocation3 + $0x220] sm:$0xff] %vm810, %v1011
  %v1013 = vld [vmem:[#allocation2 + $0xd8] sm:$0xff]
  %1014 = vst.msk [vmem:[#allocation3 + $0x228] sm:$0xff] %vm810, %v1013
  %v1015 = vld [vmem:[#allocation2 + $0xe0] sm:$0xff]
  %1016 = vst.msk [vmem:[#allocation3 + $0x230] sm:$0xff] %vm810, %v1015
  %v1017 = vld [vmem:[#allocation2 + $0xe8] sm:$0xff]
  %1018 = vst.msk [vmem:[#allocation3 + $0x238] sm:$0xff] %vm810, %v1017
  %v1019 = vld [vmem:[#allocation2 + $0x110] sm:$0xff]
  %1020 = vst.msk [vmem:[#allocation3 + $0x240] sm:$0xff] %vm810, %v1019
  %v1021 = vld [vmem:[#allocation2 + $0x118] sm:$0xff]
  %1022 = vst.msk [vmem:[#allocation3 + $0x248] sm:$0xff] %vm810, %v1021
  %v1023 = vld [vmem:[#allocation2 + $0x120] sm:$0xff]
  %1024 = vst.msk [vmem:[#allocation3 + $0x250] sm:$0xff] %vm810, %v1023
  %v1025 = vld [vmem:[#allocation2 + $0x128] sm:$0xff]
  %1026 = vst.msk [vmem:[#allocation3 + $0x258] sm:$0xff] %vm810, %v1025
  %v1027 = vld [vmem:[#allocation2 + $0x150] sm:$0xff]
  %1028 = vst.msk [vmem:[#allocation3 + $0x260] sm:$0xff] %vm810, %v1027
  %v1029 = vld [vmem:[#allocation2 + $0x158] sm:$0xff]
  %1030 = vst.msk [vmem:[#allocation3 + $0x268] sm:$0xff] %vm810, %v1029
  %v1031 = vld [vmem:[#allocation2 + $0x160] sm:$0xff]
  %1032 = vst.msk [vmem:[#allocation3 + $0x270] sm:$0xff] %vm810, %v1031
  %v1033 = vld [vmem:[#allocation2 + $0x168] sm:$0xff]
  %1034 = vst.msk [vmem:[#allocation3 + $0x278] sm:$0xff] %vm810, %v1033
  %v1035 = vld [vmem:[#allocation2 + $0xa0] sm:$0xff]
  %1036 = vst.msk [vmem:[#allocation3 + $0x280] sm:$0xff] %vm810, %v1035
  %v1037 = vld [vmem:[#allocation2 + $0xa8] sm:$0xff]
  %1038 = vst.msk [vmem:[#allocation3 + $0x288] sm:$0xff] %vm810, %v1037
  %v1039 = vld [vmem:[#allocation2 + $0xb0] sm:$0xff]
  %1040 = vst.msk [vmem:[#allocation3 + $0x290] sm:$0xff] %vm810, %v1039
  %v1041 = vld [vmem:[#allocation2 + $0xb8] sm:$0xff]
  %1042 = vst.msk [vmem:[#allocation3 + $0x298] sm:$0xff] %vm810, %v1041
  %v1043 = vld [vmem:[#allocation2 + $0xe0] sm:$0xff]
  %1044 = vst.msk [vmem:[#allocation3 + $0x2a0] sm:$0xff] %vm810, %v1043
  %v1045 = vld [vmem:[#allocation2 + $0xe8] sm:$0xff]
  %1046 = vst.msk [vmem:[#allocation3 + $0x2a8] sm:$0xff] %vm810, %v1045
  %v1047 = vld [vmem:[#allocation2 + $0xf0] sm:$0xff]
  %1048 = vst.msk [vmem:[#allocation3 + $0x2b0] sm:$0xff] %vm810, %v1047
  %v1049 = vld [vmem:[#allocation2 + $0xf8] sm:$0xff]
  %1050 = vst.msk [vmem:[#allocation3 + $0x2b8] sm:$0xff] %vm810, %v1049
  %v1051 = vld [vmem:[#allocation2 + $0x120] sm:$0xff]
  %1052 = vst.msk [vmem:[#allocation3 + $0x2c0] sm:$0xff] %vm810, %v1051
  %v1053 = vld [vmem:[#allocation2 + $0x128] sm:$0xff]
  %1054 = vst.msk [vmem:[#allocation3 + $0x2c8] sm:$0xff] %vm810, %v1053
  %v1055 = vld [vmem:[#allocation2 + $0x130] sm:$0xff]
  %1056 = vst.msk [vmem:[#allocation3 + $0x2d0] sm:$0xff] %vm810, %v1055
  %v1057 = vld [vmem:[#allocation2 + $0x138] sm:$0xff]
  %1058 = vst.msk [vmem:[#allocation3 + $0x2d8] sm:$0xff] %vm810, %v1057
  %v1059 = vld [vmem:[#allocation2 + $0x160] sm:$0xff]
  %1060 = vst.msk [vmem:[#allocation3 + $0x2e0] sm:$0xff] %vm810, %v1059
  %v1061 = vld [vmem:[#allocation2 + $0x168] sm:$0xff]
  %1062 = vst.msk [vmem:[#allocation3 + $0x2e8] sm:$0xff] %vm810, %v1061
  %v1063 = vld [vmem:[#allocation2 + $0x170] sm:$0xff]
  %1064 = vst.msk [vmem:[#allocation3 + $0x2f0] sm:$0xff] %vm810, %v1063
  %v1065 = vld [vmem:[#allocation2 + $0x178] sm:$0xff]
  %1066 = vst.msk [vmem:[#allocation3 + $0x2f8] sm:$0xff] %vm810, %v1065
  %v1067 = vld [vmem:[#allocation2 + $0x100] sm:$0xff]
  %1068 = vst.msk [vmem:[#allocation3 + $0x300] sm:$0xff] %vm810, %v1067
  %v1069 = vld [vmem:[#allocation2 + $0x108] sm:$0xff]
  %1070 = vst.msk [vmem:[#allocation3 + $0x308] sm:$0xff] %vm810, %v1069
  %v1071 = vld [vmem:[#allocation2 + $0x110] sm:$0xff]
  %1072 = vst.msk [vmem:[#allocation3 + $0x310] sm:$0xff] %vm810, %v1071
  %v1073 = vld [vmem:[#allocation2 + $0x118] sm:$0xff]
  %1074 = vst.msk [vmem:[#allocation3 + $0x318] sm:$0xff] %vm810, %v1073
  %v1075 = vld [vmem:[#allocation2 + $0x140] sm:$0xff]
  %1076 = vst.msk [vmem:[#allocation3 + $0x320] sm:$0xff] %vm810, %v1075
  %v1077 = vld [vmem:[#allocation2 + $0x148] sm:$0xff]
  %1078 = vst.msk [vmem:[#allocation3 + $0x328] sm:$0xff] %vm810, %v1077
  %v1079 = vld [vmem:[#allocation2 + $0x150] sm:$0xff]
  %1080 = vst.msk [vmem:[#allocation3 + $0x330] sm:$0xff] %vm810, %v1079
  %v1081 = vld [vmem:[#allocation2 + $0x158] sm:$0xff]
  %1082 = vst.msk [vmem:[#allocation3 + $0x338] sm:$0xff] %vm810, %v1081
  %v1083 = vld [vmem:[#allocation2 + $0x180] sm:$0xff]
  %1084 = vst.msk [vmem:[#allocation3 + $0x340] sm:$0xff] %vm810, %v1083
  %v1085 = vld [vmem:[#allocation2 + $0x188] sm:$0xff]
  %1086 = vst.msk [vmem:[#allocation3 + $0x348] sm:$0xff] %vm810, %v1085
  %v1087 = vld [vmem:[#allocation2 + $0x190] sm:$0xff]
  %1088 = vst.msk [vmem:[#allocation3 + $0x350] sm:$0xff] %vm810, %v1087
  %v1089 = vld [vmem:[#allocation2 + $0x198] sm:$0xff]
  %1090 = vst.msk [vmem:[#allocation3 + $0x358] sm:$0xff] %vm810, %v1089
  %v1091 = vld [vmem:[#allocation2 + $0x1c0] sm:$0xff]
  %1092 = vst.msk [vmem:[#allocation3 + $0x360] sm:$0xff] %vm810, %v1091
  %v1093 = vld [vmem:[#allocation2 + $0x1c8] sm:$0xff]
  %1094 = vst.msk [vmem:[#allocation3 + $0x368] sm:$0xff] %vm810, %v1093
  %v1095 = vld [vmem:[#allocation2 + $0x1d0] sm:$0xff]
  %1096 = vst.msk [vmem:[#allocation3 + $0x370] sm:$0xff] %vm810, %v1095
  %v1097 = vld [vmem:[#allocation2 + $0x1d8] sm:$0xff]
  %1098 = vst.msk [vmem:[#allocation3 + $0x378] sm:$0xff] %vm810, %v1097
  %v1099 = vld [vmem:[#allocation2 + $0x110] sm:$0xff]
  %1100 = vst.msk [vmem:[#allocation3 + $0x380] sm:$0xff] %vm810, %v1099
  %v1101 = vld [vmem:[#allocation2 + $0x118] sm:$0xff]
  %1102 = vst.msk [vmem:[#allocation3 + $0x388] sm:$0xff] %vm810, %v1101
  %v1103 = vld [vmem:[#allocation2 + $0x120] sm:$0xff]
  %1104 = vst.msk [vmem:[#allocation3 + $0x390] sm:$0xff] %vm810, %v1103
  %v1105 = vld [vmem:[#allocation2 + $0x128] sm:$0xff]
  %1106 = vst.msk [vmem:[#allocation3 + $0x398] sm:$0xff] %vm810, %v1105
  %v1107 = vld [vmem:[#allocation2 + $0x150] sm:$0xff]
  %1108 = vst.msk [vmem:[#allocation3 + $0x3a0] sm:$0xff] %vm810, %v1107
  %v1109 = vld [vmem:[#allocation2 + $0x158] sm:$0xff]
  %1110 = vst.msk [vmem:[#allocation3 + $0x3a8] sm:$0xff] %vm810, %v1109
  %v1111 = vld [vmem:[#allocation2 + $0x160] sm:$0xff]
  %1112 = vst.msk [vmem:[#allocation3 + $0x3b0] sm:$0xff] %vm810, %v1111
  %v1113 = vld [vmem:[#allocation2 + $0x168] sm:$0xff]
  %1114 = vst.msk [vmem:[#allocation3 + $0x3b8] sm:$0xff] %vm810, %v1113
  %v1115 = vld [vmem:[#allocation2 + $0x190] sm:$0xff]
  %1116 = vst.msk [vmem:[#allocation3 + $0x3c0] sm:$0xff] %vm810, %v1115
  %v1117 = vld [vmem:[#allocation2 + $0x198] sm:$0xff]
  %1118 = vst.msk [vmem:[#allocation3 + $0x3c8] sm:$0xff] %vm810, %v1117
  %v1119 = vld [vmem:[#allocation2 + $0x1a0] sm:$0xff]
  %1120 = vst.msk [vmem:[#allocation3 + $0x3d0] sm:$0xff] %vm810, %v1119
  %v1121 = vld [vmem:[#allocation2 + $0x1a8] sm:$0xff]
  %1122 = vst.msk [vmem:[#allocation3 + $0x3d8] sm:$0xff] %vm810, %v1121
  %v1123 = vld [vmem:[#allocation2 + $0x1d0] sm:$0xff]
  %1124 = vst.msk [vmem:[#allocation3 + $0x3e0] sm:$0xff] %vm810, %v1123
  %v1125 = vld [vmem:[#allocation2 + $0x1d8] sm:$0xff]
  %1126 = vst.msk [vmem:[#allocation3 + $0x3e8] sm:$0xff] %vm810, %v1125
  %v1127 = vld [vmem:[#allocation2 + $0x1e0] sm:$0xff]
  %1128 = vst.msk [vmem:[#allocation3 + $0x3f0] sm:$0xff] %vm810, %v1127
  %v1129 = vld [vmem:[#allocation2 + $0x1e8] sm:$0xff]
  %1130 = vst.msk [vmem:[#allocation3 + $0x3f8] sm:$0xff] %vm810, %v1129
  %v1131 = vld [vmem:[#allocation2 + $0x120] sm:$0xff]
  %1132 = vst.msk [vmem:[#allocation3 + $0x400] sm:$0xff] %vm810, %v1131
  %v1133 = vld [vmem:[#allocation2 + $0x128] sm:$0xff]
  %1134 = vst.msk [vmem:[#allocation3 + $0x408] sm:$0xff] %vm810, %v1133
  %v1135 = vld [vmem:[#allocation2 + $0x130] sm:$0xff]
  %1136 = vst.msk [vmem:[#allocation3 + $0x410] sm:$0xff] %vm810, %v1135
  %v1137 = vld [vmem:[#allocation2 + $0x138] sm:$0xff]
  %1138 = vst.msk [vmem:[#allocation3 + $0x418] sm:$0xff] %vm810, %v1137
  %v1139 = vld [vmem:[#allocation2 + $0x160] sm:$0xff]
  %1140 = vst.msk [vmem:[#allocation3 + $0x420] sm:$0xff] %vm810, %v1139
  %v1141 = vld [vmem:[#allocation2 + $0x168] sm:$0xff]
  %1142 = vst.msk [vmem:[#allocation3 + $0x428] sm:$0xff] %vm810, %v1141
  %v1143 = vld [vmem:[#allocation2 + $0x170] sm:$0xff]
  %1144 = vst.msk [vmem:[#allocation3 + $0x430] sm:$0xff] %vm810, %v1143
  %v1145 = vld [vmem:[#allocation2 + $0x178] sm:$0xff]
  %1146 = vst.msk [vmem:[#allocation3 + $0x438] sm:$0xff] %vm810, %v1145
  %v1147 = vld [vmem:[#allocation2 + $0x1a0] sm:$0xff]
  %1148 = vst.msk [vmem:[#allocation3 + $0x440] sm:$0xff] %vm810, %v1147
  %v1149 = vld [vmem:[#allocation2 + $0x1a8] sm:$0xff]
  %1150 = vst.msk [vmem:[#allocation3 + $0x448] sm:$0xff] %vm810, %v1149
  %v1151 = vld [vmem:[#allocation2 + $0x1b0] sm:$0xff]
  %1152 = vst.msk [vmem:[#allocation3 + $0x450] sm:$0xff] %vm810, %v1151
  %v1153 = vld [vmem:[#allocation2 + $0x1b8] sm:$0xff]
  %1154 = vst.msk [vmem:[#allocation3 + $0x458] sm:$0xff] %vm810, %v1153
  %v1155 = vld [vmem:[#allocation2 + $0x1e0] sm:$0xff]
  %1156 = vst.msk [vmem:[#allocation3 + $0x460] sm:$0xff] %vm810, %v1155
  %v1157 = vld [vmem:[#allocation2 + $0x1e8] sm:$0xff]
  %1158 = vst.msk [vmem:[#allocation3 + $0x468] sm:$0xff] %vm810, %v1157
  %v1159 = vld [vmem:[#allocation2 + $0x1f0] sm:$0xff]
  %1160 = vst.msk [vmem:[#allocation3 + $0x470] sm:$0xff] %vm810, %v1159
  %v1161 = vld [vmem:[#allocation2 + $0x1f8] sm:$0xff]
  %1162 = vst.msk [vmem:[#allocation3 + $0x478] sm:$0xff] %vm810, %v1161
  %v1163 = vld [vmem:[#allocation3] sm:$0xff]
  %v1164 = vld [vmem:[#allocation3 + $0x8] sm:$0xff]
  %v1165 = vld [vmem:[#allocation3 + $0x10] sm:$0xff]
  %v1166 = vld [vmem:[#allocation3 + $0x18] sm:$0xff]
  %v1167 = vld [vmem:[#allocation3 + $0x20] sm:$0xff]
  %v1168 = vld [vmem:[#allocation3 + $0x28] sm:$0xff]
  %v1169 = vld [vmem:[#allocation3 + $0x30] sm:$0xff]
  %v1170 = vld [vmem:[#allocation3 + $0x38] sm:$0xff]
  %v1171 = vld [vmem:[#allocation3 + $0x40] sm:$0xff]
  %v1172 = vld [vmem:[#allocation3 + $0x48] sm:$0xff]
  %v1173 = vld [vmem:[#allocation3 + $0x50] sm:$0xff]
  %v1174 = vld [vmem:[#allocation3 + $0x58] sm:$0xff]
  %v1175 = vld [vmem:[#allocation3 + $0x60] sm:$0xff]
  %v1176 = vld [vmem:[#allocation3 + $0x68] sm:$0xff]
  %v1177 = vld [vmem:[#allocation3 + $0x70] sm:$0xff]
  %v1178 = vld [vmem:[#allocation3 + $0x78] sm:$0xff]
  %v1179 = vld [vmem:[#allocation3 + $0x80] sm:$0xff]
  %v1180 = vld [vmem:[#allocation3 + $0x88] sm:$0xff]
  %v1181 = vld [vmem:[#allocation3 + $0x90] sm:$0xff]
  %v1182 = vld [vmem:[#allocation3 + $0x98] sm:$0xff]
  %v1183 = vld [vmem:[#allocation3 + $0xa0] sm:$0xff]
  %v1184 = vld [vmem:[#allocation3 + $0xa8] sm:$0xff]
  %v1185 = vld [vmem:[#allocation3 + $0xb0] sm:$0xff]
  %v1186 = vld [vmem:[#allocation3 + $0xb8] sm:$0xff]
  %v1187 = vld [vmem:[#allocation3 + $0xc0] sm:$0xff]
  %v1188 = vld [vmem:[#allocation3 + $0xc8] sm:$0xff]
  %v1189 = vld [vmem:[#allocation3 + $0xd0] sm:$0xff]
  %v1190 = vld [vmem:[#allocation3 + $0xd8] sm:$0xff]
  %v1191 = vld [vmem:[#allocation3 + $0xe0] sm:$0xff]
  %v1192 = vld [vmem:[#allocation3 + $0xe8] sm:$0xff]
  %v1193 = vld [vmem:[#allocation3 + $0xf0] sm:$0xff]
  %v1194 = vld [vmem:[#allocation3 + $0xf8] sm:$0xff]
  %v1195 = vld [vmem:[#allocation3 + $0x100] sm:$0xff]
  %v1196 = vld [vmem:[#allocation3 + $0x108] sm:$0xff]
  %v1197 = vld [vmem:[#allocation3 + $0x110] sm:$0xff]
  %v1198 = vld [vmem:[#allocation3 + $0x118] sm:$0xff]
  %v1199 = vld [vmem:[#allocation3 + $0x120] sm:$0xff]
  %v1200 = vld [vmem:[#allocation3 + $0x128] sm:$0xff]
  %v1201 = vld [vmem:[#allocation3 + $0x130] sm:$0xff]
  %v1202 = vld [vmem:[#allocation3 + $0x138] sm:$0xff]
  %v1203 = vld [vmem:[#allocation3 + $0x140] sm:$0xff]
  %v1204 = vld [vmem:[#allocation3 + $0x148] sm:$0xff]
  %v1205 = vld [vmem:[#allocation3 + $0x150] sm:$0xff]
  %v1206 = vld [vmem:[#allocation3 + $0x158] sm:$0xff]
  %v1207 = vld [vmem:[#allocation3 + $0x160] sm:$0xff]
  %v1208 = vld [vmem:[#allocation3 + $0x168] sm:$0xff]
  %v1209 = vld [vmem:[#allocation3 + $0x170] sm:$0xff]
  %v1210 = vld [vmem:[#allocation3 + $0x178] sm:$0xff]
  %v1211 = vld [vmem:[#allocation3 + $0x180] sm:$0xff]
  %v1212 = vld [vmem:[#allocation3 + $0x188] sm:$0xff]
  %v1213 = vld [vmem:[#allocation3 + $0x190] sm:$0xff]
  %v1214 = vld [vmem:[#allocation3 + $0x198] sm:$0xff]
  %v1215 = vld [vmem:[#allocation3 + $0x1a0] sm:$0xff]
  %v1216 = vld [vmem:[#allocation3 + $0x1a8] sm:$0xff]
  %v1217 = vld [vmem:[#allocation3 + $0x1b0] sm:$0xff]
  %v1218 = vld [vmem:[#allocation3 + $0x1b8] sm:$0xff]
  %v1219 = vld [vmem:[#allocation3 + $0x1c0] sm:$0xff]
  %v1220 = vld [vmem:[#allocation3 + $0x1c8] sm:$0xff]
  %v1221 = vld [vmem:[#allocation3 + $0x1d0] sm:$0xff]
  %v1222 = vld [vmem:[#allocation3 + $0x1d8] sm:$0xff]
  %v1223 = vld [vmem:[#allocation3 + $0x1e0] sm:$0xff]
  %v1224 = vld [vmem:[#allocation3 + $0x1e8] sm:$0xff]
  %v1225 = vld [vmem:[#allocation3 + $0x1f0] sm:$0xff]
  %v1226 = vld [vmem:[#allocation3 + $0x1f8] sm:$0xff]
  %v1227 = vld [vmem:[#allocation3 + $0x200] sm:$0xff]
  %v1228 = vld [vmem:[#allocation3 + $0x208] sm:$0xff]
  %v1229 = vld [vmem:[#allocation3 + $0x210] sm:$0xff]
  %v1230 = vld [vmem:[#allocation3 + $0x218] sm:$0xff]
  %v1231 = vld [vmem:[#allocation3 + $0x220] sm:$0xff]
  %v1232 = vld [vmem:[#allocation3 + $0x228] sm:$0xff]
  %v1233 = vld [vmem:[#allocation3 + $0x230] sm:$0xff]
  %v1234 = vld [vmem:[#allocation3 + $0x238] sm:$0xff]
  %v1235 = vld [vmem:[#allocation3 + $0x240] sm:$0xff]
  %v1236 = vld [vmem:[#allocation3 + $0x248] sm:$0xff]
  %v1237 = vld [vmem:[#allocation3 + $0x250] sm:$0xff]
  %v1238 = vld [vmem:[#allocation3 + $0x258] sm:$0xff]
  %v1239 = vld [vmem:[#allocation3 + $0x260] sm:$0xff]
  %v1240 = vld [vmem:[#allocation3 + $0x268] sm:$0xff]
  %v1241 = vld [vmem:[#allocation3 + $0x270] sm:$0xff]
  %v1242 = vld [vmem:[#allocation3 + $0x278] sm:$0xff]
  %v1243 = vld [vmem:[#allocation3 + $0x280] sm:$0xff]
  %v1244 = vld [vmem:[#allocation3 + $0x288] sm:$0xff]
  %v1245 = vld [vmem:[#allocation3 + $0x290] sm:$0xff]
  %v1246 = vld [vmem:[#allocation3 + $0x298] sm:$0xff]
  %v1247 = vld [vmem:[#allocation3 + $0x2a0] sm:$0xff]
  %v1248 = vld [vmem:[#allocation3 + $0x2a8] sm:$0xff]
  %v1249 = vld [vmem:[#allocation3 + $0x2b0] sm:$0xff]
  %v1250 = vld [vmem:[#allocation3 + $0x2b8] sm:$0xff]
  %v1251 = vld [vmem:[#allocation3 + $0x2c0] sm:$0xff]
  %v1252 = vld [vmem:[#allocation3 + $0x2c8] sm:$0xff]
  %v1253 = vld [vmem:[#allocation3 + $0x2d0] sm:$0xff]
  %v1254 = vld [vmem:[#allocation3 + $0x2d8] sm:$0xff]
  %v1255 = vld [vmem:[#allocation3 + $0x2e0] sm:$0xff]
  %v1256 = vld [vmem:[#allocation3 + $0x2e8] sm:$0xff]
  %v1257 = vld [vmem:[#allocation3 + $0x2f0] sm:$0xff]
  %v1258 = vld [vmem:[#allocation3 + $0x2f8] sm:$0xff]
  %v1259 = vld [vmem:[#allocation3 + $0x300] sm:$0xff]
  %v1260 = vld [vmem:[#allocation3 + $0x308] sm:$0xff]
  %v1261 = vld [vmem:[#allocation3 + $0x310] sm:$0xff]
  %v1262 = vld [vmem:[#allocation3 + $0x318] sm:$0xff]
  %v1263 = vld [vmem:[#allocation3 + $0x320] sm:$0xff]
  %v1264 = vld [vmem:[#allocation3 + $0x328] sm:$0xff]
  %v1265 = vld [vmem:[#allocation3 + $0x330] sm:$0xff]
  %v1266 = vld [vmem:[#allocation3 + $0x338] sm:$0xff]
  %v1267 = vld [vmem:[#allocation3 + $0x340] sm:$0xff]
  %v1268 = vld [vmem:[#allocation3 + $0x348] sm:$0xff]
  %v1269 = vld [vmem:[#allocation3 + $0x350] sm:$0xff]
  %v1270 = vld [vmem:[#allocation3 + $0x358] sm:$0xff]
  %v1271 = vld [vmem:[#allocation3 + $0x360] sm:$0xff]
  %v1272 = vld [vmem:[#allocation3 + $0x368] sm:$0xff]
  %v1273 = vld [vmem:[#allocation3 + $0x370] sm:$0xff]
  %v1274 = vld [vmem:[#allocation3 + $0x378] sm:$0xff]
  %v1275 = vld [vmem:[#allocation3 + $0x380] sm:$0xff]
  %v1276 = vld [vmem:[#allocation3 + $0x388] sm:$0xff]
  %v1277 = vld [vmem:[#allocation3 + $0x390] sm:$0xff]
  %v1278 = vld [vmem:[#allocation3 + $0x398] sm:$0xff]
  %v1279 = vld [vmem:[#allocation3 + $0x3a0] sm:$0xff]
  %v1280 = vld [vmem:[#allocation3 + $0x3a8] sm:$0xff]
  %v1281 = vld [vmem:[#allocation3 + $0x3b0] sm:$0xff]
  %v1282 = vld [vmem:[#allocation3 + $0x3b8] sm:$0xff]
  %v1283 = vld [vmem:[#allocation3 + $0x3c0] sm:$0xff]
  %v1284 = vld [vmem:[#allocation3 + $0x3c8] sm:$0xff]
  %v1285 = vld [vmem:[#allocation3 + $0x3d0] sm:$0xff]
  %v1286 = vld [vmem:[#allocation3 + $0x3d8] sm:$0xff]
  %v1287 = vld [vmem:[#allocation3 + $0x3e0] sm:$0xff]
  %v1288 = vld [vmem:[#allocation3 + $0x3e8] sm:$0xff]
  %v1289 = vld [vmem:[#allocation3 + $0x3f0] sm:$0xff]
  %v1290 = vld [vmem:[#allocation3 + $0x3f8] sm:$0xff]
  %v1291 = vld [vmem:[#allocation3 + $0x400] sm:$0xff]
  %v1292 = vld [vmem:[#allocation3 + $0x408] sm:$0xff]
  %v1293 = vld [vmem:[#allocation3 + $0x410] sm:$0xff]
  %v1294 = vld [vmem:[#allocation3 + $0x418] sm:$0xff]
  %v1295 = vld [vmem:[#allocation3 + $0x420] sm:$0xff]
  %v1296 = vld [vmem:[#allocation3 + $0x428] sm:$0xff]
  %v1297 = vld [vmem:[#allocation3 + $0x430] sm:$0xff]
  %v1298 = vld [vmem:[#allocation3 + $0x438] sm:$0xff]
  %v1299 = vld [vmem:[#allocation3 + $0x440] sm:$0xff]
  %v1300 = vld [vmem:[#allocation3 + $0x448] sm:$0xff]
  %v1301 = vld [vmem:[#allocation3 + $0x450] sm:$0xff]
  %v1302 = vld [vmem:[#allocation3 + $0x458] sm:$0xff]
  %v1303 = vld [vmem:[#allocation3 + $0x460] sm:$0xff]
  %v1304 = vld [vmem:[#allocation3 + $0x468] sm:$0xff]
  %v1305 = vld [vmem:[#allocation3 + $0x470] sm:$0xff]
  %v1306 = vld [vmem:[#allocation3 + $0x478] sm:$0xff]
  %v1307 = vld [vmem:[%s3] sm:$0xff]
  %v1308 = vld [vmem:[%s3 + $0x8] sm:$0xff]
  %v1309 = vld [vmem:[%s3 + $0x10] sm:$0xff]
  %v1310 = vld [vmem:[%s3 + $0x18] sm:$0xff]
  %v1311 = vld [vmem:[%s3 + $0x20] sm:$0xff]
  %v1312 = vld [vmem:[%s3 + $0x28] sm:$0xff]
  %v1313 = vld [vmem:[%s3 + $0x30] sm:$0xff]
  %v1314 = vld [vmem:[%s3 + $0x38] sm:$0xff]
  %v1315 = vld [vmem:[%s3 + $0x40] sm:$0xff]
  %v1316 = vld [vmem:[%s3 + $0x48] sm:$0xff]
  %v1317 = vld [vmem:[%s3 + $0x50] sm:$0xff]
  %v1318 = vld [vmem:[%s3 + $0x58] sm:$0xff]
  %v1319 = vld [vmem:[%s3 + $0x60] sm:$0xff]
  %v1320 = vld [vmem:[%s3 + $0x68] sm:$0xff]
  %v1321 = vld [vmem:[%s3 + $0x70] sm:$0xff]
  %v1322 = vld [vmem:[%s3 + $0x78] sm:$0xff]
  %v1323 = vld [vmem:[%s3 + $0x80] sm:$0xff]
  %v1324 = vld [vmem:[%s3 + $0x88] sm:$0xff]
  %v1325 = vld [vmem:[%s3 + $0x90] sm:$0xff]
  %v1326 = vld [vmem:[%s3 + $0x98] sm:$0xff]
  %v1327 = vld [vmem:[%s3 + $0xa0] sm:$0xff]
  %v1328 = vld [vmem:[%s3 + $0xa8] sm:$0xff]
  %v1329 = vld [vmem:[%s3 + $0xb0] sm:$0xff]
  %v1330 = vld [vmem:[%s3 + $0xb8] sm:$0xff]
  %v1331 = vld [vmem:[%s3 + $0xc0] sm:$0xff]
  %v1332 = vld [vmem:[%s3 + $0xc8] sm:$0xff]
  %v1333 = vld [vmem:[%s3 + $0xd0] sm:$0xff]
  %v1334 = vld [vmem:[%s3 + $0xd8] sm:$0xff]
  %v1335 = vld [vmem:[%s3 + $0xe0] sm:$0xff]
  %v1336 = vld [vmem:[%s3 + $0xe8] sm:$0xff]
  %v1337 = vld [vmem:[%s3 + $0xf0] sm:$0xff]
  %v1338 = vld [vmem:[%s3 + $0xf8] sm:$0xff]
  %v1339 = vld [vmem:[%s3 + $0x100] sm:$0xff]
  %v1340 = vld [vmem:[%s3 + $0x108] sm:$0xff]
  %v1341 = vld [vmem:[%s3 + $0x110] sm:$0xff]
  %v1342 = vld [vmem:[%s3 + $0x118] sm:$0xff]
  %v1343 = vld [vmem:[%s3 + $0x120] sm:$0xff]
  %v1344 = vld [vmem:[%s3 + $0x128] sm:$0xff]
  %v1345 = vld [vmem:[%s3 + $0x130] sm:$0xff]
  %v1346 = vld [vmem:[%s3 + $0x138] sm:$0xff]
  %v1347 = vld [vmem:[%s3 + $0x140] sm:$0xff]
  %v1348 = vld [vmem:[%s3 + $0x148] sm:$0xff]
  %v1349 = vld [vmem:[%s3 + $0x150] sm:$0xff]
  %v1350 = vld [vmem:[%s3 + $0x158] sm:$0xff]
  %v1351 = vld [vmem:[%s3 + $0x160] sm:$0xff]
  %v1352 = vld [vmem:[%s3 + $0x168] sm:$0xff]
  %v1353 = vld [vmem:[%s3 + $0x170] sm:$0xff]
  %v1354 = vld [vmem:[%s3 + $0x178] sm:$0xff]
  %v1355 = vld [vmem:[%s3 + $0x180] sm:$0xff]
  %v1356 = vld [vmem:[%s3 + $0x188] sm:$0xff]
  %v1357 = vld [vmem:[%s3 + $0x190] sm:$0xff]
  %v1358 = vld [vmem:[%s3 + $0x198] sm:$0xff]
  %v1359 = vld [vmem:[%s3 + $0x1a0] sm:$0xff]
  %v1360 = vld [vmem:[%s3 + $0x1a8] sm:$0xff]
  %v1361 = vld [vmem:[%s3 + $0x1b0] sm:$0xff]
  %v1362 = vld [vmem:[%s3 + $0x1b8] sm:$0xff]
  %v1363 = vld [vmem:[%s3 + $0x1c0] sm:$0xff]
  %v1364 = vld [vmem:[%s3 + $0x1c8] sm:$0xff]
  %v1365 = vld [vmem:[%s3 + $0x1d0] sm:$0xff]
  %v1366 = vld [vmem:[%s3 + $0x1d8] sm:$0xff]
  %v1367 = vld [vmem:[%s3 + $0x1e0] sm:$0xff]
  %v1368 = vld [vmem:[%s3 + $0x1e8] sm:$0xff]
  %v1369 = vld [vmem:[%s3 + $0x1f0] sm:$0xff]
  %v1370 = vld [vmem:[%s3 + $0x1f8] sm:$0xff]
  %v1371 = vld [vmem:[%s3 + $0x200] sm:$0xff]
  %v1372 = vld [vmem:[%s3 + $0x208] sm:$0xff]
  %v1373 = vld [vmem:[%s3 + $0x210] sm:$0xff]
  %v1374 = vld [vmem:[%s3 + $0x218] sm:$0xff]
  %v1375 = vld [vmem:[%s3 + $0x220] sm:$0xff]
  %v1376 = vld [vmem:[%s3 + $0x228] sm:$0xff]
  %v1377 = vld [vmem:[%s3 + $0x230] sm:$0xff]
  %v1378 = vld [vmem:[%s3 + $0x238] sm:$0xff]
  %v1379 = vld [vmem:[%s3 + $0x240] sm:$0xff]
  %v1380 = vld [vmem:[%s3 + $0x248] sm:$0xff]
  %v1381 = vld [vmem:[%s3 + $0x250] sm:$0xff]
  %v1382 = vld [vmem:[%s3 + $0x258] sm:$0xff]
  %v1383 = vld [vmem:[%s3 + $0x260] sm:$0xff]
  %v1384 = vld [vmem:[%s3 + $0x268] sm:$0xff]
  %v1385 = vld [vmem:[%s3 + $0x270] sm:$0xff]
  %v1386 = vld [vmem:[%s3 + $0x278] sm:$0xff]
  %v1387 = vld [vmem:[%s3 + $0x280] sm:$0xff]
  %v1388 = vld [vmem:[%s3 + $0x288] sm:$0xff]
  %v1389 = vld [vmem:[%s3 + $0x290] sm:$0xff]
  %v1390 = vld [vmem:[%s3 + $0x298] sm:$0xff]
  %v1391 = vld [vmem:[%s3 + $0x2a0] sm:$0xff]
  %v1392 = vld [vmem:[%s3 + $0x2a8] sm:$0xff]
  %v1393 = vld [vmem:[%s3 + $0x2b0] sm:$0xff]
  %v1394 = vld [vmem:[%s3 + $0x2b8] sm:$0xff]
  %v1395 = vld [vmem:[%s3 + $0x2c0] sm:$0xff]
  %v1396 = vld [vmem:[%s3 + $0x2c8] sm:$0xff]
  %v1397 = vld [vmem:[%s3 + $0x2d0] sm:$0xff]
  %v1398 = vld [vmem:[%s3 + $0x2d8] sm:$0xff]
  %v1399 = vld [vmem:[%s3 + $0x2e0] sm:$0xff]
  %v1400 = vld [vmem:[%s3 + $0x2e8] sm:$0xff]
  %v1401 = vld [vmem:[%s3 + $0x2f0] sm:$0xff]
  %v1402 = vld [vmem:[%s3 + $0x2f8] sm:$0xff]
  %v1403 = vld [vmem:[%s3 + $0x300] sm:$0xff]
  %v1404 = vld [vmem:[%s3 + $0x308] sm:$0xff]
  %v1405 = vld [vmem:[%s3 + $0x310] sm:$0xff]
  %v1406 = vld [vmem:[%s3 + $0x318] sm:$0xff]
  %v1407 = vld [vmem:[%s3 + $0x320] sm:$0xff]
  %v1408 = vld [vmem:[%s3 + $0x328] sm:$0xff]
  %v1409 = vld [vmem:[%s3 + $0x330] sm:$0xff]
  %v1410 = vld [vmem:[%s3 + $0x338] sm:$0xff]
  %v1411 = vld [vmem:[%s3 + $0x340] sm:$0xff]
  %v1412 = vld [vmem:[%s3 + $0x348] sm:$0xff]
  %v1413 = vld [vmem:[%s3 + $0x350] sm:$0xff]
  %v1414 = vld [vmem:[%s3 + $0x358] sm:$0xff]
  %v1415 = vld [vmem:[%s3 + $0x360] sm:$0xff]
  %v1416 = vld [vmem:[%s3 + $0x368] sm:$0xff]
  %v1417 = vld [vmem:[%s3 + $0x370] sm:$0xff]
  %v1418 = vld [vmem:[%s3 + $0x378] sm:$0xff]
  %v1419 = vld [vmem:[%s3 + $0x380] sm:$0xff]
  %v1420 = vld [vmem:[%s3 + $0x388] sm:$0xff]
  %v1421 = vld [vmem:[%s3 + $0x390] sm:$0xff]
  %v1422 = vld [vmem:[%s3 + $0x398] sm:$0xff]
  %v1423 = vld [vmem:[%s3 + $0x3a0] sm:$0xff]
  %v1424 = vld [vmem:[%s3 + $0x3a8] sm:$0xff]
  %v1425 = vld [vmem:[%s3 + $0x3b0] sm:$0xff]
  %v1426 = vld [vmem:[%s3 + $0x3b8] sm:$0xff]
  %v1427 = vld [vmem:[%s3 + $0x3c0] sm:$0xff]
  %v1428 = vld [vmem:[%s3 + $0x3c8] sm:$0xff]
  %v1429 = vld [vmem:[%s3 + $0x3d0] sm:$0xff]
  %v1430 = vld [vmem:[%s3 + $0x3d8] sm:$0xff]
  %v1431 = vld [vmem:[%s3 + $0x3e0] sm:$0xff]
  %v1432 = vld [vmem:[%s3 + $0x3e8] sm:$0xff]
  %v1433 = vld [vmem:[%s3 + $0x3f0] sm:$0xff]
  %v1434 = vld [vmem:[%s3 + $0x3f8] sm:$0xff]
  %v1435 = vld [vmem:[%s3 + $0x400] sm:$0xff]
  %v1436 = vld [vmem:[%s3 + $0x408] sm:$0xff]
  %v1437 = vld [vmem:[%s3 + $0x410] sm:$0xff]
  %v1438 = vld [vmem:[%s3 + $0x418] sm:$0xff]
  %v1439 = vld [vmem:[%s3 + $0x420] sm:$0xff]
  %v1440 = vld [vmem:[%s3 + $0x428] sm:$0xff]
  %v1441 = vld [vmem:[%s3 + $0x430] sm:$0xff]
  %v1442 = vld [vmem:[%s3 + $0x438] sm:$0xff]
  %v1443 = vld [vmem:[%s3 + $0x440] sm:$0xff]
  %v1444 = vld [vmem:[%s3 + $0x448] sm:$0xff]
  %v1445 = vld [vmem:[%s3 + $0x450] sm:$0xff]
  %v1446 = vld [vmem:[%s3 + $0x458] sm:$0xff]
  %v1447 = vld [vmem:[%s3 + $0x460] sm:$0xff]
  %v1448 = vld [vmem:[%s3 + $0x468] sm:$0xff]
  %v1449 = vld [vmem:[%s3 + $0x470] sm:$0xff]
  %v1450 = vld [vmem:[%s3 + $0x478] sm:$0xff]
  %v1451 = vld [vmem:[%s3 + $0x480] sm:$0xff]
  %v1452 = vld [vmem:[%s3 + $0x488] sm:$0xff]
  %v1453 = vld [vmem:[%s3 + $0x490] sm:$0xff]
  %v1454 = vld [vmem:[%s3 + $0x498] sm:$0xff]
  %v1455 = vld [vmem:[%s3 + $0x4a0] sm:$0xff]
  %v1456 = vld [vmem:[%s3 + $0x4a8] sm:$0xff]
  %v1457 = vld [vmem:[%s3 + $0x4b0] sm:$0xff]
  %v1458 = vld [vmem:[%s3 + $0x4b8] sm:$0xff]
  %v1459 = vld [vmem:[%s3 + $0x4c0] sm:$0xff]
  %v1460 = vld [vmem:[%s3 + $0x4c8] sm:$0xff]
  %v1461 = vld [vmem:[%s3 + $0x4d0] sm:$0xff]
  %v1462 = vld [vmem:[%s3 + $0x4d8] sm:$0xff]
  %v1463 = vld [vmem:[%s3 + $0x4e0] sm:$0xff]
  %v1464 = vld [vmem:[%s3 + $0x4e8] sm:$0xff]
  %v1465 = vld [vmem:[%s3 + $0x4f0] sm:$0xff]
  %v1466 = vld [vmem:[%s3 + $0x4f8] sm:$0xff]
  %v1467 = vld [vmem:[%s3 + $0x500] sm:$0xff]
  %v1468 = vld [vmem:[%s3 + $0x508] sm:$0xff]
  %v1469 = vld [vmem:[%s3 + $0x510] sm:$0xff]
  %v1470 = vld [vmem:[%s3 + $0x518] sm:$0xff]
  %v1471 = vld [vmem:[%s3 + $0x520] sm:$0xff]
  %v1472 = vld [vmem:[%s3 + $0x528] sm:$0xff]
  %v1473 = vld [vmem:[%s3 + $0x530] sm:$0xff]
  %v1474 = vld [vmem:[%s3 + $0x538] sm:$0xff]
  %v1475 = vld [vmem:[%s3 + $0x540] sm:$0xff]
  %v1476 = vld [vmem:[%s3 + $0x548] sm:$0xff]
  %v1477 = vld [vmem:[%s3 + $0x550] sm:$0xff]
  %v1478 = vld [vmem:[%s3 + $0x558] sm:$0xff]
  %v1479 = vld [vmem:[%s3 + $0x560] sm:$0xff]
  %v1480 = vld [vmem:[%s3 + $0x568] sm:$0xff]
  %v1481 = vld [vmem:[%s3 + $0x570] sm:$0xff]
  %v1482 = vld [vmem:[%s3 + $0x578] sm:$0xff]
  %v1483 = vld [vmem:[%s3 + $0x580] sm:$0xff]
  %v1484 = vld [vmem:[%s3 + $0x588] sm:$0xff]
  %v1485 = vld [vmem:[%s3 + $0x590] sm:$0xff]
  %v1486 = vld [vmem:[%s3 + $0x598] sm:$0xff]
  %v1487 = vld [vmem:[%s3 + $0x5a0] sm:$0xff]
  %v1488 = vld [vmem:[%s3 + $0x5a8] sm:$0xff]
  %v1489 = vld [vmem:[%s3 + $0x5b0] sm:$0xff]
  %v1490 = vld [vmem:[%s3 + $0x5b8] sm:$0xff]
  %v1491 = vld [vmem:[%s3 + $0x5c0] sm:$0xff]
  %v1492 = vld [vmem:[%s3 + $0x5c8] sm:$0xff]
  %v1493 = vld [vmem:[%s3 + $0x5d0] sm:$0xff]
  %v1494 = vld [vmem:[%s3 + $0x5d8] sm:$0xff]
  %v1495 = vld [vmem:[%s3 + $0x5e0] sm:$0xff]
  %v1496 = vld [vmem:[%s3 + $0x5e8] sm:$0xff]
  %v1497 = vld [vmem:[%s3 + $0x5f0] sm:$0xff]
  %v1498 = vld [vmem:[%s3 + $0x5f8] sm:$0xff]
  %v1499 = vld [vmem:[%s3 + $0x600] sm:$0xff]
  %v1500 = vld [vmem:[%s3 + $0x608] sm:$0xff]
  %v1501 = vld [vmem:[%s3 + $0x610] sm:$0xff]
  %v1502 = vld [vmem:[%s3 + $0x618] sm:$0xff]
  %v1503 = vld [vmem:[%s3 + $0x620] sm:$0xff]
  %v1504 = vld [vmem:[%s3 + $0x628] sm:$0xff]
  %v1505 = vld [vmem:[%s3 + $0x630] sm:$0xff]
  %v1506 = vld [vmem:[%s3 + $0x638] sm:$0xff]
  %v1507 = vld [vmem:[%s3 + $0x640] sm:$0xff]
  %v1508 = vld [vmem:[%s3 + $0x648] sm:$0xff]
  %v1509 = vld [vmem:[%s3 + $0x650] sm:$0xff]
  %v1510 = vld [vmem:[%s3 + $0x658] sm:$0xff]
  %v1511 = vld [vmem:[%s3 + $0x660] sm:$0xff]
  %v1512 = vld [vmem:[%s3 + $0x668] sm:$0xff]
  %v1513 = vld [vmem:[%s3 + $0x670] sm:$0xff]
  %v1514 = vld [vmem:[%s3 + $0x678] sm:$0xff]
  %v1515 = vld [vmem:[%s3 + $0x680] sm:$0xff]
  %v1516 = vld [vmem:[%s3 + $0x688] sm:$0xff]
  %v1517 = vld [vmem:[%s3 + $0x690] sm:$0xff]
  %v1518 = vld [vmem:[%s3 + $0x698] sm:$0xff]
  %v1519 = vld [vmem:[%s3 + $0x6a0] sm:$0xff]
  %v1520 = vld [vmem:[%s3 + $0x6a8] sm:$0xff]
  %v1521 = vld [vmem:[%s3 + $0x6b0] sm:$0xff]
  %v1522 = vld [vmem:[%s3 + $0x6b8] sm:$0xff]
  %v1523 = vld [vmem:[%s3 + $0x6c0] sm:$0xff]
  %v1524 = vld [vmem:[%s3 + $0x6c8] sm:$0xff]
  %v1525 = vld [vmem:[%s3 + $0x6d0] sm:$0xff]
  %v1526 = vld [vmem:[%s3 + $0x6d8] sm:$0xff]
  %v1527 = vld [vmem:[%s3 + $0x6e0] sm:$0xff]
  %v1528 = vld [vmem:[%s3 + $0x6e8] sm:$0xff]
  %v1529 = vld [vmem:[%s3 + $0x6f0] sm:$0xff]
  %v1530 = vld [vmem:[%s3 + $0x6f8] sm:$0xff]
  %v1531 = vld [vmem:[%s3 + $0x700] sm:$0xff]
  %v1532 = vld [vmem:[%s3 + $0x708] sm:$0xff]
  %v1533 = vld [vmem:[%s3 + $0x710] sm:$0xff]
  %v1534 = vld [vmem:[%s3 + $0x718] sm:$0xff]
  %v1535 = vld [vmem:[%s3 + $0x720] sm:$0xff]
  %v1536 = vld [vmem:[%s3 + $0x728] sm:$0xff]
  %v1537 = vld [vmem:[%s3 + $0x730] sm:$0xff]
  %v1538 = vld [vmem:[%s3 + $0x738] sm:$0xff]
  %v1539 = vld [vmem:[%s3 + $0x740] sm:$0xff]
  %v1540 = vld [vmem:[%s3 + $0x748] sm:$0xff]
  %v1541 = vld [vmem:[%s3 + $0x750] sm:$0xff]
  %v1542 = vld [vmem:[%s3 + $0x758] sm:$0xff]
  %v1543 = vld [vmem:[%s3 + $0x760] sm:$0xff]
  %v1544 = vld [vmem:[%s3 + $0x768] sm:$0xff]
  %v1545 = vld [vmem:[%s3 + $0x770] sm:$0xff]
  %v1546 = vld [vmem:[%s3 + $0x778] sm:$0xff]
  %v1547 = vld [vmem:[%s3 + $0x780] sm:$0xff]
  %v1548 = vld [vmem:[%s3 + $0x788] sm:$0xff]
  %v1549 = vld [vmem:[%s3 + $0x790] sm:$0xff]
  %v1550 = vld [vmem:[%s3 + $0x798] sm:$0xff]
  %v1551 = vld [vmem:[%s3 + $0x7a0] sm:$0xff]
  %v1552 = vld [vmem:[%s3 + $0x7a8] sm:$0xff]
  %v1553 = vld [vmem:[%s3 + $0x7b0] sm:$0xff]
  %v1554 = vld [vmem:[%s3 + $0x7b8] sm:$0xff]
  %v1555 = vld [vmem:[%s3 + $0x7c0] sm:$0xff]
  %v1556 = vld [vmem:[%s3 + $0x7c8] sm:$0xff]
  %v1557 = vld [vmem:[%s3 + $0x7d0] sm:$0xff]
  %v1558 = vld [vmem:[%s3 + $0x7d8] sm:$0xff]
  %v1559 = vld [vmem:[%s3 + $0x7e0] sm:$0xff]
  %v1560 = vld [vmem:[%s3 + $0x7e8] sm:$0xff]
  %v1561 = vld [vmem:[%s3 + $0x7f0] sm:$0xff]
  %v1562 = vld [vmem:[%s3 + $0x7f8] sm:$0xff]
  %v1563 = vld [vmem:[%s4] sm:$0x1]
  %v1565 = vlaneseq
  %v1566 = vshrl.u32 %v1565, 7
  %v1567 = vsub.s32 0, %v1566
  %v1568 = vrot.slane %v1563, %v1567
  %1570 = vmatprep.subr.mxu0 0.0
  %1571 = vmatpush1.msra.mxu0 %v1307
  %1572 = vmatprep.subr.mxu0 0.0
  %1573 = vmatpush1.msra.mxu0 %v1308
  %1574 = vmatprep.subr.mxu0 0.0
  %1575 = vmatpush1.msra.mxu0 %v1309
  %1576 = vmatprep.subr.mxu0 0.0
  %1577 = vmatpush1.msra.mxu0 %v1310
  %1578 = vmatprep.subr.mxu0 0.0
  %1579 = vmatpush1.msra.mxu0 %v1311
  %1580 = vmatprep.subr.mxu0 0.0
  %1581 = vmatpush1.msra.mxu0 %v1312
  %1582 = vmatprep.subr.mxu0 0.0
  %1583 = vmatpush1.msra.mxu0 %v1313
  %1584 = vmatprep.subr.mxu0 0.0
  %1585 = vmatpush1.msra.mxu0 %v1314
  %1586 = vmatprep.subr.mxu0 0.0
  %1587 = vmatpush1.msra.mxu0 %v1315
  %1588 = vmatprep.subr.mxu0 0.0
  %1589 = vmatpush1.msra.mxu0 %v1316
  %1590 = vmatprep.subr.mxu0 0.0
  %1591 = vmatpush1.msra.mxu0 %v1317
  %1592 = vmatprep.subr.mxu0 0.0
  %1593 = vmatpush1.msra.mxu0 %v1318
  %1594 = vmatprep.subr.mxu0 0.0
  %1595 = vmatpush1.msra.mxu0 %v1319
  %1596 = vmatprep.subr.mxu0 0.0
  %1597 = vmatpush1.msra.mxu0 %v1320
  %1598 = vmatprep.subr.mxu0 0.0
  %1599 = vmatpush1.msra.mxu0 %v1321
  %1600 = vmatprep.subr.mxu0 0.0
  %1601 = vmatpush1.msra.mxu0 %v1322
  %1602 = vmatprep.subr.mxu0 0.0
  %1603 = vmatpush1.msra.mxu0 %v1323
  %1604 = vmatprep.subr.mxu0 0.0
  %1605 = vmatpush1.msra.mxu0 %v1324
  %1606 = vmatprep.subr.mxu0 0.0
  %1607 = vmatpush1.msra.mxu0 %v1325
  %1608 = vmatprep.subr.mxu0 0.0
  %1609 = vmatpush1.msra.mxu0 %v1326
  %1610 = vmatprep.subr.mxu0 0.0
  %1611 = vmatpush1.msra.mxu0 %v1327
  %1612 = vmatprep.subr.mxu0 0.0
  %1613 = vmatpush1.msra.mxu0 %v1328
  %1614 = vmatprep.subr.mxu0 0.0
  %1615 = vmatpush1.msra.mxu0 %v1329
  %1616 = vmatprep.subr.mxu0 0.0
  %1617 = vmatpush1.msra.mxu0 %v1330
  %1618 = vmatprep.subr.mxu0 0.0
  %1619 = vmatpush1.msra.mxu0 %v1331
  %1620 = vmatprep.subr.mxu0 0.0
  %1621 = vmatpush1.msra.mxu0 %v1332
  %1622 = vmatprep.subr.mxu0 0.0
  %1623 = vmatpush1.msra.mxu0 %v1333
  %1624 = vmatprep.subr.mxu0 0.0
  %1625 = vmatpush1.msra.mxu0 %v1334
  %1626 = vmatprep.subr.mxu0 0.0
  %1627 = vmatpush1.msra.mxu0 %v1335
  %1628 = vmatprep.subr.mxu0 0.0
  %1629 = vmatpush1.msra.mxu0 %v1336
  %1630 = vmatprep.subr.mxu0 0.0
  %1631 = vmatpush1.msra.mxu0 %v1337
  %1632 = vmatprep.subr.mxu0 0.0
  %1633 = vmatpush1.msra.mxu0 %v1338
  %1634 = vmatprep.mubr.f32.mxu0 %v1164
  %1635 = vmatmul.mubr.f32.gmra.mrb[0].mxu0 %v1163
  %v1636 = vpop.f32.mrb[0].mxu0
  %v1637 = vadd.f32 %v1568, %v1636
  %v1638 = vpop.f32.mrb[0].mxu0
  %1639 = vmatprep.mubr.f32.mxu0 %v1180
  %1640 = vmatmul.mubr.f32.gmra.mrb[0].mxu0 %v1179
  %v1641 = vpop.f32.mrb[0].mxu0
  %v1642 = vadd.f32 %v1568, %v1641
  %v1643 = vpop.f32.mrb[0].mxu0
  %1644 = vmatprep.mubr.f32.mxu0 %v1196
  %1645 = vmatmul.mubr.f32.gmra.mrb[0].mxu0 %v1195
  %v1646 = vpop.f32.mrb[0].mxu0
  %v1647 = vadd.f32 %v1568, %v1646
  %v1648 = vpop.f32.mrb[0].mxu0
  %1649 = vmatprep.mubr.f32.mxu0 %v1212
  %1650 = vmatmul.mubr.f32.gmra.mrb[0].mxu0 %v1211
  %v1651 = vpop.f32.mrb[0].mxu0
  %v1652 = vadd.f32 %v1568, %v1651
  %v1653 = vpop.f32.mrb[0].mxu0
  %1654 = vmatprep.mubr.f32.mxu0 %v1228
  %1655 = vmatmul.mubr.f32.gmra.mrb[0].mxu0 %v1227
  %v1656 = vpop.f32.mrb[0].mxu0
  %v1657 = vadd.f32 %v1568, %v1656
  %v1658 = vpop.f32.mrb[0].mxu0
  %1659 = vmatprep.mubr.f32.mxu0 %v1244
  %1660 = vmatmul.mubr.f32.gmra.mrb[0].mxu0 %v1243
  %v1661 = vpop.f32.mrb[0].mxu0
  %v1662 = vadd.f32 %v1568, %v1661
  %v1663 = vpop.f32.mrb[0].mxu0
  %1664 = vmatprep.mubr.f32.mxu0 %v1260
  %1665 = vmatmul.mubr.f32.gmra.mrb[0].mxu0 %v1259
  %v1666 = vpop.f32.mrb[0].mxu0
  %v1667 = vadd.f32 %v1568, %v1666
  %v1668 = vpop.f32.mrb[0].mxu0
  %1669 = vmatprep.mubr.f32.mxu0 %v1276
  %1670 = vmatmul.mubr.f32.gmra.mrb[0].mxu0 %v1275
  %v1671 = vpop.f32.mrb[0].mxu0
  %v1672 = vadd.f32 %v1568, %v1671
  %v1673 = vpop.f32.mrb[0].mxu0
  %1674 = vmatprep.mubr.f32.mxu0 %v1292
  %1675 = vmatmul.mubr.f32.gmra.mrb[0].mxu0 %v1291
  %v1676 = vpop.f32.mrb[0].mxu0
  %v1677 = vadd.f32 %v1568, %v1676
  %v1678 = vpop.f32.mrb[0].mxu0
  %1679 = vdwg.mxu0
  %1680 = vmatprep.subr.mxu0 0.0
  %1681 = vmatpush1.msra.mxu0 %v1339
  %1682 = vmatprep.subr.mxu0 0.0
  %1683 = vmatpush1.msra.mxu0 %v1340
  %1684 = vmatprep.subr.mxu0 0.0
  %1685 = vmatpush1.msra.mxu0 %v1341
  %1686 = vmatprep.subr.mxu0 0.0
  %1687 = vmatpush1.msra.mxu0 %v1342
  %1688 = vmatprep.subr.mxu0 0.0
  %1689 = vmatpush1.msra.mxu0 %v1343
  %1690 = vmatprep.subr.mxu0 0.0
  %1691 = vmatpush1.msra.mxu0 %v1344
  %1692 = vmatprep.subr.mxu0 0.0
  %1693 = vmatpush1.msra.mxu0 %v1345
  %1694 = vmatprep.subr.mxu0 0.0
  %1695 = vmatpush1.msra.mxu0 %v1346
  %1696 = vmatprep.subr.mxu0 0.0
  %1697 = vmatpush1.msra.mxu0 %v1347
  %1698 = vmatprep.subr.mxu0 0.0
  %1699 = vmatpush1.msra.mxu0 %v1348
  %1700 = vmatprep.subr.mxu0 0.0
  %1701 = vmatpush1.msra.mxu0 %v1349
  %1702 = vmatprep.subr.mxu0 0.0
  %1703 = vmatpush1.msra.mxu0 %v1350
  %1704 = vmatprep.subr.mxu0 0.0
  %1705 = vmatpush1.msra.mxu0 %v1351
  %1706 = vmatprep.subr.mxu0 0.0
  %1707 = vmatpush1.msra.mxu0 %v1352
  %1708 = vmatprep.subr.mxu0 0.0
  %1709 = vmatpush1.msra.mxu0 %v1353
  %1710 = vmatprep.subr.mxu0 0.0
  %1711 = vmatpush1.msra.mxu0 %v1354
  %1712 = vmatprep.subr.mxu0 0.0
  %1713 = vmatpush1.msra.mxu0 %v1355
  %1714 = vmatprep.subr.mxu0 0.0
  %1715 = vmatpush1.msra.mxu0 %v1356
  %1716 = vmatprep.subr.mxu0 0.0
  %1717 = vmatpush1.msra.mxu0 %v1357
  %1718 = vmatprep.subr.mxu0 0.0
  %1719 = vmatpush1.msra.mxu0 %v1358
  %1720 = vmatprep.subr.mxu0 0.0
  %1721 = vmatpush1.msra.mxu0 %v1359
  %1722 = vmatprep.subr.mxu0 0.0
  %1723 = vmatpush1.msra.mxu0 %v1360
  %1724 = vmatprep.subr.mxu0 0.0
  %1725 = vmatpush1.msra.mxu0 %v1361
  %1726 = vmatprep.subr.mxu0 0.0
  %1727 = vmatpush1.msra.mxu0 %v1362
  %1728 = vmatprep.subr.mxu0 0.0
  %1729 = vmatpush1.msra.mxu0 %v1363
  %1730 = vmatprep.subr.mxu0 0.0
  %1731 = vmatpush1.msra.mxu0 %v1364
  %1732 = vmatprep.subr.mxu0 0.0
  %1733 = vmatpush1.msra.mxu0 %v1365
  %1734 = vmatprep.subr.mxu0 0.0
  %1735 = vmatpush1.msra.mxu0 %v1366
  %1736 = vmatprep.subr.mxu0 0.0
  %1737 = vmatpush1.msra.mxu0 %v1367
  %1738 = vmatprep.subr.mxu0 0.0
  %1739 = vmatpush1.msra.mxu0 %v1368
  %1740 = vmatprep.subr.mxu0 0.0
  %1741 = vmatpush1.msra.mxu0 %v1369
  %1742 = vmatprep.subr.mxu0 0.0
  %1743 = vmatpush1.msra.mxu0 %v1370
  %1744 = vmatprep.mubr.f32.mxu0 %v1166
  %1745 = vmatmul.mubr.f32.gmra.mrb[0].mxu0 %v1165
  %v1746 = vpop.f32.mrb[0].mxu0
  %v1747 = vadd.f32 %v1637, %v1746
  %v1748 = vpop.f32.mrb[0].mxu0
  %1749 = vmatprep.mubr.f32.mxu0 %v1182
  %1750 = vmatmul.mubr.f32.gmra.mrb[0].mxu0 %v1181
  %v1751 = vpop.f32.mrb[0].mxu0
  %v1752 = vadd.f32 %v1642, %v1751
  %v1753 = vpop.f32.mrb[0].mxu0
  %1754 = vmatprep.mubr.f32.mxu0 %v1198
  %1755 = vmatmul.mubr.f32.gmra.mrb[0].mxu0 %v1197
  %v1756 = vpop.f32.mrb[0].mxu0
  %v1757 = vadd.f32 %v1647, %v1756
  %v1758 = vpop.f32.mrb[0].mxu0
  %1759 = vmatprep.mubr.f32.mxu0 %v1214
  %1760 = vmatmul.mubr.f32.gmra.mrb[0].mxu0 %v1213
  %v1761 = vpop.f32.mrb[0].mxu0
  %v1762 = vadd.f32 %v1652, %v1761
  %v1763 = vpop.f32.mrb[0].mxu0
  %1764 = vmatprep.mubr.f32.mxu0 %v1230
  %1765 = vmatmul.mubr.f32.gmra.mrb[0].mxu0 %v1229
  %v1766 = vpop.f32.mrb[0].mxu0
  %v1767 = vadd.f32 %v1657, %v1766
  %v1768 = vpop.f32.mrb[0].mxu0
  %1769 = vmatprep.mubr.f32.mxu0 %v1246
  %1770 = vmatmul.mubr.f32.gmra.mrb[0].mxu0 %v1245
  %v1771 = vpop.f32.mrb[0].mxu0
  %v1772 = vadd.f32 %v1662, %v1771
  %v1773 = vpop.f32.mrb[0].mxu0
  %1774 = vmatprep.mubr.f32.mxu0 %v1262
  %1775 = vmatmul.mubr.f32.gmra.mrb[0].mxu0 %v1261
  %v1776 = vpop.f32.mrb[0].mxu0
  %v1777 = vadd.f32 %v1667, %v1776
  %v1778 = vpop.f32.mrb[0].mxu0
  %1779 = vmatprep.mubr.f32.mxu0 %v1278
  %1780 = vmatmul.mubr.f32.gmra.mrb[0].mxu0 %v1277
  %v1781 = vpop.f32.mrb[0].mxu0
  %v1782 = vadd.f32 %v1672, %v1781
  %v1783 = vpop.f32.mrb[0].mxu0
  %1784 = vmatprep.mubr.f32.mxu0 %v1294
  %1785 = vmatmul.mubr.f32.gmra.mrb[0].mxu0 %v1293
  %v1786 = vpop.f32.mrb[0].mxu0
  %v1787 = vadd.f32 %v1677, %v1786
  %v1788 = vpop.f32.mrb[0].mxu0
  %1789 = vdwg.mxu0
  %1790 = vmatprep.subr.mxu0 0.0
  %1791 = vmatpush1.msra.mxu0 %v1371
  %1792 = vmatprep.subr.mxu0 0.0
  %1793 = vmatpush1.msra.mxu0 %v1372
  %1794 = vmatprep.subr.mxu0 0.0
  %1795 = vmatpush1.msra.mxu0 %v1373
  %1796 = vmatprep.subr.mxu0 0.0
  %1797 = vmatpush1.msra.mxu0 %v1374
  %1798 = vmatprep.subr.mxu0 0.0
  %1799 = vmatpush1.msra.mxu0 %v1375
  %1800 = vmatprep.subr.mxu0 0.0
  %1801 = vmatpush1.msra.mxu0 %v1376
  %1802 = vmatprep.subr.mxu0 0.0
  %1803 = vmatpush1.msra.mxu0 %v1377
  %1804 = vmatprep.subr.mxu0 0.0
  %1805 = vmatpush1.msra.mxu0 %v1378
  %1806 = vmatprep.subr.mxu0 0.0
  %1807 = vmatpush1.msra.mxu0 %v1379
  %1808 = vmatprep.subr.mxu0 0.0
  %1809 = vmatpush1.msra.mxu0 %v1380
  %1810 = vmatprep.subr.mxu0 0.0
  %1811 = vmatpush1.msra.mxu0 %v1381
  %1812 = vmatprep.subr.mxu0 0.0
  %1813 = vmatpush1.msra.mxu0 %v1382
  %1814 = vmatprep.subr.mxu0 0.0
  %1815 = vmatpush1.msra.mxu0 %v1383
  %1816 = vmatprep.subr.mxu0 0.0
  %1817 = vmatpush1.msra.mxu0 %v1384
  %1818 = vmatprep.subr.mxu0 0.0
  %1819 = vmatpush1.msra.mxu0 %v1385
  %1820 = vmatprep.subr.mxu0 0.0
  %1821 = vmatpush1.msra.mxu0 %v1386
  %1822 = vmatprep.subr.mxu0 0.0
  %1823 = vmatpush1.msra.mxu0 %v1387
  %1824 = vmatprep.subr.mxu0 0.0
  %1825 = vmatpush1.msra.mxu0 %v1388
  %1826 = vmatprep.subr.mxu0 0.0
  %1827 = vmatpush1.msra.mxu0 %v1389
  %1828 = vmatprep.subr.mxu0 0.0
  %1829 = vmatpush1.msra.mxu0 %v1390
  %1830 = vmatprep.subr.mxu0 0.0
  %1831 = vmatpush1.msra.mxu0 %v1391
  %1832 = vmatprep.subr.mxu0 0.0
  %1833 = vmatpush1.msra.mxu0 %v1392
  %1834 = vmatprep.subr.mxu0 0.0
  %1835 = vmatpush1.msra.mxu0 %v1393
  %1836 = vmatprep.subr.mxu0 0.0
  %1837 = vmatpush1.msra.mxu0 %v1394
  %1838 = vmatprep.subr.mxu0 0.0
  %1839 = vmatpush1.msra.mxu0 %v1395
  %1840 = vmatprep.subr.mxu0 0.0
  %1841 = vmatpush1.msra.mxu0 %v1396
  %1842 = vmatprep.subr.mxu0 0.0
  %1843 = vmatpush1.msra.mxu0 %v1397
  %1844 = vmatprep.subr.mxu0 0.0
  %1845 = vmatpush1.msra.mxu0 %v1398
  %1846 = vmatprep.subr.mxu0 0.0
  %1847 = vmatpush1.msra.mxu0 %v1399
  %1848 = vmatprep.subr.mxu0 0.0
  %1849 = vmatpush1.msra.mxu0 %v1400
  %1850 = vmatprep.subr.mxu0 0.0
  %1851 = vmatpush1.msra.mxu0 %v1401
  %1852 = vmatprep.subr.mxu0 0.0
  %1853 = vmatpush1.msra.mxu0 %v1402
  %1854 = vmatprep.mubr.f32.mxu0 %v1168
  %1855 = vmatmul.mubr.f32.gmra.mrb[0].mxu0 %v1167
  %v1856 = vpop.f32.mrb[0].mxu0
  %v1857 = vadd.f32 %v1747, %v1856
  %v1858 = vpop.f32.mrb[0].mxu0
  %1859 = vmatprep.mubr.f32.mxu0 %v1184
  %1860 = vmatmul.mubr.f32.gmra.mrb[0].mxu0 %v1183
  %v1861 = vpop.f32.mrb[0].mxu0
  %v1862 = vadd.f32 %v1752, %v1861
  %v1863 = vpop.f32.mrb[0].mxu0
  %1864 = vmatprep.mubr.f32.mxu0 %v1200
  %1865 = vmatmul.mubr.f32.gmra.mrb[0].mxu0 %v1199
  %v1866 = vpop.f32.mrb[0].mxu0
  %v1867 = vadd.f32 %v1757, %v1866
  %v1868 = vpop.f32.mrb[0].mxu0
  %1869 = vmatprep.mubr.f32.mxu0 %v1216
  %1870 = vmatmul.mubr.f32.gmra.mrb[0].mxu0 %v1215
  %v1871 = vpop.f32.mrb[0].mxu0
  %v1872 = vadd.f32 %v1762, %v1871
  %v1873 = vpop.f32.mrb[0].mxu0
  %1874 = vmatprep.mubr.f32.mxu0 %v1232
  %1875 = vmatmul.mubr.f32.gmra.mrb[0].mxu0 %v1231
  %v1876 = vpop.f32.mrb[0].mxu0
  %v1877 = vadd.f32 %v1767, %v1876
  %v1878 = vpop.f32.mrb[0].mxu0
  %1879 = vmatprep.mubr.f32.mxu0 %v1248
  %1880 = vmatmul.mubr.f32.gmra.mrb[0].mxu0 %v1247
  %v1881 = vpop.f32.mrb[0].mxu0
  %v1882 = vadd.f32 %v1772, %v1881
  %v1883 = vpop.f32.mrb[0].mxu0
  %1884 = vmatprep.mubr.f32.mxu0 %v1264
  %1885 = vmatmul.mubr.f32.gmra.mrb[0].mxu0 %v1263
  %v1886 = vpop.f32.mrb[0].mxu0
  %v1887 = vadd.f32 %v1777, %v1886
  %v1888 = vpop.f32.mrb[0].mxu0
  %1889 = vmatprep.mubr.f32.mxu0 %v1280
  %1890 = vmatmul.mubr.f32.gmra.mrb[0].mxu0 %v1279
  %v1891 = vpop.f32.mrb[0].mxu0
  %v1892 = vadd.f32 %v1782, %v1891
  %v1893 = vpop.f32.mrb[0].mxu0
  %1894 = vmatprep.mubr.f32.mxu0 %v1296
  %1895 = vmatmul.mubr.f32.gmra.mrb[0].mxu0 %v1295
  %v1896 = vpop.f32.mrb[0].mxu0
  %v1897 = vadd.f32 %v1787, %v1896
  %v1898 = vpop.f32.mrb[0].mxu0
  %1899 = vdwg.mxu0
  %1900 = vmatprep.subr.mxu0 0.0
  %1901 = vmatpush1.msra.mxu0 %v1403
  %1902 = vmatprep.subr.mxu0 0.0
  %1903 = vmatpush1.msra.mxu0 %v1404
  %1904 = vmatprep.subr.mxu0 0.0
  %1905 = vmatpush1.msra.mxu0 %v1405
  %1906 = vmatprep.subr.mxu0 0.0
  %1907 = vmatpush1.msra.mxu0 %v1406
  %1908 = vmatprep.subr.mxu0 0.0
  %1909 = vmatpush1.msra.mxu0 %v1407
  %1910 = vmatprep.subr.mxu0 0.0
  %1911 = vmatpush1.msra.mxu0 %v1408
  %1912 = vmatprep.subr.mxu0 0.0
  %1913 = vmatpush1.msra.mxu0 %v1409
  %1914 = vmatprep.subr.mxu0 0.0
  %1915 = vmatpush1.msra.mxu0 %v1410
  %1916 = vmatprep.subr.mxu0 0.0
  %1917 = vmatpush1.msra.mxu0 %v1411
  %1918 = vmatprep.subr.mxu0 0.0
  %1919 = vmatpush1.msra.mxu0 %v1412
  %1920 = vmatprep.subr.mxu0 0.0
  %1921 = vmatpush1.msra.mxu0 %v1413
  %1922 = vmatprep.subr.mxu0 0.0
  %1923 = vmatpush1.msra.mxu0 %v1414
  %1924 = vmatprep.subr.mxu0 0.0
  %1925 = vmatpush1.msra.mxu0 %v1415
  %1926 = vmatprep.subr.mxu0 0.0
  %1927 = vmatpush1.msra.mxu0 %v1416
  %1928 = vmatprep.subr.mxu0 0.0
  %1929 = vmatpush1.msra.mxu0 %v1417
  %1930 = vmatprep.subr.mxu0 0.0
  %1931 = vmatpush1.msra.mxu0 %v1418
  %1932 = vmatprep.subr.mxu0 0.0
  %1933 = vmatpush1.msra.mxu0 %v1419
  %1934 = vmatprep.subr.mxu0 0.0
  %1935 = vmatpush1.msra.mxu0 %v1420
  %1936 = vmatprep.subr.mxu0 0.0
  %1937 = vmatpush1.msra.mxu0 %v1421
  %1938 = vmatprep.subr.mxu0 0.0
  %1939 = vmatpush1.msra.mxu0 %v1422
  %1940 = vmatprep.subr.mxu0 0.0
  %1941 = vmatpush1.msra.mxu0 %v1423
  %1942 = vmatprep.subr.mxu0 0.0
  %1943 = vmatpush1.msra.mxu0 %v1424
  %1944 = vmatprep.subr.mxu0 0.0
  %1945 = vmatpush1.msra.mxu0 %v1425
  %1946 = vmatprep.subr.mxu0 0.0
  %1947 = vmatpush1.msra.mxu0 %v1426
  %1948 = vmatprep.subr.mxu0 0.0
  %1949 = vmatpush1.msra.mxu0 %v1427
  %1950 = vmatprep.subr.mxu0 0.0
  %1951 = vmatpush1.msra.mxu0 %v1428
  %1952 = vmatprep.subr.mxu0 0.0
  %1953 = vmatpush1.msra.mxu0 %v1429
  %1954 = vmatprep.subr.mxu0 0.0
  %1955 = vmatpush1.msra.mxu0 %v1430
  %1956 = vmatprep.subr.mxu0 0.0
  %1957 = vmatpush1.msra.mxu0 %v1431
  %1958 = vmatprep.subr.mxu0 0.0
  %1959 = vmatpush1.msra.mxu0 %v1432
  %1960 = vmatprep.subr.mxu0 0.0
  %1961 = vmatpush1.msra.mxu0 %v1433
  %1962 = vmatprep.subr.mxu0 0.0
  %1963 = vmatpush1.msra.mxu0 %v1434
  %1964 = vmatprep.mubr.f32.mxu0 %v1170
  %1965 = vmatmul.mubr.f32.gmra.mrb[0].mxu0 %v1169
  %v1966 = vpop.f32.mrb[0].mxu0
  %v1967 = vadd.f32 %v1857, %v1966
  %v1968 = vpop.f32.mrb[0].mxu0
  %1969 = vmatprep.mubr.f32.mxu0 %v1186
  %1970 = vmatmul.mubr.f32.gmra.mrb[0].mxu0 %v1185
  %v1971 = vpop.f32.mrb[0].mxu0
  %v1972 = vadd.f32 %v1862, %v1971
  %v1973 = vpop.f32.mrb[0].mxu0
  %1974 = vmatprep.mubr.f32.mxu0 %v1202
  %1975 = vmatmul.mubr.f32.gmra.mrb[0].mxu0 %v1201
  %v1976 = vpop.f32.mrb[0].mxu0
  %v1977 = vadd.f32 %v1867, %v1976
  %v1978 = vpop.f32.mrb[0].mxu0
  %1979 = vmatprep.mubr.f32.mxu0 %v1218
  %1980 = vmatmul.mubr.f32.gmra.mrb[0].mxu0 %v1217
  %v1981 = vpop.f32.mrb[0].mxu0
  %v1982 = vadd.f32 %v1872, %v1981
  %v1983 = vpop.f32.mrb[0].mxu0
  %1984 = vmatprep.mubr.f32.mxu0 %v1234
  %1985 = vmatmul.mubr.f32.gmra.mrb[0].mxu0 %v1233
  %v1986 = vpop.f32.mrb[0].mxu0
  %v1987 = vadd.f32 %v1877, %v1986
  %v1988 = vpop.f32.mrb[0].mxu0
  %1989 = vmatprep.mubr.f32.mxu0 %v1250
  %1990 = vmatmul.mubr.f32.gmra.mrb[0].mxu0 %v1249
  %v1991 = vpop.f32.mrb[0].mxu0
  %v1992 = vadd.f32 %v1882, %v1991
  %v1993 = vpop.f32.mrb[0].mxu0
  %1994 = vmatprep.mubr.f32.mxu0 %v1266
  %1995 = vmatmul.mubr.f32.gmra.mrb[0].mxu0 %v1265
  %v1996 = vpop.f32.mrb[0].mxu0
  %v1997 = vadd.f32 %v1887, %v1996
  %v1998 = vpop.f32.mrb[0].mxu0
  %1999 = vmatprep.mubr.f32.mxu0 %v1282
  %2000 = vmatmul.mubr.f32.gmra.mrb[0].mxu0 %v1281
  %v2001 = vpop.f32.mrb[0].mxu0
  %v2002 = vadd.f32 %v1892, %v2001
  %v2003 = vpop.f32.mrb[0].mxu0
  %2004 = vmatprep.mubr.f32.mxu0 %v1298
  %2005 = vmatmul.mubr.f32.gmra.mrb[0].mxu0 %v1297
  %v2006 = vpop.f32.mrb[0].mxu0
  %v2007 = vadd.f32 %v1897, %v2006
  %v2008 = vpop.f32.mrb[0].mxu0
  %2009 = vdwg.mxu0
  %2010 = vmatprep.subr.mxu0 0.0
  %2011 = vmatpush1.msra.mxu0 %v1435
  %2012 = vmatprep.subr.mxu0 0.0
  %2013 = vmatpush1.msra.mxu0 %v1436
  %2014 = vmatprep.subr.mxu0 0.0
  %2015 = vmatpush1.msra.mxu0 %v1437
  %2016 = vmatprep.subr.mxu0 0.0
  %2017 = vmatpush1.msra.mxu0 %v1438
  %2018 = vmatprep.subr.mxu0 0.0
  %2019 = vmatpush1.msra.mxu0 %v1439
  %2020 = vmatprep.subr.mxu0 0.0
  %2021 = vmatpush1.msra.mxu0 %v1440
  %2022 = vmatprep.subr.mxu0 0.0
  %2023 = vmatpush1.msra.mxu0 %v1441
  %2024 = vmatprep.subr.mxu0 0.0
  %2025 = vmatpush1.msra.mxu0 %v1442
  %2026 = vmatprep.subr.mxu0 0.0
  %2027 = vmatpush1.msra.mxu0 %v1443
  %2028 = vmatprep.subr.mxu0 0.0
  %2029 = vmatpush1.msra.mxu0 %v1444
  %2030 = vmatprep.subr.mxu0 0.0
  %2031 = vmatpush1.msra.mxu0 %v1445
  %2032 = vmatprep.subr.mxu0 0.0
  %2033 = vmatpush1.msra.mxu0 %v1446
  %2034 = vmatprep.subr.mxu0 0.0
  %2035 = vmatpush1.msra.mxu0 %v1447
  %2036 = vmatprep.subr.mxu0 0.0
  %2037 = vmatpush1.msra.mxu0 %v1448
  %2038 = vmatprep.subr.mxu0 0.0
  %2039 = vmatpush1.msra.mxu0 %v1449
  %2040 = vmatprep.subr.mxu0 0.0
  %2041 = vmatpush1.msra.mxu0 %v1450
  %2042 = vmatprep.subr.mxu0 0.0
  %2043 = vmatpush1.msra.mxu0 %v1451
  %2044 = vmatprep.subr.mxu0 0.0
  %2045 = vmatpush1.msra.mxu0 %v1452
  %2046 = vmatprep.subr.mxu0 0.0
  %2047 = vmatpush1.msra.mxu0 %v1453
  %2048 = vmatprep.subr.mxu0 0.0
  %2049 = vmatpush1.msra.mxu0 %v1454
  %2050 = vmatprep.subr.mxu0 0.0
  %2051 = vmatpush1.msra.mxu0 %v1455
  %2052 = vmatprep.subr.mxu0 0.0
  %2053 = vmatpush1.msra.mxu0 %v1456
  %2054 = vmatprep.subr.mxu0 0.0
  %2055 = vmatpush1.msra.mxu0 %v1457
  %2056 = vmatprep.subr.mxu0 0.0
  %2057 = vmatpush1.msra.mxu0 %v1458
  %2058 = vmatprep.subr.mxu0 0.0
  %2059 = vmatpush1.msra.mxu0 %v1459
  %2060 = vmatprep.subr.mxu0 0.0
  %2061 = vmatpush1.msra.mxu0 %v1460
  %2062 = vmatprep.subr.mxu0 0.0
  %2063 = vmatpush1.msra.mxu0 %v1461
  %2064 = vmatprep.subr.mxu0 0.0
  %2065 = vmatpush1.msra.mxu0 %v1462
  %2066 = vmatprep.subr.mxu0 0.0
  %2067 = vmatpush1.msra.mxu0 %v1463
  %2068 = vmatprep.subr.mxu0 0.0
  %2069 = vmatpush1.msra.mxu0 %v1464
  %2070 = vmatprep.subr.mxu0 0.0
  %2071 = vmatpush1.msra.mxu0 %v1465
  %2072 = vmatprep.subr.mxu0 0.0
  %2073 = vmatpush1.msra.mxu0 %v1466
  %2074 = vmatprep.mubr.f32.mxu0 %v1172
  %2075 = vmatmul.mubr.f32.gmra.mrb[0].mxu0 %v1171
  %v2076 = vpop.f32.mrb[0].mxu0
  %v2077 = vadd.f32 %v1967, %v2076
  %v2078 = vpop.f32.mrb[0].mxu0
  %2079 = vmatprep.mubr.f32.mxu0 %v1188
  %2080 = vmatmul.mubr.f32.gmra.mrb[0].mxu0 %v1187
  %v2081 = vpop.f32.mrb[0].mxu0
  %v2082 = vadd.f32 %v1972, %v2081
  %v2083 = vpop.f32.mrb[0].mxu0
  %2084 = vmatprep.mubr.f32.mxu0 %v1204
  %2085 = vmatmul.mubr.f32.gmra.mrb[0].mxu0 %v1203
  %v2086 = vpop.f32.mrb[0].mxu0
  %v2087 = vadd.f32 %v1977, %v2086
  %v2088 = vpop.f32.mrb[0].mxu0
  %2089 = vmatprep.mubr.f32.mxu0 %v1220
  %2090 = vmatmul.mubr.f32.gmra.mrb[0].mxu0 %v1219
  %v2091 = vpop.f32.mrb[0].mxu0
  %v2092 = vadd.f32 %v1982, %v2091
  %v2093 = vpop.f32.mrb[0].mxu0
  %2094 = vmatprep.mubr.f32.mxu0 %v1236
  %2095 = vmatmul.mubr.f32.gmra.mrb[0].mxu0 %v1235
  %v2096 = vpop.f32.mrb[0].mxu0
  %v2097 = vadd.f32 %v1987, %v2096
  %v2098 = vpop.f32.mrb[0].mxu0
  %2099 = vmatprep.mubr.f32.mxu0 %v1252
  %2100 = vmatmul.mubr.f32.gmra.mrb[0].mxu0 %v1251
  %v2101 = vpop.f32.mrb[0].mxu0
  %v2102 = vadd.f32 %v1992, %v2101
  %v2103 = vpop.f32.mrb[0].mxu0
  %2104 = vmatprep.mubr.f32.mxu0 %v1268
  %2105 = vmatmul.mubr.f32.gmra.mrb[0].mxu0 %v1267
  %v2106 = vpop.f32.mrb[0].mxu0
  %v2107 = vadd.f32 %v1997, %v2106
  %v2108 = vpop.f32.mrb[0].mxu0
  %2109 = vmatprep.mubr.f32.mxu0 %v1284
  %2110 = vmatmul.mubr.f32.gmra.mrb[0].mxu0 %v1283
  %v2111 = vpop.f32.mrb[0].mxu0
  %v2112 = vadd.f32 %v2002, %v2111
  %v2113 = vpop.f32.mrb[0].mxu0
  %2114 = vmatprep.mubr.f32.mxu0 %v1300
  %2115 = vmatmul.mubr.f32.gmra.mrb[0].mxu0 %v1299
  %v2116 = vpop.f32.mrb[0].mxu0
  %v2117 = vadd.f32 %v2007, %v2116
  %v2118 = vpop.f32.mrb[0].mxu0
  %2119 = vdwg.mxu0
  %2120 = vmatprep.subr.mxu0 0.0
  %2121 = vmatpush1.msra.mxu0 %v1467
  %2122 = vmatprep.subr.mxu0 0.0
  %2123 = vmatpush1.msra.mxu0 %v1468
  %2124 = vmatprep.subr.mxu0 0.0
  %2125 = vmatpush1.msra.mxu0 %v1469
  %2126 = vmatprep.subr.mxu0 0.0
  %2127 = vmatpush1.msra.mxu0 %v1470
  %2128 = vmatprep.subr.mxu0 0.0
  %2129 = vmatpush1.msra.mxu0 %v1471
  %2130 = vmatprep.subr.mxu0 0.0
  %2131 = vmatpush1.msra.mxu0 %v1472
  %2132 = vmatprep.subr.mxu0 0.0
  %2133 = vmatpush1.msra.mxu0 %v1473
  %2134 = vmatprep.subr.mxu0 0.0
  %2135 = vmatpush1.msra.mxu0 %v1474
  %2136 = vmatprep.subr.mxu0 0.0
  %2137 = vmatpush1.msra.mxu0 %v1475
  %2138 = vmatprep.subr.mxu0 0.0
  %2139 = vmatpush1.msra.mxu0 %v1476
  %2140 = vmatprep.subr.mxu0 0.0
  %2141 = vmatpush1.msra.mxu0 %v1477
  %2142 = vmatprep.subr.mxu0 0.0
  %2143 = vmatpush1.msra.mxu0 %v1478
  %2144 = vmatprep.subr.mxu0 0.0
  %2145 = vmatpush1.msra.mxu0 %v1479
  %2146 = vmatprep.subr.mxu0 0.0
  %2147 = vmatpush1.msra.mxu0 %v1480
  %2148 = vmatprep.subr.mxu0 0.0
  %2149 = vmatpush1.msra.mxu0 %v1481
  %2150 = vmatprep.subr.mxu0 0.0
  %2151 = vmatpush1.msra.mxu0 %v1482
  %2152 = vmatprep.subr.mxu0 0.0
  %2153 = vmatpush1.msra.mxu0 %v1483
  %2154 = vmatprep.subr.mxu0 0.0
  %2155 = vmatpush1.msra.mxu0 %v1484
  %2156 = vmatprep.subr.mxu0 0.0
  %2157 = vmatpush1.msra.mxu0 %v1485
  %2158 = vmatprep.subr.mxu0 0.0
  %2159 = vmatpush1.msra.mxu0 %v1486
  %2160 = vmatprep.subr.mxu0 0.0
  %2161 = vmatpush1.msra.mxu0 %v1487
  %2162 = vmatprep.subr.mxu0 0.0
  %2163 = vmatpush1.msra.mxu0 %v1488
  %2164 = vmatprep.subr.mxu0 0.0
  %2165 = vmatpush1.msra.mxu0 %v1489
  %2166 = vmatprep.subr.mxu0 0.0
  %2167 = vmatpush1.msra.mxu0 %v1490
  %2168 = vmatprep.subr.mxu0 0.0
  %2169 = vmatpush1.msra.mxu0 %v1491
  %2170 = vmatprep.subr.mxu0 0.0
  %2171 = vmatpush1.msra.mxu0 %v1492
  %2172 = vmatprep.subr.mxu0 0.0
  %2173 = vmatpush1.msra.mxu0 %v1493
  %2174 = vmatprep.subr.mxu0 0.0
  %2175 = vmatpush1.msra.mxu0 %v1494
  %2176 = vmatprep.subr.mxu0 0.0
  %2177 = vmatpush1.msra.mxu0 %v1495
  %2178 = vmatprep.subr.mxu0 0.0
  %2179 = vmatpush1.msra.mxu0 %v1496
  %2180 = vmatprep.subr.mxu0 0.0
  %2181 = vmatpush1.msra.mxu0 %v1497
  %2182 = vmatprep.subr.mxu0 0.0
  %2183 = vmatpush1.msra.mxu0 %v1498
  %2184 = vmatprep.mubr.f32.mxu0 %v1174
  %2185 = vmatmul.mubr.f32.gmra.mrb[0].mxu0 %v1173
  %v2186 = vpop.f32.mrb[0].mxu0
  %v2187 = vadd.f32 %v2077, %v2186
  %v2188 = vpop.f32.mrb[0].mxu0
  %2189 = vmatprep.mubr.f32.mxu0 %v1190
  %2190 = vmatmul.mubr.f32.gmra.mrb[0].mxu0 %v1189
  %v2191 = vpop.f32.mrb[0].mxu0
  %v2192 = vadd.f32 %v2082, %v2191
  %v2193 = vpop.f32.mrb[0].mxu0
  %2194 = vmatprep.mubr.f32.mxu0 %v1206
  %2195 = vmatmul.mubr.f32.gmra.mrb[0].mxu0 %v1205
  %v2196 = vpop.f32.mrb[0].mxu0
  %v2197 = vadd.f32 %v2087, %v2196
  %v2198 = vpop.f32.mrb[0].mxu0
  %2199 = vmatprep.mubr.f32.mxu0 %v1222
  %2200 = vmatmul.mubr.f32.gmra.mrb[0].mxu0 %v1221
  %v2201 = vpop.f32.mrb[0].mxu0
  %v2202 = vadd.f32 %v2092, %v2201
  %v2203 = vpop.f32.mrb[0].mxu0
  %2204 = vmatprep.mubr.f32.mxu0 %v1238
  %2205 = vmatmul.mubr.f32.gmra.mrb[0].mxu0 %v1237
  %v2206 = vpop.f32.mrb[0].mxu0
  %v2207 = vadd.f32 %v2097, %v2206
  %v2208 = vpop.f32.mrb[0].mxu0
  %2209 = vmatprep.mubr.f32.mxu0 %v1254
  %2210 = vmatmul.mubr.f32.gmra.mrb[0].mxu0 %v1253
  %v2211 = vpop.f32.mrb[0].mxu0
  %v2212 = vadd.f32 %v2102, %v2211
  %v2213 = vpop.f32.mrb[0].mxu0
  %2214 = vmatprep.mubr.f32.mxu0 %v1270
  %2215 = vmatmul.mubr.f32.gmra.mrb[0].mxu0 %v1269
  %v2216 = vpop.f32.mrb[0].mxu0
  %v2217 = vadd.f32 %v2107, %v2216
  %v2218 = vpop.f32.mrb[0].mxu0
  %2219 = vmatprep.mubr.f32.mxu0 %v1286
  %2220 = vmatmul.mubr.f32.gmra.mrb[0].mxu0 %v1285
  %v2221 = vpop.f32.mrb[0].mxu0
  %v2222 = vadd.f32 %v2112, %v2221
  %v2223 = vpop.f32.mrb[0].mxu0
  %2224 = vmatprep.mubr.f32.mxu0 %v1302
  %2225 = vmatmul.mubr.f32.gmra.mrb[0].mxu0 %v1301
  %v2226 = vpop.f32.mrb[0].mxu0
  %v2227 = vadd.f32 %v2117, %v2226
  %v2228 = vpop.f32.mrb[0].mxu0
  %2229 = vdwg.mxu0
  %2230 = vmatprep.subr.mxu0 0.0
  %2231 = vmatpush1.msra.mxu0 %v1499
  %2232 = vmatprep.subr.mxu0 0.0
  %2233 = vmatpush1.msra.mxu0 %v1500
  %2234 = vmatprep.subr.mxu0 0.0
  %2235 = vmatpush1.msra.mxu0 %v1501
  %2236 = vmatprep.subr.mxu0 0.0
  %2237 = vmatpush1.msra.mxu0 %v1502
  %2238 = vmatprep.subr.mxu0 0.0
  %2239 = vmatpush1.msra.mxu0 %v1503
  %2240 = vmatprep.subr.mxu0 0.0
  %2241 = vmatpush1.msra.mxu0 %v1504
  %2242 = vmatprep.subr.mxu0 0.0
  %2243 = vmatpush1.msra.mxu0 %v1505
  %2244 = vmatprep.subr.mxu0 0.0
  %2245 = vmatpush1.msra.mxu0 %v1506
  %2246 = vmatprep.subr.mxu0 0.0
  %2247 = vmatpush1.msra.mxu0 %v1507
  %2248 = vmatprep.subr.mxu0 0.0
  %2249 = vmatpush1.msra.mxu0 %v1508
  %2250 = vmatprep.subr.mxu0 0.0
  %2251 = vmatpush1.msra.mxu0 %v1509
  %2252 = vmatprep.subr.mxu0 0.0
  %2253 = vmatpush1.msra.mxu0 %v1510
  %2254 = vmatprep.subr.mxu0 0.0
  %2255 = vmatpush1.msra.mxu0 %v1511
  %2256 = vmatprep.subr.mxu0 0.0
  %2257 = vmatpush1.msra.mxu0 %v1512
  %2258 = vmatprep.subr.mxu0 0.0
  %2259 = vmatpush1.msra.mxu0 %v1513
  %2260 = vmatprep.subr.mxu0 0.0
  %2261 = vmatpush1.msra.mxu0 %v1514
  %2262 = vmatprep.subr.mxu0 0.0
  %2263 = vmatpush1.msra.mxu0 %v1515
  %2264 = vmatprep.subr.mxu0 0.0
  %2265 = vmatpush1.msra.mxu0 %v1516
  %2266 = vmatprep.subr.mxu0 0.0
  %2267 = vmatpush1.msra.mxu0 %v1517
  %2268 = vmatprep.subr.mxu0 0.0
  %2269 = vmatpush1.msra.mxu0 %v1518
  %2270 = vmatprep.subr.mxu0 0.0
  %2271 = vmatpush1.msra.mxu0 %v1519
  %2272 = vmatprep.subr.mxu0 0.0
  %2273 = vmatpush1.msra.mxu0 %v1520
  %2274 = vmatprep.subr.mxu0 0.0
  %2275 = vmatpush1.msra.mxu0 %v1521
  %2276 = vmatprep.subr.mxu0 0.0
  %2277 = vmatpush1.msra.mxu0 %v1522
  %2278 = vmatprep.subr.mxu0 0.0
  %2279 = vmatpush1.msra.mxu0 %v1523
  %2280 = vmatprep.subr.mxu0 0.0
  %2281 = vmatpush1.msra.mxu0 %v1524
  %2282 = vmatprep.subr.mxu0 0.0
  %2283 = vmatpush1.msra.mxu0 %v1525
  %2284 = vmatprep.subr.mxu0 0.0
  %2285 = vmatpush1.msra.mxu0 %v1526
  %2286 = vmatprep.subr.mxu0 0.0
  %2287 = vmatpush1.msra.mxu0 %v1527
  %2288 = vmatprep.subr.mxu0 0.0
  %2289 = vmatpush1.msra.mxu0 %v1528
  %2290 = vmatprep.subr.mxu0 0.0
  %2291 = vmatpush1.msra.mxu0 %v1529
  %2292 = vmatprep.subr.mxu0 0.0
  %2293 = vmatpush1.msra.mxu0 %v1530
  %2294 = vmatprep.mubr.f32.mxu0 %v1176
  %2295 = vmatmul.mubr.f32.gmra.mrb[0].mxu0 %v1175
  %v2296 = vpop.f32.mrb[0].mxu0
  %v2297 = vadd.f32 %v2187, %v2296
  %v2298 = vpop.f32.mrb[0].mxu0
  %2299 = vmatprep.mubr.f32.mxu0 %v1192
  %2300 = vmatmul.mubr.f32.gmra.mrb[0].mxu0 %v1191
  %v2301 = vpop.f32.mrb[0].mxu0
  %v2302 = vadd.f32 %v2192, %v2301
  %v2303 = vpop.f32.mrb[0].mxu0
  %2304 = vmatprep.mubr.f32.mxu0 %v1208
  %2305 = vmatmul.mubr.f32.gmra.mrb[0].mxu0 %v1207
  %v2306 = vpop.f32.mrb[0].mxu0
  %v2307 = vadd.f32 %v2197, %v2306
  %v2308 = vpop.f32.mrb[0].mxu0
  %2309 = vmatprep.mubr.f32.mxu0 %v1224
  %2310 = vmatmul.mubr.f32.gmra.mrb[0].mxu0 %v1223
  %v2311 = vpop.f32.mrb[0].mxu0
  %v2312 = vadd.f32 %v2202, %v2311
  %v2313 = vpop.f32.mrb[0].mxu0
  %2314 = vmatprep.mubr.f32.mxu0 %v1240
  %2315 = vmatmul.mubr.f32.gmra.mrb[0].mxu0 %v1239
  %v2316 = vpop.f32.mrb[0].mxu0
  %v2317 = vadd.f32 %v2207, %v2316
  %v2318 = vpop.f32.mrb[0].mxu0
  %2319 = vmatprep.mubr.f32.mxu0 %v1256
  %2320 = vmatmul.mubr.f32.gmra.mrb[0].mxu0 %v1255
  %v2321 = vpop.f32.mrb[0].mxu0
  %v2322 = vadd.f32 %v2212, %v2321
  %v2323 = vpop.f32.mrb[0].mxu0
  %2324 = vmatprep.mubr.f32.mxu0 %v1272
  %2325 = vmatmul.mubr.f32.gmra.mrb[0].mxu0 %v1271
  %v2326 = vpop.f32.mrb[0].mxu0
  %v2327 = vadd.f32 %v2217, %v2326
  %v2328 = vpop.f32.mrb[0].mxu0
  %2329 = vmatprep.mubr.f32.mxu0 %v1288
  %2330 = vmatmul.mubr.f32.gmra.mrb[0].mxu0 %v1287
  %v2331 = vpop.f32.mrb[0].mxu0
  %v2332 = vadd.f32 %v2222, %v2331
  %v2333 = vpop.f32.mrb[0].mxu0
  %2334 = vmatprep.mubr.f32.mxu0 %v1304
  %2335 = vmatmul.mubr.f32.gmra.mrb[0].mxu0 %v1303
  %v2336 = vpop.f32.mrb[0].mxu0
  %v2337 = vadd.f32 %v2227, %v2336
  %v2338 = vpop.f32.mrb[0].mxu0
  %2339 = vdwg.mxu0
  %2340 = vmatprep.subr.mxu0 0.0
  %2341 = vmatpush1.msra.mxu0 %v1531
  %2342 = vmatprep.subr.mxu0 0.0
  %2343 = vmatpush1.msra.mxu0 %v1532
  %2344 = vmatprep.subr.mxu0 0.0
  %2345 = vmatpush1.msra.mxu0 %v1533
  %2346 = vmatprep.subr.mxu0 0.0
  %2347 = vmatpush1.msra.mxu0 %v1534
  %2348 = vmatprep.subr.mxu0 0.0
  %2349 = vmatpush1.msra.mxu0 %v1535
  %2350 = vmatprep.subr.mxu0 0.0
  %2351 = vmatpush1.msra.mxu0 %v1536
  %2352 = vmatprep.subr.mxu0 0.0
  %2353 = vmatpush1.msra.mxu0 %v1537
  %2354 = vmatprep.subr.mxu0 0.0
  %2355 = vmatpush1.msra.mxu0 %v1538
  %2356 = vmatprep.subr.mxu0 0.0
  %2357 = vmatpush1.msra.mxu0 %v1539
  %2358 = vmatprep.subr.mxu0 0.0
  %2359 = vmatpush1.msra.mxu0 %v1540
  %2360 = vmatprep.subr.mxu0 0.0
  %2361 = vmatpush1.msra.mxu0 %v1541
  %2362 = vmatprep.subr.mxu0 0.0
  %2363 = vmatpush1.msra.mxu0 %v1542
  %2364 = vmatprep.subr.mxu0 0.0
  %2365 = vmatpush1.msra.mxu0 %v1543
  %2366 = vmatprep.subr.mxu0 0.0
  %2367 = vmatpush1.msra.mxu0 %v1544
  %2368 = vmatprep.subr.mxu0 0.0
  %2369 = vmatpush1.msra.mxu0 %v1545
  %2370 = vmatprep.subr.mxu0 0.0
  %2371 = vmatpush1.msra.mxu0 %v1546
  %2372 = vmatprep.subr.mxu0 0.0
  %2373 = vmatpush1.msra.mxu0 %v1547
  %2374 = vmatprep.subr.mxu0 0.0
  %2375 = vmatpush1.msra.mxu0 %v1548
  %2376 = vmatprep.subr.mxu0 0.0
  %2377 = vmatpush1.msra.mxu0 %v1549
  %2378 = vmatprep.subr.mxu0 0.0
  %2379 = vmatpush1.msra.mxu0 %v1550
  %2380 = vmatprep.subr.mxu0 0.0
  %2381 = vmatpush1.msra.mxu0 %v1551
  %2382 = vmatprep.subr.mxu0 0.0
  %2383 = vmatpush1.msra.mxu0 %v1552
  %2384 = vmatprep.subr.mxu0 0.0
  %2385 = vmatpush1.msra.mxu0 %v1553
  %2386 = vmatprep.subr.mxu0 0.0
  %2387 = vmatpush1.msra.mxu0 %v1554
  %2388 = vmatprep.subr.mxu0 0.0
  %2389 = vmatpush1.msra.mxu0 %v1555
  %2390 = vmatprep.subr.mxu0 0.0
  %2391 = vmatpush1.msra.mxu0 %v1556
  %2392 = vmatprep.subr.mxu0 0.0
  %2393 = vmatpush1.msra.mxu0 %v1557
  %2394 = vmatprep.subr.mxu0 0.0
  %2395 = vmatpush1.msra.mxu0 %v1558
  %2396 = vmatprep.subr.mxu0 0.0
  %2397 = vmatpush1.msra.mxu0 %v1559
  %2398 = vmatprep.subr.mxu0 0.0
  %2399 = vmatpush1.msra.mxu0 %v1560
  %2400 = vmatprep.subr.mxu0 0.0
  %2401 = vmatpush1.msra.mxu0 %v1561
  %2402 = vmatprep.subr.mxu0 0.0
  %2403 = vmatpush1.msra.mxu0 %v1562
  %2404 = vmatprep.mubr.f32.mxu0 %v1178
  %2405 = vmatmul.mubr.f32.gmra.mrb[0].mxu0 %v1177
  %v2406 = vpop.f32.mrb[0].mxu0
  %v2407 = vadd.f32 %v2297, %v2406
  %v2408 = vpop.f32.mrb[0].mxu0
  %2409 = vmatprep.mubr.f32.mxu0 %v1194
  %2410 = vmatmul.mubr.f32.gmra.mrb[0].mxu0 %v1193
  %v2411 = vpop.f32.mrb[0].mxu0
  %v2412 = vadd.f32 %v2302, %v2411
  %v2413 = vpop.f32.mrb[0].mxu0
  %2414 = vmatprep.mubr.f32.mxu0 %v1210
  %2415 = vmatmul.mubr.f32.gmra.mrb[0].mxu0 %v1209
  %v2416 = vpop.f32.mrb[0].mxu0
  %v2417 = vadd.f32 %v2307, %v2416
  %v2418 = vpop.f32.mrb[0].mxu0
  %2419 = vmatprep.mubr.f32.mxu0 %v1226
  %2420 = vmatmul.mubr.f32.gmra.mrb[0].mxu0 %v1225
  %v2421 = vpop.f32.mrb[0].mxu0
  %v2422 = vadd.f32 %v2312, %v2421
  %v2423 = vpop.f32.mrb[0].mxu0
  %2424 = vmatprep.mubr.f32.mxu0 %v1242
  %2425 = vmatmul.mubr.f32.gmra.mrb[0].mxu0 %v1241
  %v2426 = vpop.f32.mrb[0].mxu0
  %v2427 = vadd.f32 %v2317, %v2426
  %v2428 = vpop.f32.mrb[0].mxu0
  %2429 = vmatprep.mubr.f32.mxu0 %v1258
  %2430 = vmatmul.mubr.f32.gmra.mrb[0].mxu0 %v1257
  %v2431 = vpop.f32.mrb[0].mxu0
  %v2432 = vadd.f32 %v2322, %v2431
  %v2433 = vpop.f32.mrb[0].mxu0
  %2434 = vmatprep.mubr.f32.mxu0 %v1274
  %2435 = vmatmul.mubr.f32.gmra.mrb[0].mxu0 %v1273
  %v2436 = vpop.f32.mrb[0].mxu0
  %v2437 = vadd.f32 %v2327, %v2436
  %v2438 = vpop.f32.mrb[0].mxu0
  %2439 = vmatprep.mubr.f32.mxu0 %v1290
  %2440 = vmatmul.mubr.f32.gmra.mrb[0].mxu0 %v1289
  %v2441 = vpop.f32.mrb[0].mxu0
  %v2442 = vadd.f32 %v2332, %v2441
  %v2443 = vpop.f32.mrb[0].mxu0
  %2444 = vmatprep.mubr.f32.mxu0 %v1306
  %2445 = vmatmul.mubr.f32.gmra.mrb[0].mxu0 %v1305
  %v2446 = vpop.f32.mrb[0].mxu0
  %v2447 = vadd.f32 %v2337, %v2446
  %v2448 = vpop.f32.mrb[0].mxu0
  %2449 = vdwg.mxu0
  %v2450 = vmax.f32 %v2407, 0.0
  %v2451 = vmax.f32 %v2412, 0.0
  %v2452 = vmax.f32 %v2417, 0.0
  %v2453 = vmax.f32 %v2422, 0.0
  %v2454 = vmax.f32 %v2427, 0.0
  %v2455 = vmax.f32 %v2432, 0.0
  %v2456 = vmax.f32 %v2437, 0.0
  %v2457 = vmax.f32 %v2442, 0.0
  %v2458 = vmax.f32 %v2447, 0.0
  %v2459 = vld [vmem:[%s5] sm:$0xff]
  %v2460 = vld [vmem:[%s5 + $0x8] sm:$0xff]
  %v2461 = vld [vmem:[%s5 + $0x10] sm:$0xff]
  %v2462 = vld [vmem:[%s5 + $0x18] sm:$0xff]
  %v2463 = vld [vmem:[%s5 + $0x20] sm:$0xff]
  %v2464 = vld [vmem:[%s5 + $0x28] sm:$0xff]
  %v2465 = vld [vmem:[%s5 + $0x30] sm:$0xff]
  %v2466 = vld [vmem:[%s5 + $0x38] sm:$0xff]
  %v2467 = vld [vmem:[%s5 + $0x40] sm:$0xff]
  %v2468 = vld [vmem:[%s5 + $0x48] sm:$0xff]
  %v2469 = vld [vmem:[%s5 + $0x50] sm:$0xff]
  %v2470 = vld [vmem:[%s5 + $0x58] sm:$0xff]
  %v2471 = vld [vmem:[%s5 + $0x60] sm:$0xff]
  %v2472 = vld [vmem:[%s5 + $0x68] sm:$0xff]
  %v2473 = vld [vmem:[%s5 + $0x70] sm:$0xff]
  %v2474 = vld [vmem:[%s5 + $0x78] sm:$0xff]
  %vm2475 = vcmask 523264
  %v2477 = vsel %vm2475, %v2451, 0
  %2479 = vmatprep.subr.mxu0 0.0
  %2480 = vmatpush1.msra.mxu0 %v2467
  %2481 = vmatprep.subr.mxu0 0.0
  %2482 = vmatpush1.msra.mxu0 %v2468
  %2483 = vmatprep.subr.mxu0 0.0
  %2484 = vmatpush1.msra.mxu0 %v2469
  %2485 = vmatprep.subr.mxu0 0.0
  %2486 = vmatpush1.msra.mxu0 %v2470
  %2487 = vmatprep.subr.mxu0 0.0
  %2488 = vmatpush1.msra.mxu0 %v2471
  %2489 = vmatprep.subr.mxu0 0.0
  %2490 = vmatpush1.msra.mxu0 %v2472
  %2491 = vmatprep.subr.mxu0 0.0
  %2492 = vmatpush1.msra.mxu0 %v2473
  %2493 = vmatprep.subr.mxu0 0.0
  %2494 = vmatpush1.msra.mxu0 %v2474
  %2495 = vmatprep.subr.mxu0 0.0
  %2496 = vmatpush1.msra.mxu0 0.0
  %2497 = vmatprep.subr.mxu0 0.0
  %2498 = vmatpush1.msra.mxu0 0.0
  %2499 = vmatprep.subr.mxu0 0.0
  %2500 = vmatpush1.msra.mxu0 0.0
  %2501 = vmatprep.subr.mxu0 0.0
  %2502 = vmatpush1.msra.mxu0 0.0
  %2503 = vmatprep.subr.mxu0 0.0
  %2504 = vmatpush1.msra.mxu0 0.0
  %2505 = vmatprep.subr.mxu0 0.0
  %2506 = vmatpush1.msra.mxu0 0.0
  %2507 = vmatprep.subr.mxu0 0.0
  %2508 = vmatpush1.msra.mxu0 0.0
  %2509 = vmatprep.subr.mxu0 0.0
  %2510 = vmatpush1.msra.mxu0 0.0
  %2511 = vmatprep.subr.mxu0 0.0
  %2512 = vmatpush1.msra.mxu0 0.0
  %2513 = vmatprep.subr.mxu0 0.0
  %2514 = vmatpush1.msra.mxu0 0.0
  %2515 = vmatprep.subr.mxu0 0.0
  %2516 = vmatpush1.msra.mxu0 0.0
  %2517 = vmatprep.subr.mxu0 0.0
  %2518 = vmatpush1.msra.mxu0 0.0
  %2519 = vmatprep.subr.mxu0 0.0
  %2520 = vmatpush1.msra.mxu0 0.0
  %2521 = vmatprep.subr.mxu0 0.0
  %2522 = vmatpush1.msra.mxu0 0.0
  %2523 = vmatprep.subr.mxu0 0.0
  %2524 = vmatpush1.msra.mxu0 0.0
  %2525 = vmatprep.subr.mxu0 0.0
  %2526 = vmatpush1.msra.mxu0 0.0
  %2527 = vmatprep.subr.mxu0 0.0
  %2528 = vmatpush1.msra.mxu0 0.0
  %2529 = vmatprep.subr.mxu0 0.0
  %2530 = vmatpush1.msra.mxu0 0.0
  %2531 = vmatprep.subr.mxu0 0.0
  %2532 = vmatpush1.msra.mxu0 0.0
  %2533 = vmatprep.subr.mxu0 0.0
  %2534 = vmatpush1.msra.mxu0 0.0
  %2535 = vmatprep.subr.mxu0 0.0
  %2536 = vmatpush1.msra.mxu0 0.0
  %2537 = vmatprep.subr.mxu0 0.0
  %2538 = vmatpush1.msra.mxu0 0.0
  %2539 = vmatprep.subr.mxu0 0.0
  %2540 = vmatpush1.msra.mxu0 0.0
  %2541 = vmatprep.subr.mxu0 0.0
  %2542 = vmatpush1.msra.mxu0 0.0
  %2543 = vmatprep.mubr.f32.mxu0 0.0
  %2544 = vmatmul.mubr.f32.gmra.mrb[0].mxu0 %v2477
  %v2545 = vpop.f32.mrb[0].mxu0
  %v2546 = vadd.f32 0.0, %v2545
  %v2547 = vpop.f32.mrb[0].mxu0
  %2548 = vdwg.mxu0
  %v2550 = vsel %vm2475, %v2450, 0
  %2552 = vmatprep.subr.mxu0 0.0
  %2553 = vmatpush1.msra.mxu0 %v2459
  %2554 = vmatprep.subr.mxu0 0.0
  %2555 = vmatpush1.msra.mxu0 %v2460
  %2556 = vmatprep.subr.mxu0 0.0
  %2557 = vmatpush1.msra.mxu0 %v2461
  %2558 = vmatprep.subr.mxu0 0.0
  %2559 = vmatpush1.msra.mxu0 %v2462
  %2560 = vmatprep.subr.mxu0 0.0
  %2561 = vmatpush1.msra.mxu0 %v2463
  %2562 = vmatprep.subr.mxu0 0.0
  %2563 = vmatpush1.msra.mxu0 %v2464
  %2564 = vmatprep.subr.mxu0 0.0
  %2565 = vmatpush1.msra.mxu0 %v2465
  %2566 = vmatprep.subr.mxu0 0.0
  %2567 = vmatpush1.msra.mxu0 %v2466
  %2568 = vmatprep.subr.mxu0 0.0
  %2569 = vmatpush1.msra.mxu0 0.0
  %2570 = vmatprep.subr.mxu0 0.0
  %2571 = vmatpush1.msra.mxu0 0.0
  %2572 = vmatprep.subr.mxu0 0.0
  %2573 = vmatpush1.msra.mxu0 0.0
  %2574 = vmatprep.subr.mxu0 0.0
  %2575 = vmatpush1.msra.mxu0 0.0
  %2576 = vmatprep.subr.mxu0 0.0
  %2577 = vmatpush1.msra.mxu0 0.0
  %2578 = vmatprep.subr.mxu0 0.0
  %2579 = vmatpush1.msra.mxu0 0.0
  %2580 = vmatprep.subr.mxu0 0.0
  %2581 = vmatpush1.msra.mxu0 0.0
  %2582 = vmatprep.subr.mxu0 0.0
  %2583 = vmatpush1.msra.mxu0 0.0
  %2584 = vmatprep.subr.mxu0 0.0
  %2585 = vmatpush1.msra.mxu0 0.0
  %2586 = vmatprep.subr.mxu0 0.0
  %2587 = vmatpush1.msra.mxu0 0.0
  %2588 = vmatprep.subr.mxu0 0.0
  %2589 = vmatpush1.msra.mxu0 0.0
  %2590 = vmatprep.subr.mxu0 0.0
  %2591 = vmatpush1.msra.mxu0 0.0
  %2592 = vmatprep.subr.mxu0 0.0
  %2593 = vmatpush1.msra.mxu0 0.0
  %2594 = vmatprep.subr.mxu0 0.0
  %2595 = vmatpush1.msra.mxu0 0.0
  %2596 = vmatprep.subr.mxu0 0.0
  %2597 = vmatpush1.msra.mxu0 0.0
  %2598 = vmatprep.subr.mxu0 0.0
  %2599 = vmatpush1.msra.mxu0 0.0
  %2600 = vmatprep.subr.mxu0 0.0
  %2601 = vmatpush1.msra.mxu0 0.0
  %2602 = vmatprep.subr.mxu0 0.0
  %2603 = vmatpush1.msra.mxu0 0.0
  %2604 = vmatprep.subr.mxu0 0.0
  %2605 = vmatpush1.msra.mxu0 0.0
  %2606 = vmatprep.subr.mxu0 0.0
  %2607 = vmatpush1.msra.mxu0 0.0
  %2608 = vmatprep.subr.mxu0 0.0
  %2609 = vmatpush1.msra.mxu0 0.0
  %2610 = vmatprep.subr.mxu0 0.0
  %2611 = vmatpush1.msra.mxu0 0.0
  %2612 = vmatprep.subr.mxu0 0.0
  %2613 = vmatpush1.msra.mxu0 0.0
  %2614 = vmatprep.subr.mxu0 0.0
  %2615 = vmatpush1.msra.mxu0 0.0
  %2616 = vmatprep.mubr.f32.mxu0 0.0
  %2617 = vmatmul.mubr.f32.gmra.mrb[0].mxu0 %v2550
  %v2618 = vpop.f32.mrb[0].mxu0
  %v2619 = vadd.f32 %v2546, %v2618
  %v2620 = vpop.f32.mrb[0].mxu0
  %2621 = vdwg.mxu0
  %v2622 = vld [vmem:[%s5 + $0x80] sm:$0xff]
  %v2623 = vld [vmem:[%s5 + $0x88] sm:$0xff]
  %v2624 = vld [vmem:[%s5 + $0x90] sm:$0xff]
  %v2625 = vld [vmem:[%s5 + $0x98] sm:$0xff]
  %v2626 = vld [vmem:[%s5 + $0xa0] sm:$0xff]
  %v2627 = vld [vmem:[%s5 + $0xa8] sm:$0xff]
  %v2628 = vld [vmem:[%s5 + $0xb0] sm:$0xff]
  %v2629 = vld [vmem:[%s5 + $0xb8] sm:$0xff]
  %v2631 = vsel %vm2475, %v2452, 0
  %2633 = vmatprep.subr.mxu0 0.0
  %2634 = vmatpush1.msra.mxu0 %v2622
  %2635 = vmatprep.subr.mxu0 0.0
  %2636 = vmatpush1.msra.mxu0 %v2623
  %2637 = vmatprep.subr.mxu0 0.0
  %2638 = vmatpush1.msra.mxu0 %v2624
  %2639 = vmatprep.subr.mxu0 0.0
  %2640 = vmatpush1.msra.mxu0 %v2625
  %2641 = vmatprep.subr.mxu0 0.0
  %2642 = vmatpush1.msra.mxu0 %v2626
  %2643 = vmatprep.subr.mxu0 0.0
  %2644 = vmatpush1.msra.mxu0 %v2627
  %2645 = vmatprep.subr.mxu0 0.0
  %2646 = vmatpush1.msra.mxu0 %v2628
  %2647 = vmatprep.subr.mxu0 0.0
  %2648 = vmatpush1.msra.mxu0 %v2629
  %2649 = vmatprep.subr.mxu0 0.0
  %2650 = vmatpush1.msra.mxu0 0.0
  %2651 = vmatprep.subr.mxu0 0.0
  %2652 = vmatpush1.msra.mxu0 0.0
  %2653 = vmatprep.subr.mxu0 0.0
  %2654 = vmatpush1.msra.mxu0 0.0
  %2655 = vmatprep.subr.mxu0 0.0
  %2656 = vmatpush1.msra.mxu0 0.0
  %2657 = vmatprep.subr.mxu0 0.0
  %2658 = vmatpush1.msra.mxu0 0.0
  %2659 = vmatprep.subr.mxu0 0.0
  %2660 = vmatpush1.msra.mxu0 0.0
  %2661 = vmatprep.subr.mxu0 0.0
  %2662 = vmatpush1.msra.mxu0 0.0
  %2663 = vmatprep.subr.mxu0 0.0
  %2664 = vmatpush1.msra.mxu0 0.0
  %2665 = vmatprep.subr.mxu0 0.0
  %2666 = vmatpush1.msra.mxu0 0.0
  %2667 = vmatprep.subr.mxu0 0.0
  %2668 = vmatpush1.msra.mxu0 0.0
  %2669 = vmatprep.subr.mxu0 0.0
  %2670 = vmatpush1.msra.mxu0 0.0
  %2671 = vmatprep.subr.mxu0 0.0
  %2672 = vmatpush1.msra.mxu0 0.0
  %2673 = vmatprep.subr.mxu0 0.0
  %2674 = vmatpush1.msra.mxu0 0.0
  %2675 = vmatprep.subr.mxu0 0.0
  %2676 = vmatpush1.msra.mxu0 0.0
  %2677 = vmatprep.subr.mxu0 0.0
  %2678 = vmatpush1.msra.mxu0 0.0
  %2679 = vmatprep.subr.mxu0 0.0
  %2680 = vmatpush1.msra.mxu0 0.0
  %2681 = vmatprep.subr.mxu0 0.0
  %2682 = vmatpush1.msra.mxu0 0.0
  %2683 = vmatprep.subr.mxu0 0.0
  %2684 = vmatpush1.msra.mxu0 0.0
  %2685 = vmatprep.subr.mxu0 0.0
  %2686 = vmatpush1.msra.mxu0 0.0
  %2687 = vmatprep.subr.mxu0 0.0
  %2688 = vmatpush1.msra.mxu0 0.0
  %2689 = vmatprep.subr.mxu0 0.0
  %2690 = vmatpush1.msra.mxu0 0.0
  %2691 = vmatprep.subr.mxu0 0.0
  %2692 = vmatpush1.msra.mxu0 0.0
  %2693 = vmatprep.subr.mxu0 0.0
  %2694 = vmatpush1.msra.mxu0 0.0
  %2695 = vmatprep.subr.mxu0 0.0
  %2696 = vmatpush1.msra.mxu0 0.0
  %2697 = vmatprep.mubr.f32.mxu0 0.0
  %2698 = vmatmul.mubr.f32.gmra.mrb[0].mxu0 %v2631
  %v2699 = vpop.f32.mrb[0].mxu0
  %v2700 = vadd.f32 0.0, %v2699
  %v2701 = vpop.f32.mrb[0].mxu0
  %2702 = vdwg.mxu0
  %v2703 = vadd.f32 %v2619, %v2700
  %v2704 = vld [vmem:[%s5 + $0xc0] sm:$0xff]
  %v2705 = vld [vmem:[%s5 + $0xc8] sm:$0xff]
  %v2706 = vld [vmem:[%s5 + $0xd0] sm:$0xff]
  %v2707 = vld [vmem:[%s5 + $0xd8] sm:$0xff]
  %v2708 = vld [vmem:[%s5 + $0xe0] sm:$0xff]
  %v2709 = vld [vmem:[%s5 + $0xe8] sm:$0xff]
  %v2710 = vld [vmem:[%s5 + $0xf0] sm:$0xff]
  %v2711 = vld [vmem:[%s5 + $0xf8] sm:$0xff]
  %v2713 = vsel %vm2475, %v2453, 0
  %2715 = vmatprep.subr.mxu0 0.0
  %2716 = vmatpush1.msra.mxu0 %v2704
  %2717 = vmatprep.subr.mxu0 0.0
  %2718 = vmatpush1.msra.mxu0 %v2705
  %2719 = vmatprep.subr.mxu0 0.0
  %2720 = vmatpush1.msra.mxu0 %v2706
  %2721 = vmatprep.subr.mxu0 0.0
  %2722 = vmatpush1.msra.mxu0 %v2707
  %2723 = vmatprep.subr.mxu0 0.0
  %2724 = vmatpush1.msra.mxu0 %v2708
  %2725 = vmatprep.subr.mxu0 0.0
  %2726 = vmatpush1.msra.mxu0 %v2709
  %2727 = vmatprep.subr.mxu0 0.0
  %2728 = vmatpush1.msra.mxu0 %v2710
  %2729 = vmatprep.subr.mxu0 0.0
  %2730 = vmatpush1.msra.mxu0 %v2711
  %2731 = vmatprep.subr.mxu0 0.0
  %2732 = vmatpush1.msra.mxu0 0.0
  %2733 = vmatprep.subr.mxu0 0.0
  %2734 = vmatpush1.msra.mxu0 0.0
  %2735 = vmatprep.subr.mxu0 0.0
  %2736 = vmatpush1.msra.mxu0 0.0
  %2737 = vmatprep.subr.mxu0 0.0
  %2738 = vmatpush1.msra.mxu0 0.0
  %2739 = vmatprep.subr.mxu0 0.0
  %2740 = vmatpush1.msra.mxu0 0.0
  %2741 = vmatprep.subr.mxu0 0.0
  %2742 = vmatpush1.msra.mxu0 0.0
  %2743 = vmatprep.subr.mxu0 0.0
  %2744 = vmatpush1.msra.mxu0 0.0
  %2745 = vmatprep.subr.mxu0 0.0
  %2746 = vmatpush1.msra.mxu0 0.0
  %2747 = vmatprep.subr.mxu0 0.0
  %2748 = vmatpush1.msra.mxu0 0.0
  %2749 = vmatprep.subr.mxu0 0.0
  %2750 = vmatpush1.msra.mxu0 0.0
  %2751 = vmatprep.subr.mxu0 0.0
  %2752 = vmatpush1.msra.mxu0 0.0
  %2753 = vmatprep.subr.mxu0 0.0
  %2754 = vmatpush1.msra.mxu0 0.0
  %2755 = vmatprep.subr.mxu0 0.0
  %2756 = vmatpush1.msra.mxu0 0.0
  %2757 = vmatprep.subr.mxu0 0.0
  %2758 = vmatpush1.msra.mxu0 0.0
  %2759 = vmatprep.subr.mxu0 0.0
  %2760 = vmatpush1.msra.mxu0 0.0
  %2761 = vmatprep.subr.mxu0 0.0
  %2762 = vmatpush1.msra.mxu0 0.0
  %2763 = vmatprep.subr.mxu0 0.0
  %2764 = vmatpush1.msra.mxu0 0.0
  %2765 = vmatprep.subr.mxu0 0.0
  %2766 = vmatpush1.msra.mxu0 0.0
  %2767 = vmatprep.subr.mxu0 0.0
  %2768 = vmatpush1.msra.mxu0 0.0
  %2769 = vmatprep.subr.mxu0 0.0
  %2770 = vmatpush1.msra.mxu0 0.0
  %2771 = vmatprep.subr.mxu0 0.0
  %2772 = vmatpush1.msra.mxu0 0.0
  %2773 = vmatprep.subr.mxu0 0.0
  %2774 = vmatpush1.msra.mxu0 0.0
  %2775 = vmatprep.subr.mxu0 0.0
  %2776 = vmatpush1.msra.mxu0 0.0
  %2777 = vmatprep.subr.mxu0 0.0
  %2778 = vmatpush1.msra.mxu0 0.0
  %2779 = vmatprep.mubr.f32.mxu0 0.0
  %2780 = vmatmul.mubr.f32.gmra.mrb[0].mxu0 %v2713
  %v2781 = vpop.f32.mrb[0].mxu0
  %v2782 = vadd.f32 0.0, %v2781
  %v2783 = vpop.f32.mrb[0].mxu0
  %2784 = vdwg.mxu0
  %v2785 = vadd.f32 %v2703, %v2782
  %v2786 = vld [vmem:[%s5 + $0x100] sm:$0xff]
  %v2787 = vld [vmem:[%s5 + $0x108] sm:$0xff]
  %v2788 = vld [vmem:[%s5 + $0x110] sm:$0xff]
  %v2789 = vld [vmem:[%s5 + $0x118] sm:$0xff]
  %v2790 = vld [vmem:[%s5 + $0x120] sm:$0xff]
  %v2791 = vld [vmem:[%s5 + $0x128] sm:$0xff]
  %v2792 = vld [vmem:[%s5 + $0x130] sm:$0xff]
  %v2793 = vld [vmem:[%s5 + $0x138] sm:$0xff]
  %v2795 = vsel %vm2475, %v2454, 0
  %2797 = vmatprep.subr.mxu0 0.0
  %2798 = vmatpush1.msra.mxu0 %v2786
  %2799 = vmatprep.subr.mxu0 0.0
  %2800 = vmatpush1.msra.mxu0 %v2787
  %2801 = vmatprep.subr.mxu0 0.0
  %2802 = vmatpush1.msra.mxu0 %v2788
  %2803 = vmatprep.subr.mxu0 0.0
  %2804 = vmatpush1.msra.mxu0 %v2789
  %2805 = vmatprep.subr.mxu0 0.0
  %2806 = vmatpush1.msra.mxu0 %v2790
  %2807 = vmatprep.subr.mxu0 0.0
  %2808 = vmatpush1.msra.mxu0 %v2791
  %2809 = vmatprep.subr.mxu0 0.0
  %2810 = vmatpush1.msra.mxu0 %v2792
  %2811 = vmatprep.subr.mxu0 0.0
  %2812 = vmatpush1.msra.mxu0 %v2793
  %2813 = vmatprep.subr.mxu0 0.0
  %2814 = vmatpush1.msra.mxu0 0.0
  %2815 = vmatprep.subr.mxu0 0.0
  %2816 = vmatpush1.msra.mxu0 0.0
  %2817 = vmatprep.subr.mxu0 0.0
  %2818 = vmatpush1.msra.mxu0 0.0
  %2819 = vmatprep.subr.mxu0 0.0
  %2820 = vmatpush1.msra.mxu0 0.0
  %2821 = vmatprep.subr.mxu0 0.0
  %2822 = vmatpush1.msra.mxu0 0.0
  %2823 = vmatprep.subr.mxu0 0.0
  %2824 = vmatpush1.msra.mxu0 0.0
  %2825 = vmatprep.subr.mxu0 0.0
  %2826 = vmatpush1.msra.mxu0 0.0
  %2827 = vmatprep.subr.mxu0 0.0
  %2828 = vmatpush1.msra.mxu0 0.0
  %2829 = vmatprep.subr.mxu0 0.0
  %2830 = vmatpush1.msra.mxu0 0.0
  %2831 = vmatprep.subr.mxu0 0.0
  %2832 = vmatpush1.msra.mxu0 0.0
  %2833 = vmatprep.subr.mxu0 0.0
  %2834 = vmatpush1.msra.mxu0 0.0
  %2835 = vmatprep.subr.mxu0 0.0
  %2836 = vmatpush1.msra.mxu0 0.0
  %2837 = vmatprep.subr.mxu0 0.0
  %2838 = vmatpush1.msra.mxu0 0.0
  %2839 = vmatprep.subr.mxu0 0.0
  %2840 = vmatpush1.msra.mxu0 0.0
  %2841 = vmatprep.subr.mxu0 0.0
  %2842 = vmatpush1.msra.mxu0 0.0
  %2843 = vmatprep.subr.mxu0 0.0
  %2844 = vmatpush1.msra.mxu0 0.0
  %2845 = vmatprep.subr.mxu0 0.0
  %2846 = vmatpush1.msra.mxu0 0.0
  %2847 = vmatprep.subr.mxu0 0.0
  %2848 = vmatpush1.msra.mxu0 0.0
  %2849 = vmatprep.subr.mxu0 0.0
  %2850 = vmatpush1.msra.mxu0 0.0
  %2851 = vmatprep.subr.mxu0 0.0
  %2852 = vmatpush1.msra.mxu0 0.0
  %2853 = vmatprep.subr.mxu0 0.0
  %2854 = vmatpush1.msra.mxu0 0.0
  %2855 = vmatprep.subr.mxu0 0.0
  %2856 = vmatpush1.msra.mxu0 0.0
  %2857 = vmatprep.subr.mxu0 0.0
  %2858 = vmatpush1.msra.mxu0 0.0
  %2859 = vmatprep.subr.mxu0 0.0
  %2860 = vmatpush1.msra.mxu0 0.0
  %2861 = vmatprep.mubr.f32.mxu0 0.0
  %2862 = vmatmul.mubr.f32.gmra.mrb[0].mxu0 %v2795
  %v2863 = vpop.f32.mrb[0].mxu0
  %v2864 = vadd.f32 0.0, %v2863
  %v2865 = vpop.f32.mrb[0].mxu0
  %2866 = vdwg.mxu0
  %v2867 = vadd.f32 %v2785, %v2864
  %v2868 = vld [vmem:[%s5 + $0x140] sm:$0xff]
  %v2869 = vld [vmem:[%s5 + $0x148] sm:$0xff]
  %v2870 = vld [vmem:[%s5 + $0x150] sm:$0xff]
  %v2871 = vld [vmem:[%s5 + $0x158] sm:$0xff]
  %v2872 = vld [vmem:[%s5 + $0x160] sm:$0xff]
  %v2873 = vld [vmem:[%s5 + $0x168] sm:$0xff]
  %v2874 = vld [vmem:[%s5 + $0x170] sm:$0xff]
  %v2875 = vld [vmem:[%s5 + $0x178] sm:$0xff]
  %v2877 = vsel %vm2475, %v2455, 0
  %2879 = vmatprep.subr.mxu0 0.0
  %2880 = vmatpush1.msra.mxu0 %v2868
  %2881 = vmatprep.subr.mxu0 0.0
  %2882 = vmatpush1.msra.mxu0 %v2869
  %2883 = vmatprep.subr.mxu0 0.0
  %2884 = vmatpush1.msra.mxu0 %v2870
  %2885 = vmatprep.subr.mxu0 0.0
  %2886 = vmatpush1.msra.mxu0 %v2871
  %2887 = vmatprep.subr.mxu0 0.0
  %2888 = vmatpush1.msra.mxu0 %v2872
  %2889 = vmatprep.subr.mxu0 0.0
  %2890 = vmatpush1.msra.mxu0 %v2873
  %2891 = vmatprep.subr.mxu0 0.0
  %2892 = vmatpush1.msra.mxu0 %v2874
  %2893 = vmatprep.subr.mxu0 0.0
  %2894 = vmatpush1.msra.mxu0 %v2875
  %2895 = vmatprep.subr.mxu0 0.0
  %2896 = vmatpush1.msra.mxu0 0.0
  %2897 = vmatprep.subr.mxu0 0.0
  %2898 = vmatpush1.msra.mxu0 0.0
  %2899 = vmatprep.subr.mxu0 0.0
  %2900 = vmatpush1.msra.mxu0 0.0
  %2901 = vmatprep.subr.mxu0 0.0
  %2902 = vmatpush1.msra.mxu0 0.0
  %2903 = vmatprep.subr.mxu0 0.0
  %2904 = vmatpush1.msra.mxu0 0.0
  %2905 = vmatprep.subr.mxu0 0.0
  %2906 = vmatpush1.msra.mxu0 0.0
  %2907 = vmatprep.subr.mxu0 0.0
  %2908 = vmatpush1.msra.mxu0 0.0
  %2909 = vmatprep.subr.mxu0 0.0
  %2910 = vmatpush1.msra.mxu0 0.0
  %2911 = vmatprep.subr.mxu0 0.0
  %2912 = vmatpush1.msra.mxu0 0.0
  %2913 = vmatprep.subr.mxu0 0.0
  %2914 = vmatpush1.msra.mxu0 0.0
  %2915 = vmatprep.subr.mxu0 0.0
  %2916 = vmatpush1.msra.mxu0 0.0
  %2917 = vmatprep.subr.mxu0 0.0
  %2918 = vmatpush1.msra.mxu0 0.0
  %2919 = vmatprep.subr.mxu0 0.0
  %2920 = vmatpush1.msra.mxu0 0.0
  %2921 = vmatprep.subr.mxu0 0.0
  %2922 = vmatpush1.msra.mxu0 0.0
  %2923 = vmatprep.subr.mxu0 0.0
  %2924 = vmatpush1.msra.mxu0 0.0
  %2925 = vmatprep.subr.mxu0 0.0
  %2926 = vmatpush1.msra.mxu0 0.0
  %2927 = vmatprep.subr.mxu0 0.0
  %2928 = vmatpush1.msra.mxu0 0.0
  %2929 = vmatprep.subr.mxu0 0.0
  %2930 = vmatpush1.msra.mxu0 0.0
  %2931 = vmatprep.subr.mxu0 0.0
  %2932 = vmatpush1.msra.mxu0 0.0
  %2933 = vmatprep.subr.mxu0 0.0
  %2934 = vmatpush1.msra.mxu0 0.0
  %2935 = vmatprep.subr.mxu0 0.0
  %2936 = vmatpush1.msra.mxu0 0.0
  %2937 = vmatprep.subr.mxu0 0.0
  %2938 = vmatpush1.msra.mxu0 0.0
  %2939 = vmatprep.subr.mxu0 0.0
  %2940 = vmatpush1.msra.mxu0 0.0
  %2941 = vmatprep.subr.mxu0 0.0
  %2942 = vmatpush1.msra.mxu0 0.0
  %2943 = vmatprep.mubr.f32.mxu0 0.0
  %2944 = vmatmul.mubr.f32.gmra.mrb[0].mxu0 %v2877
  %v2945 = vpop.f32.mrb[0].mxu0
  %v2946 = vadd.f32 0.0, %v2945
  %v2947 = vpop.f32.mrb[0].mxu0
  %2948 = vdwg.mxu0
  %v2949 = vadd.f32 %v2867, %v2946
  %v2950 = vld [vmem:[%s5 + $0x180] sm:$0xff]
  %v2951 = vld [vmem:[%s5 + $0x188] sm:$0xff]
  %v2952 = vld [vmem:[%s5 + $0x190] sm:$0xff]
  %v2953 = vld [vmem:[%s5 + $0x198] sm:$0xff]
  %v2954 = vld [vmem:[%s5 + $0x1a0] sm:$0xff]
  %v2955 = vld [vmem:[%s5 + $0x1a8] sm:$0xff]
  %v2956 = vld [vmem:[%s5 + $0x1b0] sm:$0xff]
  %v2957 = vld [vmem:[%s5 + $0x1b8] sm:$0xff]
  %v2959 = vsel %vm2475, %v2456, 0
  %2961 = vmatprep.subr.mxu0 0.0
  %2962 = vmatpush1.msra.mxu0 %v2950
  %2963 = vmatprep.subr.mxu0 0.0
  %2964 = vmatpush1.msra.mxu0 %v2951
  %2965 = vmatprep.subr.mxu0 0.0
  %2966 = vmatpush1.msra.mxu0 %v2952
  %2967 = vmatprep.subr.mxu0 0.0
  %2968 = vmatpush1.msra.mxu0 %v2953
  %2969 = vmatprep.subr.mxu0 0.0
  %2970 = vmatpush1.msra.mxu0 %v2954
  %2971 = vmatprep.subr.mxu0 0.0
  %2972 = vmatpush1.msra.mxu0 %v2955
  %2973 = vmatprep.subr.mxu0 0.0
  %2974 = vmatpush1.msra.mxu0 %v2956
  %2975 = vmatprep.subr.mxu0 0.0
  %2976 = vmatpush1.msra.mxu0 %v2957
  %2977 = vmatprep.subr.mxu0 0.0
  %2978 = vmatpush1.msra.mxu0 0.0
  %2979 = vmatprep.subr.mxu0 0.0
  %2980 = vmatpush1.msra.mxu0 0.0
  %2981 = vmatprep.subr.mxu0 0.0
  %2982 = vmatpush1.msra.mxu0 0.0
  %2983 = vmatprep.subr.mxu0 0.0
  %2984 = vmatpush1.msra.mxu0 0.0
  %2985 = vmatprep.subr.mxu0 0.0
  %2986 = vmatpush1.msra.mxu0 0.0
  %2987 = vmatprep.subr.mxu0 0.0
  %2988 = vmatpush1.msra.mxu0 0.0
  %2989 = vmatprep.subr.mxu0 0.0
  %2990 = vmatpush1.msra.mxu0 0.0
  %2991 = vmatprep.subr.mxu0 0.0
  %2992 = vmatpush1.msra.mxu0 0.0
  %2993 = vmatprep.subr.mxu0 0.0
  %2994 = vmatpush1.msra.mxu0 0.0
  %2995 = vmatprep.subr.mxu0 0.0
  %2996 = vmatpush1.msra.mxu0 0.0
  %2997 = vmatprep.subr.mxu0 0.0
  %2998 = vmatpush1.msra.mxu0 0.0
  %2999 = vmatprep.subr.mxu0 0.0
  %3000 = vmatpush1.msra.mxu0 0.0
  %3001 = vmatprep.subr.mxu0 0.0
  %3002 = vmatpush1.msra.mxu0 0.0
  %3003 = vmatprep.subr.mxu0 0.0
  %3004 = vmatpush1.msra.mxu0 0.0
  %3005 = vmatprep.subr.mxu0 0.0
  %3006 = vmatpush1.msra.mxu0 0.0
  %3007 = vmatprep.subr.mxu0 0.0
  %3008 = vmatpush1.msra.mxu0 0.0
  %3009 = vmatprep.subr.mxu0 0.0
  %3010 = vmatpush1.msra.mxu0 0.0
  %3011 = vmatprep.subr.mxu0 0.0
  %3012 = vmatpush1.msra.mxu0 0.0
  %3013 = vmatprep.subr.mxu0 0.0
  %3014 = vmatpush1.msra.mxu0 0.0
  %3015 = vmatprep.subr.mxu0 0.0
  %3016 = vmatpush1.msra.mxu0 0.0
  %3017 = vmatprep.subr.mxu0 0.0
  %3018 = vmatpush1.msra.mxu0 0.0
  %3019 = vmatprep.subr.mxu0 0.0
  %3020 = vmatpush1.msra.mxu0 0.0
  %3021 = vmatprep.subr.mxu0 0.0
  %3022 = vmatpush1.msra.mxu0 0.0
  %3023 = vmatprep.subr.mxu0 0.0
  %3024 = vmatpush1.msra.mxu0 0.0
  %3025 = vmatprep.mubr.f32.mxu0 0.0
  %3026 = vmatmul.mubr.f32.gmra.mrb[0].mxu0 %v2959
  %v3027 = vpop.f32.mrb[0].mxu0
  %v3028 = vadd.f32 0.0, %v3027
  %v3029 = vpop.f32.mrb[0].mxu0
  %3030 = vdwg.mxu0
  %v3031 = vadd.f32 %v2949, %v3028
  %v3032 = vld [vmem:[%s5 + $0x1c0] sm:$0xff]
  %v3033 = vld [vmem:[%s5 + $0x1c8] sm:$0xff]
  %v3034 = vld [vmem:[%s5 + $0x1d0] sm:$0xff]
  %v3035 = vld [vmem:[%s5 + $0x1d8] sm:$0xff]
  %v3036 = vld [vmem:[%s5 + $0x1e0] sm:$0xff]
  %v3037 = vld [vmem:[%s5 + $0x1e8] sm:$0xff]
  %v3038 = vld [vmem:[%s5 + $0x1f0] sm:$0xff]
  %v3039 = vld [vmem:[%s5 + $0x1f8] sm:$0xff]
  %v3041 = vsel %vm2475, %v2457, 0
  %3043 = vmatprep.subr.mxu0 0.0
  %3044 = vmatpush1.msra.mxu0 %v3032
  %3045 = vmatprep.subr.mxu0 0.0
  %3046 = vmatpush1.msra.mxu0 %v3033
  %3047 = vmatprep.subr.mxu0 0.0
  %3048 = vmatpush1.msra.mxu0 %v3034
  %3049 = vmatprep.subr.mxu0 0.0
  %3050 = vmatpush1.msra.mxu0 %v3035
  %3051 = vmatprep.subr.mxu0 0.0
  %3052 = vmatpush1.msra.mxu0 %v3036
  %3053 = vmatprep.subr.mxu0 0.0
  %3054 = vmatpush1.msra.mxu0 %v3037
  %3055 = vmatprep.subr.mxu0 0.0
  %3056 = vmatpush1.msra.mxu0 %v3038
  %3057 = vmatprep.subr.mxu0 0.0
  %3058 = vmatpush1.msra.mxu0 %v3039
  %3059 = vmatprep.subr.mxu0 0.0
  %3060 = vmatpush1.msra.mxu0 0.0
  %3061 = vmatprep.subr.mxu0 0.0
  %3062 = vmatpush1.msra.mxu0 0.0
  %3063 = vmatprep.subr.mxu0 0.0
  %3064 = vmatpush1.msra.mxu0 0.0
  %3065 = vmatprep.subr.mxu0 0.0
  %3066 = vmatpush1.msra.mxu0 0.0
  %3067 = vmatprep.subr.mxu0 0.0
  %3068 = vmatpush1.msra.mxu0 0.0
  %3069 = vmatprep.subr.mxu0 0.0
  %3070 = vmatpush1.msra.mxu0 0.0
  %3071 = vmatprep.subr.mxu0 0.0
  %3072 = vmatpush1.msra.mxu0 0.0
  %3073 = vmatprep.subr.mxu0 0.0
  %3074 = vmatpush1.msra.mxu0 0.0
  %3075 = vmatprep.subr.mxu0 0.0
  %3076 = vmatpush1.msra.mxu0 0.0
  %3077 = vmatprep.subr.mxu0 0.0
  %3078 = vmatpush1.msra.mxu0 0.0
  %3079 = vmatprep.subr.mxu0 0.0
  %3080 = vmatpush1.msra.mxu0 0.0
  %3081 = vmatprep.subr.mxu0 0.0
  %3082 = vmatpush1.msra.mxu0 0.0
  %3083 = vmatprep.subr.mxu0 0.0
  %3084 = vmatpush1.msra.mxu0 0.0
  %3085 = vmatprep.subr.mxu0 0.0
  %3086 = vmatpush1.msra.mxu0 0.0
  %3087 = vmatprep.subr.mxu0 0.0
  %3088 = vmatpush1.msra.mxu0 0.0
  %3089 = vmatprep.subr.mxu0 0.0
  %3090 = vmatpush1.msra.mxu0 0.0
  %3091 = vmatprep.subr.mxu0 0.0
  %3092 = vmatpush1.msra.mxu0 0.0
  %3093 = vmatprep.subr.mxu0 0.0
  %3094 = vmatpush1.msra.mxu0 0.0
  %3095 = vmatprep.subr.mxu0 0.0
  %3096 = vmatpush1.msra.mxu0 0.0
  %3097 = vmatprep.subr.mxu0 0.0
  %3098 = vmatpush1.msra.mxu0 0.0
  %3099 = vmatprep.subr.mxu0 0.0
  %3100 = vmatpush1.msra.mxu0 0.0
  %3101 = vmatprep.subr.mxu0 0.0
  %3102 = vmatpush1.msra.mxu0 0.0
  %3103 = vmatprep.subr.mxu0 0.0
  %3104 = vmatpush1.msra.mxu0 0.0
  %3105 = vmatprep.subr.mxu0 0.0
  %3106 = vmatpush1.msra.mxu0 0.0
  %3107 = vmatprep.mubr.f32.mxu0 0.0
  %3108 = vmatmul.mubr.f32.gmra.mrb[0].mxu0 %v3041
  %v3109 = vpop.f32.mrb[0].mxu0
  %v3110 = vadd.f32 0.0, %v3109
  %v3111 = vpop.f32.mrb[0].mxu0
  %3112 = vdwg.mxu0
  %v3113 = vadd.f32 %v3031, %v3110
  %v3114 = vld [vmem:[%s5 + $0x200] sm:$0xff]
  %v3115 = vld [vmem:[%s5 + $0x208] sm:$0xff]
  %v3116 = vld [vmem:[%s5 + $0x210] sm:$0xff]
  %v3117 = vld [vmem:[%s5 + $0x218] sm:$0xff]
  %v3118 = vld [vmem:[%s5 + $0x220] sm:$0xff]
  %v3119 = vld [vmem:[%s5 + $0x228] sm:$0xff]
  %v3120 = vld [vmem:[%s5 + $0x230] sm:$0xff]
  %v3121 = vld [vmem:[%s5 + $0x238] sm:$0xff]
  %v3123 = vsel %vm2475, %v2458, 0
  %3125 = vmatprep.subr.mxu0 0.0
  %3126 = vmatpush1.msra.mxu0 %v3114
  %3127 = vmatprep.subr.mxu0 0.0
  %3128 = vmatpush1.msra.mxu0 %v3115
  %3129 = vmatprep.subr.mxu0 0.0
  %3130 = vmatpush1.msra.mxu0 %v3116
  %3131 = vmatprep.subr.mxu0 0.0
  %3132 = vmatpush1.msra.mxu0 %v3117
  %3133 = vmatprep.subr.mxu0 0.0
  %3134 = vmatpush1.msra.mxu0 %v3118
  %3135 = vmatprep.subr.mxu0 0.0
  %3136 = vmatpush1.msra.mxu0 %v3119
  %3137 = vmatprep.subr.mxu0 0.0
  %3138 = vmatpush1.msra.mxu0 %v3120
  %3139 = vmatprep.subr.mxu0 0.0
  %3140 = vmatpush1.msra.mxu0 %v3121
  %3141 = vmatprep.subr.mxu0 0.0
  %3142 = vmatpush1.msra.mxu0 0.0
  %3143 = vmatprep.subr.mxu0 0.0
  %3144 = vmatpush1.msra.mxu0 0.0
  %3145 = vmatprep.subr.mxu0 0.0
  %3146 = vmatpush1.msra.mxu0 0.0
  %3147 = vmatprep.subr.mxu0 0.0
  %3148 = vmatpush1.msra.mxu0 0.0
  %3149 = vmatprep.subr.mxu0 0.0
  %3150 = vmatpush1.msra.mxu0 0.0
  %3151 = vmatprep.subr.mxu0 0.0
  %3152 = vmatpush1.msra.mxu0 0.0
  %3153 = vmatprep.subr.mxu0 0.0
  %3154 = vmatpush1.msra.mxu0 0.0
  %3155 = vmatprep.subr.mxu0 0.0
  %3156 = vmatpush1.msra.mxu0 0.0
  %3157 = vmatprep.subr.mxu0 0.0
  %3158 = vmatpush1.msra.mxu0 0.0
  %3159 = vmatprep.subr.mxu0 0.0
  %3160 = vmatpush1.msra.mxu0 0.0
  %3161 = vmatprep.subr.mxu0 0.0
  %3162 = vmatpush1.msra.mxu0 0.0
  %3163 = vmatprep.subr.mxu0 0.0
  %3164 = vmatpush1.msra.mxu0 0.0
  %3165 = vmatprep.subr.mxu0 0.0
  %3166 = vmatpush1.msra.mxu0 0.0
  %3167 = vmatprep.subr.mxu0 0.0
  %3168 = vmatpush1.msra.mxu0 0.0
  %3169 = vmatprep.subr.mxu0 0.0
  %3170 = vmatpush1.msra.mxu0 0.0
  %3171 = vmatprep.subr.mxu0 0.0
  %3172 = vmatpush1.msra.mxu0 0.0
  %3173 = vmatprep.subr.mxu0 0.0
  %3174 = vmatpush1.msra.mxu0 0.0
  %3175 = vmatprep.subr.mxu0 0.0
  %3176 = vmatpush1.msra.mxu0 0.0
  %3177 = vmatprep.subr.mxu0 0.0
  %3178 = vmatpush1.msra.mxu0 0.0
  %3179 = vmatprep.subr.mxu0 0.0
  %3180 = vmatpush1.msra.mxu0 0.0
  %3181 = vmatprep.subr.mxu0 0.0
  %3182 = vmatpush1.msra.mxu0 0.0
  %3183 = vmatprep.subr.mxu0 0.0
  %3184 = vmatpush1.msra.mxu0 0.0
  %3185 = vmatprep.subr.mxu0 0.0
  %3186 = vmatpush1.msra.mxu0 0.0
  %3187 = vmatprep.subr.mxu0 0.0
  %3188 = vmatpush1.msra.mxu0 0.0
  %3189 = vmatprep.mubr.f32.mxu0 0.0
  %3190 = vmatmul.mubr.f32.gmra.mrb[0].mxu0 %v3123
  %v3191 = vpop.f32.mrb[0].mxu0
  %v3192 = vadd.f32 0.0, %v3191
  %v3193 = vpop.f32.mrb[0].mxu0
  %3194 = vdwg.mxu0
  %v3195 = vadd.f32 %v3113, %v3192
  %v3196 = vld [vmem:[%s6] sm:$0x1]
  %v3198 = vlaneseq
  %v3199 = vshrl.u32 %v3198, 7
  %v3200 = vsub.s32 0, %v3199
  %v3201 = vrot.slane %v3196, %v3200
  %v3203 = vadd.f32 %v3195, %v3201
  %v3204 = vmax.f32 %v3203, 0.0
  %v3205 = vld [vmem:[%s7] sm:$0xff]
  %v3206 = vld [vmem:[%s7 + $0x8] sm:$0xff]
  %v3207 = vld [vmem:[%s7 + $0x10] sm:$0xff]
  %v3208 = vld [vmem:[%s7 + $0x18] sm:$0xff]
  %v3209 = vld [vmem:[%s7 + $0x20] sm:$0xff]
  %v3210 = vld [vmem:[%s7 + $0x28] sm:$0xff]
  %v3211 = vld [vmem:[%s7 + $0x30] sm:$0xff]
  %v3212 = vld [vmem:[%s7 + $0x38] sm:$0xff]
  %v3213 = vld [vmem:[%s7 + $0x40] sm:$0xff]
  %v3214 = vld [vmem:[%s7 + $0x48] sm:$0xff]
  %v3215 = vld [vmem:[%s7 + $0x50] sm:$0xff]
  %v3216 = vld [vmem:[%s7 + $0x58] sm:$0xff]
  %v3217 = vld [vmem:[%s7 + $0x60] sm:$0xff]
  %v3218 = vld [vmem:[%s7 + $0x68] sm:$0xff]
  %v3219 = vld [vmem:[%s7 + $0x70] sm:$0xff]
  %v3220 = vld [vmem:[%s7 + $0x78] sm:$0xff]
  %v3221 = vld [vmem:[%s7 + $0x80] sm:$0xff]
  %v3222 = vld [vmem:[%s7 + $0x88] sm:$0xff]
  %v3223 = vld [vmem:[%s7 + $0x90] sm:$0xff]
  %v3224 = vld [vmem:[%s7 + $0x98] sm:$0xff]
  %v3225 = vld [vmem:[%s7 + $0xa0] sm:$0xff]
  %v3226 = vld [vmem:[%s7 + $0xa8] sm:$0xff]
  %v3227 = vld [vmem:[%s7 + $0xb0] sm:$0xff]
  %v3228 = vld [vmem:[%s7 + $0xb8] sm:$0xff]
  %v3229 = vld [vmem:[%s7 + $0xc0] sm:$0xff]
  %v3230 = vld [vmem:[%s7 + $0xc8] sm:$0xff]
  %v3231 = vld [vmem:[%s7 + $0xd0] sm:$0xff]
  %v3232 = vld [vmem:[%s7 + $0xd8] sm:$0xff]
  %v3233 = vld [vmem:[%s7 + $0xe0] sm:$0xff]
  %v3234 = vld [vmem:[%s7 + $0xe8] sm:$0xff]
  %v3235 = vld [vmem:[%s7 + $0xf0] sm:$0xff]
  %v3236 = vld [vmem:[%s7 + $0xf8] sm:$0xff]
  %v3237 = vld [vmem:[%s7 + $0x100] sm:$0xff]
  %v3238 = vld [vmem:[%s7 + $0x108] sm:$0xff]
  %v3239 = vld [vmem:[%s7 + $0x110] sm:$0xff]
  %v3240 = vld [vmem:[%s7 + $0x118] sm:$0xff]
  %v3241 = vld [vmem:[%s7 + $0x120] sm:$0xff]
  %v3242 = vld [vmem:[%s7 + $0x128] sm:$0xff]
  %v3243 = vld [vmem:[%s7 + $0x130] sm:$0xff]
  %v3244 = vld [vmem:[%s7 + $0x138] sm:$0xff]
  %v3245 = vld [vmem:[%s7 + $0x140] sm:$0xff]
  %v3246 = vld [vmem:[%s7 + $0x148] sm:$0xff]
  %v3247 = vld [vmem:[%s7 + $0x150] sm:$0xff]
  %v3248 = vld [vmem:[%s7 + $0x158] sm:$0xff]
  %v3249 = vld [vmem:[%s7 + $0x160] sm:$0xff]
  %v3250 = vld [vmem:[%s7 + $0x168] sm:$0xff]
  %v3251 = vld [vmem:[%s7 + $0x170] sm:$0xff]
  %v3252 = vld [vmem:[%s7 + $0x178] sm:$0xff]
  %v3253 = vld [vmem:[%s7 + $0x180] sm:$0xff]
  %v3254 = vld [vmem:[%s7 + $0x188] sm:$0xff]
  %v3255 = vld [vmem:[%s7 + $0x190] sm:$0xff]
  %v3256 = vld [vmem:[%s7 + $0x198] sm:$0xff]
  %v3257 = vld [vmem:[%s7 + $0x1a0] sm:$0xff]
  %v3258 = vld [vmem:[%s7 + $0x1a8] sm:$0xff]
  %v3259 = vld [vmem:[%s7 + $0x1b0] sm:$0xff]
  %v3260 = vld [vmem:[%s7 + $0x1b8] sm:$0xff]
  %v3261 = vld [vmem:[%s7 + $0x1c0] sm:$0xff]
  %v3262 = vld [vmem:[%s7 + $0x1c8] sm:$0xff]
  %v3263 = vld [vmem:[%s7 + $0x1d0] sm:$0xff]
  %v3264 = vld [vmem:[%s7 + $0x1d8] sm:$0xff]
  %v3265 = vld [vmem:[%s7 + $0x1e0] sm:$0xff]
  %v3266 = vld [vmem:[%s7 + $0x1e8] sm:$0xff]
  %v3267 = vld [vmem:[%s7 + $0x1f0] sm:$0xff]
  %v3268 = vld [vmem:[%s7 + $0x1f8] sm:$0xff]
  %v3269 = vld [vmem:[%s8] sm:$0xff]
  %v3271 = vlaneseq
  %v3272 = vshrl.u32 %v3271, 7
  %v3273 = vsub.s32 0, %v3272
  %v3274 = vrot.slane %v3269, %v3273
  %v3275 = vlaneseq
  %v3276 = vshrl.u32 %v3275, 7
  %v3277 = vsub.s32 1, %v3276
  %v3278 = vrot.slane %v3269, %v3277
  %v3279 = vlaneseq
  %v3280 = vshrl.u32 %v3279, 7
  %v3281 = vsub.s32 2, %v3280
  %v3282 = vrot.slane %v3269, %v3281
  %v3283 = vlaneseq
  %v3284 = vshrl.u32 %v3283, 7
  %v3285 = vsub.s32 3, %v3284
  %v3286 = vrot.slane %v3269, %v3285
  %v3287 = vlaneseq
  %v3288 = vshrl.u32 %v3287, 7
  %v3289 = vsub.s32 4, %v3288
  %v3290 = vrot.slane %v3269, %v3289
  %v3291 = vlaneseq
  %v3292 = vshrl.u32 %v3291, 7
  %v3293 = vsub.s32 5, %v3292
  %v3294 = vrot.slane %v3269, %v3293
  %v3295 = vlaneseq
  %v3296 = vshrl.u32 %v3295, 7
  %v3297 = vsub.s32 6, %v3296
  %v3298 = vrot.slane %v3269, %v3297
  %v3299 = vlaneseq
  %v3300 = vshrl.u32 %v3299, 7
  %v3301 = vsub.s32 7, %v3300
  %v3302 = vrot.slane %v3269, %v3301
  %v3312 = vsel %vm2475, %v3204, 0
  %3314 = vmatprep.subr.mxu0 %v3206
  %3315 = vmatpush1.msra.mxu0 %v3205
  %3316 = vmatprep.subr.mxu0 %v3214
  %3317 = vmatpush1.msra.mxu0 %v3213
  %3318 = vmatprep.subr.mxu0 %v3222
  %3319 = vmatpush1.msra.mxu0 %v3221
  %3320 = vmatprep.subr.mxu0 %v3230
  %3321 = vmatpush1.msra.mxu0 %v3229
  %3322 = vmatprep.subr.mxu0 %v3238
  %3323 = vmatpush1.msra.mxu0 %v3237
  %3324 = vmatprep.subr.mxu0 %v3246
  %3325 = vmatpush1.msra.mxu0 %v3245
  %3326 = vmatprep.subr.mxu0 %v3254
  %3327 = vmatpush1.msra.mxu0 %v3253
  %3328 = vmatprep.subr.mxu0 %v3262
  %3329 = vmatpush1.msra.mxu0 %v3261
  %3330 = vmatprep.subr.mxu0 0.0
  %3331 = vmatpush1.msra.mxu0 0.0
  %3332 = vmatprep.subr.mxu0 0.0
  %3333 = vmatpush1.msra.mxu0 0.0
  %3334 = vmatprep.subr.mxu0 0.0
  %3335 = vmatpush1.msra.mxu0 0.0
  %3336 = vmatprep.subr.mxu0 0.0
  %3337 = vmatpush1.msra.mxu0 0.0
  %3338 = vmatprep.subr.mxu0 0.0
  %3339 = vmatpush1.msra.mxu0 0.0
  %3340 = vmatprep.subr.mxu0 0.0
  %3341 = vmatpush1.msra.mxu0 0.0
  %3342 = vmatprep.subr.mxu0 0.0
  %3343 = vmatpush1.msra.mxu0 0.0
  %3344 = vmatprep.subr.mxu0 0.0
  %3345 = vmatpush1.msra.mxu0 0.0
  %3346 = vmatprep.subr.mxu0 0.0
  %3347 = vmatpush1.msra.mxu0 0.0
  %3348 = vmatprep.subr.mxu0 0.0
  %3349 = vmatpush1.msra.mxu0 0.0
  %3350 = vmatprep.subr.mxu0 0.0
  %3351 = vmatpush1.msra.mxu0 0.0
  %3352 = vmatprep.subr.mxu0 0.0
  %3353 = vmatpush1.msra.mxu0 0.0
  %3354 = vmatprep.subr.mxu0 0.0
  %3355 = vmatpush1.msra.mxu0 0.0
  %3356 = vmatprep.subr.mxu0 0.0
  %3357 = vmatpush1.msra.mxu0 0.0
  %3358 = vmatprep.subr.mxu0 0.0
  %3359 = vmatpush1.msra.mxu0 0.0
  %3360 = vmatprep.subr.mxu0 0.0
  %3361 = vmatpush1.msra.mxu0 0.0
  %3362 = vmatprep.subr.mxu0 0.0
  %3363 = vmatpush1.msra.mxu0 0.0
  %3364 = vmatprep.subr.mxu0 0.0
  %3365 = vmatpush1.msra.mxu0 0.0
  %3366 = vmatprep.subr.mxu0 0.0
  %3367 = vmatpush1.msra.mxu0 0.0
  %3368 = vmatprep.subr.mxu0 0.0
  %3369 = vmatpush1.msra.mxu0 0.0
  %3370 = vmatprep.subr.mxu0 0.0
  %3371 = vmatpush1.msra.mxu0 0.0
  %3372 = vmatprep.subr.mxu0 0.0
  %3373 = vmatpush1.msra.mxu0 0.0
  %3374 = vmatprep.subr.mxu0 0.0
  %3375 = vmatpush1.msra.mxu0 0.0
  %3376 = vmatprep.subr.mxu0 0.0
  %3377 = vmatpush1.msra.mxu0 0.0
  %3378 = vmatprep.mubr.f32.mxu0 0.0
  %3379 = vmatmul.mubr.f32.gmra.mrb[0].mxu0 %v3312
  %v3380 = vpop.f32.mrb[0].mxu0
  %v3381 = vadd.f32 %v3274, %v3380
  %v3382 = vpop.f32.mrb[0].mxu0
  %v3383 = vadd.f32 %v3278, %v3382
  %3384 = vdwg.mxu0
  %3385 = vmatprep.subr.mxu0 %v3208
  %3386 = vmatpush1.msra.mxu0 %v3207
  %3387 = vmatprep.subr.mxu0 %v3216
  %3388 = vmatpush1.msra.mxu0 %v3215
  %3389 = vmatprep.subr.mxu0 %v3224
  %3390 = vmatpush1.msra.mxu0 %v3223
  %3391 = vmatprep.subr.mxu0 %v3232
  %3392 = vmatpush1.msra.mxu0 %v3231
  %3393 = vmatprep.subr.mxu0 %v3240
  %3394 = vmatpush1.msra.mxu0 %v3239
  %3395 = vmatprep.subr.mxu0 %v3248
  %3396 = vmatpush1.msra.mxu0 %v3247
  %3397 = vmatprep.subr.mxu0 %v3256
  %3398 = vmatpush1.msra.mxu0 %v3255
  %3399 = vmatprep.subr.mxu0 %v3264
  %3400 = vmatpush1.msra.mxu0 %v3263
  %3401 = vmatprep.subr.mxu0 0.0
  %3402 = vmatpush1.msra.mxu0 0.0
  %3403 = vmatprep.subr.mxu0 0.0
  %3404 = vmatpush1.msra.mxu0 0.0
  %3405 = vmatprep.subr.mxu0 0.0
  %3406 = vmatpush1.msra.mxu0 0.0
  %3407 = vmatprep.subr.mxu0 0.0
  %3408 = vmatpush1.msra.mxu0 0.0
  %3409 = vmatprep.subr.mxu0 0.0
  %3410 = vmatpush1.msra.mxu0 0.0
  %3411 = vmatprep.subr.mxu0 0.0
  %3412 = vmatpush1.msra.mxu0 0.0
  %3413 = vmatprep.subr.mxu0 0.0
  %3414 = vmatpush1.msra.mxu0 0.0
  %3415 = vmatprep.subr.mxu0 0.0
  %3416 = vmatpush1.msra.mxu0 0.0
  %3417 = vmatprep.subr.mxu0 0.0
  %3418 = vmatpush1.msra.mxu0 0.0
  %3419 = vmatprep.subr.mxu0 0.0
  %3420 = vmatpush1.msra.mxu0 0.0
  %3421 = vmatprep.subr.mxu0 0.0
  %3422 = vmatpush1.msra.mxu0 0.0
  %3423 = vmatprep.subr.mxu0 0.0
  %3424 = vmatpush1.msra.mxu0 0.0
  %3425 = vmatprep.subr.mxu0 0.0
  %3426 = vmatpush1.msra.mxu0 0.0
  %3427 = vmatprep.subr.mxu0 0.0
  %3428 = vmatpush1.msra.mxu0 0.0
  %3429 = vmatprep.subr.mxu0 0.0
  %3430 = vmatpush1.msra.mxu0 0.0
  %3431 = vmatprep.subr.mxu0 0.0
  %3432 = vmatpush1.msra.mxu0 0.0
  %3433 = vmatprep.subr.mxu0 0.0
  %3434 = vmatpush1.msra.mxu0 0.0
  %3435 = vmatprep.subr.mxu0 0.0
  %3436 = vmatpush1.msra.mxu0 0.0
  %3437 = vmatprep.subr.mxu0 0.0
  %3438 = vmatpush1.msra.mxu0 0.0
  %3439 = vmatprep.subr.mxu0 0.0
  %3440 = vmatpush1.msra.mxu0 0.0
  %3441 = vmatprep.subr.mxu0 0.0
  %3442 = vmatpush1.msra.mxu0 0.0
  %3443 = vmatprep.subr.mxu0 0.0
  %3444 = vmatpush1.msra.mxu0 0.0
  %3445 = vmatprep.subr.mxu0 0.0
  %3446 = vmatpush1.msra.mxu0 0.0
  %3447 = vmatprep.subr.mxu0 0.0
  %3448 = vmatpush1.msra.mxu0 0.0
  %3449 = vmatprep.mubr.f32.mxu0 0.0
  %3450 = vmatmul.mubr.f32.gmra.mrb[0].mxu0 %v3312
  %v3451 = vpop.f32.mrb[0].mxu0
  %v3452 = vadd.f32 %v3282, %v3451
  %v3453 = vpop.f32.mrb[0].mxu0
  %v3454 = vadd.f32 %v3286, %v3453
  %3455 = vdwg.mxu0
  %3456 = vmatprep.subr.mxu0 %v3210
  %3457 = vmatpush1.msra.mxu0 %v3209
  %3458 = vmatprep.subr.mxu0 %v3218
  %3459 = vmatpush1.msra.mxu0 %v3217
  %3460 = vmatprep.subr.mxu0 %v3226
  %3461 = vmatpush1.msra.mxu0 %v3225
  %3462 = vmatprep.subr.mxu0 %v3234
  %3463 = vmatpush1.msra.mxu0 %v3233
  %3464 = vmatprep.subr.mxu0 %v3242
  %3465 = vmatpush1.msra.mxu0 %v3241
  %3466 = vmatprep.subr.mxu0 %v3250
  %3467 = vmatpush1.msra.mxu0 %v3249
  %3468 = vmatprep.subr.mxu0 %v3258
  %3469 = vmatpush1.msra.mxu0 %v3257
  %3470 = vmatprep.subr.mxu0 %v3266
  %3471 = vmatpush1.msra.mxu0 %v3265
  %3472 = vmatprep.subr.mxu0 0.0
  %3473 = vmatpush1.msra.mxu0 0.0
  %3474 = vmatprep.subr.mxu0 0.0
  %3475 = vmatpush1.msra.mxu0 0.0
  %3476 = vmatprep.subr.mxu0 0.0
  %3477 = vmatpush1.msra.mxu0 0.0
  %3478 = vmatprep.subr.mxu0 0.0
  %3479 = vmatpush1.msra.mxu0 0.0
  %3480 = vmatprep.subr.mxu0 0.0
  %3481 = vmatpush1.msra.mxu0 0.0
  %3482 = vmatprep.subr.mxu0 0.0
  %3483 = vmatpush1.msra.mxu0 0.0
  %3484 = vmatprep.subr.mxu0 0.0
  %3485 = vmatpush1.msra.mxu0 0.0
  %3486 = vmatprep.subr.mxu0 0.0
  %3487 = vmatpush1.msra.mxu0 0.0
  %3488 = vmatprep.subr.mxu0 0.0
  %3489 = vmatpush1.msra.mxu0 0.0
  %3490 = vmatprep.subr.mxu0 0.0
  %3491 = vmatpush1.msra.mxu0 0.0
  %3492 = vmatprep.subr.mxu0 0.0
  %3493 = vmatpush1.msra.mxu0 0.0
  %3494 = vmatprep.subr.mxu0 0.0
  %3495 = vmatpush1.msra.mxu0 0.0
  %3496 = vmatprep.subr.mxu0 0.0
  %3497 = vmatpush1.msra.mxu0 0.0
  %3498 = vmatprep.subr.mxu0 0.0
  %3499 = vmatpush1.msra.mxu0 0.0
  %3500 = vmatprep.subr.mxu0 0.0
  %3501 = vmatpush1.msra.mxu0 0.0
  %3502 = vmatprep.subr.mxu0 0.0
  %3503 = vmatpush1.msra.mxu0 0.0
  %3504 = vmatprep.subr.mxu0 0.0
  %3505 = vmatpush1.msra.mxu0 0.0
  %3506 = vmatprep.subr.mxu0 0.0
  %3507 = vmatpush1.msra.mxu0 0.0
  %3508 = vmatprep.subr.mxu0 0.0
  %3509 = vmatpush1.msra.mxu0 0.0
  %3510 = vmatprep.subr.mxu0 0.0
  %3511 = vmatpush1.msra.mxu0 0.0
  %3512 = vmatprep.subr.mxu0 0.0
  %3513 = vmatpush1.msra.mxu0 0.0
  %3514 = vmatprep.subr.mxu0 0.0
  %3515 = vmatpush1.msra.mxu0 0.0
  %3516 = vmatprep.subr.mxu0 0.0
  %3517 = vmatpush1.msra.mxu0 0.0
  %3518 = vmatprep.subr.mxu0 0.0
  %3519 = vmatpush1.msra.mxu0 0.0
  %3520 = vmatprep.mubr.f32.mxu0 0.0
  %3521 = vmatmul.mubr.f32.gmra.mrb[0].mxu0 %v3312
  %v3522 = vpop.f32.mrb[0].mxu0
  %v3523 = vadd.f32 %v3290, %v3522
  %v3524 = vpop.f32.mrb[0].mxu0
  %v3525 = vadd.f32 %v3294, %v3524
  %3526 = vdwg.mxu0
  %3527 = vmatprep.subr.mxu0 %v3212
  %3528 = vmatpush1.msra.mxu0 %v3211
  %3529 = vmatprep.subr.mxu0 %v3220
  %3530 = vmatpush1.msra.mxu0 %v3219
  %3531 = vmatprep.subr.mxu0 %v3228
  %3532 = vmatpush1.msra.mxu0 %v3227
  %3533 = vmatprep.subr.mxu0 %v3236
  %3534 = vmatpush1.msra.mxu0 %v3235
  %3535 = vmatprep.subr.mxu0 %v3244
  %3536 = vmatpush1.msra.mxu0 %v3243
  %3537 = vmatprep.subr.mxu0 %v3252
  %3538 = vmatpush1.msra.mxu0 %v3251
  %3539 = vmatprep.subr.mxu0 %v3260
  %3540 = vmatpush1.msra.mxu0 %v3259
  %3541 = vmatprep.subr.mxu0 %v3268
  %3542 = vmatpush1.msra.mxu0 %v3267
  %3543 = vmatprep.subr.mxu0 0.0
  %3544 = vmatpush1.msra.mxu0 0.0
  %3545 = vmatprep.subr.mxu0 0.0
  %3546 = vmatpush1.msra.mxu0 0.0
  %3547 = vmatprep.subr.mxu0 0.0
  %3548 = vmatpush1.msra.mxu0 0.0
  %3549 = vmatprep.subr.mxu0 0.0
  %3550 = vmatpush1.msra.mxu0 0.0
  %3551 = vmatprep.subr.mxu0 0.0
  %3552 = vmatpush1.msra.mxu0 0.0
  %3553 = vmatprep.subr.mxu0 0.0
  %3554 = vmatpush1.msra.mxu0 0.0
  %3555 = vmatprep.subr.mxu0 0.0
  %3556 = vmatpush1.msra.mxu0 0.0
  %3557 = vmatprep.subr.mxu0 0.0
  %3558 = vmatpush1.msra.mxu0 0.0
  %3559 = vmatprep.subr.mxu0 0.0
  %3560 = vmatpush1.msra.mxu0 0.0
  %3561 = vmatprep.subr.mxu0 0.0
  %3562 = vmatpush1.msra.mxu0 0.0
  %3563 = vmatprep.subr.mxu0 0.0
  %3564 = vmatpush1.msra.mxu0 0.0
  %3565 = vmatprep.subr.mxu0 0.0
  %3566 = vmatpush1.msra.mxu0 0.0
  %3567 = vmatprep.subr.mxu0 0.0
  %3568 = vmatpush1.msra.mxu0 0.0
  %3569 = vmatprep.subr.mxu0 0.0
  %3570 = vmatpush1.msra.mxu0 0.0
  %3571 = vmatprep.subr.mxu0 0.0
  %3572 = vmatpush1.msra.mxu0 0.0
  %3573 = vmatprep.subr.mxu0 0.0
  %3574 = vmatpush1.msra.mxu0 0.0
  %3575 = vmatprep.subr.mxu0 0.0
  %3576 = vmatpush1.msra.mxu0 0.0
  %3577 = vmatprep.subr.mxu0 0.0
  %3578 = vmatpush1.msra.mxu0 0.0
  %3579 = vmatprep.subr.mxu0 0.0
  %3580 = vmatpush1.msra.mxu0 0.0
  %3581 = vmatprep.subr.mxu0 0.0
  %3582 = vmatpush1.msra.mxu0 0.0
  %3583 = vmatprep.subr.mxu0 0.0
  %3584 = vmatpush1.msra.mxu0 0.0
  %3585 = vmatprep.subr.mxu0 0.0
  %3586 = vmatpush1.msra.mxu0 0.0
  %3587 = vmatprep.subr.mxu0 0.0
  %3588 = vmatpush1.msra.mxu0 0.0
  %3589 = vmatprep.subr.mxu0 0.0
  %3590 = vmatpush1.msra.mxu0 0.0
  %3591 = vmatprep.mubr.f32.mxu0 0.0
  %3592 = vmatmul.mubr.f32.gmra.mrb[0].mxu0 %v3312
  %v3593 = vpop.f32.mrb[0].mxu0
  %v3594 = vadd.f32 %v3298, %v3593
  %v3595 = vpop.f32.mrb[0].mxu0
  %v3596 = vadd.f32 %v3302, %v3595
  %3597 = vdwg.mxu0
  %v3598 = vmax.f32 %v3381, 0.0
  %v3599 = vmax.f32 %v3383, 0.0
  %v3600 = vmax.f32 %v3452, 0.0
  %v3601 = vmax.f32 %v3454, 0.0
  %v3602 = vmax.f32 %v3523, 0.0
  %v3603 = vmax.f32 %v3525, 0.0
  %v3604 = vmax.f32 %v3594, 0.0
  %v3605 = vmax.f32 %v3596, 0.0
  %v3606 = vld [vmem:[%s9] sm:$0xff]
  %v3607 = vld [vmem:[%s9 + $0x8] sm:$0xff]
  %v3608 = vld [vmem:[%s9 + $0x10] sm:$0xff]
  %v3609 = vld [vmem:[%s9 + $0x18] sm:$0xff]
  %v3610 = vld [vmem:[%s9 + $0x20] sm:$0xff]
  %v3611 = vld [vmem:[%s9 + $0x28] sm:$0xff]
  %v3612 = vld [vmem:[%s9 + $0x30] sm:$0xff]
  %v3613 = vld [vmem:[%s9 + $0x38] sm:$0xff]
  %v3614 = vld [vmem:[%s9 + $0x40] sm:$0xff]
  %v3615 = vld [vmem:[%s9 + $0x48] sm:$0xff]
  %v3616 = vld [vmem:[%s9 + $0x50] sm:$0xff]
  %v3617 = vld [vmem:[%s9 + $0x58] sm:$0xff]
  %v3618 = vld [vmem:[%s9 + $0x60] sm:$0xff]
  %v3619 = vld [vmem:[%s9 + $0x68] sm:$0xff]
  %v3620 = vld [vmem:[%s9 + $0x70] sm:$0xff]
  %v3621 = vld [vmem:[%s9 + $0x78] sm:$0xff]
  %v3622 = vld [vmem:[%s9 + $0x80] sm:$0xff]
  %v3623 = vld [vmem:[%s9 + $0x88] sm:$0xff]
  %v3624 = vld [vmem:[%s9 + $0x90] sm:$0xff]
  %v3625 = vld [vmem:[%s9 + $0x98] sm:$0xff]
  %v3626 = vld [vmem:[%s9 + $0xa0] sm:$0xff]
  %v3627 = vld [vmem:[%s9 + $0xa8] sm:$0xff]
  %v3628 = vld [vmem:[%s9 + $0xb0] sm:$0xff]
  %v3629 = vld [vmem:[%s9 + $0xb8] sm:$0xff]
  %v3630 = vld [vmem:[%s9 + $0xc0] sm:$0xff]
  %v3631 = vld [vmem:[%s9 + $0xc8] sm:$0xff]
  %v3632 = vld [vmem:[%s9 + $0xd0] sm:$0xff]
  %v3633 = vld [vmem:[%s9 + $0xd8] sm:$0xff]
  %v3634 = vld [vmem:[%s9 + $0xe0] sm:$0xff]
  %v3635 = vld [vmem:[%s9 + $0xe8] sm:$0xff]
  %v3636 = vld [vmem:[%s9 + $0xf0] sm:$0xff]
  %v3637 = vld [vmem:[%s9 + $0xf8] sm:$0xff]
  %v3638 = vld [vmem:[%s9 + $0x100] sm:$0xff]
  %v3639 = vld [vmem:[%s9 + $0x108] sm:$0xff]
  %v3640 = vld [vmem:[%s9 + $0x110] sm:$0xff]
  %v3641 = vld [vmem:[%s9 + $0x118] sm:$0xff]
  %v3642 = vld [vmem:[%s9 + $0x120] sm:$0xff]
  %v3643 = vld [vmem:[%s9 + $0x128] sm:$0xff]
  %v3644 = vld [vmem:[%s9 + $0x130] sm:$0xff]
  %v3645 = vld [vmem:[%s9 + $0x138] sm:$0xff]
  %v3646 = vld [vmem:[%s9 + $0x140] sm:$0xff]
  %v3647 = vld [vmem:[%s9 + $0x148] sm:$0xff]
  %v3648 = vld [vmem:[%s9 + $0x150] sm:$0xff]
  %v3649 = vld [vmem:[%s9 + $0x158] sm:$0xff]
  %v3650 = vld [vmem:[%s9 + $0x160] sm:$0xff]
  %v3651 = vld [vmem:[%s9 + $0x168] sm:$0xff]
  %v3652 = vld [vmem:[%s9 + $0x170] sm:$0xff]
  %v3653 = vld [vmem:[%s9 + $0x178] sm:$0xff]
  %v3654 = vld [vmem:[%s9 + $0x180] sm:$0xff]
  %v3655 = vld [vmem:[%s9 + $0x188] sm:$0xff]
  %v3656 = vld [vmem:[%s9 + $0x190] sm:$0xff]
  %v3657 = vld [vmem:[%s9 + $0x198] sm:$0xff]
  %v3658 = vld [vmem:[%s9 + $0x1a0] sm:$0xff]
  %v3659 = vld [vmem:[%s9 + $0x1a8] sm:$0xff]
  %v3660 = vld [vmem:[%s9 + $0x1b0] sm:$0xff]
  %v3661 = vld [vmem:[%s9 + $0x1b8] sm:$0xff]
  %v3662 = vld [vmem:[%s9 + $0x1c0] sm:$0xff]
  %v3663 = vld [vmem:[%s9 + $0x1c8] sm:$0xff]
  %v3664 = vld [vmem:[%s9 + $0x1d0] sm:$0xff]
  %v3665 = vld [vmem:[%s9 + $0x1d8] sm:$0xff]
  %v3666 = vld [vmem:[%s9 + $0x1e0] sm:$0xff]
  %v3667 = vld [vmem:[%s9 + $0x1e8] sm:$0xff]
  %v3668 = vld [vmem:[%s9 + $0x1f0] sm:$0xff]
  %v3669 = vld [vmem:[%s9 + $0x1f8] sm:$0xff]
  %v3670 = vld [vmem:[#allocation4] sm:$0x1]
  %v3672 = vlaneseq
  %v3673 = vshrl.u32 %v3672, 7
  %v3674 = vsub.s32 0, %v3673
  %v3675 = vrot.slane %v3670, %v3674
  %3677 = vmatprep.subr.mxu0 0.0
  %3678 = vmatpush1.msra.mxu0 %v3606
  %3679 = vmatprep.subr.mxu0 0.0
  %3680 = vmatpush1.msra.mxu0 %v3607
  %3681 = vmatprep.subr.mxu0 0.0
  %3682 = vmatpush1.msra.mxu0 %v3608
  %3683 = vmatprep.subr.mxu0 0.0
  %3684 = vmatpush1.msra.mxu0 %v3609
  %3685 = vmatprep.subr.mxu0 0.0
  %3686 = vmatpush1.msra.mxu0 %v3610
  %3687 = vmatprep.subr.mxu0 0.0
  %3688 = vmatpush1.msra.mxu0 %v3611
  %3689 = vmatprep.subr.mxu0 0.0
  %3690 = vmatpush1.msra.mxu0 %v3612
  %3691 = vmatprep.subr.mxu0 0.0
  %3692 = vmatpush1.msra.mxu0 %v3613
  %3693 = vmatprep.subr.mxu0 0.0
  %3694 = vmatpush1.msra.mxu0 %v3614
  %3695 = vmatprep.subr.mxu0 0.0
  %3696 = vmatpush1.msra.mxu0 %v3615
  %3697 = vmatprep.subr.mxu0 0.0
  %3698 = vmatpush1.msra.mxu0 %v3616
  %3699 = vmatprep.subr.mxu0 0.0
  %3700 = vmatpush1.msra.mxu0 %v3617
  %3701 = vmatprep.subr.mxu0 0.0
  %3702 = vmatpush1.msra.mxu0 %v3618
  %3703 = vmatprep.subr.mxu0 0.0
  %3704 = vmatpush1.msra.mxu0 %v3619
  %3705 = vmatprep.subr.mxu0 0.0
  %3706 = vmatpush1.msra.mxu0 %v3620
  %3707 = vmatprep.subr.mxu0 0.0
  %3708 = vmatpush1.msra.mxu0 %v3621
  %3709 = vmatprep.subr.mxu0 0.0
  %3710 = vmatpush1.msra.mxu0 %v3622
  %3711 = vmatprep.subr.mxu0 0.0
  %3712 = vmatpush1.msra.mxu0 %v3623
  %3713 = vmatprep.subr.mxu0 0.0
  %3714 = vmatpush1.msra.mxu0 %v3624
  %3715 = vmatprep.subr.mxu0 0.0
  %3716 = vmatpush1.msra.mxu0 %v3625
  %3717 = vmatprep.subr.mxu0 0.0
  %3718 = vmatpush1.msra.mxu0 %v3626
  %3719 = vmatprep.subr.mxu0 0.0
  %3720 = vmatpush1.msra.mxu0 %v3627
  %3721 = vmatprep.subr.mxu0 0.0
  %3722 = vmatpush1.msra.mxu0 %v3628
  %3723 = vmatprep.subr.mxu0 0.0
  %3724 = vmatpush1.msra.mxu0 %v3629
  %3725 = vmatprep.subr.mxu0 0.0
  %3726 = vmatpush1.msra.mxu0 %v3630
  %3727 = vmatprep.subr.mxu0 0.0
  %3728 = vmatpush1.msra.mxu0 %v3631
  %3729 = vmatprep.subr.mxu0 0.0
  %3730 = vmatpush1.msra.mxu0 %v3632
  %3731 = vmatprep.subr.mxu0 0.0
  %3732 = vmatpush1.msra.mxu0 %v3633
  %3733 = vmatprep.subr.mxu0 0.0
  %3734 = vmatpush1.msra.mxu0 %v3634
  %3735 = vmatprep.subr.mxu0 0.0
  %3736 = vmatpush1.msra.mxu0 %v3635
  %3737 = vmatprep.subr.mxu0 0.0
  %3738 = vmatpush1.msra.mxu0 %v3636
  %3739 = vmatprep.subr.mxu0 0.0
  %3740 = vmatpush1.msra.mxu0 %v3637
  %3741 = vmatprep.mubr.f32.mxu0 %v3599
  %3742 = vmatmul.mubr.f32.gmra.mrb[0].mxu0 %v3598
  %v3743 = vpop.f32.mrb[0].mxu0
  %v3744 = vadd.f32 %v3675, %v3743
  %v3745 = vpop.f32.mrb[0].mxu0
  %3746 = vdwg.mxu0
  %3747 = vmatprep.subr.mxu0 0.0
  %3748 = vmatpush1.msra.mxu0 %v3638
  %3749 = vmatprep.subr.mxu0 0.0
  %3750 = vmatpush1.msra.mxu0 %v3639
  %3751 = vmatprep.subr.mxu0 0.0
  %3752 = vmatpush1.msra.mxu0 %v3640
  %3753 = vmatprep.subr.mxu0 0.0
  %3754 = vmatpush1.msra.mxu0 %v3641
  %3755 = vmatprep.subr.mxu0 0.0
  %3756 = vmatpush1.msra.mxu0 %v3642
  %3757 = vmatprep.subr.mxu0 0.0
  %3758 = vmatpush1.msra.mxu0 %v3643
  %3759 = vmatprep.subr.mxu0 0.0
  %3760 = vmatpush1.msra.mxu0 %v3644
  %3761 = vmatprep.subr.mxu0 0.0
  %3762 = vmatpush1.msra.mxu0 %v3645
  %3763 = vmatprep.subr.mxu0 0.0
  %3764 = vmatpush1.msra.mxu0 %v3646
  %3765 = vmatprep.subr.mxu0 0.0
  %3766 = vmatpush1.msra.mxu0 %v3647
  %3767 = vmatprep.subr.mxu0 0.0
  %3768 = vmatpush1.msra.mxu0 %v3648
  %3769 = vmatprep.subr.mxu0 0.0
  %3770 = vmatpush1.msra.mxu0 %v3649
  %3771 = vmatprep.subr.mxu0 0.0
  %3772 = vmatpush1.msra.mxu0 %v3650
  %3773 = vmatprep.subr.mxu0 0.0
  %3774 = vmatpush1.msra.mxu0 %v3651
  %3775 = vmatprep.subr.mxu0 0.0
  %3776 = vmatpush1.msra.mxu0 %v3652
  %3777 = vmatprep.subr.mxu0 0.0
  %3778 = vmatpush1.msra.mxu0 %v3653
  %3779 = vmatprep.subr.mxu0 0.0
  %3780 = vmatpush1.msra.mxu0 %v3654
  %3781 = vmatprep.subr.mxu0 0.0
  %3782 = vmatpush1.msra.mxu0 %v3655
  %3783 = vmatprep.subr.mxu0 0.0
  %3784 = vmatpush1.msra.mxu0 %v3656
  %3785 = vmatprep.subr.mxu0 0.0
  %3786 = vmatpush1.msra.mxu0 %v3657
  %3787 = vmatprep.subr.mxu0 0.0
  %3788 = vmatpush1.msra.mxu0 %v3658
  %3789 = vmatprep.subr.mxu0 0.0
  %3790 = vmatpush1.msra.mxu0 %v3659
  %3791 = vmatprep.subr.mxu0 0.0
  %3792 = vmatpush1.msra.mxu0 %v3660
  %3793 = vmatprep.subr.mxu0 0.0
  %3794 = vmatpush1.msra.mxu0 %v3661
  %3795 = vmatprep.subr.mxu0 0.0
  %3796 = vmatpush1.msra.mxu0 %v3662
  %3797 = vmatprep.subr.mxu0 0.0
  %3798 = vmatpush1.msra.mxu0 %v3663
  %3799 = vmatprep.subr.mxu0 0.0
  %3800 = vmatpush1.msra.mxu0 %v3664
  %3801 = vmatprep.subr.mxu0 0.0
  %3802 = vmatpush1.msra.mxu0 %v3665
  %3803 = vmatprep.subr.mxu0 0.0
  %3804 = vmatpush1.msra.mxu0 %v3666
  %3805 = vmatprep.subr.mxu0 0.0
  %3806 = vmatpush1.msra.mxu0 %v3667
  %3807 = vmatprep.subr.mxu0 0.0
  %3808 = vmatpush1.msra.mxu0 %v3668
  %3809 = vmatprep.subr.mxu0 0.0
  %3810 = vmatpush1.msra.mxu0 %v3669
  %3811 = vmatprep.mubr.f32.mxu0 %v3601
  %3812 = vmatmul.mubr.f32.gmra.mrb[0].mxu0 %v3600
  %v3813 = vpop.f32.mrb[0].mxu0
  %v3814 = vadd.f32 %v3744, %v3813
  %v3815 = vpop.f32.mrb[0].mxu0
  %3816 = vdwg.mxu0
  %v3817 = vld [vmem:[%s11] sm:$0xff]
  %v3818 = vld [vmem:[%s11 + $0x8] sm:$0xff]
  %v3819 = vld [vmem:[%s11 + $0x10] sm:$0xff]
  %v3820 = vld [vmem:[%s11 + $0x18] sm:$0xff]
  %v3821 = vld [vmem:[%s11 + $0x20] sm:$0xff]
  %v3822 = vld [vmem:[%s11 + $0x28] sm:$0xff]
  %v3823 = vld [vmem:[%s11 + $0x30] sm:$0xff]
  %v3824 = vld [vmem:[%s11 + $0x38] sm:$0xff]
  %v3825 = vld [vmem:[%s11 + $0x40] sm:$0xff]
  %v3826 = vld [vmem:[%s11 + $0x48] sm:$0xff]
  %v3827 = vld [vmem:[%s11 + $0x50] sm:$0xff]
  %v3828 = vld [vmem:[%s11 + $0x58] sm:$0xff]
  %v3829 = vld [vmem:[%s11 + $0x60] sm:$0xff]
  %v3830 = vld [vmem:[%s11 + $0x68] sm:$0xff]
  %v3831 = vld [vmem:[%s11 + $0x70] sm:$0xff]
  %v3832 = vld [vmem:[%s11 + $0x78] sm:$0xff]
  %v3833 = vld [vmem:[%s11 + $0x80] sm:$0xff]
  %v3834 = vld [vmem:[%s11 + $0x88] sm:$0xff]
  %v3835 = vld [vmem:[%s11 + $0x90] sm:$0xff]
  %v3836 = vld [vmem:[%s11 + $0x98] sm:$0xff]
  %v3837 = vld [vmem:[%s11 + $0xa0] sm:$0xff]
  %v3838 = vld [vmem:[%s11 + $0xa8] sm:$0xff]
  %v3839 = vld [vmem:[%s11 + $0xb0] sm:$0xff]
  %v3840 = vld [vmem:[%s11 + $0xb8] sm:$0xff]
  %v3841 = vld [vmem:[%s11 + $0xc0] sm:$0xff]
  %v3842 = vld [vmem:[%s11 + $0xc8] sm:$0xff]
  %v3843 = vld [vmem:[%s11 + $0xd0] sm:$0xff]
  %v3844 = vld [vmem:[%s11 + $0xd8] sm:$0xff]
  %v3845 = vld [vmem:[%s11 + $0xe0] sm:$0xff]
  %v3846 = vld [vmem:[%s11 + $0xe8] sm:$0xff]
  %v3847 = vld [vmem:[%s11 + $0xf0] sm:$0xff]
  %v3848 = vld [vmem:[%s11 + $0xf8] sm:$0xff]
  %v3849 = vld [vmem:[%s11 + $0x100] sm:$0xff]
  %v3850 = vld [vmem:[%s11 + $0x108] sm:$0xff]
  %v3851 = vld [vmem:[%s11 + $0x110] sm:$0xff]
  %v3852 = vld [vmem:[%s11 + $0x118] sm:$0xff]
  %v3853 = vld [vmem:[%s11 + $0x120] sm:$0xff]
  %v3854 = vld [vmem:[%s11 + $0x128] sm:$0xff]
  %v3855 = vld [vmem:[%s11 + $0x130] sm:$0xff]
  %v3856 = vld [vmem:[%s11 + $0x138] sm:$0xff]
  %v3857 = vld [vmem:[%s11 + $0x140] sm:$0xff]
  %v3858 = vld [vmem:[%s11 + $0x148] sm:$0xff]
  %v3859 = vld [vmem:[%s11 + $0x150] sm:$0xff]
  %v3860 = vld [vmem:[%s11 + $0x158] sm:$0xff]
  %v3861 = vld [vmem:[%s11 + $0x160] sm:$0xff]
  %v3862 = vld [vmem:[%s11 + $0x168] sm:$0xff]
  %v3863 = vld [vmem:[%s11 + $0x170] sm:$0xff]
  %v3864 = vld [vmem:[%s11 + $0x178] sm:$0xff]
  %v3865 = vld [vmem:[%s11 + $0x180] sm:$0xff]
  %v3866 = vld [vmem:[%s11 + $0x188] sm:$0xff]
  %v3867 = vld [vmem:[%s11 + $0x190] sm:$0xff]
  %v3868 = vld [vmem:[%s11 + $0x198] sm:$0xff]
  %v3869 = vld [vmem:[%s11 + $0x1a0] sm:$0xff]
  %v3870 = vld [vmem:[%s11 + $0x1a8] sm:$0xff]
  %v3871 = vld [vmem:[%s11 + $0x1b0] sm:$0xff]
  %v3872 = vld [vmem:[%s11 + $0x1b8] sm:$0xff]
  %v3873 = vld [vmem:[%s11 + $0x1c0] sm:$0xff]
  %v3874 = vld [vmem:[%s11 + $0x1c8] sm:$0xff]
  %v3875 = vld [vmem:[%s11 + $0x1d0] sm:$0xff]
  %v3876 = vld [vmem:[%s11 + $0x1d8] sm:$0xff]
  %v3877 = vld [vmem:[%s11 + $0x1e0] sm:$0xff]
  %v3878 = vld [vmem:[%s11 + $0x1e8] sm:$0xff]
  %v3879 = vld [vmem:[%s11 + $0x1f0] sm:$0xff]
  %v3880 = vld [vmem:[%s11 + $0x1f8] sm:$0xff]
  %v3881 = vld [vmem:[%s12] sm:$0x1]
  %v3883 = vlaneseq
  %v3884 = vshrl.u32 %v3883, 7
  %v3885 = vsub.s32 0, %v3884
  %v3886 = vrot.slane %v3881, %v3885
  %3888 = vmatprep.subr.mxu0 0.0
  %3889 = vmatpush1.msra.mxu0 %v3817
  %3890 = vmatprep.subr.mxu0 0.0
  %3891 = vmatpush1.msra.mxu0 %v3818
  %3892 = vmatprep.subr.mxu0 0.0
  %3893 = vmatpush1.msra.mxu0 %v3819
  %3894 = vmatprep.subr.mxu0 0.0
  %3895 = vmatpush1.msra.mxu0 %v3820
  %3896 = vmatprep.subr.mxu0 0.0
  %3897 = vmatpush1.msra.mxu0 %v3821
  %3898 = vmatprep.subr.mxu0 0.0
  %3899 = vmatpush1.msra.mxu0 %v3822
  %3900 = vmatprep.subr.mxu0 0.0
  %3901 = vmatpush1.msra.mxu0 %v3823
  %3902 = vmatprep.subr.mxu0 0.0
  %3903 = vmatpush1.msra.mxu0 %v3824
  %3904 = vmatprep.subr.mxu0 0.0
  %3905 = vmatpush1.msra.mxu0 %v3825
  %3906 = vmatprep.subr.mxu0 0.0
  %3907 = vmatpush1.msra.mxu0 %v3826
  %3908 = vmatprep.subr.mxu0 0.0
  %3909 = vmatpush1.msra.mxu0 %v3827
  %3910 = vmatprep.subr.mxu0 0.0
  %3911 = vmatpush1.msra.mxu0 %v3828
  %3912 = vmatprep.subr.mxu0 0.0
  %3913 = vmatpush1.msra.mxu0 %v3829
  %3914 = vmatprep.subr.mxu0 0.0
  %3915 = vmatpush1.msra.mxu0 %v3830
  %3916 = vmatprep.subr.mxu0 0.0
  %3917 = vmatpush1.msra.mxu0 %v3831
  %3918 = vmatprep.subr.mxu0 0.0
  %3919 = vmatpush1.msra.mxu0 %v3832
  %3920 = vmatprep.subr.mxu0 0.0
  %3921 = vmatpush1.msra.mxu0 %v3833
  %3922 = vmatprep.subr.mxu0 0.0
  %3923 = vmatpush1.msra.mxu0 %v3834
  %3924 = vmatprep.subr.mxu0 0.0
  %3925 = vmatpush1.msra.mxu0 %v3835
  %3926 = vmatprep.subr.mxu0 0.0
  %3927 = vmatpush1.msra.mxu0 %v3836
  %3928 = vmatprep.subr.mxu0 0.0
  %3929 = vmatpush1.msra.mxu0 %v3837
  %3930 = vmatprep.subr.mxu0 0.0
  %3931 = vmatpush1.msra.mxu0 %v3838
  %3932 = vmatprep.subr.mxu0 0.0
  %3933 = vmatpush1.msra.mxu0 %v3839
  %3934 = vmatprep.subr.mxu0 0.0
  %3935 = vmatpush1.msra.mxu0 %v3840
  %3936 = vmatprep.subr.mxu0 0.0
  %3937 = vmatpush1.msra.mxu0 %v3841
  %3938 = vmatprep.subr.mxu0 0.0
  %3939 = vmatpush1.msra.mxu0 %v3842
  %3940 = vmatprep.subr.mxu0 0.0
  %3941 = vmatpush1.msra.mxu0 %v3843
  %3942 = vmatprep.subr.mxu0 0.0
  %3943 = vmatpush1.msra.mxu0 %v3844
  %3944 = vmatprep.subr.mxu0 0.0
  %3945 = vmatpush1.msra.mxu0 %v3845
  %3946 = vmatprep.subr.mxu0 0.0
  %3947 = vmatpush1.msra.mxu0 %v3846
  %3948 = vmatprep.subr.mxu0 0.0
  %3949 = vmatpush1.msra.mxu0 %v3847
  %3950 = vmatprep.subr.mxu0 0.0
  %3951 = vmatpush1.msra.mxu0 %v3848
  %3952 = vmatprep.mubr.f32.mxu0 %v3603
  %3953 = vmatmul.mubr.f32.gmra.mrb[0].mxu0 %v3602
  %v3954 = vpop.f32.mrb[0].mxu0
  %v3955 = vadd.f32 %v3886, %v3954
  %v3956 = vpop.f32.mrb[0].mxu0
  %3957 = vdwg.mxu0
  %3958 = vmatprep.subr.mxu0 0.0
  %3959 = vmatpush1.msra.mxu0 %v3849
  %3960 = vmatprep.subr.mxu0 0.0
  %3961 = vmatpush1.msra.mxu0 %v3850
  %3962 = vmatprep.subr.mxu0 0.0
  %3963 = vmatpush1.msra.mxu0 %v3851
  %3964 = vmatprep.subr.mxu0 0.0
  %3965 = vmatpush1.msra.mxu0 %v3852
  %3966 = vmatprep.subr.mxu0 0.0
  %3967 = vmatpush1.msra.mxu0 %v3853
  %3968 = vmatprep.subr.mxu0 0.0
  %3969 = vmatpush1.msra.mxu0 %v3854
  %3970 = vmatprep.subr.mxu0 0.0
  %3971 = vmatpush1.msra.mxu0 %v3855
  %3972 = vmatprep.subr.mxu0 0.0
  %3973 = vmatpush1.msra.mxu0 %v3856
  %3974 = vmatprep.subr.mxu0 0.0
  %3975 = vmatpush1.msra.mxu0 %v3857
  %3976 = vmatprep.subr.mxu0 0.0
  %3977 = vmatpush1.msra.mxu0 %v3858
  %3978 = vmatprep.subr.mxu0 0.0
  %3979 = vmatpush1.msra.mxu0 %v3859
  %3980 = vmatprep.subr.mxu0 0.0
  %3981 = vmatpush1.msra.mxu0 %v3860
  %3982 = vmatprep.subr.mxu0 0.0
  %3983 = vmatpush1.msra.mxu0 %v3861
  %3984 = vmatprep.subr.mxu0 0.0
  %3985 = vmatpush1.msra.mxu0 %v3862
  %3986 = vmatprep.subr.mxu0 0.0
  %3987 = vmatpush1.msra.mxu0 %v3863
  %3988 = vmatprep.subr.mxu0 0.0
  %3989 = vmatpush1.msra.mxu0 %v3864
  %3990 = vmatprep.subr.mxu0 0.0
  %3991 = vmatpush1.msra.mxu0 %v3865
  %3992 = vmatprep.subr.mxu0 0.0
  %3993 = vmatpush1.msra.mxu0 %v3866
  %3994 = vmatprep.subr.mxu0 0.0
  %3995 = vmatpush1.msra.mxu0 %v3867
  %3996 = vmatprep.subr.mxu0 0.0
  %3997 = vmatpush1.msra.mxu0 %v3868
  %3998 = vmatprep.subr.mxu0 0.0
  %3999 = vmatpush1.msra.mxu0 %v3869
  %4000 = vmatprep.subr.mxu0 0.0
  %4001 = vmatpush1.msra.mxu0 %v3870
  %4002 = vmatprep.subr.mxu0 0.0
  %4003 = vmatpush1.msra.mxu0 %v3871
  %4004 = vmatprep.subr.mxu0 0.0
  %4005 = vmatpush1.msra.mxu0 %v3872
  %4006 = vmatprep.subr.mxu0 0.0
  %4007 = vmatpush1.msra.mxu0 %v3873
  %4008 = vmatprep.subr.mxu0 0.0
  %4009 = vmatpush1.msra.mxu0 %v3874
  %4010 = vmatprep.subr.mxu0 0.0
  %4011 = vmatpush1.msra.mxu0 %v3875
  %4012 = vmatprep.subr.mxu0 0.0
  %4013 = vmatpush1.msra.mxu0 %v3876
  %4014 = vmatprep.subr.mxu0 0.0
  %4015 = vmatpush1.msra.mxu0 %v3877
  %4016 = vmatprep.subr.mxu0 0.0
  %4017 = vmatpush1.msra.mxu0 %v3878
  %4018 = vmatprep.subr.mxu0 0.0
  %4019 = vmatpush1.msra.mxu0 %v3879
  %4020 = vmatprep.subr.mxu0 0.0
  %4021 = vmatpush1.msra.mxu0 %v3880
  %4022 = vmatprep.mubr.f32.mxu0 %v3605
  %4023 = vmatmul.mubr.f32.gmra.mrb[0].mxu0 %v3604
  %v4024 = vpop.f32.mrb[0].mxu0
  %v4025 = vadd.f32 %v3955, %v4024
  %v4026 = vpop.f32.mrb[0].mxu0
  %4027 = vdwg.mxu0
  %vm4028 = vcmask 48128
  %v4029 = vsel %vm4028, %v4025, 0.0
  %4030 = vadd.xlane.f32.xlu0 %v4029
  %v4031 = vpop.xlane.xlu0 %4030
  %v4032 = vrcp.pop 6.0
  %v4033 = vmul.f32 %v4031, %v4032
  %v4034 = vsub.f32 %v4025, %v4033
  %4036 = vset.pattern.permute.xlu0 0
  %4037 = vperm.xlu0 %4036, %v3814
  %v4038 = vpop.permute.xlu0 %4037
  %v4040 = vadd.f32 %v4038, %v4034
  %4041 = vst.msk [vmem:[%s13] sm:$0xff] %vm4028, %v4040
  // Predicated region
  $region58: #{qnet_forward.1} parent=0 // pred_check
    _
  $region59: #{qnet_forward.1} parent=0 // pred_check_branch
    %4043 = sbr.rel (0) target = $region61
  $region60: #{qnet_forward.1} parent=0 // pred_region
    _
  $region61: #{qnet_forward.1} parent=0 // pred_fallthru
    _
  // Predicated region
  $region62: #{qnet_forward.1} parent=0 // pred_check
    _
  $region63: #{qnet_forward.1} parent=0 // pred_check_branch
    %4045 = sbr.rel (0) target = $region65
  $region64: #{qnet_forward.1} parent=0 // pred_region
    _
  $region65: #{qnet_forward.1} parent=0 // pred_fallthru
    _

</llo_original>
